<compile_context>
chip_gen: v6e
topology: v6e:2x2x1
jax: 0.10.0
libtpu: 0.0.40
codegen_flags: <defaults>
</compile_context>

<pallas_src>
import functools

import jax
import jax.numpy as jnp
from jax.experimental import pallas as pl
from jax.experimental.pallas import tpu as pltpu

EPS = 1e-5
LANE = 128            # TPU lane width; channel dims are padded to a multiple of this.


def _ceil_to(x, m):
    return (x + m - 1) // m * m


# ---------------------------------------------------------------------------------
# Fused Block kernel:
#   conv3x3(stride s) -> IN -> ReLU -> conv3x3(stride 1) -> IN -> ReLU [-> +x] -> ReLU
# One grid step = one batch element.
# ---------------------------------------------------------------------------------
def _block_kernel(xp_ref, w1_ref, w2_ref, o_ref, h_ref, *,
                  stride, Ho, Wo, residual, eps):
    P = Ho * Wo
    Cout = o_ref.shape[-1]

    def instancenorm_relu(acc):
        # One-pass biased statistics in f32: var = E[y^2] - E[y]^2.
        mean = jnp.sum(acc, axis=0, keepdims=True) * (1.0 / P)
        msq = jnp.sum(acc * acc, axis=0, keepdims=True) * (1.0 / P)
        var = jnp.maximum(msq - mean * mean, 0.0)
        return jnp.maximum((acc - mean) * jax.lax.rsqrt(var + eps), 0.0)

    def conv3x3(tap_fn, w_ref):
        # 9 accumulated (P, Cin) @ (Cin, Cout) MXU matmuls (bf16 in, f32 accumulate).
        acc = jnp.zeros((P, Cout), jnp.float32)
        for kh in range(3):
            for kw in range(3):
                tap = tap_fn(kh, kw).reshape(P, -1).astype(jnp.bfloat16)
                acc = acc + jnp.dot(tap, w_ref[kh * 3 + kw],
                                    preferred_element_type=jnp.float32)
        return acc

    # ---- stage 1: taps come from the pre-padded (parity-decomposed) input -------
    def tap1(kh, kw):
        plane = (kh % stride) * stride + (kw % stride)
        i0, j0 = kh // stride, kw // stride
        return xp_ref[0, plane, i0:i0 + Ho, j0:j0 + Wo, :]

    h = instancenorm_relu(conv3x3(tap1, w1_ref))

    # Stage-1 activation never leaves VMEM: write it into a spatially zero-padded
    # scratch so stage-2 taps are plain contiguous slices.
    h_ref[...] = jnp.zeros_like(h_ref)
    h_ref[1:1 + Ho, 1:1 + Wo, :] = h.reshape(Ho, Wo, Cout)

    # ---- stage 2: stride-1 conv over the VMEM-resident padded intermediate ------
    def tap2(kh, kw):
        return h_ref[kh:kh + Ho, kw:kw + Wo, :]

    y = instancenorm_relu(conv3x3(tap2, w2_ref))

    if residual:
        # Residual = original block input = centre of the (stride-1) padded planes.
        res = xp_ref[0, 0, 1:1 + Ho, 1:1 + Wo, :].reshape(P, Cout)
        y = jnp.maximum(y + res, 0.0)

    o_ref[0] = y.reshape(Ho, Wo, Cout)


# ---------------------------------------------------------------------------------
# Wrappers (layout plumbing only; all compute is inside the kernel)
# ---------------------------------------------------------------------------------
def _prep_weight(w_pt, c_in_pad, c_out_pad):
    """(Cout, Cin, 3, 3) PyTorch layout -> (9, Cin_pad, Cout_pad) bf16, tap-ordered."""
    cout, cin = w_pt.shape[0], w_pt.shape[1]
    w = jnp.transpose(w_pt, (2, 3, 1, 0)).reshape(9, cin, cout)
    w = jnp.pad(w, ((0, 0), (0, c_in_pad - cin), (0, c_out_pad - cout)))
    return w.astype(jnp.bfloat16)


def _make_tap_planes(x_nhwc, stride):
    """Spatial 'same' pad (pad=1) and decompose into stride*stride parity planes so
    every 3x3 tap is a contiguous (un-strided) slice inside the kernel."""
    N, H, W, C = x_nhwc.shape
    xp = jnp.pad(x_nhwc, ((0, 0), (1, 1), (1, 1), (0, 0)))
    Hp, Wp = H + 2, W + 2
    Ho = (Hp - 3) // stride + 1
    Wo = (Wp - 3) // stride + 1
    if stride == 1:
        return xp.reshape(N, 1, Hp, Wp, C), Ho, Wo
    Hs = _ceil_to(Hp, stride) // stride
    Ws = _ceil_to(Wp, stride) // stride
    xp = jnp.pad(xp, ((0, 0), (0, stride * Hs - Hp), (0, stride * Ws - Wp), (0, 0)))
    planes = xp.reshape(N, Hs, stride, Ws, stride, C).transpose(0, 2, 4, 1, 3, 5)
    return planes.reshape(N, stride * stride, Hs, Ws, C), Ho, Wo


def _block_forward(x_nhwc, w1, w2, stride, residual):
    """x_nhwc: (N, H, W, Cp_in) f32 with channels already padded to a lane multiple."""
    N = x_nhwc.shape[0]
    c_in_pad = x_nhwc.shape[-1]
    c_out_pad = w1.shape[-1]
    planes, Ho, Wo = _make_tap_planes(x_nhwc, stride)
    n_planes, Hs, Ws = planes.shape[1], planes.shape[2], planes.shape[3]

    kernel = functools.partial(_block_kernel, stride=stride, Ho=Ho, Wo=Wo,
                               residual=residual, eps=EPS)

    # TODO(synk): add a P-tiled two-pass InstanceNorm path for very large H*W that
    # would not fit whole-image-per-step in VMEM (esp. v7x's 64 MiB).
    return pl.pallas_call(
        kernel,
        out_shape=jax.ShapeDtypeStruct((N, Ho, Wo, c_out_pad), jnp.float32),
        grid=(N,),   # batch axis marked "parallel" so v7x's two TensorCores shard it
        in_specs=[
            pl.BlockSpec((1, n_planes, Hs, Ws, c_in_pad),
                         lambda n: (n, 0, 0, 0, 0)),
            pl.BlockSpec((9, c_in_pad, c_out_pad), lambda n: (0, 0, 0)),
            pl.BlockSpec((9, c_out_pad, c_out_pad), lambda n: (0, 0, 0)),
        ],
        out_specs=pl.BlockSpec((1, Ho, Wo, c_out_pad), lambda n: (n, 0, 0, 0)),
        scratch_shapes=[pltpu.VMEM((Ho + 2, Wo + 2, c_out_pad), jnp.float32)],
        compiler_params=pltpu.CompilerParams(
            dimension_semantics=("parallel",),
            vmem_limit_bytes=32 * 1024 * 1024,   # explicit scoped-VMEM budget (v5e default is 16 MiB)
        ),
    )(planes, w1, w2)


def layer_forward(x_nchw, layer_params):
    """Forward pass of Layer: NCHW in, NCHW out (matches the PyTorch module)."""
    cout = layer_params[0]["w1"].shape[0]
    c_out_pad = _ceil_to(cout, LANE)

    x = jnp.transpose(x_nchw, (0, 2, 3, 1)).astype(jnp.float32)      # NCHW -> NHWC
    cin = x.shape[-1]
    c_in_pad = _ceil_to(cin, LANE)
    x = jnp.pad(x, ((0, 0), (0, 0), (0, 0), (0, c_in_pad - cin)))    # lane-pad channels

    for i, bp in enumerate(layer_params):
        stride = 2 if i == 0 else 1
        residual = i != 0
        cpi = c_in_pad if i == 0 else c_out_pad
        # Conv biases (b1, b2) are intentionally not passed: InstanceNorm2d
        # (affine=False) cancels a per-channel constant exactly.
        w1 = _prep_weight(bp["w1"], cpi, c_out_pad)
        w2 = _prep_weight(bp["w2"], c_out_pad, c_out_pad)
        x = _block_forward(x, w1, w2, stride, residual)

    x = x[..., :cout]                                                # drop lane padding
    return jnp.transpose(x, (0, 3, 1, 2))                            # NHWC -> NCHW


# ---------------------------------------------------------------------------------
# Parameters and pure-JAX reference (for a numerical self-check)
# ---------------------------------------------------------------------------------
def init_layer_params(key, in_features, out_features, n_blocks=2):
    """Deterministic synthetic parameters (PyTorch conv weight layout)."""
    params = []
    for i in range(n_blocks):
        cin = in_features if i == 0 else out_features
        key, k1, k2, k3, k4 = jax.random.split(key, 5)
        params.append({
            "w1": 0.1 * jax.random.normal(k1, (out_features, cin, 3, 3), jnp.float32),
            "b1": 0.1 * jax.random.normal(k2, (out_features,), jnp.float32),
            "w2": 0.1 * jax.random.normal(k3, (out_features, out_features, 3, 3), jnp.float32),
            "b2": 0.1 * jax.random.normal(k4, (out_features,), jnp.float32),
        })
    return params


def _layer_reference(x_nchw, layer_params):
    """f32 XLA-conv reference of the PyTorch module (biases included - they cancel)."""
    def conv(x, w, b, stride):
        y = jax.lax.conv_general_dilated(
            x, w, window_strides=(stride, stride), padding=((1, 1), (1, 1)),
            dimension_numbers=("NCHW", "OIHW", "NCHW"))
        return y + b[None, :, None, None]

    def inorm(y):
        m = jnp.mean(y, axis=(2, 3), keepdims=True)
        v = jnp.mean((y - m) ** 2, axis=(2, 3), keepdims=True)
        return (y - m) * jax.lax.rsqrt(v + EPS)

    h = x_nchw.astype(jnp.float32)
    for i, bp in enumerate(layer_params):
        stride = 2 if i == 0 else 1
        x_in = h
        h = jax.nn.relu(inorm(conv(h, bp["w1"], bp["b1"], stride)))
        h = jax.nn.relu(inorm(conv(h, bp["w2"], bp["b2"], 1)))
        if i != 0:
            h = h + x_in
        h = jax.nn.relu(h)
    return h


if __name__ == "__main__":
    key = jax.random.PRNGKey(0)
    kx, kp = jax.random.split(key)

    # Layer(in_features=4, out_features=8, n_blocks=2); input is NCHW like PyTorch.
    x = jax.random.normal(kx, (2, 4, 16, 16), jnp.float32)
    params = init_layer_params(kp, in_features=4, out_features=8, n_blocks=2)

    y = jax.jit(layer_forward)(x, params)
    jax.block_until_ready(y)

    assert y.shape == (2, 8, 8, 8), y.shape       # stride-2 first block halves spatial dims
    assert bool(jnp.all(y >= 0.0))                # final ReLU

    # Numerical check against the pure-JAX reference (loose tol: bf16 MXU inputs).
    y_ref = _layer_reference(x, params)
    max_err = float(jnp.max(jnp.abs(y - y_ref)))
    assert max_err < 2e-1, f"kernel deviates from reference: max_err={max_err}"
    print("KERNEL_OK")
</pallas_src>

<mosaic_0001>
module attributes {stable_mosaic.version = 11 : i64} {
  func.func @_block_kernel(%arg0: i32, %arg1: memref<1x4x9x9x128xf32, #tpu.memory_space<vmem>>, %arg2: memref<9x128x128xbf16, #tpu.memory_space<vmem>>, %arg3: memref<9x128x128xbf16, #tpu.memory_space<vmem>>, %arg4: memref<1x8x8x128xf32, #tpu.memory_space<vmem>>, %arg5: memref<10x10x128xf32, #tpu.memory_space<vmem>>) attributes {dimension_semantics = [#tpu.dimension_semantics<parallel>], iteration_bounds = array<i64: 2>, scalar_prefetch = 0 : i64, scratch_operands = 1 : i64, tpu.core_type = #tpu.core_type<tc>, window_params = [{transform_indices = @transform_0, window_bounds = array<i64: 1, 4, 9, 9, 128>}, {pipeline_mode = #tpu.pipeline_mode<synchronous>, transform_indices = @transform_1, window_bounds = array<i64: 9, 128, 128>}, {pipeline_mode = #tpu.pipeline_mode<synchronous>, transform_indices = @transform_2, window_bounds = array<i64: 9, 128, 128>}, {transform_indices = @transform_3, window_bounds = array<i64: 1, 8, 8, 128>}]} {
    %cst = arith.constant 0.000000e+00 : f32
    %0 = vector.broadcast %cst : f32 to vector<64x128xf32>
    %c0 = arith.constant 0 : index
    %c0_0 = arith.constant 0 : index
    %c0_1 = arith.constant 0 : index
    %c0_2 = arith.constant 0 : index
    %c0_3 = arith.constant 0 : index
    %1 = vector.load %arg1[%c0, %c0_0, %c0_1, %c0_2, %c0_3] : memref<1x4x9x9x128xf32, #tpu.memory_space<vmem>>, vector<1x1x8x8x128xf32>
    %2 = vector.shape_cast %1 : vector<1x1x8x8x128xf32> to vector<8x8x128xf32>
    %3 = vector.shape_cast %2 : vector<8x8x128xf32> to vector<64x128xf32>
    %4 = arith.truncf %3 : vector<64x128xf32> to vector<64x128xbf16>
    %c0_4 = arith.constant 0 : index
    %c0_5 = arith.constant 0 : index
    %c0_6 = arith.constant 0 : index
    %5 = vector.load %arg2[%c0_4, %c0_5, %c0_6] : memref<9x128x128xbf16, #tpu.memory_space<vmem>>, vector<1x128x128xbf16>
    %6 = vector.shape_cast %5 : vector<1x128x128xbf16> to vector<128x128xbf16>
    %cst_7 = arith.constant dense<0.000000e+00> : vector<64x128xf32>
    %7 = tpu.matmul %4, %6, %cst_7 {dimension_numbers = #tpu.dot_dimension_numbers<[1], [0], [0], [1], [0, 0, 1, 1], [], []>} : vector<64x128xbf16>, vector<128x128xbf16>, vector<64x128xf32> -> vector<64x128xf32>
    %8 = arith.addf %0, %7 : vector<64x128xf32>
    %c0_8 = arith.constant 0 : index
    %c1 = arith.constant 1 : index
    %c0_9 = arith.constant 0 : index
    %c0_10 = arith.constant 0 : index
    %c0_11 = arith.constant 0 : index
    %9 = vector.load %arg1[%c0_8, %c1, %c0_9, %c0_10, %c0_11] : memref<1x4x9x9x128xf32, #tpu.memory_space<vmem>>, vector<1x1x8x8x128xf32>
    %10 = vector.shape_cast %9 : vector<1x1x8x8x128xf32> to vector<8x8x128xf32>
    %11 = vector.shape_cast %10 : vector<8x8x128xf32> to vector<64x128xf32>
    %12 = arith.truncf %11 : vector<64x128xf32> to vector<64x128xbf16>
    %c1_12 = arith.constant 1 : index
    %c0_13 = arith.constant 0 : index
    %c0_14 = arith.constant 0 : index
    %13 = vector.load %arg2[%c1_12, %c0_13, %c0_14] : memref<9x128x128xbf16, #tpu.memory_space<vmem>>, vector<1x128x128xbf16>
    %14 = vector.shape_cast %13 : vector<1x128x128xbf16> to vector<128x128xbf16>
    %cst_15 = arith.constant dense<0.000000e+00> : vector<64x128xf32>
    %15 = tpu.matmul %12, %14, %cst_15 {dimension_numbers = #tpu.dot_dimension_numbers<[1], [0], [0], [1], [0, 0, 1, 1], [], []>} : vector<64x128xbf16>, vector<128x128xbf16>, vector<64x128xf32> -> vector<64x128xf32>
    %16 = arith.addf %8, %15 : vector<64x128xf32>
    %c0_16 = arith.constant 0 : index
    %c0_17 = arith.constant 0 : index
    %c0_18 = arith.constant 0 : index
    %c1_19 = arith.constant 1 : index
    %c0_20 = arith.constant 0 : index
    %17 = vector.load %arg1[%c0_16, %c0_17, %c0_18, %c1_19, %c0_20] : memref<1x4x9x9x128xf32, #tpu.memory_space<vmem>>, vector<1x1x8x8x128xf32>
    %18 = vector.shape_cast %17 : vector<1x1x8x8x128xf32> to vector<8x8x128xf32>
    %19 = vector.shape_cast %18 : vector<8x8x128xf32> to vector<64x128xf32>
    %20 = arith.truncf %19 : vector<64x128xf32> to vector<64x128xbf16>
    %c2 = arith.constant 2 : index
    %c0_21 = arith.constant 0 : index
    %c0_22 = arith.constant 0 : index
    %21 = vector.load %arg2[%c2, %c0_21, %c0_22] : memref<9x128x128xbf16, #tpu.memory_space<vmem>>, vector<1x128x128xbf16>
    %22 = vector.shape_cast %21 : vector<1x128x128xbf16> to vector<128x128xbf16>
    %cst_23 = arith.constant dense<0.000000e+00> : vector<64x128xf32>
    %23 = tpu.matmul %20, %22, %cst_23 {dimension_numbers = #tpu.dot_dimension_numbers<[1], [0], [0], [1], [0, 0, 1, 1], [], []>} : vector<64x128xbf16>, vector<128x128xbf16>, vector<64x128xf32> -> vector<64x128xf32>
    %24 = arith.addf %16, %23 : vector<64x128xf32>
    %c0_24 = arith.constant 0 : index
    %c2_25 = arith.constant 2 : index
    %c0_26 = arith.constant 0 : index
    %c0_27 = arith.constant 0 : index
    %c0_28 = arith.constant 0 : index
    %25 = vector.load %arg1[%c0_24, %c2_25, %c0_26, %c0_27, %c0_28] : memref<1x4x9x9x128xf32, #tpu.memory_space<vmem>>, vector<1x1x8x8x128xf32>
    %26 = vector.shape_cast %25 : vector<1x1x8x8x128xf32> to vector<8x8x128xf32>
    %27 = vector.shape_cast %26 : vector<8x8x128xf32> to vector<64x128xf32>
    %28 = arith.truncf %27 : vector<64x128xf32> to vector<64x128xbf16>
    %c3 = arith.constant 3 : index
    %c0_29 = arith.constant 0 : index
    %c0_30 = arith.constant 0 : index
    %29 = vector.load %arg2[%c3, %c0_29, %c0_30] : memref<9x128x128xbf16, #tpu.memory_space<vmem>>, vector<1x128x128xbf16>
    %30 = vector.shape_cast %29 : vector<1x128x128xbf16> to vector<128x128xbf16>
    %cst_31 = arith.constant dense<0.000000e+00> : vector<64x128xf32>
    %31 = tpu.matmul %28, %30, %cst_31 {dimension_numbers = #tpu.dot_dimension_numbers<[1], [0], [0], [1], [0, 0, 1, 1], [], []>} : vector<64x128xbf16>, vector<128x128xbf16>, vector<64x128xf32> -> vector<64x128xf32>
    %32 = arith.addf %24, %31 : vector<64x128xf32>
    %c0_32 = arith.constant 0 : index
    %c3_33 = arith.constant 3 : index
    %c0_34 = arith.constant 0 : index
    %c0_35 = arith.constant 0 : index
    %c0_36 = arith.constant 0 : index
    %33 = vector.load %arg1[%c0_32, %c3_33, %c0_34, %c0_35, %c0_36] : memref<1x4x9x9x128xf32, #tpu.memory_space<vmem>>, vector<1x1x8x8x128xf32>
    %34 = vector.shape_cast %33 : vector<1x1x8x8x128xf32> to vector<8x8x128xf32>
    %35 = vector.shape_cast %34 : vector<8x8x128xf32> to vector<64x128xf32>
    %36 = arith.truncf %35 : vector<64x128xf32> to vector<64x128xbf16>
    %c4 = arith.constant 4 : index
    %c0_37 = arith.constant 0 : index
    %c0_38 = arith.constant 0 : index
    %37 = vector.load %arg2[%c4, %c0_37, %c0_38] : memref<9x128x128xbf16, #tpu.memory_space<vmem>>, vector<1x128x128xbf16>
    %38 = vector.shape_cast %37 : vector<1x128x128xbf16> to vector<128x128xbf16>
    %cst_39 = arith.constant dense<0.000000e+00> : vector<64x128xf32>
    %39 = tpu.matmul %36, %38, %cst_39 {dimension_numbers = #tpu.dot_dimension_numbers<[1], [0], [0], [1], [0, 0, 1, 1], [], []>} : vector<64x128xbf16>, vector<128x128xbf16>, vector<64x128xf32> -> vector<64x128xf32>
    %40 = arith.addf %32, %39 : vector<64x128xf32>
    %c0_40 = arith.constant 0 : index
    %c2_41 = arith.constant 2 : index
    %c0_42 = arith.constant 0 : index
    %c1_43 = arith.constant 1 : index
    %c0_44 = arith.constant 0 : index
    %41 = vector.load %arg1[%c0_40, %c2_41, %c0_42, %c1_43, %c0_44] : memref<1x4x9x9x128xf32, #tpu.memory_space<vmem>>, vector<1x1x8x8x128xf32>
    %42 = vector.shape_cast %41 : vector<1x1x8x8x128xf32> to vector<8x8x128xf32>
    %43 = vector.shape_cast %42 : vector<8x8x128xf32> to vector<64x128xf32>
    %44 = arith.truncf %43 : vector<64x128xf32> to vector<64x128xbf16>
    %c5 = arith.constant 5 : index
    %c0_45 = arith.constant 0 : index
    %c0_46 = arith.constant 0 : index
    %45 = vector.load %arg2[%c5, %c0_45, %c0_46] : memref<9x128x128xbf16, #tpu.memory_space<vmem>>, vector<1x128x128xbf16>
    %46 = vector.shape_cast %45 : vector<1x128x128xbf16> to vector<128x128xbf16>
    %cst_47 = arith.constant dense<0.000000e+00> : vector<64x128xf32>
    %47 = tpu.matmul %44, %46, %cst_47 {dimension_numbers = #tpu.dot_dimension_numbers<[1], [0], [0], [1], [0, 0, 1, 1], [], []>} : vector<64x128xbf16>, vector<128x128xbf16>, vector<64x128xf32> -> vector<64x128xf32>
    %48 = arith.addf %40, %47 : vector<64x128xf32>
    %c0_48 = arith.constant 0 : index
    %c0_49 = arith.constant 0 : index
    %c1_50 = arith.constant 1 : index
    %c0_51 = arith.constant 0 : index
    %c0_52 = arith.constant 0 : index
    %49 = vector.load %arg1[%c0_48, %c0_49, %c1_50, %c0_51, %c0_52] : memref<1x4x9x9x128xf32, #tpu.memory_space<vmem>>, vector<1x1x8x8x128xf32>
    %50 = vector.shape_cast %49 : vector<1x1x8x8x128xf32> to vector<8x8x128xf32>
    %51 = vector.shape_cast %50 : vector<8x8x128xf32> to vector<64x128xf32>
    %52 = arith.truncf %51 : vector<64x128xf32> to vector<64x128xbf16>
    %c6 = arith.constant 6 : index
    %c0_53 = arith.constant 0 : index
    %c0_54 = arith.constant 0 : index
    %53 = vector.load %arg2[%c6, %c0_53, %c0_54] : memref<9x128x128xbf16, #tpu.memory_space<vmem>>, vector<1x128x128xbf16>
    %54 = vector.shape_cast %53 : vector<1x128x128xbf16> to vector<128x128xbf16>
    %cst_55 = arith.constant dense<0.000000e+00> : vector<64x128xf32>
    %55 = tpu.matmul %52, %54, %cst_55 {dimension_numbers = #tpu.dot_dimension_numbers<[1], [0], [0], [1], [0, 0, 1, 1], [], []>} : vector<64x128xbf16>, vector<128x128xbf16>, vector<64x128xf32> -> vector<64x128xf32>
    %56 = arith.addf %48, %55 : vector<64x128xf32>
    %c0_56 = arith.constant 0 : index
    %c1_57 = arith.constant 1 : index
    %c1_58 = arith.constant 1 : index
    %c0_59 = arith.constant 0 : index
    %c0_60 = arith.constant 0 : index
    %57 = vector.load %arg1[%c0_56, %c1_57, %c1_58, %c0_59, %c0_60] : memref<1x4x9x9x128xf32, #tpu.memory_space<vmem>>, vector<1x1x8x8x128xf32>
    %58 = vector.shape_cast %57 : vector<1x1x8x8x128xf32> to vector<8x8x128xf32>
    %59 = vector.shape_cast %58 : vector<8x8x128xf32> to vector<64x128xf32>
    %60 = arith.truncf %59 : vector<64x128xf32> to vector<64x128xbf16>
    %c7 = arith.constant 7 : index
    %c0_61 = arith.constant 0 : index
    %c0_62 = arith.constant 0 : index
    %61 = vector.load %arg2[%c7, %c0_61, %c0_62] : memref<9x128x128xbf16, #tpu.memory_space<vmem>>, vector<1x128x128xbf16>
    %62 = vector.shape_cast %61 : vector<1x128x128xbf16> to vector<128x128xbf16>
    %cst_63 = arith.constant dense<0.000000e+00> : vector<64x128xf32>
    %63 = tpu.matmul %60, %62, %cst_63 {dimension_numbers = #tpu.dot_dimension_numbers<[1], [0], [0], [1], [0, 0, 1, 1], [], []>} : vector<64x128xbf16>, vector<128x128xbf16>, vector<64x128xf32> -> vector<64x128xf32>
    %64 = arith.addf %56, %63 : vector<64x128xf32>
    %c0_64 = arith.constant 0 : index
    %c0_65 = arith.constant 0 : index
    %c1_66 = arith.constant 1 : index
    %c1_67 = arith.constant 1 : index
    %c0_68 = arith.constant 0 : index
    %65 = vector.load %arg1[%c0_64, %c0_65, %c1_66, %c1_67, %c0_68] : memref<1x4x9x9x128xf32, #tpu.memory_space<vmem>>, vector<1x1x8x8x128xf32>
    %66 = vector.shape_cast %65 : vector<1x1x8x8x128xf32> to vector<8x8x128xf32>
    %67 = vector.shape_cast %66 : vector<8x8x128xf32> to vector<64x128xf32>
    %68 = arith.truncf %67 : vector<64x128xf32> to vector<64x128xbf16>
    %c8 = arith.constant 8 : index
    %c0_69 = arith.constant 0 : index
    %c0_70 = arith.constant 0 : index
    %69 = vector.load %arg2[%c8, %c0_69, %c0_70] : memref<9x128x128xbf16, #tpu.memory_space<vmem>>, vector<1x128x128xbf16>
    %70 = vector.shape_cast %69 : vector<1x128x128xbf16> to vector<128x128xbf16>
    %cst_71 = arith.constant dense<0.000000e+00> : vector<64x128xf32>
    %71 = tpu.matmul %68, %70, %cst_71 {dimension_numbers = #tpu.dot_dimension_numbers<[1], [0], [0], [1], [0, 0, 1, 1], [], []>} : vector<64x128xbf16>, vector<128x128xbf16>, vector<64x128xf32> -> vector<64x128xf32>
    %72 = arith.addf %64, %71 : vector<64x128xf32>
    %cst_72 = arith.constant dense<0.000000e+00> : vector<128xf32>
    %73 = vector.multi_reduction <add>, %72, %cst_72 [0] : vector<64x128xf32> to vector<128xf32>
    %74 = vector.shape_cast %73 : vector<128xf32> to vector<1x128xf32>
    %cst_73 = arith.constant 1.562500e-02 : f32
    %75 = vector.broadcast %cst_73 : f32 to vector<1x128xf32>
    %76 = arith.mulf %74, %75 : vector<1x128xf32>
    %77 = arith.mulf %72, %72 : vector<64x128xf32>
    %cst_74 = arith.constant dense<0.000000e+00> : vector<128xf32>
    %78 = vector.multi_reduction <add>, %77, %cst_74 [0] : vector<64x128xf32> to vector<128xf32>
    %79 = vector.shape_cast %78 : vector<128xf32> to vector<1x128xf32>
    %cst_75 = arith.constant 1.562500e-02 : f32
    %80 = vector.broadcast %cst_75 : f32 to vector<1x128xf32>
    %81 = arith.mulf %79, %80 : vector<1x128xf32>
    %82 = arith.mulf %76, %76 : vector<1x128xf32>
    %83 = arith.subf %81, %82 : vector<1x128xf32>
    %cst_76 = arith.constant 0.000000e+00 : f32
    %84 = vector.broadcast %cst_76 : f32 to vector<1x128xf32>
    %85 = arith.maximumf %83, %84 : vector<1x128xf32>
    %86 = vector.broadcast %76 : vector<1x128xf32> to vector<64x128xf32>
    %87 = arith.subf %72, %86 : vector<64x128xf32>
    %cst_77 = arith.constant 9.99999974E-6 : f32
    %88 = vector.broadcast %cst_77 : f32 to vector<1x128xf32>
    %89 = arith.addf %85, %88 : vector<1x128xf32>
    %90 = math.rsqrt %89 : vector<1x128xf32>
    %91 = vector.broadcast %90 : vector<1x128xf32> to vector<64x128xf32>
    %92 = arith.mulf %87, %91 : vector<64x128xf32>
    %cst_78 = arith.constant 0.000000e+00 : f32
    %93 = vector.broadcast %cst_78 : f32 to vector<64x128xf32>
    %94 = arith.maximumf %92, %93 : vector<64x128xf32>
    %cst_79 = arith.constant 0.000000e+00 : f32
    %95 = vector.broadcast %cst_79 : f32 to vector<10x10x128xf32>
    %c0_80 = arith.constant 0 : index
    %c0_81 = arith.constant 0 : index
    %c0_82 = arith.constant 0 : index
    %96 = vector.load %arg5[%c0_80, %c0_81, %c0_82] : memref<10x10x128xf32, #tpu.memory_space<vmem>>, vector<10x10x128xf32>
    tpu.vector_store %arg5[%c0_80, %c0_81, %c0_82], %95 {strides = array<i32>} : memref<10x10x128xf32, #tpu.memory_space<vmem>>, vector<10x10x128xf32>,
    %97 = vector.shape_cast %94 : vector<64x128xf32> to vector<8x8x128xf32>
    %c1_83 = arith.constant 1 : index
    %c1_84 = arith.constant 1 : index
    %c0_85 = arith.constant 0 : index
    %98 = vector.load %arg5[%c1_83, %c1_84, %c0_85] : memref<10x10x128xf32, #tpu.memory_space<vmem>>, vector<8x8x128xf32>
    tpu.vector_store %arg5[%c1_83, %c1_84, %c0_85], %97 {strides = array<i32>} : memref<10x10x128xf32, #tpu.memory_space<vmem>>, vector<8x8x128xf32>,
    %cst_86 = arith.constant 0.000000e+00 : f32
    %99 = vector.broadcast %cst_86 : f32 to vector<64x128xf32>
    %c0_87 = arith.constant 0 : index
    %c0_88 = arith.constant 0 : index
    %c0_89 = arith.constant 0 : index
    %100 = vector.load %arg5[%c0_87, %c0_88, %c0_89] : memref<10x10x128xf32, #tpu.memory_space<vmem>>, vector<8x8x128xf32>
    %101 = vector.shape_cast %100 : vector<8x8x128xf32> to vector<64x128xf32>
    %102 = arith.truncf %101 : vector<64x128xf32> to vector<64x128xbf16>
    %c0_90 = arith.constant 0 : index
    %c0_91 = arith.constant 0 : index
    %c0_92 = arith.constant 0 : index
    %103 = vector.load %arg3[%c0_90, %c0_91, %c0_92] : memref<9x128x128xbf16, #tpu.memory_space<vmem>>, vector<1x128x128xbf16>
    %104 = vector.shape_cast %103 : vector<1x128x128xbf16> to vector<128x128xbf16>
    %cst_93 = arith.constant dense<0.000000e+00> : vector<64x128xf32>
    %105 = tpu.matmul %102, %104, %cst_93 {dimension_numbers = #tpu.dot_dimension_numbers<[1], [0], [0], [1], [0, 0, 1, 1], [], []>} : vector<64x128xbf16>, vector<128x128xbf16>, vector<64x128xf32> -> vector<64x128xf32>
    %106 = arith.addf %99, %105 : vector<64x128xf32>
    %c0_94 = arith.constant 0 : index
    %c1_95 = arith.constant 1 : index
    %c0_96 = arith.constant 0 : index
    %107 = vector.load %arg5[%c0_94, %c1_95, %c0_96] : memref<10x10x128xf32, #tpu.memory_space<vmem>>, vector<8x8x128xf32>
    %108 = vector.shape_cast %107 : vector<8x8x128xf32> to vector<64x128xf32>
    %109 = arith.truncf %108 : vector<64x128xf32> to vector<64x128xbf16>
    %c1_97 = arith.constant 1 : index
    %c0_98 = arith.constant 0 : index
    %c0_99 = arith.constant 0 : index
    %110 = vector.load %arg3[%c1_97, %c0_98, %c0_99] : memref<9x128x128xbf16, #tpu.memory_space<vmem>>, vector<1x128x128xbf16>
    %111 = vector.shape_cast %110 : vector<1x128x128xbf16> to vector<128x128xbf16>
    %cst_100 = arith.constant dense<0.000000e+00> : vector<64x128xf32>
    %112 = tpu.matmul %109, %111, %cst_100 {dimension_numbers = #tpu.dot_dimension_numbers<[1], [0], [0], [1], [0, 0, 1, 1], [], []>} : vector<64x128xbf16>, vector<128x128xbf16>, vector<64x128xf32> -> vector<64x128xf32>
    %113 = arith.addf %106, %112 : vector<64x128xf32>
    %c0_101 = arith.constant 0 : index
    %c2_102 = arith.constant 2 : index
    %c0_103 = arith.constant 0 : index
    %114 = vector.load %arg5[%c0_101, %c2_102, %c0_103] : memref<10x10x128xf32, #tpu.memory_space<vmem>>, vector<8x8x128xf32>
    %115 = vector.shape_cast %114 : vector<8x8x128xf32> to vector<64x128xf32>
    %116 = arith.truncf %115 : vector<64x128xf32> to vector<64x128xbf16>
    %c2_104 = arith.constant 2 : index
    %c0_105 = arith.constant 0 : index
    %c0_106 = arith.constant 0 : index
    %117 = vector.load %arg3[%c2_104, %c0_105, %c0_106] : memref<9x128x128xbf16, #tpu.memory_space<vmem>>, vector<1x128x128xbf16>
    %118 = vector.shape_cast %117 : vector<1x128x128xbf16> to vector<128x128xbf16>
    %cst_107 = arith.constant dense<0.000000e+00> : vector<64x128xf32>
    %119 = tpu.matmul %116, %118, %cst_107 {dimension_numbers = #tpu.dot_dimension_numbers<[1], [0], [0], [1], [0, 0, 1, 1], [], []>} : vector<64x128xbf16>, vector<128x128xbf16>, vector<64x128xf32> -> vector<64x128xf32>
    %120 = arith.addf %113, %119 : vector<64x128xf32>
    %c1_108 = arith.constant 1 : index
    %c0_109 = arith.constant 0 : index
    %c0_110 = arith.constant 0 : index
    %121 = vector.load %arg5[%c1_108, %c0_109, %c0_110] : memref<10x10x128xf32, #tpu.memory_space<vmem>>, vector<8x8x128xf32>
    %122 = vector.shape_cast %121 : vector<8x8x128xf32> to vector<64x128xf32>
    %123 = arith.truncf %122 : vector<64x128xf32> to vector<64x128xbf16>
    %c3_111 = arith.constant 3 : index
    %c0_112 = arith.constant 0 : index
    %c0_113 = arith.constant 0 : index
    %124 = vector.load %arg3[%c3_111, %c0_112, %c0_113] : memref<9x128x128xbf16, #tpu.memory_space<vmem>>, vector<1x128x128xbf16>
    %125 = vector.shape_cast %124 : vector<1x128x128xbf16> to vector<128x128xbf16>
    %cst_114 = arith.constant dense<0.000000e+00> : vector<64x128xf32>
    %126 = tpu.matmul %123, %125, %cst_114 {dimension_numbers = #tpu.dot_dimension_numbers<[1], [0], [0], [1], [0, 0, 1, 1], [], []>} : vector<64x128xbf16>, vector<128x128xbf16>, vector<64x128xf32> -> vector<64x128xf32>
    %127 = arith.addf %120, %126 : vector<64x128xf32>
    %c1_115 = arith.constant 1 : index
    %c1_116 = arith.constant 1 : index
    %c0_117 = arith.constant 0 : index
    %128 = vector.load %arg5[%c1_115, %c1_116, %c0_117] : memref<10x10x128xf32, #tpu.memory_space<vmem>>, vector<8x8x128xf32>
    %129 = vector.shape_cast %128 : vector<8x8x128xf32> to vector<64x128xf32>
    %130 = arith.truncf %129 : vector<64x128xf32> to vector<64x128xbf16>
    %c4_118 = arith.constant 4 : index
    %c0_119 = arith.constant 0 : index
    %c0_120 = arith.constant 0 : index
    %131 = vector.load %arg3[%c4_118, %c0_119, %c0_120] : memref<9x128x128xbf16, #tpu.memory_space<vmem>>, vector<1x128x128xbf16>
    %132 = vector.shape_cast %131 : vector<1x128x128xbf16> to vector<128x128xbf16>
    %cst_121 = arith.constant dense<0.000000e+00> : vector<64x128xf32>
    %133 = tpu.matmul %130, %132, %cst_121 {dimension_numbers = #tpu.dot_dimension_numbers<[1], [0], [0], [1], [0, 0, 1, 1], [], []>} : vector<64x128xbf16>, vector<128x128xbf16>, vector<64x128xf32> -> vector<64x128xf32>
    %134 = arith.addf %127, %133 : vector<64x128xf32>
    %c1_122 = arith.constant 1 : index
    %c2_123 = arith.constant 2 : index
    %c0_124 = arith.constant 0 : index
    %135 = vector.load %arg5[%c1_122, %c2_123, %c0_124] : memref<10x10x128xf32, #tpu.memory_space<vmem>>, vector<8x8x128xf32>
    %136 = vector.shape_cast %135 : vector<8x8x128xf32> to vector<64x128xf32>
    %137 = arith.truncf %136 : vector<64x128xf32> to vector<64x128xbf16>
    %c5_125 = arith.constant 5 : index
    %c0_126 = arith.constant 0 : index
    %c0_127 = arith.constant 0 : index
    %138 = vector.load %arg3[%c5_125, %c0_126, %c0_127] : memref<9x128x128xbf16, #tpu.memory_space<vmem>>, vector<1x128x128xbf16>
    %139 = vector.shape_cast %138 : vector<1x128x128xbf16> to vector<128x128xbf16>
    %cst_128 = arith.constant dense<0.000000e+00> : vector<64x128xf32>
    %140 = tpu.matmul %137, %139, %cst_128 {dimension_numbers = #tpu.dot_dimension_numbers<[1], [0], [0], [1], [0, 0, 1, 1], [], []>} : vector<64x128xbf16>, vector<128x128xbf16>, vector<64x128xf32> -> vector<64x128xf32>
    %141 = arith.addf %134, %140 : vector<64x128xf32>
    %c2_129 = arith.constant 2 : index
    %c0_130 = arith.constant 0 : index
    %c0_131 = arith.constant 0 : index
    %142 = vector.load %arg5[%c2_129, %c0_130, %c0_131] : memref<10x10x128xf32, #tpu.memory_space<vmem>>, vector<8x8x128xf32>
    %143 = vector.shape_cast %142 : vector<8x8x128xf32> to vector<64x128xf32>
    %144 = arith.truncf %143 : vector<64x128xf32> to vector<64x128xbf16>
    %c6_132 = arith.constant 6 : index
    %c0_133 = arith.constant 0 : index
    %c0_134 = arith.constant 0 : index
    %145 = vector.load %arg3[%c6_132, %c0_133, %c0_134] : memref<9x128x128xbf16, #tpu.memory_space<vmem>>, vector<1x128x128xbf16>
    %146 = vector.shape_cast %145 : vector<1x128x128xbf16> to vector<128x128xbf16>
    %cst_135 = arith.constant dense<0.000000e+00> : vector<64x128xf32>
    %147 = tpu.matmul %144, %146, %cst_135 {dimension_numbers = #tpu.dot_dimension_numbers<[1], [0], [0], [1], [0, 0, 1, 1], [], []>} : vector<64x128xbf16>, vector<128x128xbf16>, vector<64x128xf32> -> vector<64x128xf32>
    %148 = arith.addf %141, %147 : vector<64x128xf32>
    %c2_136 = arith.constant 2 : index
    %c1_137 = arith.constant 1 : index
    %c0_138 = arith.constant 0 : index
    %149 = vector.load %arg5[%c2_136, %c1_137, %c0_138] : memref<10x10x128xf32, #tpu.memory_space<vmem>>, vector<8x8x128xf32>
    %150 = vector.shape_cast %149 : vector<8x8x128xf32> to vector<64x128xf32>
    %151 = arith.truncf %150 : vector<64x128xf32> to vector<64x128xbf16>
    %c7_139 = arith.constant 7 : index
    %c0_140 = arith.constant 0 : index
    %c0_141 = arith.constant 0 : index
    %152 = vector.load %arg3[%c7_139, %c0_140, %c0_141] : memref<9x128x128xbf16, #tpu.memory_space<vmem>>, vector<1x128x128xbf16>
    %153 = vector.shape_cast %152 : vector<1x128x128xbf16> to vector<128x128xbf16>
    %cst_142 = arith.constant dense<0.000000e+00> : vector<64x128xf32>
    %154 = tpu.matmul %151, %153, %cst_142 {dimension_numbers = #tpu.dot_dimension_numbers<[1], [0], [0], [1], [0, 0, 1, 1], [], []>} : vector<64x128xbf16>, vector<128x128xbf16>, vector<64x128xf32> -> vector<64x128xf32>
    %155 = arith.addf %148, %154 : vector<64x128xf32>
    %c2_143 = arith.constant 2 : index
    %c2_144 = arith.constant 2 : index
    %c0_145 = arith.constant 0 : index
    %156 = vector.load %arg5[%c2_143, %c2_144, %c0_145] : memref<10x10x128xf32, #tpu.memory_space<vmem>>, vector<8x8x128xf32>
    %157 = vector.shape_cast %156 : vector<8x8x128xf32> to vector<64x128xf32>
    %158 = arith.truncf %157 : vector<64x128xf32> to vector<64x128xbf16>
    %c8_146 = arith.constant 8 : index
    %c0_147 = arith.constant 0 : index
    %c0_148 = arith.constant 0 : index
    %159 = vector.load %arg3[%c8_146, %c0_147, %c0_148] : memref<9x128x128xbf16, #tpu.memory_space<vmem>>, vector<1x128x128xbf16>
    %160 = vector.shape_cast %159 : vector<1x128x128xbf16> to vector<128x128xbf16>
    %cst_149 = arith.constant dense<0.000000e+00> : vector<64x128xf32>
    %161 = tpu.matmul %158, %160, %cst_149 {dimension_numbers = #tpu.dot_dimension_numbers<[1], [0], [0], [1], [0, 0, 1, 1], [], []>} : vector<64x128xbf16>, vector<128x128xbf16>, vector<64x128xf32> -> vector<64x128xf32>
    %162 = arith.addf %155, %161 : vector<64x128xf32>
    %cst_150 = arith.constant dense<0.000000e+00> : vector<128xf32>
    %163 = vector.multi_reduction <add>, %162, %cst_150 [0] : vector<64x128xf32> to vector<128xf32>
    %164 = vector.shape_cast %163 : vector<128xf32> to vector<1x128xf32>
    %cst_151 = arith.constant 1.562500e-02 : f32
    %165 = vector.broadcast %cst_151 : f32 to vector<1x128xf32>
    %166 = arith.mulf %164, %165 : vector<1x128xf32>
    %167 = arith.mulf %162, %162 : vector<64x128xf32>
    %cst_152 = arith.constant dense<0.000000e+00> : vector<128xf32>
    %168 = vector.multi_reduction <add>, %167, %cst_152 [0] : vector<64x128xf32> to vector<128xf32>
    %169 = vector.shape_cast %168 : vector<128xf32> to vector<1x128xf32>
    %cst_153 = arith.constant 1.562500e-02 : f32
    %170 = vector.broadcast %cst_153 : f32 to vector<1x128xf32>
    %171 = arith.mulf %169, %170 : vector<1x128xf32>
    %172 = arith.mulf %166, %166 : vector<1x128xf32>
    %173 = arith.subf %171, %172 : vector<1x128xf32>
    %cst_154 = arith.constant 0.000000e+00 : f32
    %174 = vector.broadcast %cst_154 : f32 to vector<1x128xf32>
    %175 = arith.maximumf %173, %174 : vector<1x128xf32>
    %176 = vector.broadcast %166 : vector<1x128xf32> to vector<64x128xf32>
    %177 = arith.subf %162, %176 : vector<64x128xf32>
    %cst_155 = arith.constant 9.99999974E-6 : f32
    %178 = vector.broadcast %cst_155 : f32 to vector<1x128xf32>
    %179 = arith.addf %175, %178 : vector<1x128xf32>
    %180 = math.rsqrt %179 : vector<1x128xf32>
    %181 = vector.broadcast %180 : vector<1x128xf32> to vector<64x128xf32>
    %182 = arith.mulf %177, %181 : vector<64x128xf32>
    %cst_156 = arith.constant 0.000000e+00 : f32
    %183 = vector.broadcast %cst_156 : f32 to vector<64x128xf32>
    %184 = arith.maximumf %182, %183 : vector<64x128xf32>
    %185 = vector.shape_cast %184 : vector<64x128xf32> to vector<8x8x128xf32>
    %c0_157 = arith.constant 0 : index
    %c0_158 = arith.constant 0 : index
    %c0_159 = arith.constant 0 : index
    %c0_160 = arith.constant 0 : index
    %186 = vector.load %arg4[%c0_157, %c0_158, %c0_159, %c0_160] : memref<1x8x8x128xf32, #tpu.memory_space<vmem>>, vector<1x8x8x128xf32>
    %187 = vector.shape_cast %186 : vector<1x8x8x128xf32> to vector<8x8x128xf32>
    %188 = vector.shape_cast %185 : vector<8x8x128xf32> to vector<1x8x8x128xf32>
    tpu.vector_store %arg4[%c0_157, %c0_158, %c0_159, %c0_160], %188 {strides = array<i32>} : memref<1x8x8x128xf32, #tpu.memory_space<vmem>>, vector<1x8x8x128xf32>,
    return
  }
  func.func @transform_0(%arg0: i32) -> (i32, i32, i32, i32, i32) {
    %c0_i32 = arith.constant 0 : i32
    %c0_i32_0 = arith.constant 0 : i32
    %c0_i32_1 = arith.constant 0 : i32
    %c0_i32_2 = arith.constant 0 : i32
    %c0_i32_3 = arith.constant 0 : i32
    return %arg0, %c0_i32, %c0_i32_0, %c0_i32_1, %c0_i32_2 : i32, i32, i32, i32, i32
  }
  func.func @transform_1(%arg0: i32) -> (i32, i32, i32) {
    %c0_i32 = arith.constant 0 : i32
    %c0_i32_0 = arith.constant 0 : i32
    %c0_i32_1 = arith.constant 0 : i32
    %c0_i32_2 = arith.constant 0 : i32
    return %c0_i32, %c0_i32_0, %c0_i32_1 : i32, i32, i32
  }
  func.func @transform_2(%arg0: i32) -> (i32, i32, i32) {
    %c0_i32 = arith.constant 0 : i32
    %c0_i32_0 = arith.constant 0 : i32
    %c0_i32_1 = arith.constant 0 : i32
    %c0_i32_2 = arith.constant 0 : i32
    return %c0_i32, %c0_i32_0, %c0_i32_1 : i32, i32, i32
  }
  func.func @transform_3(%arg0: i32) -> (i32, i32, i32, i32) {
    %c0_i32 = arith.constant 0 : i32
    %c0_i32_0 = arith.constant 0 : i32
    %c0_i32_1 = arith.constant 0 : i32
    %c0_i32_2 = arith.constant 0 : i32
    return %arg0, %c0_i32, %c0_i32_0, %c0_i32_1 : i32, i32, i32, i32
  }
}

module attributes {stable_mosaic.version = 11 : i64} {
  func.func @_block_kernel(%arg0: i32, %arg1: memref<1x1x10x10x128xf32, #tpu.memory_space<vmem>>, %arg2: memref<9x128x128xbf16, #tpu.memory_space<vmem>>, %arg3: memref<9x128x128xbf16, #tpu.memory_space<vmem>>, %arg4: memref<1x8x8x128xf32, #tpu.memory_space<vmem>>, %arg5: memref<10x10x128xf32, #tpu.memory_space<vmem>>) attributes {dimension_semantics = [#tpu.dimension_semantics<parallel>], iteration_bounds = array<i64: 2>, scalar_prefetch = 0 : i64, scratch_operands = 1 : i64, tpu.core_type = #tpu.core_type<tc>, window_params = [{transform_indices = @transform_0, window_bounds = array<i64: 1, 1, 10, 10, 128>}, {pipeline_mode = #tpu.pipeline_mode<synchronous>, transform_indices = @transform_1, window_bounds = array<i64: 9, 128, 128>}, {pipeline_mode = #tpu.pipeline_mode<synchronous>, transform_indices = @transform_2, window_bounds = array<i64: 9, 128, 128>}, {transform_indices = @transform_3, window_bounds = array<i64: 1, 8, 8, 128>}]} {
    %cst = arith.constant 0.000000e+00 : f32
    %0 = vector.broadcast %cst : f32 to vector<64x128xf32>
    %c0 = arith.constant 0 : index
    %c0_0 = arith.constant 0 : index
    %c0_1 = arith.constant 0 : index
    %c0_2 = arith.constant 0 : index
    %c0_3 = arith.constant 0 : index
    %1 = vector.load %arg1[%c0, %c0_0, %c0_1, %c0_2, %c0_3] : memref<1x1x10x10x128xf32, #tpu.memory_space<vmem>>, vector<1x1x8x8x128xf32>
    %2 = vector.shape_cast %1 : vector<1x1x8x8x128xf32> to vector<8x8x128xf32>
    %3 = vector.shape_cast %2 : vector<8x8x128xf32> to vector<64x128xf32>
    %4 = arith.truncf %3 : vector<64x128xf32> to vector<64x128xbf16>
    %c0_4 = arith.constant 0 : index
    %c0_5 = arith.constant 0 : index
    %c0_6 = arith.constant 0 : index
    %5 = vector.load %arg2[%c0_4, %c0_5, %c0_6] : memref<9x128x128xbf16, #tpu.memory_space<vmem>>, vector<1x128x128xbf16>
    %6 = vector.shape_cast %5 : vector<1x128x128xbf16> to vector<128x128xbf16>
    %cst_7 = arith.constant dense<0.000000e+00> : vector<64x128xf32>
    %7 = tpu.matmul %4, %6, %cst_7 {dimension_numbers = #tpu.dot_dimension_numbers<[1], [0], [0], [1], [0, 0, 1, 1], [], []>} : vector<64x128xbf16>, vector<128x128xbf16>, vector<64x128xf32> -> vector<64x128xf32>
    %8 = arith.addf %0, %7 : vector<64x128xf32>
    %c0_8 = arith.constant 0 : index
    %c0_9 = arith.constant 0 : index
    %c0_10 = arith.constant 0 : index
    %c1 = arith.constant 1 : index
    %c0_11 = arith.constant 0 : index
    %9 = vector.load %arg1[%c0_8, %c0_9, %c0_10, %c1, %c0_11] : memref<1x1x10x10x128xf32, #tpu.memory_space<vmem>>, vector<1x1x8x8x128xf32>
    %10 = vector.shape_cast %9 : vector<1x1x8x8x128xf32> to vector<8x8x128xf32>
    %11 = vector.shape_cast %10 : vector<8x8x128xf32> to vector<64x128xf32>
    %12 = arith.truncf %11 : vector<64x128xf32> to vector<64x128xbf16>
    %c1_12 = arith.constant 1 : index
    %c0_13 = arith.constant 0 : index
    %c0_14 = arith.constant 0 : index
    %13 = vector.load %arg2[%c1_12, %c0_13, %c0_14] : memref<9x128x128xbf16, #tpu.memory_space<vmem>>, vector<1x128x128xbf16>
    %14 = vector.shape_cast %13 : vector<1x128x128xbf16> to vector<128x128xbf16>
    %cst_15 = arith.constant dense<0.000000e+00> : vector<64x128xf32>
    %15 = tpu.matmul %12, %14, %cst_15 {dimension_numbers = #tpu.dot_dimension_numbers<[1], [0], [0], [1], [0, 0, 1, 1], [], []>} : vector<64x128xbf16>, vector<128x128xbf16>, vector<64x128xf32> -> vector<64x128xf32>
    %16 = arith.addf %8, %15 : vector<64x128xf32>
    %c0_16 = arith.constant 0 : index
    %c0_17 = arith.constant 0 : index
    %c0_18 = arith.constant 0 : index
    %c2 = arith.constant 2 : index
    %c0_19 = arith.constant 0 : index
    %17 = vector.load %arg1[%c0_16, %c0_17, %c0_18, %c2, %c0_19] : memref<1x1x10x10x128xf32, #tpu.memory_space<vmem>>, vector<1x1x8x8x128xf32>
    %18 = vector.shape_cast %17 : vector<1x1x8x8x128xf32> to vector<8x8x128xf32>
    %19 = vector.shape_cast %18 : vector<8x8x128xf32> to vector<64x128xf32>
    %20 = arith.truncf %19 : vector<64x128xf32> to vector<64x128xbf16>
    %c2_20 = arith.constant 2 : index
    %c0_21 = arith.constant 0 : index
    %c0_22 = arith.constant 0 : index
    %21 = vector.load %arg2[%c2_20, %c0_21, %c0_22] : memref<9x128x128xbf16, #tpu.memory_space<vmem>>, vector<1x128x128xbf16>
    %22 = vector.shape_cast %21 : vector<1x128x128xbf16> to vector<128x128xbf16>
    %cst_23 = arith.constant dense<0.000000e+00> : vector<64x128xf32>
    %23 = tpu.matmul %20, %22, %cst_23 {dimension_numbers = #tpu.dot_dimension_numbers<[1], [0], [0], [1], [0, 0, 1, 1], [], []>} : vector<64x128xbf16>, vector<128x128xbf16>, vector<64x128xf32> -> vector<64x128xf32>
    %24 = arith.addf %16, %23 : vector<64x128xf32>
    %c0_24 = arith.constant 0 : index
    %c0_25 = arith.constant 0 : index
    %c1_26 = arith.constant 1 : index
    %c0_27 = arith.constant 0 : index
    %c0_28 = arith.constant 0 : index
    %25 = vector.load %arg1[%c0_24, %c0_25, %c1_26, %c0_27, %c0_28] : memref<1x1x10x10x128xf32, #tpu.memory_space<vmem>>, vector<1x1x8x8x128xf32>
    %26 = vector.shape_cast %25 : vector<1x1x8x8x128xf32> to vector<8x8x128xf32>
    %27 = vector.shape_cast %26 : vector<8x8x128xf32> to vector<64x128xf32>
    %28 = arith.truncf %27 : vector<64x128xf32> to vector<64x128xbf16>
    %c3 = arith.constant 3 : index
    %c0_29 = arith.constant 0 : index
    %c0_30 = arith.constant 0 : index
    %29 = vector.load %arg2[%c3, %c0_29, %c0_30] : memref<9x128x128xbf16, #tpu.memory_space<vmem>>, vector<1x128x128xbf16>
    %30 = vector.shape_cast %29 : vector<1x128x128xbf16> to vector<128x128xbf16>
    %cst_31 = arith.constant dense<0.000000e+00> : vector<64x128xf32>
    %31 = tpu.matmul %28, %30, %cst_31 {dimension_numbers = #tpu.dot_dimension_numbers<[1], [0], [0], [1], [0, 0, 1, 1], [], []>} : vector<64x128xbf16>, vector<128x128xbf16>, vector<64x128xf32> -> vector<64x128xf32>
    %32 = arith.addf %24, %31 : vector<64x128xf32>
    %c0_32 = arith.constant 0 : index
    %c0_33 = arith.constant 0 : index
    %c1_34 = arith.constant 1 : index
    %c1_35 = arith.constant 1 : index
    %c0_36 = arith.constant 0 : index
    %33 = vector.load %arg1[%c0_32, %c0_33, %c1_34, %c1_35, %c0_36] : memref<1x1x10x10x128xf32, #tpu.memory_space<vmem>>, vector<1x1x8x8x128xf32>
    %34 = vector.shape_cast %33 : vector<1x1x8x8x128xf32> to vector<8x8x128xf32>
    %35 = vector.shape_cast %34 : vector<8x8x128xf32> to vector<64x128xf32>
    %36 = arith.truncf %35 : vector<64x128xf32> to vector<64x128xbf16>
    %c4 = arith.constant 4 : index
    %c0_37 = arith.constant 0 : index
    %c0_38 = arith.constant 0 : index
    %37 = vector.load %arg2[%c4, %c0_37, %c0_38] : memref<9x128x128xbf16, #tpu.memory_space<vmem>>, vector<1x128x128xbf16>
    %38 = vector.shape_cast %37 : vector<1x128x128xbf16> to vector<128x128xbf16>
    %cst_39 = arith.constant dense<0.000000e+00> : vector<64x128xf32>
    %39 = tpu.matmul %36, %38, %cst_39 {dimension_numbers = #tpu.dot_dimension_numbers<[1], [0], [0], [1], [0, 0, 1, 1], [], []>} : vector<64x128xbf16>, vector<128x128xbf16>, vector<64x128xf32> -> vector<64x128xf32>
    %40 = arith.addf %32, %39 : vector<64x128xf32>
    %c0_40 = arith.constant 0 : index
    %c0_41 = arith.constant 0 : index
    %c1_42 = arith.constant 1 : index
    %c2_43 = arith.constant 2 : index
    %c0_44 = arith.constant 0 : index
    %41 = vector.load %arg1[%c0_40, %c0_41, %c1_42, %c2_43, %c0_44] : memref<1x1x10x10x128xf32, #tpu.memory_space<vmem>>, vector<1x1x8x8x128xf32>
    %42 = vector.shape_cast %41 : vector<1x1x8x8x128xf32> to vector<8x8x128xf32>
    %43 = vector.shape_cast %42 : vector<8x8x128xf32> to vector<64x128xf32>
    %44 = arith.truncf %43 : vector<64x128xf32> to vector<64x128xbf16>
    %c5 = arith.constant 5 : index
    %c0_45 = arith.constant 0 : index
    %c0_46 = arith.constant 0 : index
    %45 = vector.load %arg2[%c5, %c0_45, %c0_46] : memref<9x128x128xbf16, #tpu.memory_space<vmem>>, vector<1x128x128xbf16>
    %46 = vector.shape_cast %45 : vector<1x128x128xbf16> to vector<128x128xbf16>
    %cst_47 = arith.constant dense<0.000000e+00> : vector<64x128xf32>
    %47 = tpu.matmul %44, %46, %cst_47 {dimension_numbers = #tpu.dot_dimension_numbers<[1], [0], [0], [1], [0, 0, 1, 1], [], []>} : vector<64x128xbf16>, vector<128x128xbf16>, vector<64x128xf32> -> vector<64x128xf32>
    %48 = arith.addf %40, %47 : vector<64x128xf32>
    %c0_48 = arith.constant 0 : index
    %c0_49 = arith.constant 0 : index
    %c2_50 = arith.constant 2 : index
    %c0_51 = arith.constant 0 : index
    %c0_52 = arith.constant 0 : index
    %49 = vector.load %arg1[%c0_48, %c0_49, %c2_50, %c0_51, %c0_52] : memref<1x1x10x10x128xf32, #tpu.memory_space<vmem>>, vector<1x1x8x8x128xf32>
    %50 = vector.shape_cast %49 : vector<1x1x8x8x128xf32> to vector<8x8x128xf32>
    %51 = vector.shape_cast %50 : vector<8x8x128xf32> to vector<64x128xf32>
    %52 = arith.truncf %51 : vector<64x128xf32> to vector<64x128xbf16>
    %c6 = arith.constant 6 : index
    %c0_53 = arith.constant 0 : index
    %c0_54 = arith.constant 0 : index
    %53 = vector.load %arg2[%c6, %c0_53, %c0_54] : memref<9x128x128xbf16, #tpu.memory_space<vmem>>, vector<1x128x128xbf16>
    %54 = vector.shape_cast %53 : vector<1x128x128xbf16> to vector<128x128xbf16>
    %cst_55 = arith.constant dense<0.000000e+00> : vector<64x128xf32>
    %55 = tpu.matmul %52, %54, %cst_55 {dimension_numbers = #tpu.dot_dimension_numbers<[1], [0], [0], [1], [0, 0, 1, 1], [], []>} : vector<64x128xbf16>, vector<128x128xbf16>, vector<64x128xf32> -> vector<64x128xf32>
    %56 = arith.addf %48, %55 : vector<64x128xf32>
    %c0_56 = arith.constant 0 : index
    %c0_57 = arith.constant 0 : index
    %c2_58 = arith.constant 2 : index
    %c1_59 = arith.constant 1 : index
    %c0_60 = arith.constant 0 : index
    %57 = vector.load %arg1[%c0_56, %c0_57, %c2_58, %c1_59, %c0_60] : memref<1x1x10x10x128xf32, #tpu.memory_space<vmem>>, vector<1x1x8x8x128xf32>
    %58 = vector.shape_cast %57 : vector<1x1x8x8x128xf32> to vector<8x8x128xf32>
    %59 = vector.shape_cast %58 : vector<8x8x128xf32> to vector<64x128xf32>
    %60 = arith.truncf %59 : vector<64x128xf32> to vector<64x128xbf16>
    %c7 = arith.constant 7 : index
    %c0_61 = arith.constant 0 : index
    %c0_62 = arith.constant 0 : index
    %61 = vector.load %arg2[%c7, %c0_61, %c0_62] : memref<9x128x128xbf16, #tpu.memory_space<vmem>>, vector<1x128x128xbf16>
    %62 = vector.shape_cast %61 : vector<1x128x128xbf16> to vector<128x128xbf16>
    %cst_63 = arith.constant dense<0.000000e+00> : vector<64x128xf32>
    %63 = tpu.matmul %60, %62, %cst_63 {dimension_numbers = #tpu.dot_dimension_numbers<[1], [0], [0], [1], [0, 0, 1, 1], [], []>} : vector<64x128xbf16>, vector<128x128xbf16>, vector<64x128xf32> -> vector<64x128xf32>
    %64 = arith.addf %56, %63 : vector<64x128xf32>
    %c0_64 = arith.constant 0 : index
    %c0_65 = arith.constant 0 : index
    %c2_66 = arith.constant 2 : index
    %c2_67 = arith.constant 2 : index
    %c0_68 = arith.constant 0 : index
    %65 = vector.load %arg1[%c0_64, %c0_65, %c2_66, %c2_67, %c0_68] : memref<1x1x10x10x128xf32, #tpu.memory_space<vmem>>, vector<1x1x8x8x128xf32>
    %66 = vector.shape_cast %65 : vector<1x1x8x8x128xf32> to vector<8x8x128xf32>
    %67 = vector.shape_cast %66 : vector<8x8x128xf32> to vector<64x128xf32>
    %68 = arith.truncf %67 : vector<64x128xf32> to vector<64x128xbf16>
    %c8 = arith.constant 8 : index
    %c0_69 = arith.constant 0 : index
    %c0_70 = arith.constant 0 : index
    %69 = vector.load %arg2[%c8, %c0_69, %c0_70] : memref<9x128x128xbf16, #tpu.memory_space<vmem>>, vector<1x128x128xbf16>
    %70 = vector.shape_cast %69 : vector<1x128x128xbf16> to vector<128x128xbf16>
    %cst_71 = arith.constant dense<0.000000e+00> : vector<64x128xf32>
    %71 = tpu.matmul %68, %70, %cst_71 {dimension_numbers = #tpu.dot_dimension_numbers<[1], [0], [0], [1], [0, 0, 1, 1], [], []>} : vector<64x128xbf16>, vector<128x128xbf16>, vector<64x128xf32> -> vector<64x128xf32>
    %72 = arith.addf %64, %71 : vector<64x128xf32>
    %cst_72 = arith.constant dense<0.000000e+00> : vector<128xf32>
    %73 = vector.multi_reduction <add>, %72, %cst_72 [0] : vector<64x128xf32> to vector<128xf32>
    %74 = vector.shape_cast %73 : vector<128xf32> to vector<1x128xf32>
    %cst_73 = arith.constant 1.562500e-02 : f32
    %75 = vector.broadcast %cst_73 : f32 to vector<1x128xf32>
    %76 = arith.mulf %74, %75 : vector<1x128xf32>
    %77 = arith.mulf %72, %72 : vector<64x128xf32>
    %cst_74 = arith.constant dense<0.000000e+00> : vector<128xf32>
    %78 = vector.multi_reduction <add>, %77, %cst_74 [0] : vector<64x128xf32> to vector<128xf32>
    %79 = vector.shape_cast %78 : vector<128xf32> to vector<1x128xf32>
    %cst_75 = arith.constant 1.562500e-02 : f32
    %80 = vector.broadcast %cst_75 : f32 to vector<1x128xf32>
    %81 = arith.mulf %79, %80 : vector<1x128xf32>
    %82 = arith.mulf %76, %76 : vector<1x128xf32>
    %83 = arith.subf %81, %82 : vector<1x128xf32>
    %cst_76 = arith.constant 0.000000e+00 : f32
    %84 = vector.broadcast %cst_76 : f32 to vector<1x128xf32>
    %85 = arith.maximumf %83, %84 : vector<1x128xf32>
    %86 = vector.broadcast %76 : vector<1x128xf32> to vector<64x128xf32>
    %87 = arith.subf %72, %86 : vector<64x128xf32>
    %cst_77 = arith.constant 9.99999974E-6 : f32
    %88 = vector.broadcast %cst_77 : f32 to vector<1x128xf32>
    %89 = arith.addf %85, %88 : vector<1x128xf32>
    %90 = math.rsqrt %89 : vector<1x128xf32>
    %91 = vector.broadcast %90 : vector<1x128xf32> to vector<64x128xf32>
    %92 = arith.mulf %87, %91 : vector<64x128xf32>
    %cst_78 = arith.constant 0.000000e+00 : f32
    %93 = vector.broadcast %cst_78 : f32 to vector<64x128xf32>
    %94 = arith.maximumf %92, %93 : vector<64x128xf32>
    %cst_79 = arith.constant 0.000000e+00 : f32
    %95 = vector.broadcast %cst_79 : f32 to vector<10x10x128xf32>
    %c0_80 = arith.constant 0 : index
    %c0_81 = arith.constant 0 : index
    %c0_82 = arith.constant 0 : index
    %96 = vector.load %arg5[%c0_80, %c0_81, %c0_82] : memref<10x10x128xf32, #tpu.memory_space<vmem>>, vector<10x10x128xf32>
    tpu.vector_store %arg5[%c0_80, %c0_81, %c0_82], %95 {strides = array<i32>} : memref<10x10x128xf32, #tpu.memory_space<vmem>>, vector<10x10x128xf32>,
    %97 = vector.shape_cast %94 : vector<64x128xf32> to vector<8x8x128xf32>
    %c1_83 = arith.constant 1 : index
    %c1_84 = arith.constant 1 : index
    %c0_85 = arith.constant 0 : index
    %98 = vector.load %arg5[%c1_83, %c1_84, %c0_85] : memref<10x10x128xf32, #tpu.memory_space<vmem>>, vector<8x8x128xf32>
    tpu.vector_store %arg5[%c1_83, %c1_84, %c0_85], %97 {strides = array<i32>} : memref<10x10x128xf32, #tpu.memory_space<vmem>>, vector<8x8x128xf32>,
    %cst_86 = arith.constant 0.000000e+00 : f32
    %99 = vector.broadcast %cst_86 : f32 to vector<64x128xf32>
    %c0_87 = arith.constant 0 : index
    %c0_88 = arith.constant 0 : index
    %c0_89 = arith.constant 0 : index
    %100 = vector.load %arg5[%c0_87, %c0_88, %c0_89] : memref<10x10x128xf32, #tpu.memory_space<vmem>>, vector<8x8x128xf32>
    %101 = vector.shape_cast %100 : vector<8x8x128xf32> to vector<64x128xf32>
    %102 = arith.truncf %101 : vector<64x128xf32> to vector<64x128xbf16>
    %c0_90 = arith.constant 0 : index
    %c0_91 = arith.constant 0 : index
    %c0_92 = arith.constant 0 : index
    %103 = vector.load %arg3[%c0_90, %c0_91, %c0_92] : memref<9x128x128xbf16, #tpu.memory_space<vmem>>, vector<1x128x128xbf16>
    %104 = vector.shape_cast %103 : vector<1x128x128xbf16> to vector<128x128xbf16>
    %cst_93 = arith.constant dense<0.000000e+00> : vector<64x128xf32>
    %105 = tpu.matmul %102, %104, %cst_93 {dimension_numbers = #tpu.dot_dimension_numbers<[1], [0], [0], [1], [0, 0, 1, 1], [], []>} : vector<64x128xbf16>, vector<128x128xbf16>, vector<64x128xf32> -> vector<64x128xf32>
    %106 = arith.addf %99, %105 : vector<64x128xf32>
    %c0_94 = arith.constant 0 : index
    %c1_95 = arith.constant 1 : index
    %c0_96 = arith.constant 0 : index
    %107 = vector.load %arg5[%c0_94, %c1_95, %c0_96] : memref<10x10x128xf32, #tpu.memory_space<vmem>>, vector<8x8x128xf32>
    %108 = vector.shape_cast %107 : vector<8x8x128xf32> to vector<64x128xf32>
    %109 = arith.truncf %108 : vector<64x128xf32> to vector<64x128xbf16>
    %c1_97 = arith.constant 1 : index
    %c0_98 = arith.constant 0 : index
    %c0_99 = arith.constant 0 : index
    %110 = vector.load %arg3[%c1_97, %c0_98, %c0_99] : memref<9x128x128xbf16, #tpu.memory_space<vmem>>, vector<1x128x128xbf16>
    %111 = vector.shape_cast %110 : vector<1x128x128xbf16> to vector<128x128xbf16>
    %cst_100 = arith.constant dense<0.000000e+00> : vector<64x128xf32>
    %112 = tpu.matmul %109, %111, %cst_100 {dimension_numbers = #tpu.dot_dimension_numbers<[1], [0], [0], [1], [0, 0, 1, 1], [], []>} : vector<64x128xbf16>, vector<128x128xbf16>, vector<64x128xf32> -> vector<64x128xf32>
    %113 = arith.addf %106, %112 : vector<64x128xf32>
    %c0_101 = arith.constant 0 : index
    %c2_102 = arith.constant 2 : index
    %c0_103 = arith.constant 0 : index
    %114 = vector.load %arg5[%c0_101, %c2_102, %c0_103] : memref<10x10x128xf32, #tpu.memory_space<vmem>>, vector<8x8x128xf32>
    %115 = vector.shape_cast %114 : vector<8x8x128xf32> to vector<64x128xf32>
    %116 = arith.truncf %115 : vector<64x128xf32> to vector<64x128xbf16>
    %c2_104 = arith.constant 2 : index
    %c0_105 = arith.constant 0 : index
    %c0_106 = arith.constant 0 : index
    %117 = vector.load %arg3[%c2_104, %c0_105, %c0_106] : memref<9x128x128xbf16, #tpu.memory_space<vmem>>, vector<1x128x128xbf16>
    %118 = vector.shape_cast %117 : vector<1x128x128xbf16> to vector<128x128xbf16>
    %cst_107 = arith.constant dense<0.000000e+00> : vector<64x128xf32>
    %119 = tpu.matmul %116, %118, %cst_107 {dimension_numbers = #tpu.dot_dimension_numbers<[1], [0], [0], [1], [0, 0, 1, 1], [], []>} : vector<64x128xbf16>, vector<128x128xbf16>, vector<64x128xf32> -> vector<64x128xf32>
    %120 = arith.addf %113, %119 : vector<64x128xf32>
    %c1_108 = arith.constant 1 : index
    %c0_109 = arith.constant 0 : index
    %c0_110 = arith.constant 0 : index
    %121 = vector.load %arg5[%c1_108, %c0_109, %c0_110] : memref<10x10x128xf32, #tpu.memory_space<vmem>>, vector<8x8x128xf32>
    %122 = vector.shape_cast %121 : vector<8x8x128xf32> to vector<64x128xf32>
    %123 = arith.truncf %122 : vector<64x128xf32> to vector<64x128xbf16>
    %c3_111 = arith.constant 3 : index
    %c0_112 = arith.constant 0 : index
    %c0_113 = arith.constant 0 : index
    %124 = vector.load %arg3[%c3_111, %c0_112, %c0_113] : memref<9x128x128xbf16, #tpu.memory_space<vmem>>, vector<1x128x128xbf16>
    %125 = vector.shape_cast %124 : vector<1x128x128xbf16> to vector<128x128xbf16>
    %cst_114 = arith.constant dense<0.000000e+00> : vector<64x128xf32>
    %126 = tpu.matmul %123, %125, %cst_114 {dimension_numbers = #tpu.dot_dimension_numbers<[1], [0], [0], [1], [0, 0, 1, 1], [], []>} : vector<64x128xbf16>, vector<128x128xbf16>, vector<64x128xf32> -> vector<64x128xf32>
    %127 = arith.addf %120, %126 : vector<64x128xf32>
    %c1_115 = arith.constant 1 : index
    %c1_116 = arith.constant 1 : index
    %c0_117 = arith.constant 0 : index
    %128 = vector.load %arg5[%c1_115, %c1_116, %c0_117] : memref<10x10x128xf32, #tpu.memory_space<vmem>>, vector<8x8x128xf32>
    %129 = vector.shape_cast %128 : vector<8x8x128xf32> to vector<64x128xf32>
    %130 = arith.truncf %129 : vector<64x128xf32> to vector<64x128xbf16>
    %c4_118 = arith.constant 4 : index
    %c0_119 = arith.constant 0 : index
    %c0_120 = arith.constant 0 : index
    %131 = vector.load %arg3[%c4_118, %c0_119, %c0_120] : memref<9x128x128xbf16, #tpu.memory_space<vmem>>, vector<1x128x128xbf16>
    %132 = vector.shape_cast %131 : vector<1x128x128xbf16> to vector<128x128xbf16>
    %cst_121 = arith.constant dense<0.000000e+00> : vector<64x128xf32>
    %133 = tpu.matmul %130, %132, %cst_121 {dimension_numbers = #tpu.dot_dimension_numbers<[1], [0], [0], [1], [0, 0, 1, 1], [], []>} : vector<64x128xbf16>, vector<128x128xbf16>, vector<64x128xf32> -> vector<64x128xf32>
    %134 = arith.addf %127, %133 : vector<64x128xf32>
    %c1_122 = arith.constant 1 : index
    %c2_123 = arith.constant 2 : index
    %c0_124 = arith.constant 0 : index
    %135 = vector.load %arg5[%c1_122, %c2_123, %c0_124] : memref<10x10x128xf32, #tpu.memory_space<vmem>>, vector<8x8x128xf32>
    %136 = vector.shape_cast %135 : vector<8x8x128xf32> to vector<64x128xf32>
    %137 = arith.truncf %136 : vector<64x128xf32> to vector<64x128xbf16>
    %c5_125 = arith.constant 5 : index
    %c0_126 = arith.constant 0 : index
    %c0_127 = arith.constant 0 : index
    %138 = vector.load %arg3[%c5_125, %c0_126, %c0_127] : memref<9x128x128xbf16, #tpu.memory_space<vmem>>, vector<1x128x128xbf16>
    %139 = vector.shape_cast %138 : vector<1x128x128xbf16> to vector<128x128xbf16>
    %cst_128 = arith.constant dense<0.000000e+00> : vector<64x128xf32>
    %140 = tpu.matmul %137, %139, %cst_128 {dimension_numbers = #tpu.dot_dimension_numbers<[1], [0], [0], [1], [0, 0, 1, 1], [], []>} : vector<64x128xbf16>, vector<128x128xbf16>, vector<64x128xf32> -> vector<64x128xf32>
    %141 = arith.addf %134, %140 : vector<64x128xf32>
    %c2_129 = arith.constant 2 : index
    %c0_130 = arith.constant 0 : index
    %c0_131 = arith.constant 0 : index
    %142 = vector.load %arg5[%c2_129, %c0_130, %c0_131] : memref<10x10x128xf32, #tpu.memory_space<vmem>>, vector<8x8x128xf32>
    %143 = vector.shape_cast %142 : vector<8x8x128xf32> to vector<64x128xf32>
    %144 = arith.truncf %143 : vector<64x128xf32> to vector<64x128xbf16>
    %c6_132 = arith.constant 6 : index
    %c0_133 = arith.constant 0 : index
    %c0_134 = arith.constant 0 : index
    %145 = vector.load %arg3[%c6_132, %c0_133, %c0_134] : memref<9x128x128xbf16, #tpu.memory_space<vmem>>, vector<1x128x128xbf16>
    %146 = vector.shape_cast %145 : vector<1x128x128xbf16> to vector<128x128xbf16>
    %cst_135 = arith.constant dense<0.000000e+00> : vector<64x128xf32>
    %147 = tpu.matmul %144, %146, %cst_135 {dimension_numbers = #tpu.dot_dimension_numbers<[1], [0], [0], [1], [0, 0, 1, 1], [], []>} : vector<64x128xbf16>, vector<128x128xbf16>, vector<64x128xf32> -> vector<64x128xf32>
    %148 = arith.addf %141, %147 : vector<64x128xf32>
    %c2_136 = arith.constant 2 : index
    %c1_137 = arith.constant 1 : index
    %c0_138 = arith.constant 0 : index
    %149 = vector.load %arg5[%c2_136, %c1_137, %c0_138] : memref<10x10x128xf32, #tpu.memory_space<vmem>>, vector<8x8x128xf32>
    %150 = vector.shape_cast %149 : vector<8x8x128xf32> to vector<64x128xf32>
    %151 = arith.truncf %150 : vector<64x128xf32> to vector<64x128xbf16>
    %c7_139 = arith.constant 7 : index
    %c0_140 = arith.constant 0 : index
    %c0_141 = arith.constant 0 : index
    %152 = vector.load %arg3[%c7_139, %c0_140, %c0_141] : memref<9x128x128xbf16, #tpu.memory_space<vmem>>, vector<1x128x128xbf16>
    %153 = vector.shape_cast %152 : vector<1x128x128xbf16> to vector<128x128xbf16>
    %cst_142 = arith.constant dense<0.000000e+00> : vector<64x128xf32>
    %154 = tpu.matmul %151, %153, %cst_142 {dimension_numbers = #tpu.dot_dimension_numbers<[1], [0], [0], [1], [0, 0, 1, 1], [], []>} : vector<64x128xbf16>, vector<128x128xbf16>, vector<64x128xf32> -> vector<64x128xf32>
    %155 = arith.addf %148, %154 : vector<64x128xf32>
    %c2_143 = arith.constant 2 : index
    %c2_144 = arith.constant 2 : index
    %c0_145 = arith.constant 0 : index
    %156 = vector.load %arg5[%c2_143, %c2_144, %c0_145] : memref<10x10x128xf32, #tpu.memory_space<vmem>>, vector<8x8x128xf32>
    %157 = vector.shape_cast %156 : vector<8x8x128xf32> to vector<64x128xf32>
    %158 = arith.truncf %157 : vector<64x128xf32> to vector<64x128xbf16>
    %c8_146 = arith.constant 8 : index
    %c0_147 = arith.constant 0 : index
    %c0_148 = arith.constant 0 : index
    %159 = vector.load %arg3[%c8_146, %c0_147, %c0_148] : memref<9x128x128xbf16, #tpu.memory_space<vmem>>, vector<1x128x128xbf16>
    %160 = vector.shape_cast %159 : vector<1x128x128xbf16> to vector<128x128xbf16>
    %cst_149 = arith.constant dense<0.000000e+00> : vector<64x128xf32>
    %161 = tpu.matmul %158, %160, %cst_149 {dimension_numbers = #tpu.dot_dimension_numbers<[1], [0], [0], [1], [0, 0, 1, 1], [], []>} : vector<64x128xbf16>, vector<128x128xbf16>, vector<64x128xf32> -> vector<64x128xf32>
    %162 = arith.addf %155, %161 : vector<64x128xf32>
    %cst_150 = arith.constant dense<0.000000e+00> : vector<128xf32>
    %163 = vector.multi_reduction <add>, %162, %cst_150 [0] : vector<64x128xf32> to vector<128xf32>
    %164 = vector.shape_cast %163 : vector<128xf32> to vector<1x128xf32>
    %cst_151 = arith.constant 1.562500e-02 : f32
    %165 = vector.broadcast %cst_151 : f32 to vector<1x128xf32>
    %166 = arith.mulf %164, %165 : vector<1x128xf32>
    %167 = arith.mulf %162, %162 : vector<64x128xf32>
    %cst_152 = arith.constant dense<0.000000e+00> : vector<128xf32>
    %168 = vector.multi_reduction <add>, %167, %cst_152 [0] : vector<64x128xf32> to vector<128xf32>
    %169 = vector.shape_cast %168 : vector<128xf32> to vector<1x128xf32>
    %cst_153 = arith.constant 1.562500e-02 : f32
    %170 = vector.broadcast %cst_153 : f32 to vector<1x128xf32>
    %171 = arith.mulf %169, %170 : vector<1x128xf32>
    %172 = arith.mulf %166, %166 : vector<1x128xf32>
    %173 = arith.subf %171, %172 : vector<1x128xf32>
    %cst_154 = arith.constant 0.000000e+00 : f32
    %174 = vector.broadcast %cst_154 : f32 to vector<1x128xf32>
    %175 = arith.maximumf %173, %174 : vector<1x128xf32>
    %176 = vector.broadcast %166 : vector<1x128xf32> to vector<64x128xf32>
    %177 = arith.subf %162, %176 : vector<64x128xf32>
    %cst_155 = arith.constant 9.99999974E-6 : f32
    %178 = vector.broadcast %cst_155 : f32 to vector<1x128xf32>
    %179 = arith.addf %175, %178 : vector<1x128xf32>
    %180 = math.rsqrt %179 : vector<1x128xf32>
    %181 = vector.broadcast %180 : vector<1x128xf32> to vector<64x128xf32>
    %182 = arith.mulf %177, %181 : vector<64x128xf32>
    %cst_156 = arith.constant 0.000000e+00 : f32
    %183 = vector.broadcast %cst_156 : f32 to vector<64x128xf32>
    %184 = arith.maximumf %182, %183 : vector<64x128xf32>
    %c0_157 = arith.constant 0 : index
    %c0_158 = arith.constant 0 : index
    %c1_159 = arith.constant 1 : index
    %c1_160 = arith.constant 1 : index
    %c0_161 = arith.constant 0 : index
    %185 = vector.load %arg1[%c0_157, %c0_158, %c1_159, %c1_160, %c0_161] : memref<1x1x10x10x128xf32, #tpu.memory_space<vmem>>, vector<1x1x8x8x128xf32>
    %186 = vector.shape_cast %185 : vector<1x1x8x8x128xf32> to vector<8x8x128xf32>
    %187 = vector.shape_cast %186 : vector<8x8x128xf32> to vector<64x128xf32>
    %188 = arith.addf %184, %187 : vector<64x128xf32>
    %cst_162 = arith.constant 0.000000e+00 : f32
    %189 = vector.broadcast %cst_162 : f32 to vector<64x128xf32>
    %190 = arith.maximumf %188, %189 : vector<64x128xf32>
    %191 = vector.shape_cast %190 : vector<64x128xf32> to vector<8x8x128xf32>
    %c0_163 = arith.constant 0 : index
    %c0_164 = arith.constant 0 : index
    %c0_165 = arith.constant 0 : index
    %c0_166 = arith.constant 0 : index
    %192 = vector.load %arg4[%c0_163, %c0_164, %c0_165, %c0_166] : memref<1x8x8x128xf32, #tpu.memory_space<vmem>>, vector<1x8x8x128xf32>
    %193 = vector.shape_cast %192 : vector<1x8x8x128xf32> to vector<8x8x128xf32>
    %194 = vector.shape_cast %191 : vector<8x8x128xf32> to vector<1x8x8x128xf32>
    tpu.vector_store %arg4[%c0_163, %c0_164, %c0_165, %c0_166], %194 {strides = array<i32>} : memref<1x8x8x128xf32, #tpu.memory_space<vmem>>, vector<1x8x8x128xf32>,
    return
  }
  func.func @transform_0(%arg0: i32) -> (i32, i32, i32, i32, i32) {
    %c0_i32 = arith.constant 0 : i32
    %c0_i32_0 = arith.constant 0 : i32
    %c0_i32_1 = arith.constant 0 : i32
    %c0_i32_2 = arith.constant 0 : i32
    %c0_i32_3 = arith.constant 0 : i32
    return %arg0, %c0_i32, %c0_i32_0, %c0_i32_1, %c0_i32_2 : i32, i32, i32, i32, i32
  }
  func.func @transform_1(%arg0: i32) -> (i32, i32, i32) {
    %c0_i32 = arith.constant 0 : i32
    %c0_i32_0 = arith.constant 0 : i32
    %c0_i32_1 = arith.constant 0 : i32
    %c0_i32_2 = arith.constant 0 : i32
    return %c0_i32, %c0_i32_0, %c0_i32_1 : i32, i32, i32
  }
  func.func @transform_2(%arg0: i32) -> (i32, i32, i32) {
    %c0_i32 = arith.constant 0 : i32
    %c0_i32_0 = arith.constant 0 : i32
    %c0_i32_1 = arith.constant 0 : i32
    %c0_i32_2 = arith.constant 0 : i32
    return %c0_i32, %c0_i32_0, %c0_i32_1 : i32, i32, i32
  }
  func.func @transform_3(%arg0: i32) -> (i32, i32, i32, i32) {
    %c0_i32 = arith.constant 0 : i32
    %c0_i32_0 = arith.constant 0 : i32
    %c0_i32_1 = arith.constant 0 : i32
    %c0_i32_2 = arith.constant 0 : i32
    return %arg0, %c0_i32, %c0_i32_0, %c0_i32_1 : i32, i32, i32, i32
  }
}

</mosaic_0001>

<llo_original>
// kernel: layer_forward.3
$region0: #{layer_forward.3}
  #allocation0 [shape = 'u32[]', space=smem, size = 0x4, offset = 0x4, fixed_abs, tag = 'smem constant byte address 0x4 - core index']
  #allocation1 [shape = 'u32[144,128]{1,0:T(1,128)}', space=vmem, size = 0x12000, scoped, tag = 'internal scratch']
  #allocation2 [shape = 'f32[10,10,128]{2,1,0:T(8,128)}', space=vmem, size = 0x14000, scoped, tag = 'scratch operand']
  %s0 = inlined_call_operand.vmem [shape: f32[2,1,10,10,128], index: 0, kind: input, shape index: {}]
  %s1 = inlined_call_operand.vmem [shape: bf16[9,128,128], index: 1, kind: input, shape index: {}]
  %s2 = inlined_call_operand.vmem [shape: bf16[9,128,128], index: 2, kind: input, shape index: {}]
  %s3 = inlined_call_operand.vmem [shape: f32[2,8,8,128], index: 3, kind: output, shape index: {}]
  %s4 = sld [smem:[#allocation0]]
  $region45: #{layer_forward.3} parent=0
    _
  %s6 = ssub.s32 1, %s4
  %s7 = scalar_select 0, %s6, %s4
  loop: start=0, step=1, limit=4
  $region2: #{layer_forward.3} parent=0 // loop_pre_header
    _
  $region3: #{layer_forward.3} parent=0 // loop_header
    %s9 = sphi 0, %s13
    %p10 = scmp.ge.s32.totalorder %s9, 4
    %s19 = sphi 0, %s21
    %s22 = sphi 0, %s19
    %s23 = sphi 0, %s22
    %s39 = sphi 0, %s23
    %s43 = sphi 0, %s43
    %s45 = sphi 0, %s43
    %s46 = sphi 0, %s45
    %s60 = sphi 0, %s46
    %s64 = sphi 0, %s64
    %s66 = sphi 0, %s64
    %s67 = sphi 0, %s66
    %s81 = sphi 0, %s67
    %s87 = sphi 0, %s89
    %s90 = sphi 0, %s87
    %s91 = sphi 0, %s90
    %s107 = sphi 0, %s91
  $region4: #{layer_forward.3} parent=0 // loop_header_branch
    %12 = sbr.rel (%p10) target = $region8
  $region5: #{layer_forward.3} parent=0 // loop_body
    %s14 = ssub.s32 %s9, 1
    %s15 = ssub.s32 %s9, 2
    %s16 = sadd.s32 %s9, 1
    %s17 = ssub.s32 %s9, %s16
    %p18 = scmp.eq.s32.totalorder %s17, 0
    %s20 = sadd.s32 %s19, 1
    %s21 = scalar_select %p18, %s19, %s20
    %p24 = pneg %p18
    %p25 = scmp.eq.s32.totalorder %s9, 1
    %p26 = por %p24, %p25
    %p27 = scmp.ne.s32.totalorder %s19, %s22
    %p28 = scmp.eq.s32.totalorder %s9, 0
    %p29 = por %p27, %p28
    %p30 = scmp.ne.s32.totalorder %s19, %s22
    %p31 = scmp.eq.s32.totalorder %s14, 1
    %p32 = por %p30, %p31
    %p33 = scmp.ne.s32.totalorder %s22, %s23
    %p34 = scmp.eq.s32.totalorder %s14, 0
    %p35 = por %p33, %p34
    %p36 = scmp.ne.s32.totalorder %s22, %s23
    %p37 = scmp.eq.s32.totalorder %s15, 1
    %p38 = por %p36, %p37
    %p40 = scmp.ne.s32.totalorder %s23, %s39
    %p41 = scmp.eq.s32.totalorder %s15, 0
    %p42 = por %p40, %p41
    %s44 = sadd.s32 %s43, 1
    %p47 = scmp.eq.s32.totalorder %s9, 1
    %p48 = scmp.ne.s32.totalorder %s43, %s45
    %p49 = scmp.eq.s32.totalorder %s9, 0
    %p50 = por %p48, %p49
    %p51 = scmp.ne.s32.totalorder %s43, %s45
    %p52 = scmp.eq.s32.totalorder %s14, 1
    %p53 = por %p51, %p52
    %p54 = scmp.ne.s32.totalorder %s45, %s46
    %p55 = scmp.eq.s32.totalorder %s14, 0
    %p56 = por %p54, %p55
    %p57 = scmp.ne.s32.totalorder %s45, %s46
    %p58 = scmp.eq.s32.totalorder %s15, 1
    %p59 = por %p57, %p58
    %p61 = scmp.ne.s32.totalorder %s46, %s60
    %p62 = scmp.eq.s32.totalorder %s15, 0
    %p63 = por %p61, %p62
    %s65 = sadd.s32 %s64, 1
    %p68 = scmp.eq.s32.totalorder %s9, 1
    %p69 = scmp.ne.s32.totalorder %s64, %s66
    %p70 = scmp.eq.s32.totalorder %s9, 0
    %p71 = por %p69, %p70
    %p72 = scmp.ne.s32.totalorder %s64, %s66
    %p73 = scmp.eq.s32.totalorder %s14, 1
    %p74 = por %p72, %p73
    %p75 = scmp.ne.s32.totalorder %s66, %s67
    %p76 = scmp.eq.s32.totalorder %s14, 0
    %p77 = por %p75, %p76
    %p78 = scmp.ne.s32.totalorder %s66, %s67
    %p79 = scmp.eq.s32.totalorder %s15, 1
    %p80 = por %p78, %p79
    %p82 = scmp.ne.s32.totalorder %s67, %s81
    %p83 = scmp.eq.s32.totalorder %s15, 0
    %p84 = por %p82, %p83
    %s85 = ssub.s32 %s9, %s16
    %p86 = scmp.eq.s32.totalorder %s85, 0
    %s88 = sadd.s32 %s87, 1
    %s89 = scalar_select %p86, %s87, %s88
    %p92 = pneg %p86
    %p93 = scmp.eq.s32.totalorder %s9, 1
    %p94 = por %p92, %p93
    %p95 = scmp.ne.s32.totalorder %s87, %s90
    %p96 = scmp.eq.s32.totalorder %s9, 0
    %p97 = por %p95, %p96
    %p98 = scmp.ne.s32.totalorder %s87, %s90
    %p99 = scmp.eq.s32.totalorder %s14, 1
    %p100 = por %p98, %p99
    %p101 = scmp.ne.s32.totalorder %s90, %s91
    %p102 = scmp.eq.s32.totalorder %s14, 0
    %p103 = por %p101, %p102
    %p104 = scmp.ne.s32.totalorder %s90, %s91
    %p105 = scmp.eq.s32.totalorder %s15, 1
    %p106 = por %p104, %p105
    %p108 = scmp.ne.s32.totalorder %s91, %s107
    %p109 = scmp.eq.s32.totalorder %s15, 0
    %p110 = por %p108, %p109
    %p111 = scmp.le.s32.totalorder 1, %s9
    %p112 = scmp.lt.s32.totalorder %s9, 3
    %p113 = pnand %p111, %p112
    %p114 = pneg %p113
    // Predicated region
    $region9: #{layer_forward.3} parent=5 // pred_check
      _
    $region10: #{layer_forward.3} parent=5 // pred_check_branch
      %116 = sbr.rel (%p113) target = $region12
    $region11: #{layer_forward.3} parent=5 // pred_region
      %s117 = ssub.s32 %s9, 1
      // Predicated region
      $region13: #{layer_forward.3} parent=11 // pred_check
        %p118 = pneg %p56
      $region14: #{layer_forward.3} parent=11 // pred_check_branch
        %120 = sbr.rel (%p118) target = $region16
      $region15: #{layer_forward.3} parent=11 // pred_region
        _
      $region16: #{layer_forward.3} parent=11 // pred_fallthru
        _
      // Predicated region
      $region17: #{layer_forward.3} parent=11 // pred_check
        %p121 = pneg %p77
      $region18: #{layer_forward.3} parent=11 // pred_check_branch
        %123 = sbr.rel (%p121) target = $region20
      $region19: #{layer_forward.3} parent=11 // pred_region
        _
      $region20: #{layer_forward.3} parent=11 // pred_fallthru
        _
    $region12: #{layer_forward.3} parent=5 // pred_fallthru
      _
    %p124 = scmp.lt.s32.totalorder %s9, 2
    // Predicated region
    $region21: #{layer_forward.3} parent=5 // pred_check
      %p125 = pneg %p124
    $region22: #{layer_forward.3} parent=5 // pred_check_branch
      %127 = sbr.rel (%p125) target = $region24
    $region23: #{layer_forward.3} parent=5 // pred_region
      // Predicated region
      $region25: #{layer_forward.3} parent=23 // pred_check
        %p128 = pneg %p29
      $region26: #{layer_forward.3} parent=23 // pred_check_branch
        %130 = sbr.rel (%p128) target = $region28
      $region27: #{layer_forward.3} parent=23 // pred_region
        %p131 = scmp.lt.s32.totalorder %s9, 1
        %s132 = scalar_select %p131, %s9, 1
        %s133 = smul.addr %s132, 20
        %s134 = smul.addr %s133, 8
        %s135 = scalar_lea.vmem %s0, %s134
      $region28: #{layer_forward.3} parent=23 // pred_fallthru
        _
    $region24: #{layer_forward.3} parent=5 // pred_fallthru
      _
    %p136 = scmp.le.s32.totalorder 1, %s9
    %p137 = scmp.lt.s32.totalorder %s9, 3
    %p138 = pnand %p136, %p137
    %p139 = pneg %p138
    // Predicated region
    $region29: #{layer_forward.3} parent=5 // pred_check
      _
    $region30: #{layer_forward.3} parent=5 // pred_check_branch
      %141 = sbr.rel (%p138) target = $region32
    $region31: #{layer_forward.3} parent=5 // pred_region
      %s142 = ssub.s32 %s9, 1
      %p143 = scmp.lt.s32.totalorder %s14, 1
      %s144 = scalar_select %p143, %s14, 1
      %s145 = smul.addr %s144, 20
      %s146 = smul.addr %s145, 8
      %s147 = scalar_lea.vmem %s0, %s146
      %p148 = pneg %p35
      %p149 = pneg %p32
      %p150 = pneg %p56
      %p151 = pneg %p53
      %p152 = pneg %p77
      %p153 = pneg %p74
      %p154 = pneg %p103
      %p155 = pneg %p100
      %p156 = scmp.lt.s32.totalorder %s14, 1
      %s157 = scalar_select %p156, %s14, 1
      %s158 = smul.addr %s157, 8
      %s159 = smul.addr %s158, 8
      %s160 = scalar_lea.vmem %s3, %s159
      %p161 = scmp.lt.s32.totalorder %s14, 1
      %s162 = scalar_select %p161, %s14, 1
      %s163 = smul.addr %s162, 20
      %s164 = smul.addr %s163, 8
      %s165 = scalar_lea.vmem %s0, %s164
      %p166 = scmp.lt.s32.totalorder %s14, 1
      %s167 = scalar_select %p166, %s14, 1
      %s168 = smul.addr %s167, 8
      %s169 = smul.addr %s168, 8
      %s170 = scalar_lea.vmem %s3, %s169
      %v172 = vld [vmem:[%s165] sm:$0xff]
      %v173 = vld [vmem:[%s165 + $0x10] sm:$0xff]
      %v174 = vld [vmem:[%s165 + $0x20] sm:$0xff]
      %v175 = vld [vmem:[%s165 + $0x30] sm:$0xff]
      %v176 = vld [vmem:[%s165 + $0x40] sm:$0xff]
      %v177 = vld [vmem:[%s165 + $0x50] sm:$0xff]
      %v178 = vld [vmem:[%s165 + $0x60] sm:$0xff]
      %v179 = vld [vmem:[%s165 + $0x70] sm:$0xff]
      %v180 = vpack.c.bf16 %v173, %v172
      %v181 = vpack.c.bf16 %v175, %v174
      %v182 = vpack.c.bf16 %v177, %v176
      %v183 = vpack.c.bf16 %v179, %v178
      %v184 = vld [vmem:[%s1] sm:$0xf]
      %v185 = vld [vmem:[%s1 + $0x4] sm:$0xf]
      %v186 = vld [vmem:[%s1 + $0x8] sm:$0xf]
      %v187 = vld [vmem:[%s1 + $0xc] sm:$0xf]
      %v188 = vld [vmem:[%s1 + $0x10] sm:$0xf]
      %v189 = vld [vmem:[%s1 + $0x14] sm:$0xf]
      %v190 = vld [vmem:[%s1 + $0x18] sm:$0xf]
      %v191 = vld [vmem:[%s1 + $0x1c] sm:$0xf]
      %v192 = vld [vmem:[%s1 + $0x20] sm:$0xf]
      %v193 = vld [vmem:[%s1 + $0x24] sm:$0xf]
      %v194 = vld [vmem:[%s1 + $0x28] sm:$0xf]
      %v195 = vld [vmem:[%s1 + $0x2c] sm:$0xf]
      %v196 = vld [vmem:[%s1 + $0x30] sm:$0xf]
      %v197 = vld [vmem:[%s1 + $0x34] sm:$0xf]
      %v198 = vld [vmem:[%s1 + $0x38] sm:$0xf]
      %v199 = vld [vmem:[%s1 + $0x3c] sm:$0xf]
      %v200 = vld [vmem:[%s165 + $0x1] sm:$0xff]
      %v201 = vld [vmem:[%s165 + $0x11] sm:$0xff]
      %v202 = vld [vmem:[%s165 + $0x21] sm:$0xff]
      %v203 = vld [vmem:[%s165 + $0x31] sm:$0xff]
      %v204 = vld [vmem:[%s165 + $0x41] sm:$0xff]
      %v205 = vld [vmem:[%s165 + $0x51] sm:$0xff]
      %v206 = vld [vmem:[%s165 + $0x61] sm:$0xff]
      %v207 = vld [vmem:[%s165 + $0x71] sm:$0xff]
      %v208 = vpack.c.bf16 %v201, %v200
      %v209 = vpack.c.bf16 %v203, %v202
      %v210 = vpack.c.bf16 %v205, %v204
      %v211 = vpack.c.bf16 %v207, %v206
      %s212 = scalar_lea.vmem %s1, 64
      %v213 = vld [vmem:[%s212] sm:$0xf]
      %v214 = vld [vmem:[%s212 + $0x4] sm:$0xf]
      %v215 = vld [vmem:[%s212 + $0x8] sm:$0xf]
      %v216 = vld [vmem:[%s212 + $0xc] sm:$0xf]
      %v217 = vld [vmem:[%s212 + $0x10] sm:$0xf]
      %v218 = vld [vmem:[%s212 + $0x14] sm:$0xf]
      %v219 = vld [vmem:[%s212 + $0x18] sm:$0xf]
      %v220 = vld [vmem:[%s212 + $0x1c] sm:$0xf]
      %v221 = vld [vmem:[%s212 + $0x20] sm:$0xf]
      %v222 = vld [vmem:[%s212 + $0x24] sm:$0xf]
      %v223 = vld [vmem:[%s212 + $0x28] sm:$0xf]
      %v224 = vld [vmem:[%s212 + $0x2c] sm:$0xf]
      %v225 = vld [vmem:[%s212 + $0x30] sm:$0xf]
      %v226 = vld [vmem:[%s212 + $0x34] sm:$0xf]
      %v227 = vld [vmem:[%s212 + $0x38] sm:$0xf]
      %v228 = vld [vmem:[%s212 + $0x3c] sm:$0xf]
      %v245 = vunpack.c.l.b16 %v213
      %v246 = vunpack.c.l.b16 %v214
      %v247 = vunpack.c.l.b16 %v215
      %v248 = vunpack.c.l.b16 %v216
      %v249 = vunpack.c.l.b16 %v217
      %v250 = vunpack.c.l.b16 %v218
      %v251 = vunpack.c.l.b16 %v219
      %v252 = vunpack.c.l.b16 %v220
      %v253 = vunpack.c.l.b16 %v221
      %v254 = vunpack.c.l.b16 %v222
      %v255 = vunpack.c.l.b16 %v223
      %v256 = vunpack.c.l.b16 %v224
      %v257 = vunpack.c.l.b16 %v225
      %v258 = vunpack.c.l.b16 %v226
      %v259 = vunpack.c.l.b16 %v227
      %v260 = vunpack.c.l.b16 %v228
      %v261 = vpack.c.b16 %v246, %v245
      %v262 = vpack.c.b16 %v248, %v247
      %v263 = vpack.c.b16 %v250, %v249
      %v264 = vpack.c.b16 %v252, %v251
      %v265 = vpack.c.b16 %v254, %v253
      %v266 = vpack.c.b16 %v256, %v255
      %v267 = vpack.c.b16 %v258, %v257
      %v268 = vpack.c.b16 %v260, %v259
      %277 = vmatprep.subr.bf16.mxu0 0
      %278 = vmatpush1.bf16.msra.mxu0 %v268
      %279 = vmatprep.subr.bf16.mxu0 0
      %280 = vmatpush1.bf16.msra.mxu0 %v267
      %281 = vmatprep.subr.bf16.mxu0 0
      %282 = vmatpush1.bf16.msra.mxu0 %v266
      %283 = vmatprep.subr.bf16.mxu0 0
      %284 = vmatpush1.bf16.msra.mxu0 %v265
      %285 = vmatprep.subr.bf16.mxu0 0
      %286 = vmatpush1.bf16.msra.mxu0 %v264
      %287 = vmatprep.subr.bf16.mxu0 0
      %288 = vmatpush1.bf16.msra.mxu0 %v263
      %289 = vmatprep.subr.bf16.mxu0 0
      %290 = vmatpush1.bf16.msra.mxu0 %v262
      %291 = vmatprep.subr.bf16.mxu0 0
      %292 = vmatpush1.bf16.msra.mxu0 %v261
      %293 = vmatprep.subr.bf16.mxu0 0
      %294 = vmatpush2.bf16.msra.mxu0 0
      %295 = vmatprep.subr.bf16.mxu0 0
      %296 = vmatpush2.bf16.msra.mxu0 0
      %297 = vmatprep.subr.bf16.mxu0 0
      %298 = vmatpush2.bf16.msra.mxu0 0
      %299 = vmatprep.subr.bf16.mxu0 0
      %300 = vmatpush2.bf16.msra.mxu0 0
      %301 = vmatprep.subr.bf16.mxu0 0
      %302 = vmatpush2.bf16.msra.mxu0 0
      %303 = vmatprep.subr.bf16.mxu0 0
      %304 = vmatpush2.bf16.msra.mxu0 0
      %305 = vmatprep.subr.bf16.mxu0 0
      %306 = vmatpush2.bf16.msra.mxu0 0
      %307 = vmatprep.subr.bf16.mxu0 0
      %308 = vmatpush2.bf16.msra.mxu0 0
      %309 = vmatprep.mubr.bf16.mxu0 0
      %310 = vmatmul.mubr.bf16.gmra.mxu0 %v208
      %v311 = vpop.f32.mrf.mxu0
      %v312 = vadd.f32 0.0, %v311
      %v313 = vpop.f32.mrf.mxu0
      %v314 = vpop.f32.mrf.mxu0
      %v315 = vadd.f32 0.0, %v314
      %v316 = vpop.f32.mrf.mxu0
      %317 = vmatprep.mubr.bf16.mxu0 0
      %318 = vmatmul.mubr.bf16.gmra.mxu0 %v209
      %v319 = vpop.f32.mrf.mxu0
      %v320 = vadd.f32 0.0, %v319
      %v321 = vpop.f32.mrf.mxu0
      %v322 = vpop.f32.mrf.mxu0
      %v323 = vadd.f32 0.0, %v322
      %v324 = vpop.f32.mrf.mxu0
      %325 = vmatprep.mubr.bf16.mxu0 0
      %326 = vmatmul.mubr.bf16.gmra.mxu0 %v210
      %v327 = vpop.f32.mrf.mxu0
      %v328 = vadd.f32 0.0, %v327
      %v329 = vpop.f32.mrf.mxu0
      %v330 = vpop.f32.mrf.mxu0
      %v331 = vadd.f32 0.0, %v330
      %v332 = vpop.f32.mrf.mxu0
      %333 = vmatprep.mubr.bf16.mxu0 0
      %334 = vmatmul.mubr.bf16.gmra.mxu0 %v211
      %v335 = vpop.f32.mrf.mxu0
      %v336 = vadd.f32 0.0, %v335
      %v337 = vpop.f32.mrf.mxu0
      %v338 = vpop.f32.mrf.mxu0
      %v339 = vadd.f32 0.0, %v338
      %v340 = vpop.f32.mrf.mxu0
      %341 = vdwg.mxu0
      %v358 = vunpack.c.l.b16 %v184
      %v359 = vunpack.c.l.b16 %v185
      %v360 = vunpack.c.l.b16 %v186
      %v361 = vunpack.c.l.b16 %v187
      %v362 = vunpack.c.l.b16 %v188
      %v363 = vunpack.c.l.b16 %v189
      %v364 = vunpack.c.l.b16 %v190
      %v365 = vunpack.c.l.b16 %v191
      %v366 = vunpack.c.l.b16 %v192
      %v367 = vunpack.c.l.b16 %v193
      %v368 = vunpack.c.l.b16 %v194
      %v369 = vunpack.c.l.b16 %v195
      %v370 = vunpack.c.l.b16 %v196
      %v371 = vunpack.c.l.b16 %v197
      %v372 = vunpack.c.l.b16 %v198
      %v373 = vunpack.c.l.b16 %v199
      %v374 = vpack.c.b16 %v359, %v358
      %v375 = vpack.c.b16 %v361, %v360
      %v376 = vpack.c.b16 %v363, %v362
      %v377 = vpack.c.b16 %v365, %v364
      %v378 = vpack.c.b16 %v367, %v366
      %v379 = vpack.c.b16 %v369, %v368
      %v380 = vpack.c.b16 %v371, %v370
      %v381 = vpack.c.b16 %v373, %v372
      %390 = vmatprep.subr.bf16.mxu0 0
      %391 = vmatpush1.bf16.msra.mxu0 %v381
      %392 = vmatprep.subr.bf16.mxu0 0
      %393 = vmatpush1.bf16.msra.mxu0 %v380
      %394 = vmatprep.subr.bf16.mxu0 0
      %395 = vmatpush1.bf16.msra.mxu0 %v379
      %396 = vmatprep.subr.bf16.mxu0 0
      %397 = vmatpush1.bf16.msra.mxu0 %v378
      %398 = vmatprep.subr.bf16.mxu0 0
      %399 = vmatpush1.bf16.msra.mxu0 %v377
      %400 = vmatprep.subr.bf16.mxu0 0
      %401 = vmatpush1.bf16.msra.mxu0 %v376
      %402 = vmatprep.subr.bf16.mxu0 0
      %403 = vmatpush1.bf16.msra.mxu0 %v375
      %404 = vmatprep.subr.bf16.mxu0 0
      %405 = vmatpush1.bf16.msra.mxu0 %v374
      %406 = vmatprep.subr.bf16.mxu0 0
      %407 = vmatpush2.bf16.msra.mxu0 0
      %408 = vmatprep.subr.bf16.mxu0 0
      %409 = vmatpush2.bf16.msra.mxu0 0
      %410 = vmatprep.subr.bf16.mxu0 0
      %411 = vmatpush2.bf16.msra.mxu0 0
      %412 = vmatprep.subr.bf16.mxu0 0
      %413 = vmatpush2.bf16.msra.mxu0 0
      %414 = vmatprep.subr.bf16.mxu0 0
      %415 = vmatpush2.bf16.msra.mxu0 0
      %416 = vmatprep.subr.bf16.mxu0 0
      %417 = vmatpush2.bf16.msra.mxu0 0
      %418 = vmatprep.subr.bf16.mxu0 0
      %419 = vmatpush2.bf16.msra.mxu0 0
      %420 = vmatprep.subr.bf16.mxu0 0
      %421 = vmatpush2.bf16.msra.mxu0 0
      %422 = vmatprep.mubr.bf16.mxu0 0
      %423 = vmatmul.mubr.bf16.gmra.mxu0 %v180
      %v424 = vpop.f32.mrf.mxu0
      %v425 = vadd.f32 %v312, %v424
      %v426 = vpop.f32.mrf.mxu0
      %v427 = vpop.f32.mrf.mxu0
      %v428 = vadd.f32 %v315, %v427
      %v429 = vpop.f32.mrf.mxu0
      %430 = vmatprep.mubr.bf16.mxu0 0
      %431 = vmatmul.mubr.bf16.gmra.mxu0 %v181
      %v432 = vpop.f32.mrf.mxu0
      %v433 = vadd.f32 %v320, %v432
      %v434 = vpop.f32.mrf.mxu0
      %v435 = vpop.f32.mrf.mxu0
      %v436 = vadd.f32 %v323, %v435
      %v437 = vpop.f32.mrf.mxu0
      %438 = vmatprep.mubr.bf16.mxu0 0
      %439 = vmatmul.mubr.bf16.gmra.mxu0 %v182
      %v440 = vpop.f32.mrf.mxu0
      %v441 = vadd.f32 %v328, %v440
      %v442 = vpop.f32.mrf.mxu0
      %v443 = vpop.f32.mrf.mxu0
      %v444 = vadd.f32 %v331, %v443
      %v445 = vpop.f32.mrf.mxu0
      %446 = vmatprep.mubr.bf16.mxu0 0
      %447 = vmatmul.mubr.bf16.gmra.mxu0 %v183
      %v448 = vpop.f32.mrf.mxu0
      %v449 = vadd.f32 %v336, %v448
      %v450 = vpop.f32.mrf.mxu0
      %v451 = vpop.f32.mrf.mxu0
      %v452 = vadd.f32 %v339, %v451
      %v453 = vpop.f32.mrf.mxu0
      %454 = vdwg.mxu0
      %v455 = vld [vmem:[%s165 + $0x2] sm:$0xff]
      %v456 = vld [vmem:[%s165 + $0x12] sm:$0xff]
      %v457 = vld [vmem:[%s165 + $0x22] sm:$0xff]
      %v458 = vld [vmem:[%s165 + $0x32] sm:$0xff]
      %v459 = vld [vmem:[%s165 + $0x42] sm:$0xff]
      %v460 = vld [vmem:[%s165 + $0x52] sm:$0xff]
      %v461 = vld [vmem:[%s165 + $0x62] sm:$0xff]
      %v462 = vld [vmem:[%s165 + $0x72] sm:$0xff]
      %v463 = vpack.c.bf16 %v456, %v455
      %v464 = vpack.c.bf16 %v458, %v457
      %v465 = vpack.c.bf16 %v460, %v459
      %v466 = vpack.c.bf16 %v462, %v461
      %s467 = scalar_lea.vmem %s1, 128
      %v468 = vld [vmem:[%s467] sm:$0xf]
      %v469 = vld [vmem:[%s467 + $0x4] sm:$0xf]
      %v470 = vld [vmem:[%s467 + $0x8] sm:$0xf]
      %v471 = vld [vmem:[%s467 + $0xc] sm:$0xf]
      %v472 = vld [vmem:[%s467 + $0x10] sm:$0xf]
      %v473 = vld [vmem:[%s467 + $0x14] sm:$0xf]
      %v474 = vld [vmem:[%s467 + $0x18] sm:$0xf]
      %v475 = vld [vmem:[%s467 + $0x1c] sm:$0xf]
      %v476 = vld [vmem:[%s467 + $0x20] sm:$0xf]
      %v477 = vld [vmem:[%s467 + $0x24] sm:$0xf]
      %v478 = vld [vmem:[%s467 + $0x28] sm:$0xf]
      %v479 = vld [vmem:[%s467 + $0x2c] sm:$0xf]
      %v480 = vld [vmem:[%s467 + $0x30] sm:$0xf]
      %v481 = vld [vmem:[%s467 + $0x34] sm:$0xf]
      %v482 = vld [vmem:[%s467 + $0x38] sm:$0xf]
      %v483 = vld [vmem:[%s467 + $0x3c] sm:$0xf]
      %v500 = vunpack.c.l.b16 %v468
      %v501 = vunpack.c.l.b16 %v469
      %v502 = vunpack.c.l.b16 %v470
      %v503 = vunpack.c.l.b16 %v471
      %v504 = vunpack.c.l.b16 %v472
      %v505 = vunpack.c.l.b16 %v473
      %v506 = vunpack.c.l.b16 %v474
      %v507 = vunpack.c.l.b16 %v475
      %v508 = vunpack.c.l.b16 %v476
      %v509 = vunpack.c.l.b16 %v477
      %v510 = vunpack.c.l.b16 %v478
      %v511 = vunpack.c.l.b16 %v479
      %v512 = vunpack.c.l.b16 %v480
      %v513 = vunpack.c.l.b16 %v481
      %v514 = vunpack.c.l.b16 %v482
      %v515 = vunpack.c.l.b16 %v483
      %v516 = vpack.c.b16 %v501, %v500
      %v517 = vpack.c.b16 %v503, %v502
      %v518 = vpack.c.b16 %v505, %v504
      %v519 = vpack.c.b16 %v507, %v506
      %v520 = vpack.c.b16 %v509, %v508
      %v521 = vpack.c.b16 %v511, %v510
      %v522 = vpack.c.b16 %v513, %v512
      %v523 = vpack.c.b16 %v515, %v514
      %532 = vmatprep.subr.bf16.mxu0 0
      %533 = vmatpush1.bf16.msra.mxu0 %v523
      %534 = vmatprep.subr.bf16.mxu0 0
      %535 = vmatpush1.bf16.msra.mxu0 %v522
      %536 = vmatprep.subr.bf16.mxu0 0
      %537 = vmatpush1.bf16.msra.mxu0 %v521
      %538 = vmatprep.subr.bf16.mxu0 0
      %539 = vmatpush1.bf16.msra.mxu0 %v520
      %540 = vmatprep.subr.bf16.mxu0 0
      %541 = vmatpush1.bf16.msra.mxu0 %v519
      %542 = vmatprep.subr.bf16.mxu0 0
      %543 = vmatpush1.bf16.msra.mxu0 %v518
      %544 = vmatprep.subr.bf16.mxu0 0
      %545 = vmatpush1.bf16.msra.mxu0 %v517
      %546 = vmatprep.subr.bf16.mxu0 0
      %547 = vmatpush1.bf16.msra.mxu0 %v516
      %548 = vmatprep.subr.bf16.mxu0 0
      %549 = vmatpush2.bf16.msra.mxu0 0
      %550 = vmatprep.subr.bf16.mxu0 0
      %551 = vmatpush2.bf16.msra.mxu0 0
      %552 = vmatprep.subr.bf16.mxu0 0
      %553 = vmatpush2.bf16.msra.mxu0 0
      %554 = vmatprep.subr.bf16.mxu0 0
      %555 = vmatpush2.bf16.msra.mxu0 0
      %556 = vmatprep.subr.bf16.mxu0 0
      %557 = vmatpush2.bf16.msra.mxu0 0
      %558 = vmatprep.subr.bf16.mxu0 0
      %559 = vmatpush2.bf16.msra.mxu0 0
      %560 = vmatprep.subr.bf16.mxu0 0
      %561 = vmatpush2.bf16.msra.mxu0 0
      %562 = vmatprep.subr.bf16.mxu0 0
      %563 = vmatpush2.bf16.msra.mxu0 0
      %564 = vmatprep.mubr.bf16.mxu0 0
      %565 = vmatmul.mubr.bf16.gmra.mxu0 %v463
      %v566 = vpop.f32.mrf.mxu0
      %v567 = vadd.f32 0.0, %v566
      %v568 = vpop.f32.mrf.mxu0
      %v569 = vpop.f32.mrf.mxu0
      %v570 = vadd.f32 0.0, %v569
      %v571 = vpop.f32.mrf.mxu0
      %572 = vmatprep.mubr.bf16.mxu0 0
      %573 = vmatmul.mubr.bf16.gmra.mxu0 %v464
      %v574 = vpop.f32.mrf.mxu0
      %v575 = vadd.f32 0.0, %v574
      %v576 = vpop.f32.mrf.mxu0
      %v577 = vpop.f32.mrf.mxu0
      %v578 = vadd.f32 0.0, %v577
      %v579 = vpop.f32.mrf.mxu0
      %580 = vmatprep.mubr.bf16.mxu0 0
      %581 = vmatmul.mubr.bf16.gmra.mxu0 %v465
      %v582 = vpop.f32.mrf.mxu0
      %v583 = vadd.f32 0.0, %v582
      %v584 = vpop.f32.mrf.mxu0
      %v585 = vpop.f32.mrf.mxu0
      %v586 = vadd.f32 0.0, %v585
      %v587 = vpop.f32.mrf.mxu0
      %588 = vmatprep.mubr.bf16.mxu0 0
      %589 = vmatmul.mubr.bf16.gmra.mxu0 %v466
      %v590 = vpop.f32.mrf.mxu0
      %v591 = vadd.f32 0.0, %v590
      %v592 = vpop.f32.mrf.mxu0
      %v593 = vpop.f32.mrf.mxu0
      %v594 = vadd.f32 0.0, %v593
      %v595 = vpop.f32.mrf.mxu0
      %596 = vdwg.mxu0
      %v597 = vadd.f32 %v425, %v567
      %v598 = vadd.f32 %v428, %v570
      %v599 = vadd.f32 %v433, %v575
      %v600 = vadd.f32 %v436, %v578
      %v601 = vadd.f32 %v441, %v583
      %v602 = vadd.f32 %v444, %v586
      %v603 = vadd.f32 %v449, %v591
      %v604 = vadd.f32 %v452, %v594
      %s605 = scalar_lea.vmem %s165, 16
      %v606 = vld [vmem:[%s605] sm:$0xff]
      %v607 = vld [vmem:[%s605 + $0x10] sm:$0xff]
      %v608 = vld [vmem:[%s605 + $0x20] sm:$0xff]
      %v609 = vld [vmem:[%s605 + $0x30] sm:$0xff]
      %v610 = vld [vmem:[%s605 + $0x40] sm:$0xff]
      %v611 = vld [vmem:[%s605 + $0x50] sm:$0xff]
      %v612 = vld [vmem:[%s605 + $0x60] sm:$0xff]
      %v613 = vld [vmem:[%s605 + $0x70] sm:$0xff]
      %v614 = vpack.c.bf16 %v607, %v606
      %v615 = vpack.c.bf16 %v609, %v608
      %v616 = vpack.c.bf16 %v611, %v610
      %v617 = vpack.c.bf16 %v613, %v612
      %s618 = scalar_lea.vmem %s1, 192
      %v619 = vld [vmem:[%s618] sm:$0xf]
      %v620 = vld [vmem:[%s618 + $0x4] sm:$0xf]
      %v621 = vld [vmem:[%s618 + $0x8] sm:$0xf]
      %v622 = vld [vmem:[%s618 + $0xc] sm:$0xf]
      %v623 = vld [vmem:[%s618 + $0x10] sm:$0xf]
      %v624 = vld [vmem:[%s618 + $0x14] sm:$0xf]
      %v625 = vld [vmem:[%s618 + $0x18] sm:$0xf]
      %v626 = vld [vmem:[%s618 + $0x1c] sm:$0xf]
      %v627 = vld [vmem:[%s618 + $0x20] sm:$0xf]
      %v628 = vld [vmem:[%s618 + $0x24] sm:$0xf]
      %v629 = vld [vmem:[%s618 + $0x28] sm:$0xf]
      %v630 = vld [vmem:[%s618 + $0x2c] sm:$0xf]
      %v631 = vld [vmem:[%s618 + $0x30] sm:$0xf]
      %v632 = vld [vmem:[%s618 + $0x34] sm:$0xf]
      %v633 = vld [vmem:[%s618 + $0x38] sm:$0xf]
      %v634 = vld [vmem:[%s618 + $0x3c] sm:$0xf]
      %v651 = vunpack.c.l.b16 %v619
      %v652 = vunpack.c.l.b16 %v620
      %v653 = vunpack.c.l.b16 %v621
      %v654 = vunpack.c.l.b16 %v622
      %v655 = vunpack.c.l.b16 %v623
      %v656 = vunpack.c.l.b16 %v624
      %v657 = vunpack.c.l.b16 %v625
      %v658 = vunpack.c.l.b16 %v626
      %v659 = vunpack.c.l.b16 %v627
      %v660 = vunpack.c.l.b16 %v628
      %v661 = vunpack.c.l.b16 %v629
      %v662 = vunpack.c.l.b16 %v630
      %v663 = vunpack.c.l.b16 %v631
      %v664 = vunpack.c.l.b16 %v632
      %v665 = vunpack.c.l.b16 %v633
      %v666 = vunpack.c.l.b16 %v634
      %v667 = vpack.c.b16 %v652, %v651
      %v668 = vpack.c.b16 %v654, %v653
      %v669 = vpack.c.b16 %v656, %v655
      %v670 = vpack.c.b16 %v658, %v657
      %v671 = vpack.c.b16 %v660, %v659
      %v672 = vpack.c.b16 %v662, %v661
      %v673 = vpack.c.b16 %v664, %v663
      %v674 = vpack.c.b16 %v666, %v665
      %683 = vmatprep.subr.bf16.mxu0 0
      %684 = vmatpush1.bf16.msra.mxu0 %v674
      %685 = vmatprep.subr.bf16.mxu0 0
      %686 = vmatpush1.bf16.msra.mxu0 %v673
      %687 = vmatprep.subr.bf16.mxu0 0
      %688 = vmatpush1.bf16.msra.mxu0 %v672
      %689 = vmatprep.subr.bf16.mxu0 0
      %690 = vmatpush1.bf16.msra.mxu0 %v671
      %691 = vmatprep.subr.bf16.mxu0 0
      %692 = vmatpush1.bf16.msra.mxu0 %v670
      %693 = vmatprep.subr.bf16.mxu0 0
      %694 = vmatpush1.bf16.msra.mxu0 %v669
      %695 = vmatprep.subr.bf16.mxu0 0
      %696 = vmatpush1.bf16.msra.mxu0 %v668
      %697 = vmatprep.subr.bf16.mxu0 0
      %698 = vmatpush1.bf16.msra.mxu0 %v667
      %699 = vmatprep.subr.bf16.mxu0 0
      %700 = vmatpush2.bf16.msra.mxu0 0
      %701 = vmatprep.subr.bf16.mxu0 0
      %702 = vmatpush2.bf16.msra.mxu0 0
      %703 = vmatprep.subr.bf16.mxu0 0
      %704 = vmatpush2.bf16.msra.mxu0 0
      %705 = vmatprep.subr.bf16.mxu0 0
      %706 = vmatpush2.bf16.msra.mxu0 0
      %707 = vmatprep.subr.bf16.mxu0 0
      %708 = vmatpush2.bf16.msra.mxu0 0
      %709 = vmatprep.subr.bf16.mxu0 0
      %710 = vmatpush2.bf16.msra.mxu0 0
      %711 = vmatprep.subr.bf16.mxu0 0
      %712 = vmatpush2.bf16.msra.mxu0 0
      %713 = vmatprep.subr.bf16.mxu0 0
      %714 = vmatpush2.bf16.msra.mxu0 0
      %715 = vmatprep.mubr.bf16.mxu0 0
      %716 = vmatmul.mubr.bf16.gmra.mxu0 %v614
      %v717 = vpop.f32.mrf.mxu0
      %v718 = vadd.f32 0.0, %v717
      %v719 = vpop.f32.mrf.mxu0
      %v720 = vpop.f32.mrf.mxu0
      %v721 = vadd.f32 0.0, %v720
      %v722 = vpop.f32.mrf.mxu0
      %723 = vmatprep.mubr.bf16.mxu0 0
      %724 = vmatmul.mubr.bf16.gmra.mxu0 %v615
      %v725 = vpop.f32.mrf.mxu0
      %v726 = vadd.f32 0.0, %v725
      %v727 = vpop.f32.mrf.mxu0
      %v728 = vpop.f32.mrf.mxu0
      %v729 = vadd.f32 0.0, %v728
      %v730 = vpop.f32.mrf.mxu0
      %731 = vmatprep.mubr.bf16.mxu0 0
      %732 = vmatmul.mubr.bf16.gmra.mxu0 %v616
      %v733 = vpop.f32.mrf.mxu0
      %v734 = vadd.f32 0.0, %v733
      %v735 = vpop.f32.mrf.mxu0
      %v736 = vpop.f32.mrf.mxu0
      %v737 = vadd.f32 0.0, %v736
      %v738 = vpop.f32.mrf.mxu0
      %739 = vmatprep.mubr.bf16.mxu0 0
      %740 = vmatmul.mubr.bf16.gmra.mxu0 %v617
      %v741 = vpop.f32.mrf.mxu0
      %v742 = vadd.f32 0.0, %v741
      %v743 = vpop.f32.mrf.mxu0
      %v744 = vpop.f32.mrf.mxu0
      %v745 = vadd.f32 0.0, %v744
      %v746 = vpop.f32.mrf.mxu0
      %747 = vdwg.mxu0
      %v748 = vadd.f32 %v597, %v718
      %v749 = vadd.f32 %v598, %v721
      %v750 = vadd.f32 %v599, %v726
      %v751 = vadd.f32 %v600, %v729
      %v752 = vadd.f32 %v601, %v734
      %v753 = vadd.f32 %v602, %v737
      %v754 = vadd.f32 %v603, %v742
      %v755 = vadd.f32 %v604, %v745
      %v756 = vld [vmem:[%s605 + $0x1] sm:$0xff]
      %v757 = vld [vmem:[%s605 + $0x11] sm:$0xff]
      %v758 = vld [vmem:[%s605 + $0x21] sm:$0xff]
      %v759 = vld [vmem:[%s605 + $0x31] sm:$0xff]
      %v760 = vld [vmem:[%s605 + $0x41] sm:$0xff]
      %v761 = vld [vmem:[%s605 + $0x51] sm:$0xff]
      %v762 = vld [vmem:[%s605 + $0x61] sm:$0xff]
      %v763 = vld [vmem:[%s605 + $0x71] sm:$0xff]
      %v764 = vpack.c.bf16 %v757, %v756
      %v765 = vpack.c.bf16 %v759, %v758
      %v766 = vpack.c.bf16 %v761, %v760
      %v767 = vpack.c.bf16 %v763, %v762
      %s768 = scalar_lea.vmem %s1, 256
      %v769 = vld [vmem:[%s768] sm:$0xf]
      %v770 = vld [vmem:[%s768 + $0x4] sm:$0xf]
      %v771 = vld [vmem:[%s768 + $0x8] sm:$0xf]
      %v772 = vld [vmem:[%s768 + $0xc] sm:$0xf]
      %v773 = vld [vmem:[%s768 + $0x10] sm:$0xf]
      %v774 = vld [vmem:[%s768 + $0x14] sm:$0xf]
      %v775 = vld [vmem:[%s768 + $0x18] sm:$0xf]
      %v776 = vld [vmem:[%s768 + $0x1c] sm:$0xf]
      %v777 = vld [vmem:[%s768 + $0x20] sm:$0xf]
      %v778 = vld [vmem:[%s768 + $0x24] sm:$0xf]
      %v779 = vld [vmem:[%s768 + $0x28] sm:$0xf]
      %v780 = vld [vmem:[%s768 + $0x2c] sm:$0xf]
      %v781 = vld [vmem:[%s768 + $0x30] sm:$0xf]
      %v782 = vld [vmem:[%s768 + $0x34] sm:$0xf]
      %v783 = vld [vmem:[%s768 + $0x38] sm:$0xf]
      %v784 = vld [vmem:[%s768 + $0x3c] sm:$0xf]
      %v801 = vunpack.c.l.b16 %v769
      %v802 = vunpack.c.l.b16 %v770
      %v803 = vunpack.c.l.b16 %v771
      %v804 = vunpack.c.l.b16 %v772
      %v805 = vunpack.c.l.b16 %v773
      %v806 = vunpack.c.l.b16 %v774
      %v807 = vunpack.c.l.b16 %v775
      %v808 = vunpack.c.l.b16 %v776
      %v809 = vunpack.c.l.b16 %v777
      %v810 = vunpack.c.l.b16 %v778
      %v811 = vunpack.c.l.b16 %v779
      %v812 = vunpack.c.l.b16 %v780
      %v813 = vunpack.c.l.b16 %v781
      %v814 = vunpack.c.l.b16 %v782
      %v815 = vunpack.c.l.b16 %v783
      %v816 = vunpack.c.l.b16 %v784
      %v817 = vpack.c.b16 %v802, %v801
      %v818 = vpack.c.b16 %v804, %v803
      %v819 = vpack.c.b16 %v806, %v805
      %v820 = vpack.c.b16 %v808, %v807
      %v821 = vpack.c.b16 %v810, %v809
      %v822 = vpack.c.b16 %v812, %v811
      %v823 = vpack.c.b16 %v814, %v813
      %v824 = vpack.c.b16 %v816, %v815
      %833 = vmatprep.subr.bf16.mxu0 0
      %834 = vmatpush1.bf16.msra.mxu0 %v824
      %835 = vmatprep.subr.bf16.mxu0 0
      %836 = vmatpush1.bf16.msra.mxu0 %v823
      %837 = vmatprep.subr.bf16.mxu0 0
      %838 = vmatpush1.bf16.msra.mxu0 %v822
      %839 = vmatprep.subr.bf16.mxu0 0
      %840 = vmatpush1.bf16.msra.mxu0 %v821
      %841 = vmatprep.subr.bf16.mxu0 0
      %842 = vmatpush1.bf16.msra.mxu0 %v820
      %843 = vmatprep.subr.bf16.mxu0 0
      %844 = vmatpush1.bf16.msra.mxu0 %v819
      %845 = vmatprep.subr.bf16.mxu0 0
      %846 = vmatpush1.bf16.msra.mxu0 %v818
      %847 = vmatprep.subr.bf16.mxu0 0
      %848 = vmatpush1.bf16.msra.mxu0 %v817
      %849 = vmatprep.subr.bf16.mxu0 0
      %850 = vmatpush2.bf16.msra.mxu0 0
      %851 = vmatprep.subr.bf16.mxu0 0
      %852 = vmatpush2.bf16.msra.mxu0 0
      %853 = vmatprep.subr.bf16.mxu0 0
      %854 = vmatpush2.bf16.msra.mxu0 0
      %855 = vmatprep.subr.bf16.mxu0 0
      %856 = vmatpush2.bf16.msra.mxu0 0
      %857 = vmatprep.subr.bf16.mxu0 0
      %858 = vmatpush2.bf16.msra.mxu0 0
      %859 = vmatprep.subr.bf16.mxu0 0
      %860 = vmatpush2.bf16.msra.mxu0 0
      %861 = vmatprep.subr.bf16.mxu0 0
      %862 = vmatpush2.bf16.msra.mxu0 0
      %863 = vmatprep.subr.bf16.mxu0 0
      %864 = vmatpush2.bf16.msra.mxu0 0
      %865 = vmatprep.mubr.bf16.mxu0 0
      %866 = vmatmul.mubr.bf16.gmra.mxu0 %v764
      %v867 = vpop.f32.mrf.mxu0
      %v868 = vadd.f32 0.0, %v867
      %v869 = vpop.f32.mrf.mxu0
      %v870 = vpop.f32.mrf.mxu0
      %v871 = vadd.f32 0.0, %v870
      %v872 = vpop.f32.mrf.mxu0
      %873 = vmatprep.mubr.bf16.mxu0 0
      %874 = vmatmul.mubr.bf16.gmra.mxu0 %v765
      %v875 = vpop.f32.mrf.mxu0
      %v876 = vadd.f32 0.0, %v875
      %v877 = vpop.f32.mrf.mxu0
      %v878 = vpop.f32.mrf.mxu0
      %v879 = vadd.f32 0.0, %v878
      %v880 = vpop.f32.mrf.mxu0
      %881 = vmatprep.mubr.bf16.mxu0 0
      %882 = vmatmul.mubr.bf16.gmra.mxu0 %v766
      %v883 = vpop.f32.mrf.mxu0
      %v884 = vadd.f32 0.0, %v883
      %v885 = vpop.f32.mrf.mxu0
      %v886 = vpop.f32.mrf.mxu0
      %v887 = vadd.f32 0.0, %v886
      %v888 = vpop.f32.mrf.mxu0
      %889 = vmatprep.mubr.bf16.mxu0 0
      %890 = vmatmul.mubr.bf16.gmra.mxu0 %v767
      %v891 = vpop.f32.mrf.mxu0
      %v892 = vadd.f32 0.0, %v891
      %v893 = vpop.f32.mrf.mxu0
      %v894 = vpop.f32.mrf.mxu0
      %v895 = vadd.f32 0.0, %v894
      %v896 = vpop.f32.mrf.mxu0
      %897 = vdwg.mxu0
      %v898 = vadd.f32 %v748, %v868
      %v899 = vadd.f32 %v749, %v871
      %v900 = vadd.f32 %v750, %v876
      %v901 = vadd.f32 %v751, %v879
      %v902 = vadd.f32 %v752, %v884
      %v903 = vadd.f32 %v753, %v887
      %v904 = vadd.f32 %v754, %v892
      %v905 = vadd.f32 %v755, %v895
      %v906 = vld [vmem:[%s605 + $0x2] sm:$0xff]
      %v907 = vld [vmem:[%s605 + $0x12] sm:$0xff]
      %v908 = vld [vmem:[%s605 + $0x22] sm:$0xff]
      %v909 = vld [vmem:[%s605 + $0x32] sm:$0xff]
      %v910 = vld [vmem:[%s605 + $0x42] sm:$0xff]
      %v911 = vld [vmem:[%s605 + $0x52] sm:$0xff]
      %v912 = vld [vmem:[%s605 + $0x62] sm:$0xff]
      %v913 = vld [vmem:[%s605 + $0x72] sm:$0xff]
      %v914 = vpack.c.bf16 %v907, %v906
      %v915 = vpack.c.bf16 %v909, %v908
      %v916 = vpack.c.bf16 %v911, %v910
      %v917 = vpack.c.bf16 %v913, %v912
      %s918 = scalar_lea.vmem %s1, 320
      %v919 = vld [vmem:[%s918] sm:$0xf]
      %v920 = vld [vmem:[%s918 + $0x4] sm:$0xf]
      %v921 = vld [vmem:[%s918 + $0x8] sm:$0xf]
      %v922 = vld [vmem:[%s918 + $0xc] sm:$0xf]
      %v923 = vld [vmem:[%s918 + $0x10] sm:$0xf]
      %v924 = vld [vmem:[%s918 + $0x14] sm:$0xf]
      %v925 = vld [vmem:[%s918 + $0x18] sm:$0xf]
      %v926 = vld [vmem:[%s918 + $0x1c] sm:$0xf]
      %v927 = vld [vmem:[%s918 + $0x20] sm:$0xf]
      %v928 = vld [vmem:[%s918 + $0x24] sm:$0xf]
      %v929 = vld [vmem:[%s918 + $0x28] sm:$0xf]
      %v930 = vld [vmem:[%s918 + $0x2c] sm:$0xf]
      %v931 = vld [vmem:[%s918 + $0x30] sm:$0xf]
      %v932 = vld [vmem:[%s918 + $0x34] sm:$0xf]
      %v933 = vld [vmem:[%s918 + $0x38] sm:$0xf]
      %v934 = vld [vmem:[%s918 + $0x3c] sm:$0xf]
      %v951 = vunpack.c.l.b16 %v919
      %v952 = vunpack.c.l.b16 %v920
      %v953 = vunpack.c.l.b16 %v921
      %v954 = vunpack.c.l.b16 %v922
      %v955 = vunpack.c.l.b16 %v923
      %v956 = vunpack.c.l.b16 %v924
      %v957 = vunpack.c.l.b16 %v925
      %v958 = vunpack.c.l.b16 %v926
      %v959 = vunpack.c.l.b16 %v927
      %v960 = vunpack.c.l.b16 %v928
      %v961 = vunpack.c.l.b16 %v929
      %v962 = vunpack.c.l.b16 %v930
      %v963 = vunpack.c.l.b16 %v931
      %v964 = vunpack.c.l.b16 %v932
      %v965 = vunpack.c.l.b16 %v933
      %v966 = vunpack.c.l.b16 %v934
      %v967 = vpack.c.b16 %v952, %v951
      %v968 = vpack.c.b16 %v954, %v953
      %v969 = vpack.c.b16 %v956, %v955
      %v970 = vpack.c.b16 %v958, %v957
      %v971 = vpack.c.b16 %v960, %v959
      %v972 = vpack.c.b16 %v962, %v961
      %v973 = vpack.c.b16 %v964, %v963
      %v974 = vpack.c.b16 %v966, %v965
      %983 = vmatprep.subr.bf16.mxu0 0
      %984 = vmatpush1.bf16.msra.mxu0 %v974
      %985 = vmatprep.subr.bf16.mxu0 0
      %986 = vmatpush1.bf16.msra.mxu0 %v973
      %987 = vmatprep.subr.bf16.mxu0 0
      %988 = vmatpush1.bf16.msra.mxu0 %v972
      %989 = vmatprep.subr.bf16.mxu0 0
      %990 = vmatpush1.bf16.msra.mxu0 %v971
      %991 = vmatprep.subr.bf16.mxu0 0
      %992 = vmatpush1.bf16.msra.mxu0 %v970
      %993 = vmatprep.subr.bf16.mxu0 0
      %994 = vmatpush1.bf16.msra.mxu0 %v969
      %995 = vmatprep.subr.bf16.mxu0 0
      %996 = vmatpush1.bf16.msra.mxu0 %v968
      %997 = vmatprep.subr.bf16.mxu0 0
      %998 = vmatpush1.bf16.msra.mxu0 %v967
      %999 = vmatprep.subr.bf16.mxu0 0
      %1000 = vmatpush2.bf16.msra.mxu0 0
      %1001 = vmatprep.subr.bf16.mxu0 0
      %1002 = vmatpush2.bf16.msra.mxu0 0
      %1003 = vmatprep.subr.bf16.mxu0 0
      %1004 = vmatpush2.bf16.msra.mxu0 0
      %1005 = vmatprep.subr.bf16.mxu0 0
      %1006 = vmatpush2.bf16.msra.mxu0 0
      %1007 = vmatprep.subr.bf16.mxu0 0
      %1008 = vmatpush2.bf16.msra.mxu0 0
      %1009 = vmatprep.subr.bf16.mxu0 0
      %1010 = vmatpush2.bf16.msra.mxu0 0
      %1011 = vmatprep.subr.bf16.mxu0 0
      %1012 = vmatpush2.bf16.msra.mxu0 0
      %1013 = vmatprep.subr.bf16.mxu0 0
      %1014 = vmatpush2.bf16.msra.mxu0 0
      %1015 = vmatprep.mubr.bf16.mxu0 0
      %1016 = vmatmul.mubr.bf16.gmra.mxu0 %v914
      %v1017 = vpop.f32.mrf.mxu0
      %v1018 = vadd.f32 0.0, %v1017
      %v1019 = vpop.f32.mrf.mxu0
      %v1020 = vpop.f32.mrf.mxu0
      %v1021 = vadd.f32 0.0, %v1020
      %v1022 = vpop.f32.mrf.mxu0
      %1023 = vmatprep.mubr.bf16.mxu0 0
      %1024 = vmatmul.mubr.bf16.gmra.mxu0 %v915
      %v1025 = vpop.f32.mrf.mxu0
      %v1026 = vadd.f32 0.0, %v1025
      %v1027 = vpop.f32.mrf.mxu0
      %v1028 = vpop.f32.mrf.mxu0
      %v1029 = vadd.f32 0.0, %v1028
      %v1030 = vpop.f32.mrf.mxu0
      %1031 = vmatprep.mubr.bf16.mxu0 0
      %1032 = vmatmul.mubr.bf16.gmra.mxu0 %v916
      %v1033 = vpop.f32.mrf.mxu0
      %v1034 = vadd.f32 0.0, %v1033
      %v1035 = vpop.f32.mrf.mxu0
      %v1036 = vpop.f32.mrf.mxu0
      %v1037 = vadd.f32 0.0, %v1036
      %v1038 = vpop.f32.mrf.mxu0
      %1039 = vmatprep.mubr.bf16.mxu0 0
      %1040 = vmatmul.mubr.bf16.gmra.mxu0 %v917
      %v1041 = vpop.f32.mrf.mxu0
      %v1042 = vadd.f32 0.0, %v1041
      %v1043 = vpop.f32.mrf.mxu0
      %v1044 = vpop.f32.mrf.mxu0
      %v1045 = vadd.f32 0.0, %v1044
      %v1046 = vpop.f32.mrf.mxu0
      %1047 = vdwg.mxu0
      %v1048 = vadd.f32 %v898, %v1018
      %v1049 = vadd.f32 %v899, %v1021
      %v1050 = vadd.f32 %v900, %v1026
      %v1051 = vadd.f32 %v901, %v1029
      %v1052 = vadd.f32 %v902, %v1034
      %v1053 = vadd.f32 %v903, %v1037
      %v1054 = vadd.f32 %v904, %v1042
      %v1055 = vadd.f32 %v905, %v1045
      %s1056 = scalar_lea.vmem %s165, 32
      %v1057 = vld [vmem:[%s1056] sm:$0xff]
      %v1058 = vld [vmem:[%s1056 + $0x10] sm:$0xff]
      %v1059 = vld [vmem:[%s1056 + $0x20] sm:$0xff]
      %v1060 = vld [vmem:[%s1056 + $0x30] sm:$0xff]
      %v1061 = vld [vmem:[%s1056 + $0x40] sm:$0xff]
      %v1062 = vld [vmem:[%s1056 + $0x50] sm:$0xff]
      %v1063 = vld [vmem:[%s1056 + $0x60] sm:$0xff]
      %v1064 = vld [vmem:[%s1056 + $0x70] sm:$0xff]
      %v1065 = vpack.c.bf16 %v1058, %v1057
      %v1066 = vpack.c.bf16 %v1060, %v1059
      %v1067 = vpack.c.bf16 %v1062, %v1061
      %v1068 = vpack.c.bf16 %v1064, %v1063
      %s1069 = scalar_lea.vmem %s1, 384
      %v1070 = vld [vmem:[%s1069] sm:$0xf]
      %v1071 = vld [vmem:[%s1069 + $0x4] sm:$0xf]
      %v1072 = vld [vmem:[%s1069 + $0x8] sm:$0xf]
      %v1073 = vld [vmem:[%s1069 + $0xc] sm:$0xf]
      %v1074 = vld [vmem:[%s1069 + $0x10] sm:$0xf]
      %v1075 = vld [vmem:[%s1069 + $0x14] sm:$0xf]
      %v1076 = vld [vmem:[%s1069 + $0x18] sm:$0xf]
      %v1077 = vld [vmem:[%s1069 + $0x1c] sm:$0xf]
      %v1078 = vld [vmem:[%s1069 + $0x20] sm:$0xf]
      %v1079 = vld [vmem:[%s1069 + $0x24] sm:$0xf]
      %v1080 = vld [vmem:[%s1069 + $0x28] sm:$0xf]
      %v1081 = vld [vmem:[%s1069 + $0x2c] sm:$0xf]
      %v1082 = vld [vmem:[%s1069 + $0x30] sm:$0xf]
      %v1083 = vld [vmem:[%s1069 + $0x34] sm:$0xf]
      %v1084 = vld [vmem:[%s1069 + $0x38] sm:$0xf]
      %v1085 = vld [vmem:[%s1069 + $0x3c] sm:$0xf]
      %v1102 = vunpack.c.l.b16 %v1070
      %v1103 = vunpack.c.l.b16 %v1071
      %v1104 = vunpack.c.l.b16 %v1072
      %v1105 = vunpack.c.l.b16 %v1073
      %v1106 = vunpack.c.l.b16 %v1074
      %v1107 = vunpack.c.l.b16 %v1075
      %v1108 = vunpack.c.l.b16 %v1076
      %v1109 = vunpack.c.l.b16 %v1077
      %v1110 = vunpack.c.l.b16 %v1078
      %v1111 = vunpack.c.l.b16 %v1079
      %v1112 = vunpack.c.l.b16 %v1080
      %v1113 = vunpack.c.l.b16 %v1081
      %v1114 = vunpack.c.l.b16 %v1082
      %v1115 = vunpack.c.l.b16 %v1083
      %v1116 = vunpack.c.l.b16 %v1084
      %v1117 = vunpack.c.l.b16 %v1085
      %v1118 = vpack.c.b16 %v1103, %v1102
      %v1119 = vpack.c.b16 %v1105, %v1104
      %v1120 = vpack.c.b16 %v1107, %v1106
      %v1121 = vpack.c.b16 %v1109, %v1108
      %v1122 = vpack.c.b16 %v1111, %v1110
      %v1123 = vpack.c.b16 %v1113, %v1112
      %v1124 = vpack.c.b16 %v1115, %v1114
      %v1125 = vpack.c.b16 %v1117, %v1116
      %1134 = vmatprep.subr.bf16.mxu0 0
      %1135 = vmatpush1.bf16.msra.mxu0 %v1125
      %1136 = vmatprep.subr.bf16.mxu0 0
      %1137 = vmatpush1.bf16.msra.mxu0 %v1124
      %1138 = vmatprep.subr.bf16.mxu0 0
      %1139 = vmatpush1.bf16.msra.mxu0 %v1123
      %1140 = vmatprep.subr.bf16.mxu0 0
      %1141 = vmatpush1.bf16.msra.mxu0 %v1122
      %1142 = vmatprep.subr.bf16.mxu0 0
      %1143 = vmatpush1.bf16.msra.mxu0 %v1121
      %1144 = vmatprep.subr.bf16.mxu0 0
      %1145 = vmatpush1.bf16.msra.mxu0 %v1120
      %1146 = vmatprep.subr.bf16.mxu0 0
      %1147 = vmatpush1.bf16.msra.mxu0 %v1119
      %1148 = vmatprep.subr.bf16.mxu0 0
      %1149 = vmatpush1.bf16.msra.mxu0 %v1118
      %1150 = vmatprep.subr.bf16.mxu0 0
      %1151 = vmatpush2.bf16.msra.mxu0 0
      %1152 = vmatprep.subr.bf16.mxu0 0
      %1153 = vmatpush2.bf16.msra.mxu0 0
      %1154 = vmatprep.subr.bf16.mxu0 0
      %1155 = vmatpush2.bf16.msra.mxu0 0
      %1156 = vmatprep.subr.bf16.mxu0 0
      %1157 = vmatpush2.bf16.msra.mxu0 0
      %1158 = vmatprep.subr.bf16.mxu0 0
      %1159 = vmatpush2.bf16.msra.mxu0 0
      %1160 = vmatprep.subr.bf16.mxu0 0
      %1161 = vmatpush2.bf16.msra.mxu0 0
      %1162 = vmatprep.subr.bf16.mxu0 0
      %1163 = vmatpush2.bf16.msra.mxu0 0
      %1164 = vmatprep.subr.bf16.mxu0 0
      %1165 = vmatpush2.bf16.msra.mxu0 0
      %1166 = vmatprep.mubr.bf16.mxu0 0
      %1167 = vmatmul.mubr.bf16.gmra.mxu0 %v1065
      %v1168 = vpop.f32.mrf.mxu0
      %v1169 = vadd.f32 0.0, %v1168
      %v1170 = vpop.f32.mrf.mxu0
      %v1171 = vpop.f32.mrf.mxu0
      %v1172 = vadd.f32 0.0, %v1171
      %v1173 = vpop.f32.mrf.mxu0
      %1174 = vmatprep.mubr.bf16.mxu0 0
      %1175 = vmatmul.mubr.bf16.gmra.mxu0 %v1066
      %v1176 = vpop.f32.mrf.mxu0
      %v1177 = vadd.f32 0.0, %v1176
      %v1178 = vpop.f32.mrf.mxu0
      %v1179 = vpop.f32.mrf.mxu0
      %v1180 = vadd.f32 0.0, %v1179
      %v1181 = vpop.f32.mrf.mxu0
      %1182 = vmatprep.mubr.bf16.mxu0 0
      %1183 = vmatmul.mubr.bf16.gmra.mxu0 %v1067
      %v1184 = vpop.f32.mrf.mxu0
      %v1185 = vadd.f32 0.0, %v1184
      %v1186 = vpop.f32.mrf.mxu0
      %v1187 = vpop.f32.mrf.mxu0
      %v1188 = vadd.f32 0.0, %v1187
      %v1189 = vpop.f32.mrf.mxu0
      %1190 = vmatprep.mubr.bf16.mxu0 0
      %1191 = vmatmul.mubr.bf16.gmra.mxu0 %v1068
      %v1192 = vpop.f32.mrf.mxu0
      %v1193 = vadd.f32 0.0, %v1192
      %v1194 = vpop.f32.mrf.mxu0
      %v1195 = vpop.f32.mrf.mxu0
      %v1196 = vadd.f32 0.0, %v1195
      %v1197 = vpop.f32.mrf.mxu0
      %1198 = vdwg.mxu0
      %v1199 = vadd.f32 %v1048, %v1169
      %v1200 = vadd.f32 %v1049, %v1172
      %v1201 = vadd.f32 %v1050, %v1177
      %v1202 = vadd.f32 %v1051, %v1180
      %v1203 = vadd.f32 %v1052, %v1185
      %v1204 = vadd.f32 %v1053, %v1188
      %v1205 = vadd.f32 %v1054, %v1193
      %v1206 = vadd.f32 %v1055, %v1196
      %v1207 = vld [vmem:[%s1056 + $0x1] sm:$0xff]
      %v1208 = vld [vmem:[%s1056 + $0x11] sm:$0xff]
      %v1209 = vld [vmem:[%s1056 + $0x21] sm:$0xff]
      %v1210 = vld [vmem:[%s1056 + $0x31] sm:$0xff]
      %v1211 = vld [vmem:[%s1056 + $0x41] sm:$0xff]
      %v1212 = vld [vmem:[%s1056 + $0x51] sm:$0xff]
      %v1213 = vld [vmem:[%s1056 + $0x61] sm:$0xff]
      %v1214 = vld [vmem:[%s1056 + $0x71] sm:$0xff]
      %v1215 = vpack.c.bf16 %v1208, %v1207
      %v1216 = vpack.c.bf16 %v1210, %v1209
      %v1217 = vpack.c.bf16 %v1212, %v1211
      %v1218 = vpack.c.bf16 %v1214, %v1213
      %s1219 = scalar_lea.vmem %s1, 448
      %v1220 = vld [vmem:[%s1219] sm:$0xf]
      %v1221 = vld [vmem:[%s1219 + $0x4] sm:$0xf]
      %v1222 = vld [vmem:[%s1219 + $0x8] sm:$0xf]
      %v1223 = vld [vmem:[%s1219 + $0xc] sm:$0xf]
      %v1224 = vld [vmem:[%s1219 + $0x10] sm:$0xf]
      %v1225 = vld [vmem:[%s1219 + $0x14] sm:$0xf]
      %v1226 = vld [vmem:[%s1219 + $0x18] sm:$0xf]
      %v1227 = vld [vmem:[%s1219 + $0x1c] sm:$0xf]
      %v1228 = vld [vmem:[%s1219 + $0x20] sm:$0xf]
      %v1229 = vld [vmem:[%s1219 + $0x24] sm:$0xf]
      %v1230 = vld [vmem:[%s1219 + $0x28] sm:$0xf]
      %v1231 = vld [vmem:[%s1219 + $0x2c] sm:$0xf]
      %v1232 = vld [vmem:[%s1219 + $0x30] sm:$0xf]
      %v1233 = vld [vmem:[%s1219 + $0x34] sm:$0xf]
      %v1234 = vld [vmem:[%s1219 + $0x38] sm:$0xf]
      %v1235 = vld [vmem:[%s1219 + $0x3c] sm:$0xf]
      %v1252 = vunpack.c.l.b16 %v1220
      %v1253 = vunpack.c.l.b16 %v1221
      %v1254 = vunpack.c.l.b16 %v1222
      %v1255 = vunpack.c.l.b16 %v1223
      %v1256 = vunpack.c.l.b16 %v1224
      %v1257 = vunpack.c.l.b16 %v1225
      %v1258 = vunpack.c.l.b16 %v1226
      %v1259 = vunpack.c.l.b16 %v1227
      %v1260 = vunpack.c.l.b16 %v1228
      %v1261 = vunpack.c.l.b16 %v1229
      %v1262 = vunpack.c.l.b16 %v1230
      %v1263 = vunpack.c.l.b16 %v1231
      %v1264 = vunpack.c.l.b16 %v1232
      %v1265 = vunpack.c.l.b16 %v1233
      %v1266 = vunpack.c.l.b16 %v1234
      %v1267 = vunpack.c.l.b16 %v1235
      %v1268 = vpack.c.b16 %v1253, %v1252
      %v1269 = vpack.c.b16 %v1255, %v1254
      %v1270 = vpack.c.b16 %v1257, %v1256
      %v1271 = vpack.c.b16 %v1259, %v1258
      %v1272 = vpack.c.b16 %v1261, %v1260
      %v1273 = vpack.c.b16 %v1263, %v1262
      %v1274 = vpack.c.b16 %v1265, %v1264
      %v1275 = vpack.c.b16 %v1267, %v1266
      %1284 = vmatprep.subr.bf16.mxu0 0
      %1285 = vmatpush1.bf16.msra.mxu0 %v1275
      %1286 = vmatprep.subr.bf16.mxu0 0
      %1287 = vmatpush1.bf16.msra.mxu0 %v1274
      %1288 = vmatprep.subr.bf16.mxu0 0
      %1289 = vmatpush1.bf16.msra.mxu0 %v1273
      %1290 = vmatprep.subr.bf16.mxu0 0
      %1291 = vmatpush1.bf16.msra.mxu0 %v1272
      %1292 = vmatprep.subr.bf16.mxu0 0
      %1293 = vmatpush1.bf16.msra.mxu0 %v1271
      %1294 = vmatprep.subr.bf16.mxu0 0
      %1295 = vmatpush1.bf16.msra.mxu0 %v1270
      %1296 = vmatprep.subr.bf16.mxu0 0
      %1297 = vmatpush1.bf16.msra.mxu0 %v1269
      %1298 = vmatprep.subr.bf16.mxu0 0
      %1299 = vmatpush1.bf16.msra.mxu0 %v1268
      %1300 = vmatprep.subr.bf16.mxu0 0
      %1301 = vmatpush2.bf16.msra.mxu0 0
      %1302 = vmatprep.subr.bf16.mxu0 0
      %1303 = vmatpush2.bf16.msra.mxu0 0
      %1304 = vmatprep.subr.bf16.mxu0 0
      %1305 = vmatpush2.bf16.msra.mxu0 0
      %1306 = vmatprep.subr.bf16.mxu0 0
      %1307 = vmatpush2.bf16.msra.mxu0 0
      %1308 = vmatprep.subr.bf16.mxu0 0
      %1309 = vmatpush2.bf16.msra.mxu0 0
      %1310 = vmatprep.subr.bf16.mxu0 0
      %1311 = vmatpush2.bf16.msra.mxu0 0
      %1312 = vmatprep.subr.bf16.mxu0 0
      %1313 = vmatpush2.bf16.msra.mxu0 0
      %1314 = vmatprep.subr.bf16.mxu0 0
      %1315 = vmatpush2.bf16.msra.mxu0 0
      %1316 = vmatprep.mubr.bf16.mxu0 0
      %1317 = vmatmul.mubr.bf16.gmra.mxu0 %v1215
      %v1318 = vpop.f32.mrf.mxu0
      %v1319 = vadd.f32 0.0, %v1318
      %v1320 = vpop.f32.mrf.mxu0
      %v1321 = vpop.f32.mrf.mxu0
      %v1322 = vadd.f32 0.0, %v1321
      %v1323 = vpop.f32.mrf.mxu0
      %1324 = vmatprep.mubr.bf16.mxu0 0
      %1325 = vmatmul.mubr.bf16.gmra.mxu0 %v1216
      %v1326 = vpop.f32.mrf.mxu0
      %v1327 = vadd.f32 0.0, %v1326
      %v1328 = vpop.f32.mrf.mxu0
      %v1329 = vpop.f32.mrf.mxu0
      %v1330 = vadd.f32 0.0, %v1329
      %v1331 = vpop.f32.mrf.mxu0
      %1332 = vmatprep.mubr.bf16.mxu0 0
      %1333 = vmatmul.mubr.bf16.gmra.mxu0 %v1217
      %v1334 = vpop.f32.mrf.mxu0
      %v1335 = vadd.f32 0.0, %v1334
      %v1336 = vpop.f32.mrf.mxu0
      %v1337 = vpop.f32.mrf.mxu0
      %v1338 = vadd.f32 0.0, %v1337
      %v1339 = vpop.f32.mrf.mxu0
      %1340 = vmatprep.mubr.bf16.mxu0 0
      %1341 = vmatmul.mubr.bf16.gmra.mxu0 %v1218
      %v1342 = vpop.f32.mrf.mxu0
      %v1343 = vadd.f32 0.0, %v1342
      %v1344 = vpop.f32.mrf.mxu0
      %v1345 = vpop.f32.mrf.mxu0
      %v1346 = vadd.f32 0.0, %v1345
      %v1347 = vpop.f32.mrf.mxu0
      %1348 = vdwg.mxu0
      %v1349 = vadd.f32 %v1199, %v1319
      %v1350 = vadd.f32 %v1200, %v1322
      %v1351 = vadd.f32 %v1201, %v1327
      %v1352 = vadd.f32 %v1202, %v1330
      %v1353 = vadd.f32 %v1203, %v1335
      %v1354 = vadd.f32 %v1204, %v1338
      %v1355 = vadd.f32 %v1205, %v1343
      %v1356 = vadd.f32 %v1206, %v1346
      %v1357 = vld [vmem:[%s1056 + $0x2] sm:$0xff]
      %v1358 = vld [vmem:[%s1056 + $0x12] sm:$0xff]
      %v1359 = vld [vmem:[%s1056 + $0x22] sm:$0xff]
      %v1360 = vld [vmem:[%s1056 + $0x32] sm:$0xff]
      %v1361 = vld [vmem:[%s1056 + $0x42] sm:$0xff]
      %v1362 = vld [vmem:[%s1056 + $0x52] sm:$0xff]
      %v1363 = vld [vmem:[%s1056 + $0x62] sm:$0xff]
      %v1364 = vld [vmem:[%s1056 + $0x72] sm:$0xff]
      %v1365 = vpack.c.bf16 %v1358, %v1357
      %v1366 = vpack.c.bf16 %v1360, %v1359
      %v1367 = vpack.c.bf16 %v1362, %v1361
      %v1368 = vpack.c.bf16 %v1364, %v1363
      %s1369 = scalar_lea.vmem %s1, 512
      %v1370 = vld [vmem:[%s1369] sm:$0xf]
      %v1371 = vld [vmem:[%s1369 + $0x4] sm:$0xf]
      %v1372 = vld [vmem:[%s1369 + $0x8] sm:$0xf]
      %v1373 = vld [vmem:[%s1369 + $0xc] sm:$0xf]
      %v1374 = vld [vmem:[%s1369 + $0x10] sm:$0xf]
      %v1375 = vld [vmem:[%s1369 + $0x14] sm:$0xf]
      %v1376 = vld [vmem:[%s1369 + $0x18] sm:$0xf]
      %v1377 = vld [vmem:[%s1369 + $0x1c] sm:$0xf]
      %v1378 = vld [vmem:[%s1369 + $0x20] sm:$0xf]
      %v1379 = vld [vmem:[%s1369 + $0x24] sm:$0xf]
      %v1380 = vld [vmem:[%s1369 + $0x28] sm:$0xf]
      %v1381 = vld [vmem:[%s1369 + $0x2c] sm:$0xf]
      %v1382 = vld [vmem:[%s1369 + $0x30] sm:$0xf]
      %v1383 = vld [vmem:[%s1369 + $0x34] sm:$0xf]
      %v1384 = vld [vmem:[%s1369 + $0x38] sm:$0xf]
      %v1385 = vld [vmem:[%s1369 + $0x3c] sm:$0xf]
      %v1402 = vunpack.c.l.b16 %v1370
      %v1403 = vunpack.c.l.b16 %v1371
      %v1404 = vunpack.c.l.b16 %v1372
      %v1405 = vunpack.c.l.b16 %v1373
      %v1406 = vunpack.c.l.b16 %v1374
      %v1407 = vunpack.c.l.b16 %v1375
      %v1408 = vunpack.c.l.b16 %v1376
      %v1409 = vunpack.c.l.b16 %v1377
      %v1410 = vunpack.c.l.b16 %v1378
      %v1411 = vunpack.c.l.b16 %v1379
      %v1412 = vunpack.c.l.b16 %v1380
      %v1413 = vunpack.c.l.b16 %v1381
      %v1414 = vunpack.c.l.b16 %v1382
      %v1415 = vunpack.c.l.b16 %v1383
      %v1416 = vunpack.c.l.b16 %v1384
      %v1417 = vunpack.c.l.b16 %v1385
      %v1418 = vpack.c.b16 %v1403, %v1402
      %v1419 = vpack.c.b16 %v1405, %v1404
      %v1420 = vpack.c.b16 %v1407, %v1406
      %v1421 = vpack.c.b16 %v1409, %v1408
      %v1422 = vpack.c.b16 %v1411, %v1410
      %v1423 = vpack.c.b16 %v1413, %v1412
      %v1424 = vpack.c.b16 %v1415, %v1414
      %v1425 = vpack.c.b16 %v1417, %v1416
      %1434 = vmatprep.subr.bf16.mxu0 0
      %1435 = vmatpush1.bf16.msra.mxu0 %v1425
      %1436 = vmatprep.subr.bf16.mxu0 0
      %1437 = vmatpush1.bf16.msra.mxu0 %v1424
      %1438 = vmatprep.subr.bf16.mxu0 0
      %1439 = vmatpush1.bf16.msra.mxu0 %v1423
      %1440 = vmatprep.subr.bf16.mxu0 0
      %1441 = vmatpush1.bf16.msra.mxu0 %v1422
      %1442 = vmatprep.subr.bf16.mxu0 0
      %1443 = vmatpush1.bf16.msra.mxu0 %v1421
      %1444 = vmatprep.subr.bf16.mxu0 0
      %1445 = vmatpush1.bf16.msra.mxu0 %v1420
      %1446 = vmatprep.subr.bf16.mxu0 0
      %1447 = vmatpush1.bf16.msra.mxu0 %v1419
      %1448 = vmatprep.subr.bf16.mxu0 0
      %1449 = vmatpush1.bf16.msra.mxu0 %v1418
      %1450 = vmatprep.subr.bf16.mxu0 0
      %1451 = vmatpush2.bf16.msra.mxu0 0
      %1452 = vmatprep.subr.bf16.mxu0 0
      %1453 = vmatpush2.bf16.msra.mxu0 0
      %1454 = vmatprep.subr.bf16.mxu0 0
      %1455 = vmatpush2.bf16.msra.mxu0 0
      %1456 = vmatprep.subr.bf16.mxu0 0
      %1457 = vmatpush2.bf16.msra.mxu0 0
      %1458 = vmatprep.subr.bf16.mxu0 0
      %1459 = vmatpush2.bf16.msra.mxu0 0
      %1460 = vmatprep.subr.bf16.mxu0 0
      %1461 = vmatpush2.bf16.msra.mxu0 0
      %1462 = vmatprep.subr.bf16.mxu0 0
      %1463 = vmatpush2.bf16.msra.mxu0 0
      %1464 = vmatprep.subr.bf16.mxu0 0
      %1465 = vmatpush2.bf16.msra.mxu0 0
      %1466 = vmatprep.mubr.bf16.mxu0 0
      %1467 = vmatmul.mubr.bf16.gmra.mxu0 %v1365
      %v1468 = vpop.f32.mrf.mxu0
      %v1469 = vadd.f32 0.0, %v1468
      %v1470 = vpop.f32.mrf.mxu0
      %v1471 = vpop.f32.mrf.mxu0
      %v1472 = vadd.f32 0.0, %v1471
      %v1473 = vpop.f32.mrf.mxu0
      %1474 = vmatprep.mubr.bf16.mxu0 0
      %1475 = vmatmul.mubr.bf16.gmra.mxu0 %v1366
      %v1476 = vpop.f32.mrf.mxu0
      %v1477 = vadd.f32 0.0, %v1476
      %v1478 = vpop.f32.mrf.mxu0
      %v1479 = vpop.f32.mrf.mxu0
      %v1480 = vadd.f32 0.0, %v1479
      %v1481 = vpop.f32.mrf.mxu0
      %1482 = vmatprep.mubr.bf16.mxu0 0
      %1483 = vmatmul.mubr.bf16.gmra.mxu0 %v1367
      %v1484 = vpop.f32.mrf.mxu0
      %v1485 = vadd.f32 0.0, %v1484
      %v1486 = vpop.f32.mrf.mxu0
      %v1487 = vpop.f32.mrf.mxu0
      %v1488 = vadd.f32 0.0, %v1487
      %v1489 = vpop.f32.mrf.mxu0
      %1490 = vmatprep.mubr.bf16.mxu0 0
      %1491 = vmatmul.mubr.bf16.gmra.mxu0 %v1368
      %v1492 = vpop.f32.mrf.mxu0
      %v1493 = vadd.f32 0.0, %v1492
      %v1494 = vpop.f32.mrf.mxu0
      %v1495 = vpop.f32.mrf.mxu0
      %v1496 = vadd.f32 0.0, %v1495
      %v1497 = vpop.f32.mrf.mxu0
      %1498 = vdwg.mxu0
      %v1499 = vadd.f32 %v1349, %v1469
      %v1500 = vadd.f32 %v1350, %v1472
      %v1501 = vadd.f32 %v1351, %v1477
      %v1502 = vadd.f32 %v1352, %v1480
      %v1503 = vadd.f32 %v1353, %v1485
      %v1504 = vadd.f32 %v1354, %v1488
      %v1505 = vadd.f32 %v1355, %v1493
      %v1506 = vadd.f32 %v1356, %v1496
      %v1507 = vadd.f32 %v1499, %v1500
      %v1508 = vadd.f32 %v1507, %v1501
      %v1509 = vadd.f32 %v1508, %v1502
      %v1510 = vadd.f32 %v1509, %v1503
      %v1511 = vadd.f32 %v1510, %v1504
      %v1512 = vadd.f32 %v1511, %v1505
      %v1513 = vadd.f32 %v1512, %v1506
      %v1514 = vrot.slane %v1513, 4
      %v1515 = vadd.f32 %v1513, %v1514
      %v1516 = vrot.slane %v1515, 2
      %v1517 = vadd.f32 %v1515, %v1516
      %v1518 = vrot.slane %v1517, 1
      %v1519 = vadd.f32 %v1517, %v1518
      %v1520 = vmul.f32 %v1519, 0.015625
      %v1521 = vmul.f32 %v1499, %v1499
      %v1522 = vmul.f32 %v1500, %v1500
      %v1523 = vmul.f32 %v1501, %v1501
      %v1524 = vmul.f32 %v1502, %v1502
      %v1525 = vmul.f32 %v1503, %v1503
      %v1526 = vmul.f32 %v1504, %v1504
      %v1527 = vmul.f32 %v1505, %v1505
      %v1528 = vmul.f32 %v1506, %v1506
      %v1529 = vadd.f32 %v1521, %v1522
      %v1530 = vadd.f32 %v1529, %v1523
      %v1531 = vadd.f32 %v1530, %v1524
      %v1532 = vadd.f32 %v1531, %v1525
      %v1533 = vadd.f32 %v1532, %v1526
      %v1534 = vadd.f32 %v1533, %v1527
      %v1535 = vadd.f32 %v1534, %v1528
      %v1536 = vrot.slane %v1535, 4
      %v1537 = vadd.f32 %v1535, %v1536
      %v1538 = vrot.slane %v1537, 2
      %v1539 = vadd.f32 %v1537, %v1538
      %v1540 = vrot.slane %v1539, 1
      %v1541 = vadd.f32 %v1539, %v1540
      %v1542 = vmul.f32 %v1541, 0.015625
      %v1543 = vmul.f32 %v1520, %v1520
      %v1544 = vsub.f32 %v1542, %v1543
      %v1545 = vmax.f32 %v1544, 0.0
      %v1546 = vsub.f32 %v1499, %v1520
      %v1547 = vsub.f32 %v1500, %v1520
      %v1548 = vsub.f32 %v1501, %v1520
      %v1549 = vsub.f32 %v1502, %v1520
      %v1550 = vsub.f32 %v1503, %v1520
      %v1551 = vsub.f32 %v1504, %v1520
      %v1552 = vsub.f32 %v1505, %v1520
      %v1553 = vsub.f32 %v1506, %v1520
      %v1554 = vadd.f32 %v1545, 1e-05
      %v1555 = vrsqrt.pop %v1554
      %v1556 = vmul.f32 %v1546, %v1555
      %v1557 = vmul.f32 %v1547, %v1555
      %v1558 = vmul.f32 %v1548, %v1555
      %v1559 = vmul.f32 %v1549, %v1555
      %v1560 = vmul.f32 %v1550, %v1555
      %v1561 = vmul.f32 %v1551, %v1555
      %v1562 = vmul.f32 %v1552, %v1555
      %v1563 = vmul.f32 %v1553, %v1555
      %v1564 = vmax.f32 %v1556, 0.0
      %v1565 = vmax.f32 %v1557, 0.0
      %v1566 = vmax.f32 %v1558, 0.0
      %v1567 = vmax.f32 %v1559, 0.0
      %v1568 = vmax.f32 %v1560, 0.0
      %v1569 = vmax.f32 %v1561, 0.0
      %v1570 = vmax.f32 %v1562, 0.0
      %v1571 = vmax.f32 %v1563, 0.0
      %1572 = vst [vmem:[#allocation2] sm:$0xff] 0.0
      %1573 = vst [vmem:[#allocation2 + $0x8] sm:$0x3] 0.0
      %1574 = vst [vmem:[#allocation2 + $0x10] sm:$0xff] 0.0
      %1575 = vst [vmem:[#allocation2 + $0x18] sm:$0x3] 0.0
      %1576 = vst [vmem:[#allocation2 + $0x20] sm:$0xff] 0.0
      %1577 = vst [vmem:[#allocation2 + $0x28] sm:$0x3] 0.0
      %1578 = vst [vmem:[#allocation2 + $0x30] sm:$0xff] 0.0
      %1579 = vst [vmem:[#allocation2 + $0x38] sm:$0x3] 0.0
      %1580 = vst [vmem:[#allocation2 + $0x40] sm:$0xff] 0.0
      %1581 = vst [vmem:[#allocation2 + $0x48] sm:$0x3] 0.0
      %1582 = vst [vmem:[#allocation2 + $0x50] sm:$0xff] 0.0
      %1583 = vst [vmem:[#allocation2 + $0x58] sm:$0x3] 0.0
      %1584 = vst [vmem:[#allocation2 + $0x60] sm:$0xff] 0.0
      %1585 = vst [vmem:[#allocation2 + $0x68] sm:$0x3] 0.0
      %1586 = vst [vmem:[#allocation2 + $0x70] sm:$0xff] 0.0
      %1587 = vst [vmem:[#allocation2 + $0x78] sm:$0x3] 0.0
      %1588 = vst [vmem:[#allocation2 + $0x80] sm:$0xff] 0.0
      %1589 = vst [vmem:[#allocation2 + $0x88] sm:$0x3] 0.0
      %1590 = vst [vmem:[#allocation2 + $0x90] sm:$0xff] 0.0
      %1591 = vst [vmem:[#allocation2 + $0x98] sm:$0x3] 0.0
      %s1592 = scalar_lea.vmem [#allocation2], 16
      %1593 = vst [vmem:[%s1592 + $0x1] sm:$0xff] %v1564
      %1594 = vst [vmem:[%s1592 + $0x11] sm:$0xff] %v1565
      %1595 = vst [vmem:[%s1592 + $0x21] sm:$0xff] %v1566
      %1596 = vst [vmem:[%s1592 + $0x31] sm:$0xff] %v1567
      %1597 = vst [vmem:[%s1592 + $0x41] sm:$0xff] %v1568
      %1598 = vst [vmem:[%s1592 + $0x51] sm:$0xff] %v1569
      %1599 = vst [vmem:[%s1592 + $0x61] sm:$0xff] %v1570
      %1600 = vst [vmem:[%s1592 + $0x71] sm:$0xff] %v1571
      %v1601 = vld [vmem:[#allocation2] sm:$0xff]
      %v1602 = vld [vmem:[#allocation2 + $0x10] sm:$0xff]
      %v1603 = vld [vmem:[#allocation2 + $0x20] sm:$0xff]
      %v1604 = vld [vmem:[#allocation2 + $0x30] sm:$0xff]
      %v1605 = vld [vmem:[#allocation2 + $0x40] sm:$0xff]
      %v1606 = vld [vmem:[#allocation2 + $0x50] sm:$0xff]
      %v1607 = vld [vmem:[#allocation2 + $0x60] sm:$0xff]
      %v1608 = vld [vmem:[#allocation2 + $0x70] sm:$0xff]
      %v1609 = vpack.c.bf16 %v1602, %v1601
      %v1610 = vpack.c.bf16 %v1604, %v1603
      %v1611 = vpack.c.bf16 %v1606, %v1605
      %v1612 = vpack.c.bf16 %v1608, %v1607
      %v1613 = vld [vmem:[%s2] sm:$0xf]
      %v1614 = vld [vmem:[%s2 + $0x4] sm:$0xf]
      %v1615 = vld [vmem:[%s2 + $0x8] sm:$0xf]
      %v1616 = vld [vmem:[%s2 + $0xc] sm:$0xf]
      %v1617 = vld [vmem:[%s2 + $0x10] sm:$0xf]
      %v1618 = vld [vmem:[%s2 + $0x14] sm:$0xf]
      %v1619 = vld [vmem:[%s2 + $0x18] sm:$0xf]
      %v1620 = vld [vmem:[%s2 + $0x1c] sm:$0xf]
      %v1621 = vld [vmem:[%s2 + $0x20] sm:$0xf]
      %v1622 = vld [vmem:[%s2 + $0x24] sm:$0xf]
      %v1623 = vld [vmem:[%s2 + $0x28] sm:$0xf]
      %v1624 = vld [vmem:[%s2 + $0x2c] sm:$0xf]
      %v1625 = vld [vmem:[%s2 + $0x30] sm:$0xf]
      %v1626 = vld [vmem:[%s2 + $0x34] sm:$0xf]
      %v1627 = vld [vmem:[%s2 + $0x38] sm:$0xf]
      %v1628 = vld [vmem:[%s2 + $0x3c] sm:$0xf]
      %v1629 = vld [vmem:[#allocation2 + $0x1] sm:$0xff]
      %v1630 = vld [vmem:[#allocation2 + $0x11] sm:$0xff]
      %v1631 = vld [vmem:[#allocation2 + $0x21] sm:$0xff]
      %v1632 = vld [vmem:[#allocation2 + $0x31] sm:$0xff]
      %v1633 = vld [vmem:[#allocation2 + $0x41] sm:$0xff]
      %v1634 = vld [vmem:[#allocation2 + $0x51] sm:$0xff]
      %v1635 = vld [vmem:[#allocation2 + $0x61] sm:$0xff]
      %v1636 = vld [vmem:[#allocation2 + $0x71] sm:$0xff]
      %v1637 = vpack.c.bf16 %v1630, %v1629
      %v1638 = vpack.c.bf16 %v1632, %v1631
      %v1639 = vpack.c.bf16 %v1634, %v1633
      %v1640 = vpack.c.bf16 %v1636, %v1635
      %s1641 = scalar_lea.vmem %s2, 64
      %v1642 = vld [vmem:[%s1641] sm:$0xf]
      %v1643 = vld [vmem:[%s1641 + $0x4] sm:$0xf]
      %v1644 = vld [vmem:[%s1641 + $0x8] sm:$0xf]
      %v1645 = vld [vmem:[%s1641 + $0xc] sm:$0xf]
      %v1646 = vld [vmem:[%s1641 + $0x10] sm:$0xf]
      %v1647 = vld [vmem:[%s1641 + $0x14] sm:$0xf]
      %v1648 = vld [vmem:[%s1641 + $0x18] sm:$0xf]
      %v1649 = vld [vmem:[%s1641 + $0x1c] sm:$0xf]
      %v1650 = vld [vmem:[%s1641 + $0x20] sm:$0xf]
      %v1651 = vld [vmem:[%s1641 + $0x24] sm:$0xf]
      %v1652 = vld [vmem:[%s1641 + $0x28] sm:$0xf]
      %v1653 = vld [vmem:[%s1641 + $0x2c] sm:$0xf]
      %v1654 = vld [vmem:[%s1641 + $0x30] sm:$0xf]
      %v1655 = vld [vmem:[%s1641 + $0x34] sm:$0xf]
      %v1656 = vld [vmem:[%s1641 + $0x38] sm:$0xf]
      %v1657 = vld [vmem:[%s1641 + $0x3c] sm:$0xf]
      %v1674 = vunpack.c.l.b16 %v1642
      %v1675 = vunpack.c.l.b16 %v1643
      %v1676 = vunpack.c.l.b16 %v1644
      %v1677 = vunpack.c.l.b16 %v1645
      %v1678 = vunpack.c.l.b16 %v1646
      %v1679 = vunpack.c.l.b16 %v1647
      %v1680 = vunpack.c.l.b16 %v1648
      %v1681 = vunpack.c.l.b16 %v1649
      %v1682 = vunpack.c.l.b16 %v1650
      %v1683 = vunpack.c.l.b16 %v1651
      %v1684 = vunpack.c.l.b16 %v1652
      %v1685 = vunpack.c.l.b16 %v1653
      %v1686 = vunpack.c.l.b16 %v1654
      %v1687 = vunpack.c.l.b16 %v1655
      %v1688 = vunpack.c.l.b16 %v1656
      %v1689 = vunpack.c.l.b16 %v1657
      %v1690 = vpack.c.b16 %v1675, %v1674
      %v1691 = vpack.c.b16 %v1677, %v1676
      %v1692 = vpack.c.b16 %v1679, %v1678
      %v1693 = vpack.c.b16 %v1681, %v1680
      %v1694 = vpack.c.b16 %v1683, %v1682
      %v1695 = vpack.c.b16 %v1685, %v1684
      %v1696 = vpack.c.b16 %v1687, %v1686
      %v1697 = vpack.c.b16 %v1689, %v1688
      %1706 = vmatprep.subr.bf16.mxu0 0
      %1707 = vmatpush1.bf16.msra.mxu0 %v1697
      %1708 = vmatprep.subr.bf16.mxu0 0
      %1709 = vmatpush1.bf16.msra.mxu0 %v1696
      %1710 = vmatprep.subr.bf16.mxu0 0
      %1711 = vmatpush1.bf16.msra.mxu0 %v1695
      %1712 = vmatprep.subr.bf16.mxu0 0
      %1713 = vmatpush1.bf16.msra.mxu0 %v1694
      %1714 = vmatprep.subr.bf16.mxu0 0
      %1715 = vmatpush1.bf16.msra.mxu0 %v1693
      %1716 = vmatprep.subr.bf16.mxu0 0
      %1717 = vmatpush1.bf16.msra.mxu0 %v1692
      %1718 = vmatprep.subr.bf16.mxu0 0
      %1719 = vmatpush1.bf16.msra.mxu0 %v1691
      %1720 = vmatprep.subr.bf16.mxu0 0
      %1721 = vmatpush1.bf16.msra.mxu0 %v1690
      %1722 = vmatprep.subr.bf16.mxu0 0
      %1723 = vmatpush2.bf16.msra.mxu0 0
      %1724 = vmatprep.subr.bf16.mxu0 0
      %1725 = vmatpush2.bf16.msra.mxu0 0
      %1726 = vmatprep.subr.bf16.mxu0 0
      %1727 = vmatpush2.bf16.msra.mxu0 0
      %1728 = vmatprep.subr.bf16.mxu0 0
      %1729 = vmatpush2.bf16.msra.mxu0 0
      %1730 = vmatprep.subr.bf16.mxu0 0
      %1731 = vmatpush2.bf16.msra.mxu0 0
      %1732 = vmatprep.subr.bf16.mxu0 0
      %1733 = vmatpush2.bf16.msra.mxu0 0
      %1734 = vmatprep.subr.bf16.mxu0 0
      %1735 = vmatpush2.bf16.msra.mxu0 0
      %1736 = vmatprep.subr.bf16.mxu0 0
      %1737 = vmatpush2.bf16.msra.mxu0 0
      %1738 = vmatprep.mubr.bf16.mxu0 0
      %1739 = vmatmul.mubr.bf16.gmra.mxu0 %v1637
      %v1740 = vpop.f32.mrf.mxu0
      %v1741 = vadd.f32 0.0, %v1740
      %v1742 = vpop.f32.mrf.mxu0
      %v1743 = vpop.f32.mrf.mxu0
      %v1744 = vadd.f32 0.0, %v1743
      %v1745 = vpop.f32.mrf.mxu0
      %1746 = vmatprep.mubr.bf16.mxu0 0
      %1747 = vmatmul.mubr.bf16.gmra.mxu0 %v1638
      %v1748 = vpop.f32.mrf.mxu0
      %v1749 = vadd.f32 0.0, %v1748
      %v1750 = vpop.f32.mrf.mxu0
      %v1751 = vpop.f32.mrf.mxu0
      %v1752 = vadd.f32 0.0, %v1751
      %v1753 = vpop.f32.mrf.mxu0
      %1754 = vmatprep.mubr.bf16.mxu0 0
      %1755 = vmatmul.mubr.bf16.gmra.mxu0 %v1639
      %v1756 = vpop.f32.mrf.mxu0
      %v1757 = vadd.f32 0.0, %v1756
      %v1758 = vpop.f32.mrf.mxu0
      %v1759 = vpop.f32.mrf.mxu0
      %v1760 = vadd.f32 0.0, %v1759
      %v1761 = vpop.f32.mrf.mxu0
      %1762 = vmatprep.mubr.bf16.mxu0 0
      %1763 = vmatmul.mubr.bf16.gmra.mxu0 %v1640
      %v1764 = vpop.f32.mrf.mxu0
      %v1765 = vadd.f32 0.0, %v1764
      %v1766 = vpop.f32.mrf.mxu0
      %v1767 = vpop.f32.mrf.mxu0
      %v1768 = vadd.f32 0.0, %v1767
      %v1769 = vpop.f32.mrf.mxu0
      %1770 = vdwg.mxu0
      %v1787 = vunpack.c.l.b16 %v1613
      %v1788 = vunpack.c.l.b16 %v1614
      %v1789 = vunpack.c.l.b16 %v1615
      %v1790 = vunpack.c.l.b16 %v1616
      %v1791 = vunpack.c.l.b16 %v1617
      %v1792 = vunpack.c.l.b16 %v1618
      %v1793 = vunpack.c.l.b16 %v1619
      %v1794 = vunpack.c.l.b16 %v1620
      %v1795 = vunpack.c.l.b16 %v1621
      %v1796 = vunpack.c.l.b16 %v1622
      %v1797 = vunpack.c.l.b16 %v1623
      %v1798 = vunpack.c.l.b16 %v1624
      %v1799 = vunpack.c.l.b16 %v1625
      %v1800 = vunpack.c.l.b16 %v1626
      %v1801 = vunpack.c.l.b16 %v1627
      %v1802 = vunpack.c.l.b16 %v1628
      %v1803 = vpack.c.b16 %v1788, %v1787
      %v1804 = vpack.c.b16 %v1790, %v1789
      %v1805 = vpack.c.b16 %v1792, %v1791
      %v1806 = vpack.c.b16 %v1794, %v1793
      %v1807 = vpack.c.b16 %v1796, %v1795
      %v1808 = vpack.c.b16 %v1798, %v1797
      %v1809 = vpack.c.b16 %v1800, %v1799
      %v1810 = vpack.c.b16 %v1802, %v1801
      %1819 = vmatprep.subr.bf16.mxu0 0
      %1820 = vmatpush1.bf16.msra.mxu0 %v1810
      %1821 = vmatprep.subr.bf16.mxu0 0
      %1822 = vmatpush1.bf16.msra.mxu0 %v1809
      %1823 = vmatprep.subr.bf16.mxu0 0
      %1824 = vmatpush1.bf16.msra.mxu0 %v1808
      %1825 = vmatprep.subr.bf16.mxu0 0
      %1826 = vmatpush1.bf16.msra.mxu0 %v1807
      %1827 = vmatprep.subr.bf16.mxu0 0
      %1828 = vmatpush1.bf16.msra.mxu0 %v1806
      %1829 = vmatprep.subr.bf16.mxu0 0
      %1830 = vmatpush1.bf16.msra.mxu0 %v1805
      %1831 = vmatprep.subr.bf16.mxu0 0
      %1832 = vmatpush1.bf16.msra.mxu0 %v1804
      %1833 = vmatprep.subr.bf16.mxu0 0
      %1834 = vmatpush1.bf16.msra.mxu0 %v1803
      %1835 = vmatprep.subr.bf16.mxu0 0
      %1836 = vmatpush2.bf16.msra.mxu0 0
      %1837 = vmatprep.subr.bf16.mxu0 0
      %1838 = vmatpush2.bf16.msra.mxu0 0
      %1839 = vmatprep.subr.bf16.mxu0 0
      %1840 = vmatpush2.bf16.msra.mxu0 0
      %1841 = vmatprep.subr.bf16.mxu0 0
      %1842 = vmatpush2.bf16.msra.mxu0 0
      %1843 = vmatprep.subr.bf16.mxu0 0
      %1844 = vmatpush2.bf16.msra.mxu0 0
      %1845 = vmatprep.subr.bf16.mxu0 0
      %1846 = vmatpush2.bf16.msra.mxu0 0
      %1847 = vmatprep.subr.bf16.mxu0 0
      %1848 = vmatpush2.bf16.msra.mxu0 0
      %1849 = vmatprep.subr.bf16.mxu0 0
      %1850 = vmatpush2.bf16.msra.mxu0 0
      %1851 = vmatprep.mubr.bf16.mxu0 0
      %1852 = vmatmul.mubr.bf16.gmra.mxu0 %v1609
      %v1853 = vpop.f32.mrf.mxu0
      %v1854 = vadd.f32 %v1741, %v1853
      %v1855 = vpop.f32.mrf.mxu0
      %v1856 = vpop.f32.mrf.mxu0
      %v1857 = vadd.f32 %v1744, %v1856
      %v1858 = vpop.f32.mrf.mxu0
      %1859 = vmatprep.mubr.bf16.mxu0 0
      %1860 = vmatmul.mubr.bf16.gmra.mxu0 %v1610
      %v1861 = vpop.f32.mrf.mxu0
      %v1862 = vadd.f32 %v1749, %v1861
      %v1863 = vpop.f32.mrf.mxu0
      %v1864 = vpop.f32.mrf.mxu0
      %v1865 = vadd.f32 %v1752, %v1864
      %v1866 = vpop.f32.mrf.mxu0
      %1867 = vmatprep.mubr.bf16.mxu0 0
      %1868 = vmatmul.mubr.bf16.gmra.mxu0 %v1611
      %v1869 = vpop.f32.mrf.mxu0
      %v1870 = vadd.f32 %v1757, %v1869
      %v1871 = vpop.f32.mrf.mxu0
      %v1872 = vpop.f32.mrf.mxu0
      %v1873 = vadd.f32 %v1760, %v1872
      %v1874 = vpop.f32.mrf.mxu0
      %1875 = vmatprep.mubr.bf16.mxu0 0
      %1876 = vmatmul.mubr.bf16.gmra.mxu0 %v1612
      %v1877 = vpop.f32.mrf.mxu0
      %v1878 = vadd.f32 %v1765, %v1877
      %v1879 = vpop.f32.mrf.mxu0
      %v1880 = vpop.f32.mrf.mxu0
      %v1881 = vadd.f32 %v1768, %v1880
      %v1882 = vpop.f32.mrf.mxu0
      %1883 = vdwg.mxu0
      %v1884 = vld [vmem:[#allocation2 + $0x2] sm:$0xff]
      %v1885 = vld [vmem:[#allocation2 + $0x12] sm:$0xff]
      %v1886 = vld [vmem:[#allocation2 + $0x22] sm:$0xff]
      %v1887 = vld [vmem:[#allocation2 + $0x32] sm:$0xff]
      %v1888 = vld [vmem:[#allocation2 + $0x42] sm:$0xff]
      %v1889 = vld [vmem:[#allocation2 + $0x52] sm:$0xff]
      %v1890 = vld [vmem:[#allocation2 + $0x62] sm:$0xff]
      %v1891 = vld [vmem:[#allocation2 + $0x72] sm:$0xff]
      %v1892 = vpack.c.bf16 %v1885, %v1884
      %v1893 = vpack.c.bf16 %v1887, %v1886
      %v1894 = vpack.c.bf16 %v1889, %v1888
      %v1895 = vpack.c.bf16 %v1891, %v1890
      %s1896 = scalar_lea.vmem %s2, 128
      %v1897 = vld [vmem:[%s1896] sm:$0xf]
      %v1898 = vld [vmem:[%s1896 + $0x4] sm:$0xf]
      %v1899 = vld [vmem:[%s1896 + $0x8] sm:$0xf]
      %v1900 = vld [vmem:[%s1896 + $0xc] sm:$0xf]
      %v1901 = vld [vmem:[%s1896 + $0x10] sm:$0xf]
      %v1902 = vld [vmem:[%s1896 + $0x14] sm:$0xf]
      %v1903 = vld [vmem:[%s1896 + $0x18] sm:$0xf]
      %v1904 = vld [vmem:[%s1896 + $0x1c] sm:$0xf]
      %v1905 = vld [vmem:[%s1896 + $0x20] sm:$0xf]
      %v1906 = vld [vmem:[%s1896 + $0x24] sm:$0xf]
      %v1907 = vld [vmem:[%s1896 + $0x28] sm:$0xf]
      %v1908 = vld [vmem:[%s1896 + $0x2c] sm:$0xf]
      %v1909 = vld [vmem:[%s1896 + $0x30] sm:$0xf]
      %v1910 = vld [vmem:[%s1896 + $0x34] sm:$0xf]
      %v1911 = vld [vmem:[%s1896 + $0x38] sm:$0xf]
      %v1912 = vld [vmem:[%s1896 + $0x3c] sm:$0xf]
      %v1929 = vunpack.c.l.b16 %v1897
      %v1930 = vunpack.c.l.b16 %v1898
      %v1931 = vunpack.c.l.b16 %v1899
      %v1932 = vunpack.c.l.b16 %v1900
      %v1933 = vunpack.c.l.b16 %v1901
      %v1934 = vunpack.c.l.b16 %v1902
      %v1935 = vunpack.c.l.b16 %v1903
      %v1936 = vunpack.c.l.b16 %v1904
      %v1937 = vunpack.c.l.b16 %v1905
      %v1938 = vunpack.c.l.b16 %v1906
      %v1939 = vunpack.c.l.b16 %v1907
      %v1940 = vunpack.c.l.b16 %v1908
      %v1941 = vunpack.c.l.b16 %v1909
      %v1942 = vunpack.c.l.b16 %v1910
      %v1943 = vunpack.c.l.b16 %v1911
      %v1944 = vunpack.c.l.b16 %v1912
      %v1945 = vpack.c.b16 %v1930, %v1929
      %v1946 = vpack.c.b16 %v1932, %v1931
      %v1947 = vpack.c.b16 %v1934, %v1933
      %v1948 = vpack.c.b16 %v1936, %v1935
      %v1949 = vpack.c.b16 %v1938, %v1937
      %v1950 = vpack.c.b16 %v1940, %v1939
      %v1951 = vpack.c.b16 %v1942, %v1941
      %v1952 = vpack.c.b16 %v1944, %v1943
      %1961 = vmatprep.subr.bf16.mxu0 0
      %1962 = vmatpush1.bf16.msra.mxu0 %v1952
      %1963 = vmatprep.subr.bf16.mxu0 0
      %1964 = vmatpush1.bf16.msra.mxu0 %v1951
      %1965 = vmatprep.subr.bf16.mxu0 0
      %1966 = vmatpush1.bf16.msra.mxu0 %v1950
      %1967 = vmatprep.subr.bf16.mxu0 0
      %1968 = vmatpush1.bf16.msra.mxu0 %v1949
      %1969 = vmatprep.subr.bf16.mxu0 0
      %1970 = vmatpush1.bf16.msra.mxu0 %v1948
      %1971 = vmatprep.subr.bf16.mxu0 0
      %1972 = vmatpush1.bf16.msra.mxu0 %v1947
      %1973 = vmatprep.subr.bf16.mxu0 0
      %1974 = vmatpush1.bf16.msra.mxu0 %v1946
      %1975 = vmatprep.subr.bf16.mxu0 0
      %1976 = vmatpush1.bf16.msra.mxu0 %v1945
      %1977 = vmatprep.subr.bf16.mxu0 0
      %1978 = vmatpush2.bf16.msra.mxu0 0
      %1979 = vmatprep.subr.bf16.mxu0 0
      %1980 = vmatpush2.bf16.msra.mxu0 0
      %1981 = vmatprep.subr.bf16.mxu0 0
      %1982 = vmatpush2.bf16.msra.mxu0 0
      %1983 = vmatprep.subr.bf16.mxu0 0
      %1984 = vmatpush2.bf16.msra.mxu0 0
      %1985 = vmatprep.subr.bf16.mxu0 0
      %1986 = vmatpush2.bf16.msra.mxu0 0
      %1987 = vmatprep.subr.bf16.mxu0 0
      %1988 = vmatpush2.bf16.msra.mxu0 0
      %1989 = vmatprep.subr.bf16.mxu0 0
      %1990 = vmatpush2.bf16.msra.mxu0 0
      %1991 = vmatprep.subr.bf16.mxu0 0
      %1992 = vmatpush2.bf16.msra.mxu0 0
      %1993 = vmatprep.mubr.bf16.mxu0 0
      %1994 = vmatmul.mubr.bf16.gmra.mxu0 %v1892
      %v1995 = vpop.f32.mrf.mxu0
      %v1996 = vadd.f32 0.0, %v1995
      %v1997 = vpop.f32.mrf.mxu0
      %v1998 = vpop.f32.mrf.mxu0
      %v1999 = vadd.f32 0.0, %v1998
      %v2000 = vpop.f32.mrf.mxu0
      %2001 = vmatprep.mubr.bf16.mxu0 0
      %2002 = vmatmul.mubr.bf16.gmra.mxu0 %v1893
      %v2003 = vpop.f32.mrf.mxu0
      %v2004 = vadd.f32 0.0, %v2003
      %v2005 = vpop.f32.mrf.mxu0
      %v2006 = vpop.f32.mrf.mxu0
      %v2007 = vadd.f32 0.0, %v2006
      %v2008 = vpop.f32.mrf.mxu0
      %2009 = vmatprep.mubr.bf16.mxu0 0
      %2010 = vmatmul.mubr.bf16.gmra.mxu0 %v1894
      %v2011 = vpop.f32.mrf.mxu0
      %v2012 = vadd.f32 0.0, %v2011
      %v2013 = vpop.f32.mrf.mxu0
      %v2014 = vpop.f32.mrf.mxu0
      %v2015 = vadd.f32 0.0, %v2014
      %v2016 = vpop.f32.mrf.mxu0
      %2017 = vmatprep.mubr.bf16.mxu0 0
      %2018 = vmatmul.mubr.bf16.gmra.mxu0 %v1895
      %v2019 = vpop.f32.mrf.mxu0
      %v2020 = vadd.f32 0.0, %v2019
      %v2021 = vpop.f32.mrf.mxu0
      %v2022 = vpop.f32.mrf.mxu0
      %v2023 = vadd.f32 0.0, %v2022
      %v2024 = vpop.f32.mrf.mxu0
      %2025 = vdwg.mxu0
      %v2026 = vadd.f32 %v1854, %v1996
      %v2027 = vadd.f32 %v1857, %v1999
      %v2028 = vadd.f32 %v1862, %v2004
      %v2029 = vadd.f32 %v1865, %v2007
      %v2030 = vadd.f32 %v1870, %v2012
      %v2031 = vadd.f32 %v1873, %v2015
      %v2032 = vadd.f32 %v1878, %v2020
      %v2033 = vadd.f32 %v1881, %v2023
      %v2034 = vld [vmem:[%s1592] sm:$0xff]
      %v2035 = vld [vmem:[%s1592 + $0x10] sm:$0xff]
      %v2036 = vld [vmem:[%s1592 + $0x20] sm:$0xff]
      %v2037 = vld [vmem:[%s1592 + $0x30] sm:$0xff]
      %v2038 = vld [vmem:[%s1592 + $0x40] sm:$0xff]
      %v2039 = vld [vmem:[%s1592 + $0x50] sm:$0xff]
      %v2040 = vld [vmem:[%s1592 + $0x60] sm:$0xff]
      %v2041 = vld [vmem:[%s1592 + $0x70] sm:$0xff]
      %v2042 = vpack.c.bf16 %v2035, %v2034
      %v2043 = vpack.c.bf16 %v2037, %v2036
      %v2044 = vpack.c.bf16 %v2039, %v2038
      %v2045 = vpack.c.bf16 %v2041, %v2040
      %s2046 = scalar_lea.vmem %s2, 192
      %v2047 = vld [vmem:[%s2046] sm:$0xf]
      %v2048 = vld [vmem:[%s2046 + $0x4] sm:$0xf]
      %v2049 = vld [vmem:[%s2046 + $0x8] sm:$0xf]
      %v2050 = vld [vmem:[%s2046 + $0xc] sm:$0xf]
      %v2051 = vld [vmem:[%s2046 + $0x10] sm:$0xf]
      %v2052 = vld [vmem:[%s2046 + $0x14] sm:$0xf]
      %v2053 = vld [vmem:[%s2046 + $0x18] sm:$0xf]
      %v2054 = vld [vmem:[%s2046 + $0x1c] sm:$0xf]
      %v2055 = vld [vmem:[%s2046 + $0x20] sm:$0xf]
      %v2056 = vld [vmem:[%s2046 + $0x24] sm:$0xf]
      %v2057 = vld [vmem:[%s2046 + $0x28] sm:$0xf]
      %v2058 = vld [vmem:[%s2046 + $0x2c] sm:$0xf]
      %v2059 = vld [vmem:[%s2046 + $0x30] sm:$0xf]
      %v2060 = vld [vmem:[%s2046 + $0x34] sm:$0xf]
      %v2061 = vld [vmem:[%s2046 + $0x38] sm:$0xf]
      %v2062 = vld [vmem:[%s2046 + $0x3c] sm:$0xf]
      %v2079 = vunpack.c.l.b16 %v2047
      %v2080 = vunpack.c.l.b16 %v2048
      %v2081 = vunpack.c.l.b16 %v2049
      %v2082 = vunpack.c.l.b16 %v2050
      %v2083 = vunpack.c.l.b16 %v2051
      %v2084 = vunpack.c.l.b16 %v2052
      %v2085 = vunpack.c.l.b16 %v2053
      %v2086 = vunpack.c.l.b16 %v2054
      %v2087 = vunpack.c.l.b16 %v2055
      %v2088 = vunpack.c.l.b16 %v2056
      %v2089 = vunpack.c.l.b16 %v2057
      %v2090 = vunpack.c.l.b16 %v2058
      %v2091 = vunpack.c.l.b16 %v2059
      %v2092 = vunpack.c.l.b16 %v2060
      %v2093 = vunpack.c.l.b16 %v2061
      %v2094 = vunpack.c.l.b16 %v2062
      %v2095 = vpack.c.b16 %v2080, %v2079
      %v2096 = vpack.c.b16 %v2082, %v2081
      %v2097 = vpack.c.b16 %v2084, %v2083
      %v2098 = vpack.c.b16 %v2086, %v2085
      %v2099 = vpack.c.b16 %v2088, %v2087
      %v2100 = vpack.c.b16 %v2090, %v2089
      %v2101 = vpack.c.b16 %v2092, %v2091
      %v2102 = vpack.c.b16 %v2094, %v2093
      %2111 = vmatprep.subr.bf16.mxu0 0
      %2112 = vmatpush1.bf16.msra.mxu0 %v2102
      %2113 = vmatprep.subr.bf16.mxu0 0
      %2114 = vmatpush1.bf16.msra.mxu0 %v2101
      %2115 = vmatprep.subr.bf16.mxu0 0
      %2116 = vmatpush1.bf16.msra.mxu0 %v2100
      %2117 = vmatprep.subr.bf16.mxu0 0
      %2118 = vmatpush1.bf16.msra.mxu0 %v2099
      %2119 = vmatprep.subr.bf16.mxu0 0
      %2120 = vmatpush1.bf16.msra.mxu0 %v2098
      %2121 = vmatprep.subr.bf16.mxu0 0
      %2122 = vmatpush1.bf16.msra.mxu0 %v2097
      %2123 = vmatprep.subr.bf16.mxu0 0
      %2124 = vmatpush1.bf16.msra.mxu0 %v2096
      %2125 = vmatprep.subr.bf16.mxu0 0
      %2126 = vmatpush1.bf16.msra.mxu0 %v2095
      %2127 = vmatprep.subr.bf16.mxu0 0
      %2128 = vmatpush2.bf16.msra.mxu0 0
      %2129 = vmatprep.subr.bf16.mxu0 0
      %2130 = vmatpush2.bf16.msra.mxu0 0
      %2131 = vmatprep.subr.bf16.mxu0 0
      %2132 = vmatpush2.bf16.msra.mxu0 0
      %2133 = vmatprep.subr.bf16.mxu0 0
      %2134 = vmatpush2.bf16.msra.mxu0 0
      %2135 = vmatprep.subr.bf16.mxu0 0
      %2136 = vmatpush2.bf16.msra.mxu0 0
      %2137 = vmatprep.subr.bf16.mxu0 0
      %2138 = vmatpush2.bf16.msra.mxu0 0
      %2139 = vmatprep.subr.bf16.mxu0 0
      %2140 = vmatpush2.bf16.msra.mxu0 0
      %2141 = vmatprep.subr.bf16.mxu0 0
      %2142 = vmatpush2.bf16.msra.mxu0 0
      %2143 = vmatprep.mubr.bf16.mxu0 0
      %2144 = vmatmul.mubr.bf16.gmra.mxu0 %v2042
      %v2145 = vpop.f32.mrf.mxu0
      %v2146 = vadd.f32 0.0, %v2145
      %v2147 = vpop.f32.mrf.mxu0
      %v2148 = vpop.f32.mrf.mxu0
      %v2149 = vadd.f32 0.0, %v2148
      %v2150 = vpop.f32.mrf.mxu0
      %2151 = vmatprep.mubr.bf16.mxu0 0
      %2152 = vmatmul.mubr.bf16.gmra.mxu0 %v2043
      %v2153 = vpop.f32.mrf.mxu0
      %v2154 = vadd.f32 0.0, %v2153
      %v2155 = vpop.f32.mrf.mxu0
      %v2156 = vpop.f32.mrf.mxu0
      %v2157 = vadd.f32 0.0, %v2156
      %v2158 = vpop.f32.mrf.mxu0
      %2159 = vmatprep.mubr.bf16.mxu0 0
      %2160 = vmatmul.mubr.bf16.gmra.mxu0 %v2044
      %v2161 = vpop.f32.mrf.mxu0
      %v2162 = vadd.f32 0.0, %v2161
      %v2163 = vpop.f32.mrf.mxu0
      %v2164 = vpop.f32.mrf.mxu0
      %v2165 = vadd.f32 0.0, %v2164
      %v2166 = vpop.f32.mrf.mxu0
      %2167 = vmatprep.mubr.bf16.mxu0 0
      %2168 = vmatmul.mubr.bf16.gmra.mxu0 %v2045
      %v2169 = vpop.f32.mrf.mxu0
      %v2170 = vadd.f32 0.0, %v2169
      %v2171 = vpop.f32.mrf.mxu0
      %v2172 = vpop.f32.mrf.mxu0
      %v2173 = vadd.f32 0.0, %v2172
      %v2174 = vpop.f32.mrf.mxu0
      %2175 = vdwg.mxu0
      %v2176 = vadd.f32 %v2026, %v2146
      %v2177 = vadd.f32 %v2027, %v2149
      %v2178 = vadd.f32 %v2028, %v2154
      %v2179 = vadd.f32 %v2029, %v2157
      %v2180 = vadd.f32 %v2030, %v2162
      %v2181 = vadd.f32 %v2031, %v2165
      %v2182 = vadd.f32 %v2032, %v2170
      %v2183 = vadd.f32 %v2033, %v2173
      %v2184 = vld [vmem:[%s1592 + $0x1] sm:$0xff]
      %v2185 = vld [vmem:[%s1592 + $0x11] sm:$0xff]
      %v2186 = vld [vmem:[%s1592 + $0x21] sm:$0xff]
      %v2187 = vld [vmem:[%s1592 + $0x31] sm:$0xff]
      %v2188 = vld [vmem:[%s1592 + $0x41] sm:$0xff]
      %v2189 = vld [vmem:[%s1592 + $0x51] sm:$0xff]
      %v2190 = vld [vmem:[%s1592 + $0x61] sm:$0xff]
      %v2191 = vld [vmem:[%s1592 + $0x71] sm:$0xff]
      %v2192 = vpack.c.bf16 %v2185, %v2184
      %v2193 = vpack.c.bf16 %v2187, %v2186
      %v2194 = vpack.c.bf16 %v2189, %v2188
      %v2195 = vpack.c.bf16 %v2191, %v2190
      %s2196 = scalar_lea.vmem %s2, 256
      %v2197 = vld [vmem:[%s2196] sm:$0xf]
      %v2198 = vld [vmem:[%s2196 + $0x4] sm:$0xf]
      %v2199 = vld [vmem:[%s2196 + $0x8] sm:$0xf]
      %v2200 = vld [vmem:[%s2196 + $0xc] sm:$0xf]
      %v2201 = vld [vmem:[%s2196 + $0x10] sm:$0xf]
      %v2202 = vld [vmem:[%s2196 + $0x14] sm:$0xf]
      %v2203 = vld [vmem:[%s2196 + $0x18] sm:$0xf]
      %v2204 = vld [vmem:[%s2196 + $0x1c] sm:$0xf]
      %v2205 = vld [vmem:[%s2196 + $0x20] sm:$0xf]
      %v2206 = vld [vmem:[%s2196 + $0x24] sm:$0xf]
      %v2207 = vld [vmem:[%s2196 + $0x28] sm:$0xf]
      %v2208 = vld [vmem:[%s2196 + $0x2c] sm:$0xf]
      %v2209 = vld [vmem:[%s2196 + $0x30] sm:$0xf]
      %v2210 = vld [vmem:[%s2196 + $0x34] sm:$0xf]
      %v2211 = vld [vmem:[%s2196 + $0x38] sm:$0xf]
      %v2212 = vld [vmem:[%s2196 + $0x3c] sm:$0xf]
      %v2229 = vunpack.c.l.b16 %v2197
      %v2230 = vunpack.c.l.b16 %v2198
      %v2231 = vunpack.c.l.b16 %v2199
      %v2232 = vunpack.c.l.b16 %v2200
      %v2233 = vunpack.c.l.b16 %v2201
      %v2234 = vunpack.c.l.b16 %v2202
      %v2235 = vunpack.c.l.b16 %v2203
      %v2236 = vunpack.c.l.b16 %v2204
      %v2237 = vunpack.c.l.b16 %v2205
      %v2238 = vunpack.c.l.b16 %v2206
      %v2239 = vunpack.c.l.b16 %v2207
      %v2240 = vunpack.c.l.b16 %v2208
      %v2241 = vunpack.c.l.b16 %v2209
      %v2242 = vunpack.c.l.b16 %v2210
      %v2243 = vunpack.c.l.b16 %v2211
      %v2244 = vunpack.c.l.b16 %v2212
      %v2245 = vpack.c.b16 %v2230, %v2229
      %v2246 = vpack.c.b16 %v2232, %v2231
      %v2247 = vpack.c.b16 %v2234, %v2233
      %v2248 = vpack.c.b16 %v2236, %v2235
      %v2249 = vpack.c.b16 %v2238, %v2237
      %v2250 = vpack.c.b16 %v2240, %v2239
      %v2251 = vpack.c.b16 %v2242, %v2241
      %v2252 = vpack.c.b16 %v2244, %v2243
      %2261 = vmatprep.subr.bf16.mxu0 0
      %2262 = vmatpush1.bf16.msra.mxu0 %v2252
      %2263 = vmatprep.subr.bf16.mxu0 0
      %2264 = vmatpush1.bf16.msra.mxu0 %v2251
      %2265 = vmatprep.subr.bf16.mxu0 0
      %2266 = vmatpush1.bf16.msra.mxu0 %v2250
      %2267 = vmatprep.subr.bf16.mxu0 0
      %2268 = vmatpush1.bf16.msra.mxu0 %v2249
      %2269 = vmatprep.subr.bf16.mxu0 0
      %2270 = vmatpush1.bf16.msra.mxu0 %v2248
      %2271 = vmatprep.subr.bf16.mxu0 0
      %2272 = vmatpush1.bf16.msra.mxu0 %v2247
      %2273 = vmatprep.subr.bf16.mxu0 0
      %2274 = vmatpush1.bf16.msra.mxu0 %v2246
      %2275 = vmatprep.subr.bf16.mxu0 0
      %2276 = vmatpush1.bf16.msra.mxu0 %v2245
      %2277 = vmatprep.subr.bf16.mxu0 0
      %2278 = vmatpush2.bf16.msra.mxu0 0
      %2279 = vmatprep.subr.bf16.mxu0 0
      %2280 = vmatpush2.bf16.msra.mxu0 0
      %2281 = vmatprep.subr.bf16.mxu0 0
      %2282 = vmatpush2.bf16.msra.mxu0 0
      %2283 = vmatprep.subr.bf16.mxu0 0
      %2284 = vmatpush2.bf16.msra.mxu0 0
      %2285 = vmatprep.subr.bf16.mxu0 0
      %2286 = vmatpush2.bf16.msra.mxu0 0
      %2287 = vmatprep.subr.bf16.mxu0 0
      %2288 = vmatpush2.bf16.msra.mxu0 0
      %2289 = vmatprep.subr.bf16.mxu0 0
      %2290 = vmatpush2.bf16.msra.mxu0 0
      %2291 = vmatprep.subr.bf16.mxu0 0
      %2292 = vmatpush2.bf16.msra.mxu0 0
      %2293 = vmatprep.mubr.bf16.mxu0 0
      %2294 = vmatmul.mubr.bf16.gmra.mxu0 %v2192
      %v2295 = vpop.f32.mrf.mxu0
      %v2296 = vadd.f32 0.0, %v2295
      %v2297 = vpop.f32.mrf.mxu0
      %v2298 = vpop.f32.mrf.mxu0
      %v2299 = vadd.f32 0.0, %v2298
      %v2300 = vpop.f32.mrf.mxu0
      %2301 = vmatprep.mubr.bf16.mxu0 0
      %2302 = vmatmul.mubr.bf16.gmra.mxu0 %v2193
      %v2303 = vpop.f32.mrf.mxu0
      %v2304 = vadd.f32 0.0, %v2303
      %v2305 = vpop.f32.mrf.mxu0
      %v2306 = vpop.f32.mrf.mxu0
      %v2307 = vadd.f32 0.0, %v2306
      %v2308 = vpop.f32.mrf.mxu0
      %2309 = vmatprep.mubr.bf16.mxu0 0
      %2310 = vmatmul.mubr.bf16.gmra.mxu0 %v2194
      %v2311 = vpop.f32.mrf.mxu0
      %v2312 = vadd.f32 0.0, %v2311
      %v2313 = vpop.f32.mrf.mxu0
      %v2314 = vpop.f32.mrf.mxu0
      %v2315 = vadd.f32 0.0, %v2314
      %v2316 = vpop.f32.mrf.mxu0
      %2317 = vmatprep.mubr.bf16.mxu0 0
      %2318 = vmatmul.mubr.bf16.gmra.mxu0 %v2195
      %v2319 = vpop.f32.mrf.mxu0
      %v2320 = vadd.f32 0.0, %v2319
      %v2321 = vpop.f32.mrf.mxu0
      %v2322 = vpop.f32.mrf.mxu0
      %v2323 = vadd.f32 0.0, %v2322
      %v2324 = vpop.f32.mrf.mxu0
      %2325 = vdwg.mxu0
      %v2326 = vadd.f32 %v2176, %v2296
      %v2327 = vadd.f32 %v2177, %v2299
      %v2328 = vadd.f32 %v2178, %v2304
      %v2329 = vadd.f32 %v2179, %v2307
      %v2330 = vadd.f32 %v2180, %v2312
      %v2331 = vadd.f32 %v2181, %v2315
      %v2332 = vadd.f32 %v2182, %v2320
      %v2333 = vadd.f32 %v2183, %v2323
      %v2334 = vld [vmem:[%s1592 + $0x2] sm:$0xff]
      %v2335 = vld [vmem:[%s1592 + $0x12] sm:$0xff]
      %v2336 = vld [vmem:[%s1592 + $0x22] sm:$0xff]
      %v2337 = vld [vmem:[%s1592 + $0x32] sm:$0xff]
      %v2338 = vld [vmem:[%s1592 + $0x42] sm:$0xff]
      %v2339 = vld [vmem:[%s1592 + $0x52] sm:$0xff]
      %v2340 = vld [vmem:[%s1592 + $0x62] sm:$0xff]
      %v2341 = vld [vmem:[%s1592 + $0x72] sm:$0xff]
      %v2342 = vpack.c.bf16 %v2335, %v2334
      %v2343 = vpack.c.bf16 %v2337, %v2336
      %v2344 = vpack.c.bf16 %v2339, %v2338
      %v2345 = vpack.c.bf16 %v2341, %v2340
      %s2346 = scalar_lea.vmem %s2, 320
      %v2347 = vld [vmem:[%s2346] sm:$0xf]
      %v2348 = vld [vmem:[%s2346 + $0x4] sm:$0xf]
      %v2349 = vld [vmem:[%s2346 + $0x8] sm:$0xf]
      %v2350 = vld [vmem:[%s2346 + $0xc] sm:$0xf]
      %v2351 = vld [vmem:[%s2346 + $0x10] sm:$0xf]
      %v2352 = vld [vmem:[%s2346 + $0x14] sm:$0xf]
      %v2353 = vld [vmem:[%s2346 + $0x18] sm:$0xf]
      %v2354 = vld [vmem:[%s2346 + $0x1c] sm:$0xf]
      %v2355 = vld [vmem:[%s2346 + $0x20] sm:$0xf]
      %v2356 = vld [vmem:[%s2346 + $0x24] sm:$0xf]
      %v2357 = vld [vmem:[%s2346 + $0x28] sm:$0xf]
      %v2358 = vld [vmem:[%s2346 + $0x2c] sm:$0xf]
      %v2359 = vld [vmem:[%s2346 + $0x30] sm:$0xf]
      %v2360 = vld [vmem:[%s2346 + $0x34] sm:$0xf]
      %v2361 = vld [vmem:[%s2346 + $0x38] sm:$0xf]
      %v2362 = vld [vmem:[%s2346 + $0x3c] sm:$0xf]
      %v2379 = vunpack.c.l.b16 %v2347
      %v2380 = vunpack.c.l.b16 %v2348
      %v2381 = vunpack.c.l.b16 %v2349
      %v2382 = vunpack.c.l.b16 %v2350
      %v2383 = vunpack.c.l.b16 %v2351
      %v2384 = vunpack.c.l.b16 %v2352
      %v2385 = vunpack.c.l.b16 %v2353
      %v2386 = vunpack.c.l.b16 %v2354
      %v2387 = vunpack.c.l.b16 %v2355
      %v2388 = vunpack.c.l.b16 %v2356
      %v2389 = vunpack.c.l.b16 %v2357
      %v2390 = vunpack.c.l.b16 %v2358
      %v2391 = vunpack.c.l.b16 %v2359
      %v2392 = vunpack.c.l.b16 %v2360
      %v2393 = vunpack.c.l.b16 %v2361
      %v2394 = vunpack.c.l.b16 %v2362
      %v2395 = vpack.c.b16 %v2380, %v2379
      %v2396 = vpack.c.b16 %v2382, %v2381
      %v2397 = vpack.c.b16 %v2384, %v2383
      %v2398 = vpack.c.b16 %v2386, %v2385
      %v2399 = vpack.c.b16 %v2388, %v2387
      %v2400 = vpack.c.b16 %v2390, %v2389
      %v2401 = vpack.c.b16 %v2392, %v2391
      %v2402 = vpack.c.b16 %v2394, %v2393
      %2411 = vmatprep.subr.bf16.mxu0 0
      %2412 = vmatpush1.bf16.msra.mxu0 %v2402
      %2413 = vmatprep.subr.bf16.mxu0 0
      %2414 = vmatpush1.bf16.msra.mxu0 %v2401
      %2415 = vmatprep.subr.bf16.mxu0 0
      %2416 = vmatpush1.bf16.msra.mxu0 %v2400
      %2417 = vmatprep.subr.bf16.mxu0 0
      %2418 = vmatpush1.bf16.msra.mxu0 %v2399
      %2419 = vmatprep.subr.bf16.mxu0 0
      %2420 = vmatpush1.bf16.msra.mxu0 %v2398
      %2421 = vmatprep.subr.bf16.mxu0 0
      %2422 = vmatpush1.bf16.msra.mxu0 %v2397
      %2423 = vmatprep.subr.bf16.mxu0 0
      %2424 = vmatpush1.bf16.msra.mxu0 %v2396
      %2425 = vmatprep.subr.bf16.mxu0 0
      %2426 = vmatpush1.bf16.msra.mxu0 %v2395
      %2427 = vmatprep.subr.bf16.mxu0 0
      %2428 = vmatpush2.bf16.msra.mxu0 0
      %2429 = vmatprep.subr.bf16.mxu0 0
      %2430 = vmatpush2.bf16.msra.mxu0 0
      %2431 = vmatprep.subr.bf16.mxu0 0
      %2432 = vmatpush2.bf16.msra.mxu0 0
      %2433 = vmatprep.subr.bf16.mxu0 0
      %2434 = vmatpush2.bf16.msra.mxu0 0
      %2435 = vmatprep.subr.bf16.mxu0 0
      %2436 = vmatpush2.bf16.msra.mxu0 0
      %2437 = vmatprep.subr.bf16.mxu0 0
      %2438 = vmatpush2.bf16.msra.mxu0 0
      %2439 = vmatprep.subr.bf16.mxu0 0
      %2440 = vmatpush2.bf16.msra.mxu0 0
      %2441 = vmatprep.subr.bf16.mxu0 0
      %2442 = vmatpush2.bf16.msra.mxu0 0
      %2443 = vmatprep.mubr.bf16.mxu0 0
      %2444 = vmatmul.mubr.bf16.gmra.mxu0 %v2342
      %v2445 = vpop.f32.mrf.mxu0
      %v2446 = vadd.f32 0.0, %v2445
      %v2447 = vpop.f32.mrf.mxu0
      %v2448 = vpop.f32.mrf.mxu0
      %v2449 = vadd.f32 0.0, %v2448
      %v2450 = vpop.f32.mrf.mxu0
      %2451 = vmatprep.mubr.bf16.mxu0 0
      %2452 = vmatmul.mubr.bf16.gmra.mxu0 %v2343
      %v2453 = vpop.f32.mrf.mxu0
      %v2454 = vadd.f32 0.0, %v2453
      %v2455 = vpop.f32.mrf.mxu0
      %v2456 = vpop.f32.mrf.mxu0
      %v2457 = vadd.f32 0.0, %v2456
      %v2458 = vpop.f32.mrf.mxu0
      %2459 = vmatprep.mubr.bf16.mxu0 0
      %2460 = vmatmul.mubr.bf16.gmra.mxu0 %v2344
      %v2461 = vpop.f32.mrf.mxu0
      %v2462 = vadd.f32 0.0, %v2461
      %v2463 = vpop.f32.mrf.mxu0
      %v2464 = vpop.f32.mrf.mxu0
      %v2465 = vadd.f32 0.0, %v2464
      %v2466 = vpop.f32.mrf.mxu0
      %2467 = vmatprep.mubr.bf16.mxu0 0
      %2468 = vmatmul.mubr.bf16.gmra.mxu0 %v2345
      %v2469 = vpop.f32.mrf.mxu0
      %v2470 = vadd.f32 0.0, %v2469
      %v2471 = vpop.f32.mrf.mxu0
      %v2472 = vpop.f32.mrf.mxu0
      %v2473 = vadd.f32 0.0, %v2472
      %v2474 = vpop.f32.mrf.mxu0
      %2475 = vdwg.mxu0
      %v2476 = vadd.f32 %v2326, %v2446
      %v2477 = vadd.f32 %v2327, %v2449
      %v2478 = vadd.f32 %v2328, %v2454
      %v2479 = vadd.f32 %v2329, %v2457
      %v2480 = vadd.f32 %v2330, %v2462
      %v2481 = vadd.f32 %v2331, %v2465
      %v2482 = vadd.f32 %v2332, %v2470
      %v2483 = vadd.f32 %v2333, %v2473
      %s2484 = scalar_lea.vmem [#allocation2], 32
      %v2485 = vld [vmem:[%s2484] sm:$0xff]
      %v2486 = vld [vmem:[%s2484 + $0x10] sm:$0xff]
      %v2487 = vld [vmem:[%s2484 + $0x20] sm:$0xff]
      %v2488 = vld [vmem:[%s2484 + $0x30] sm:$0xff]
      %v2489 = vld [vmem:[%s2484 + $0x40] sm:$0xff]
      %v2490 = vld [vmem:[%s2484 + $0x50] sm:$0xff]
      %v2491 = vld [vmem:[%s2484 + $0x60] sm:$0xff]
      %v2492 = vld [vmem:[%s2484 + $0x70] sm:$0xff]
      %v2493 = vpack.c.bf16 %v2486, %v2485
      %v2494 = vpack.c.bf16 %v2488, %v2487
      %v2495 = vpack.c.bf16 %v2490, %v2489
      %v2496 = vpack.c.bf16 %v2492, %v2491
      %s2497 = scalar_lea.vmem %s2, 384
      %v2498 = vld [vmem:[%s2497] sm:$0xf]
      %v2499 = vld [vmem:[%s2497 + $0x4] sm:$0xf]
      %v2500 = vld [vmem:[%s2497 + $0x8] sm:$0xf]
      %v2501 = vld [vmem:[%s2497 + $0xc] sm:$0xf]
      %v2502 = vld [vmem:[%s2497 + $0x10] sm:$0xf]
      %v2503 = vld [vmem:[%s2497 + $0x14] sm:$0xf]
      %v2504 = vld [vmem:[%s2497 + $0x18] sm:$0xf]
      %v2505 = vld [vmem:[%s2497 + $0x1c] sm:$0xf]
      %v2506 = vld [vmem:[%s2497 + $0x20] sm:$0xf]
      %v2507 = vld [vmem:[%s2497 + $0x24] sm:$0xf]
      %v2508 = vld [vmem:[%s2497 + $0x28] sm:$0xf]
      %v2509 = vld [vmem:[%s2497 + $0x2c] sm:$0xf]
      %v2510 = vld [vmem:[%s2497 + $0x30] sm:$0xf]
      %v2511 = vld [vmem:[%s2497 + $0x34] sm:$0xf]
      %v2512 = vld [vmem:[%s2497 + $0x38] sm:$0xf]
      %v2513 = vld [vmem:[%s2497 + $0x3c] sm:$0xf]
      %v2530 = vunpack.c.l.b16 %v2498
      %v2531 = vunpack.c.l.b16 %v2499
      %v2532 = vunpack.c.l.b16 %v2500
      %v2533 = vunpack.c.l.b16 %v2501
      %v2534 = vunpack.c.l.b16 %v2502
      %v2535 = vunpack.c.l.b16 %v2503
      %v2536 = vunpack.c.l.b16 %v2504
      %v2537 = vunpack.c.l.b16 %v2505
      %v2538 = vunpack.c.l.b16 %v2506
      %v2539 = vunpack.c.l.b16 %v2507
      %v2540 = vunpack.c.l.b16 %v2508
      %v2541 = vunpack.c.l.b16 %v2509
      %v2542 = vunpack.c.l.b16 %v2510
      %v2543 = vunpack.c.l.b16 %v2511
      %v2544 = vunpack.c.l.b16 %v2512
      %v2545 = vunpack.c.l.b16 %v2513
      %v2546 = vpack.c.b16 %v2531, %v2530
      %v2547 = vpack.c.b16 %v2533, %v2532
      %v2548 = vpack.c.b16 %v2535, %v2534
      %v2549 = vpack.c.b16 %v2537, %v2536
      %v2550 = vpack.c.b16 %v2539, %v2538
      %v2551 = vpack.c.b16 %v2541, %v2540
      %v2552 = vpack.c.b16 %v2543, %v2542
      %v2553 = vpack.c.b16 %v2545, %v2544
      %2562 = vmatprep.subr.bf16.mxu0 0
      %2563 = vmatpush1.bf16.msra.mxu0 %v2553
      %2564 = vmatprep.subr.bf16.mxu0 0
      %2565 = vmatpush1.bf16.msra.mxu0 %v2552
      %2566 = vmatprep.subr.bf16.mxu0 0
      %2567 = vmatpush1.bf16.msra.mxu0 %v2551
      %2568 = vmatprep.subr.bf16.mxu0 0
      %2569 = vmatpush1.bf16.msra.mxu0 %v2550
      %2570 = vmatprep.subr.bf16.mxu0 0
      %2571 = vmatpush1.bf16.msra.mxu0 %v2549
      %2572 = vmatprep.subr.bf16.mxu0 0
      %2573 = vmatpush1.bf16.msra.mxu0 %v2548
      %2574 = vmatprep.subr.bf16.mxu0 0
      %2575 = vmatpush1.bf16.msra.mxu0 %v2547
      %2576 = vmatprep.subr.bf16.mxu0 0
      %2577 = vmatpush1.bf16.msra.mxu0 %v2546
      %2578 = vmatprep.subr.bf16.mxu0 0
      %2579 = vmatpush2.bf16.msra.mxu0 0
      %2580 = vmatprep.subr.bf16.mxu0 0
      %2581 = vmatpush2.bf16.msra.mxu0 0
      %2582 = vmatprep.subr.bf16.mxu0 0
      %2583 = vmatpush2.bf16.msra.mxu0 0
      %2584 = vmatprep.subr.bf16.mxu0 0
      %2585 = vmatpush2.bf16.msra.mxu0 0
      %2586 = vmatprep.subr.bf16.mxu0 0
      %2587 = vmatpush2.bf16.msra.mxu0 0
      %2588 = vmatprep.subr.bf16.mxu0 0
      %2589 = vmatpush2.bf16.msra.mxu0 0
      %2590 = vmatprep.subr.bf16.mxu0 0
      %2591 = vmatpush2.bf16.msra.mxu0 0
      %2592 = vmatprep.subr.bf16.mxu0 0
      %2593 = vmatpush2.bf16.msra.mxu0 0
      %2594 = vmatprep.mubr.bf16.mxu0 0
      %2595 = vmatmul.mubr.bf16.gmra.mxu0 %v2493
      %v2596 = vpop.f32.mrf.mxu0
      %v2597 = vadd.f32 0.0, %v2596
      %v2598 = vpop.f32.mrf.mxu0
      %v2599 = vpop.f32.mrf.mxu0
      %v2600 = vadd.f32 0.0, %v2599
      %v2601 = vpop.f32.mrf.mxu0
      %2602 = vmatprep.mubr.bf16.mxu0 0
      %2603 = vmatmul.mubr.bf16.gmra.mxu0 %v2494
      %v2604 = vpop.f32.mrf.mxu0
      %v2605 = vadd.f32 0.0, %v2604
      %v2606 = vpop.f32.mrf.mxu0
      %v2607 = vpop.f32.mrf.mxu0
      %v2608 = vadd.f32 0.0, %v2607
      %v2609 = vpop.f32.mrf.mxu0
      %2610 = vmatprep.mubr.bf16.mxu0 0
      %2611 = vmatmul.mubr.bf16.gmra.mxu0 %v2495
      %v2612 = vpop.f32.mrf.mxu0
      %v2613 = vadd.f32 0.0, %v2612
      %v2614 = vpop.f32.mrf.mxu0
      %v2615 = vpop.f32.mrf.mxu0
      %v2616 = vadd.f32 0.0, %v2615
      %v2617 = vpop.f32.mrf.mxu0
      %2618 = vmatprep.mubr.bf16.mxu0 0
      %2619 = vmatmul.mubr.bf16.gmra.mxu0 %v2496
      %v2620 = vpop.f32.mrf.mxu0
      %v2621 = vadd.f32 0.0, %v2620
      %v2622 = vpop.f32.mrf.mxu0
      %v2623 = vpop.f32.mrf.mxu0
      %v2624 = vadd.f32 0.0, %v2623
      %v2625 = vpop.f32.mrf.mxu0
      %2626 = vdwg.mxu0
      %v2627 = vadd.f32 %v2476, %v2597
      %v2628 = vadd.f32 %v2477, %v2600
      %v2629 = vadd.f32 %v2478, %v2605
      %v2630 = vadd.f32 %v2479, %v2608
      %v2631 = vadd.f32 %v2480, %v2613
      %v2632 = vadd.f32 %v2481, %v2616
      %v2633 = vadd.f32 %v2482, %v2621
      %v2634 = vadd.f32 %v2483, %v2624
      %v2635 = vld [vmem:[%s2484 + $0x1] sm:$0xff]
      %v2636 = vld [vmem:[%s2484 + $0x11] sm:$0xff]
      %v2637 = vld [vmem:[%s2484 + $0x21] sm:$0xff]
      %v2638 = vld [vmem:[%s2484 + $0x31] sm:$0xff]
      %v2639 = vld [vmem:[%s2484 + $0x41] sm:$0xff]
      %v2640 = vld [vmem:[%s2484 + $0x51] sm:$0xff]
      %v2641 = vld [vmem:[%s2484 + $0x61] sm:$0xff]
      %v2642 = vld [vmem:[%s2484 + $0x71] sm:$0xff]
      %v2643 = vpack.c.bf16 %v2636, %v2635
      %v2644 = vpack.c.bf16 %v2638, %v2637
      %v2645 = vpack.c.bf16 %v2640, %v2639
      %v2646 = vpack.c.bf16 %v2642, %v2641
      %s2647 = scalar_lea.vmem %s2, 448
      %v2648 = vld [vmem:[%s2647] sm:$0xf]
      %v2649 = vld [vmem:[%s2647 + $0x4] sm:$0xf]
      %v2650 = vld [vmem:[%s2647 + $0x8] sm:$0xf]
      %v2651 = vld [vmem:[%s2647 + $0xc] sm:$0xf]
      %v2652 = vld [vmem:[%s2647 + $0x10] sm:$0xf]
      %v2653 = vld [vmem:[%s2647 + $0x14] sm:$0xf]
      %v2654 = vld [vmem:[%s2647 + $0x18] sm:$0xf]
      %v2655 = vld [vmem:[%s2647 + $0x1c] sm:$0xf]
      %v2656 = vld [vmem:[%s2647 + $0x20] sm:$0xf]
      %v2657 = vld [vmem:[%s2647 + $0x24] sm:$0xf]
      %v2658 = vld [vmem:[%s2647 + $0x28] sm:$0xf]
      %v2659 = vld [vmem:[%s2647 + $0x2c] sm:$0xf]
      %v2660 = vld [vmem:[%s2647 + $0x30] sm:$0xf]
      %v2661 = vld [vmem:[%s2647 + $0x34] sm:$0xf]
      %v2662 = vld [vmem:[%s2647 + $0x38] sm:$0xf]
      %v2663 = vld [vmem:[%s2647 + $0x3c] sm:$0xf]
      %v2680 = vunpack.c.l.b16 %v2648
      %v2681 = vunpack.c.l.b16 %v2649
      %v2682 = vunpack.c.l.b16 %v2650
      %v2683 = vunpack.c.l.b16 %v2651
      %v2684 = vunpack.c.l.b16 %v2652
      %v2685 = vunpack.c.l.b16 %v2653
      %v2686 = vunpack.c.l.b16 %v2654
      %v2687 = vunpack.c.l.b16 %v2655
      %v2688 = vunpack.c.l.b16 %v2656
      %v2689 = vunpack.c.l.b16 %v2657
      %v2690 = vunpack.c.l.b16 %v2658
      %v2691 = vunpack.c.l.b16 %v2659
      %v2692 = vunpack.c.l.b16 %v2660
      %v2693 = vunpack.c.l.b16 %v2661
      %v2694 = vunpack.c.l.b16 %v2662
      %v2695 = vunpack.c.l.b16 %v2663
      %v2696 = vpack.c.b16 %v2681, %v2680
      %v2697 = vpack.c.b16 %v2683, %v2682
      %v2698 = vpack.c.b16 %v2685, %v2684
      %v2699 = vpack.c.b16 %v2687, %v2686
      %v2700 = vpack.c.b16 %v2689, %v2688
      %v2701 = vpack.c.b16 %v2691, %v2690
      %v2702 = vpack.c.b16 %v2693, %v2692
      %v2703 = vpack.c.b16 %v2695, %v2694
      %2712 = vmatprep.subr.bf16.mxu0 0
      %2713 = vmatpush1.bf16.msra.mxu0 %v2703
      %2714 = vmatprep.subr.bf16.mxu0 0
      %2715 = vmatpush1.bf16.msra.mxu0 %v2702
      %2716 = vmatprep.subr.bf16.mxu0 0
      %2717 = vmatpush1.bf16.msra.mxu0 %v2701
      %2718 = vmatprep.subr.bf16.mxu0 0
      %2719 = vmatpush1.bf16.msra.mxu0 %v2700
      %2720 = vmatprep.subr.bf16.mxu0 0
      %2721 = vmatpush1.bf16.msra.mxu0 %v2699
      %2722 = vmatprep.subr.bf16.mxu0 0
      %2723 = vmatpush1.bf16.msra.mxu0 %v2698
      %2724 = vmatprep.subr.bf16.mxu0 0
      %2725 = vmatpush1.bf16.msra.mxu0 %v2697
      %2726 = vmatprep.subr.bf16.mxu0 0
      %2727 = vmatpush1.bf16.msra.mxu0 %v2696
      %2728 = vmatprep.subr.bf16.mxu0 0
      %2729 = vmatpush2.bf16.msra.mxu0 0
      %2730 = vmatprep.subr.bf16.mxu0 0
      %2731 = vmatpush2.bf16.msra.mxu0 0
      %2732 = vmatprep.subr.bf16.mxu0 0
      %2733 = vmatpush2.bf16.msra.mxu0 0
      %2734 = vmatprep.subr.bf16.mxu0 0
      %2735 = vmatpush2.bf16.msra.mxu0 0
      %2736 = vmatprep.subr.bf16.mxu0 0
      %2737 = vmatpush2.bf16.msra.mxu0 0
      %2738 = vmatprep.subr.bf16.mxu0 0
      %2739 = vmatpush2.bf16.msra.mxu0 0
      %2740 = vmatprep.subr.bf16.mxu0 0
      %2741 = vmatpush2.bf16.msra.mxu0 0
      %2742 = vmatprep.subr.bf16.mxu0 0
      %2743 = vmatpush2.bf16.msra.mxu0 0
      %2744 = vmatprep.mubr.bf16.mxu0 0
      %2745 = vmatmul.mubr.bf16.gmra.mxu0 %v2643
      %v2746 = vpop.f32.mrf.mxu0
      %v2747 = vadd.f32 0.0, %v2746
      %v2748 = vpop.f32.mrf.mxu0
      %v2749 = vpop.f32.mrf.mxu0
      %v2750 = vadd.f32 0.0, %v2749
      %v2751 = vpop.f32.mrf.mxu0
      %2752 = vmatprep.mubr.bf16.mxu0 0
      %2753 = vmatmul.mubr.bf16.gmra.mxu0 %v2644
      %v2754 = vpop.f32.mrf.mxu0
      %v2755 = vadd.f32 0.0, %v2754
      %v2756 = vpop.f32.mrf.mxu0
      %v2757 = vpop.f32.mrf.mxu0
      %v2758 = vadd.f32 0.0, %v2757
      %v2759 = vpop.f32.mrf.mxu0
      %2760 = vmatprep.mubr.bf16.mxu0 0
      %2761 = vmatmul.mubr.bf16.gmra.mxu0 %v2645
      %v2762 = vpop.f32.mrf.mxu0
      %v2763 = vadd.f32 0.0, %v2762
      %v2764 = vpop.f32.mrf.mxu0
      %v2765 = vpop.f32.mrf.mxu0
      %v2766 = vadd.f32 0.0, %v2765
      %v2767 = vpop.f32.mrf.mxu0
      %2768 = vmatprep.mubr.bf16.mxu0 0
      %2769 = vmatmul.mubr.bf16.gmra.mxu0 %v2646
      %v2770 = vpop.f32.mrf.mxu0
      %v2771 = vadd.f32 0.0, %v2770
      %v2772 = vpop.f32.mrf.mxu0
      %v2773 = vpop.f32.mrf.mxu0
      %v2774 = vadd.f32 0.0, %v2773
      %v2775 = vpop.f32.mrf.mxu0
      %2776 = vdwg.mxu0
      %v2777 = vadd.f32 %v2627, %v2747
      %v2778 = vadd.f32 %v2628, %v2750
      %v2779 = vadd.f32 %v2629, %v2755
      %v2780 = vadd.f32 %v2630, %v2758
      %v2781 = vadd.f32 %v2631, %v2763
      %v2782 = vadd.f32 %v2632, %v2766
      %v2783 = vadd.f32 %v2633, %v2771
      %v2784 = vadd.f32 %v2634, %v2774
      %v2785 = vld [vmem:[%s2484 + $0x2] sm:$0xff]
      %v2786 = vld [vmem:[%s2484 + $0x12] sm:$0xff]
      %v2787 = vld [vmem:[%s2484 + $0x22] sm:$0xff]
      %v2788 = vld [vmem:[%s2484 + $0x32] sm:$0xff]
      %v2789 = vld [vmem:[%s2484 + $0x42] sm:$0xff]
      %v2790 = vld [vmem:[%s2484 + $0x52] sm:$0xff]
      %v2791 = vld [vmem:[%s2484 + $0x62] sm:$0xff]
      %v2792 = vld [vmem:[%s2484 + $0x72] sm:$0xff]
      %v2793 = vpack.c.bf16 %v2786, %v2785
      %v2794 = vpack.c.bf16 %v2788, %v2787
      %v2795 = vpack.c.bf16 %v2790, %v2789
      %v2796 = vpack.c.bf16 %v2792, %v2791
      %s2797 = scalar_lea.vmem %s2, 512
      %v2798 = vld [vmem:[%s2797] sm:$0xf]
      %v2799 = vld [vmem:[%s2797 + $0x4] sm:$0xf]
      %v2800 = vld [vmem:[%s2797 + $0x8] sm:$0xf]
      %v2801 = vld [vmem:[%s2797 + $0xc] sm:$0xf]
      %v2802 = vld [vmem:[%s2797 + $0x10] sm:$0xf]
      %v2803 = vld [vmem:[%s2797 + $0x14] sm:$0xf]
      %v2804 = vld [vmem:[%s2797 + $0x18] sm:$0xf]
      %v2805 = vld [vmem:[%s2797 + $0x1c] sm:$0xf]
      %v2806 = vld [vmem:[%s2797 + $0x20] sm:$0xf]
      %v2807 = vld [vmem:[%s2797 + $0x24] sm:$0xf]
      %v2808 = vld [vmem:[%s2797 + $0x28] sm:$0xf]
      %v2809 = vld [vmem:[%s2797 + $0x2c] sm:$0xf]
      %v2810 = vld [vmem:[%s2797 + $0x30] sm:$0xf]
      %v2811 = vld [vmem:[%s2797 + $0x34] sm:$0xf]
      %v2812 = vld [vmem:[%s2797 + $0x38] sm:$0xf]
      %v2813 = vld [vmem:[%s2797 + $0x3c] sm:$0xf]
      %v2830 = vunpack.c.l.b16 %v2798
      %v2831 = vunpack.c.l.b16 %v2799
      %v2832 = vunpack.c.l.b16 %v2800
      %v2833 = vunpack.c.l.b16 %v2801
      %v2834 = vunpack.c.l.b16 %v2802
      %v2835 = vunpack.c.l.b16 %v2803
      %v2836 = vunpack.c.l.b16 %v2804
      %v2837 = vunpack.c.l.b16 %v2805
      %v2838 = vunpack.c.l.b16 %v2806
      %v2839 = vunpack.c.l.b16 %v2807
      %v2840 = vunpack.c.l.b16 %v2808
      %v2841 = vunpack.c.l.b16 %v2809
      %v2842 = vunpack.c.l.b16 %v2810
      %v2843 = vunpack.c.l.b16 %v2811
      %v2844 = vunpack.c.l.b16 %v2812
      %v2845 = vunpack.c.l.b16 %v2813
      %v2846 = vpack.c.b16 %v2831, %v2830
      %v2847 = vpack.c.b16 %v2833, %v2832
      %v2848 = vpack.c.b16 %v2835, %v2834
      %v2849 = vpack.c.b16 %v2837, %v2836
      %v2850 = vpack.c.b16 %v2839, %v2838
      %v2851 = vpack.c.b16 %v2841, %v2840
      %v2852 = vpack.c.b16 %v2843, %v2842
      %v2853 = vpack.c.b16 %v2845, %v2844
      %2862 = vmatprep.subr.bf16.mxu0 0
      %2863 = vmatpush1.bf16.msra.mxu0 %v2853
      %2864 = vmatprep.subr.bf16.mxu0 0
      %2865 = vmatpush1.bf16.msra.mxu0 %v2852
      %2866 = vmatprep.subr.bf16.mxu0 0
      %2867 = vmatpush1.bf16.msra.mxu0 %v2851
      %2868 = vmatprep.subr.bf16.mxu0 0
      %2869 = vmatpush1.bf16.msra.mxu0 %v2850
      %2870 = vmatprep.subr.bf16.mxu0 0
      %2871 = vmatpush1.bf16.msra.mxu0 %v2849
      %2872 = vmatprep.subr.bf16.mxu0 0
      %2873 = vmatpush1.bf16.msra.mxu0 %v2848
      %2874 = vmatprep.subr.bf16.mxu0 0
      %2875 = vmatpush1.bf16.msra.mxu0 %v2847
      %2876 = vmatprep.subr.bf16.mxu0 0
      %2877 = vmatpush1.bf16.msra.mxu0 %v2846
      %2878 = vmatprep.subr.bf16.mxu0 0
      %2879 = vmatpush2.bf16.msra.mxu0 0
      %2880 = vmatprep.subr.bf16.mxu0 0
      %2881 = vmatpush2.bf16.msra.mxu0 0
      %2882 = vmatprep.subr.bf16.mxu0 0
      %2883 = vmatpush2.bf16.msra.mxu0 0
      %2884 = vmatprep.subr.bf16.mxu0 0
      %2885 = vmatpush2.bf16.msra.mxu0 0
      %2886 = vmatprep.subr.bf16.mxu0 0
      %2887 = vmatpush2.bf16.msra.mxu0 0
      %2888 = vmatprep.subr.bf16.mxu0 0
      %2889 = vmatpush2.bf16.msra.mxu0 0
      %2890 = vmatprep.subr.bf16.mxu0 0
      %2891 = vmatpush2.bf16.msra.mxu0 0
      %2892 = vmatprep.subr.bf16.mxu0 0
      %2893 = vmatpush2.bf16.msra.mxu0 0
      %2894 = vmatprep.mubr.bf16.mxu0 0
      %2895 = vmatmul.mubr.bf16.gmra.mxu0 %v2793
      %v2896 = vpop.f32.mrf.mxu0
      %v2897 = vadd.f32 0.0, %v2896
      %v2898 = vpop.f32.mrf.mxu0
      %v2899 = vpop.f32.mrf.mxu0
      %v2900 = vadd.f32 0.0, %v2899
      %v2901 = vpop.f32.mrf.mxu0
      %2902 = vmatprep.mubr.bf16.mxu0 0
      %2903 = vmatmul.mubr.bf16.gmra.mxu0 %v2794
      %v2904 = vpop.f32.mrf.mxu0
      %v2905 = vadd.f32 0.0, %v2904
      %v2906 = vpop.f32.mrf.mxu0
      %v2907 = vpop.f32.mrf.mxu0
      %v2908 = vadd.f32 0.0, %v2907
      %v2909 = vpop.f32.mrf.mxu0
      %2910 = vmatprep.mubr.bf16.mxu0 0
      %2911 = vmatmul.mubr.bf16.gmra.mxu0 %v2795
      %v2912 = vpop.f32.mrf.mxu0
      %v2913 = vadd.f32 0.0, %v2912
      %v2914 = vpop.f32.mrf.mxu0
      %v2915 = vpop.f32.mrf.mxu0
      %v2916 = vadd.f32 0.0, %v2915
      %v2917 = vpop.f32.mrf.mxu0
      %2918 = vmatprep.mubr.bf16.mxu0 0
      %2919 = vmatmul.mubr.bf16.gmra.mxu0 %v2796
      %v2920 = vpop.f32.mrf.mxu0
      %v2921 = vadd.f32 0.0, %v2920
      %v2922 = vpop.f32.mrf.mxu0
      %v2923 = vpop.f32.mrf.mxu0
      %v2924 = vadd.f32 0.0, %v2923
      %v2925 = vpop.f32.mrf.mxu0
      %2926 = vdwg.mxu0
      %v2927 = vadd.f32 %v2777, %v2897
      %v2928 = vadd.f32 %v2778, %v2900
      %v2929 = vadd.f32 %v2779, %v2905
      %v2930 = vadd.f32 %v2780, %v2908
      %v2931 = vadd.f32 %v2781, %v2913
      %v2932 = vadd.f32 %v2782, %v2916
      %v2933 = vadd.f32 %v2783, %v2921
      %v2934 = vadd.f32 %v2784, %v2924
      %v2935 = vadd.f32 %v2927, %v2928
      %v2936 = vadd.f32 %v2935, %v2929
      %v2937 = vadd.f32 %v2936, %v2930
      %v2938 = vadd.f32 %v2937, %v2931
      %v2939 = vadd.f32 %v2938, %v2932
      %v2940 = vadd.f32 %v2939, %v2933
      %v2941 = vadd.f32 %v2940, %v2934
      %v2942 = vrot.slane %v2941, 4
      %v2943 = vadd.f32 %v2941, %v2942
      %v2944 = vrot.slane %v2943, 2
      %v2945 = vadd.f32 %v2943, %v2944
      %v2946 = vrot.slane %v2945, 1
      %v2947 = vadd.f32 %v2945, %v2946
      %v2948 = vmul.f32 %v2947, 0.015625
      %v2949 = vmul.f32 %v2927, %v2927
      %v2950 = vmul.f32 %v2928, %v2928
      %v2951 = vmul.f32 %v2929, %v2929
      %v2952 = vmul.f32 %v2930, %v2930
      %v2953 = vmul.f32 %v2931, %v2931
      %v2954 = vmul.f32 %v2932, %v2932
      %v2955 = vmul.f32 %v2933, %v2933
      %v2956 = vmul.f32 %v2934, %v2934
      %v2957 = vadd.f32 %v2949, %v2950
      %v2958 = vadd.f32 %v2957, %v2951
      %v2959 = vadd.f32 %v2958, %v2952
      %v2960 = vadd.f32 %v2959, %v2953
      %v2961 = vadd.f32 %v2960, %v2954
      %v2962 = vadd.f32 %v2961, %v2955
      %v2963 = vadd.f32 %v2962, %v2956
      %v2964 = vrot.slane %v2963, 4
      %v2965 = vadd.f32 %v2963, %v2964
      %v2966 = vrot.slane %v2965, 2
      %v2967 = vadd.f32 %v2965, %v2966
      %v2968 = vrot.slane %v2967, 1
      %v2969 = vadd.f32 %v2967, %v2968
      %v2970 = vmul.f32 %v2969, 0.015625
      %v2971 = vmul.f32 %v2948, %v2948
      %v2972 = vsub.f32 %v2970, %v2971
      %v2973 = vmax.f32 %v2972, 0.0
      %v2974 = vsub.f32 %v2927, %v2948
      %v2975 = vsub.f32 %v2928, %v2948
      %v2976 = vsub.f32 %v2929, %v2948
      %v2977 = vsub.f32 %v2930, %v2948
      %v2978 = vsub.f32 %v2931, %v2948
      %v2979 = vsub.f32 %v2932, %v2948
      %v2980 = vsub.f32 %v2933, %v2948
      %v2981 = vsub.f32 %v2934, %v2948
      %v2982 = vadd.f32 %v2973, 1e-05
      %v2983 = vrsqrt.pop %v2982
      %v2984 = vmul.f32 %v2974, %v2983
      %v2985 = vmul.f32 %v2975, %v2983
      %v2986 = vmul.f32 %v2976, %v2983
      %v2987 = vmul.f32 %v2977, %v2983
      %v2988 = vmul.f32 %v2978, %v2983
      %v2989 = vmul.f32 %v2979, %v2983
      %v2990 = vmul.f32 %v2980, %v2983
      %v2991 = vmul.f32 %v2981, %v2983
      %v2992 = vmax.f32 %v2984, 0.0
      %v2993 = vmax.f32 %v2985, 0.0
      %v2994 = vmax.f32 %v2986, 0.0
      %v2995 = vmax.f32 %v2987, 0.0
      %v2996 = vmax.f32 %v2988, 0.0
      %v2997 = vmax.f32 %v2989, 0.0
      %v2998 = vmax.f32 %v2990, 0.0
      %v2999 = vmax.f32 %v2991, 0.0
      %v3000 = vld [vmem:[%s605 + $0x1] sm:$0xff]
      %v3001 = vld [vmem:[%s605 + $0x11] sm:$0xff]
      %v3002 = vld [vmem:[%s605 + $0x21] sm:$0xff]
      %v3003 = vld [vmem:[%s605 + $0x31] sm:$0xff]
      %v3004 = vld [vmem:[%s605 + $0x41] sm:$0xff]
      %v3005 = vld [vmem:[%s605 + $0x51] sm:$0xff]
      %v3006 = vld [vmem:[%s605 + $0x61] sm:$0xff]
      %v3007 = vld [vmem:[%s605 + $0x71] sm:$0xff]
      %v3008 = vadd.f32 %v2992, %v3000
      %v3009 = vadd.f32 %v2993, %v3001
      %v3010 = vadd.f32 %v2994, %v3002
      %v3011 = vadd.f32 %v2995, %v3003
      %v3012 = vadd.f32 %v2996, %v3004
      %v3013 = vadd.f32 %v2997, %v3005
      %v3014 = vadd.f32 %v2998, %v3006
      %v3015 = vadd.f32 %v2999, %v3007
      %v3016 = vmax.f32 %v3008, 0.0
      %v3017 = vmax.f32 %v3009, 0.0
      %v3018 = vmax.f32 %v3010, 0.0
      %v3019 = vmax.f32 %v3011, 0.0
      %v3020 = vmax.f32 %v3012, 0.0
      %v3021 = vmax.f32 %v3013, 0.0
      %v3022 = vmax.f32 %v3014, 0.0
      %v3023 = vmax.f32 %v3015, 0.0
      %3024 = vst [vmem:[%s170] sm:$0xff] %v3016
      %3025 = vst [vmem:[%s170 + $0x8] sm:$0xff] %v3017
      %3026 = vst [vmem:[%s170 + $0x10] sm:$0xff] %v3018
      %3027 = vst [vmem:[%s170 + $0x18] sm:$0xff] %v3019
      %3028 = vst [vmem:[%s170 + $0x20] sm:$0xff] %v3020
      %3029 = vst [vmem:[%s170 + $0x28] sm:$0xff] %v3021
      %3030 = vst [vmem:[%s170 + $0x30] sm:$0xff] %v3022
      %3031 = vst [vmem:[%s170 + $0x38] sm:$0xff] %v3023
      %p3032 = scmp.lt.s32.totalorder %s14, 1
      %s3033 = scalar_select %p3032, %s14, 1
      %s3034 = smul.addr %s3033, 8
      %s3035 = smul.addr %s3034, 8
      %s3036 = scalar_lea.vmem %s3, %s3035
      // Predicated region
      $region33: #{layer_forward.3} parent=31 // pred_check
        %p3037 = pneg %p100
      $region34: #{layer_forward.3} parent=31 // pred_check_branch
        %3039 = sbr.rel (%p3037) target = $region36
      $region35: #{layer_forward.3} parent=31 // pred_region
        _
      $region36: #{layer_forward.3} parent=31 // pred_fallthru
        _
    $region32: #{layer_forward.3} parent=5 // pred_fallthru
      _
    %p3040 = scmp.le.s32.totalorder 2, %s9
    // Predicated region
    $region37: #{layer_forward.3} parent=5 // pred_check
      %p3041 = pneg %p3040
    $region38: #{layer_forward.3} parent=5 // pred_check_branch
      %3043 = sbr.rel (%p3041) target = $region40
    $region39: #{layer_forward.3} parent=5 // pred_region
      %s3044 = ssub.s32 %s9, 2
      // Predicated region
      $region41: #{layer_forward.3} parent=39 // pred_check
        %p3045 = pneg %p106
      $region42: #{layer_forward.3} parent=39 // pred_check_branch
        %3047 = sbr.rel (%p3045) target = $region44
      $region43: #{layer_forward.3} parent=39 // pred_region
        %p3048 = scmp.lt.s32.totalorder %s15, 1
        %s3049 = scalar_select %p3048, %s15, 1
        %s3050 = smul.addr %s3049, 8
        %s3051 = smul.addr %s3050, 8
        %s3052 = scalar_lea.vmem %s3, %s3051
      $region44: #{layer_forward.3} parent=39 // pred_fallthru
        _
    $region40: #{layer_forward.3} parent=5 // pred_fallthru
      _
  $region6: #{layer_forward.3} parent=0 // loop_footer
    %s13 = sadd.s32 1, %s9
  $region7: #{layer_forward.3} parent=0 // loop_footer_branch
    %8 = sbr.rel target = $region3
  $region8: #{layer_forward.3} parent=0 // loop_exit
    _

// kernel: layer_forward.2
$region0: #{layer_forward.2}
  #allocation0 [shape = 'u32[]', space=smem, size = 0x4, offset = 0x4, fixed_abs, tag = 'smem constant byte address 0x4 - core index']
  #allocation1 [shape = 'u32[144,128]{1,0:T(1,128)}', space=vmem, size = 0x12000, scoped, tag = 'internal scratch']
  #allocation2 [shape = 'f32[10,10,128]{2,1,0:T(8,128)}', space=vmem, size = 0x14000, scoped, tag = 'scratch operand']
  %s0 = inlined_call_operand.vmem [shape: f32[2,4,9,9,128], index: 0, kind: input, shape index: {}]
  %s1 = inlined_call_operand.vmem [shape: bf16[9,128,128], index: 1, kind: input, shape index: {}]
  %s2 = inlined_call_operand.vmem [shape: bf16[9,128,128], index: 2, kind: input, shape index: {}]
  %s3 = inlined_call_operand.vmem [shape: f32[2,8,8,128], index: 3, kind: output, shape index: {}]
  %s4 = sld [smem:[#allocation0]]
  $region45: #{layer_forward.2} parent=0
    _
  %s6 = ssub.s32 1, %s4
  %s7 = scalar_select 0, %s6, %s4
  loop: start=0, step=1, limit=4
  $region2: #{layer_forward.2} parent=0 // loop_pre_header
    _
  $region3: #{layer_forward.2} parent=0 // loop_header
    %s9 = sphi 0, %s13
    %p10 = scmp.ge.s32.totalorder %s9, 4
    %s19 = sphi 0, %s21
    %s22 = sphi 0, %s19
    %s23 = sphi 0, %s22
    %s39 = sphi 0, %s23
    %s43 = sphi 0, %s43
    %s45 = sphi 0, %s43
    %s46 = sphi 0, %s45
    %s60 = sphi 0, %s46
    %s64 = sphi 0, %s64
    %s66 = sphi 0, %s64
    %s67 = sphi 0, %s66
    %s81 = sphi 0, %s67
    %s87 = sphi 0, %s89
    %s90 = sphi 0, %s87
    %s91 = sphi 0, %s90
    %s107 = sphi 0, %s91
  $region4: #{layer_forward.2} parent=0 // loop_header_branch
    %12 = sbr.rel (%p10) target = $region8
  $region5: #{layer_forward.2} parent=0 // loop_body
    %s14 = ssub.s32 %s9, 1
    %s15 = ssub.s32 %s9, 2
    %s16 = sadd.s32 %s9, 1
    %s17 = ssub.s32 %s9, %s16
    %p18 = scmp.eq.s32.totalorder %s17, 0
    %s20 = sadd.s32 %s19, 1
    %s21 = scalar_select %p18, %s19, %s20
    %p24 = pneg %p18
    %p25 = scmp.eq.s32.totalorder %s9, 1
    %p26 = por %p24, %p25
    %p27 = scmp.ne.s32.totalorder %s19, %s22
    %p28 = scmp.eq.s32.totalorder %s9, 0
    %p29 = por %p27, %p28
    %p30 = scmp.ne.s32.totalorder %s19, %s22
    %p31 = scmp.eq.s32.totalorder %s14, 1
    %p32 = por %p30, %p31
    %p33 = scmp.ne.s32.totalorder %s22, %s23
    %p34 = scmp.eq.s32.totalorder %s14, 0
    %p35 = por %p33, %p34
    %p36 = scmp.ne.s32.totalorder %s22, %s23
    %p37 = scmp.eq.s32.totalorder %s15, 1
    %p38 = por %p36, %p37
    %p40 = scmp.ne.s32.totalorder %s23, %s39
    %p41 = scmp.eq.s32.totalorder %s15, 0
    %p42 = por %p40, %p41
    %s44 = sadd.s32 %s43, 1
    %p47 = scmp.eq.s32.totalorder %s9, 1
    %p48 = scmp.ne.s32.totalorder %s43, %s45
    %p49 = scmp.eq.s32.totalorder %s9, 0
    %p50 = por %p48, %p49
    %p51 = scmp.ne.s32.totalorder %s43, %s45
    %p52 = scmp.eq.s32.totalorder %s14, 1
    %p53 = por %p51, %p52
    %p54 = scmp.ne.s32.totalorder %s45, %s46
    %p55 = scmp.eq.s32.totalorder %s14, 0
    %p56 = por %p54, %p55
    %p57 = scmp.ne.s32.totalorder %s45, %s46
    %p58 = scmp.eq.s32.totalorder %s15, 1
    %p59 = por %p57, %p58
    %p61 = scmp.ne.s32.totalorder %s46, %s60
    %p62 = scmp.eq.s32.totalorder %s15, 0
    %p63 = por %p61, %p62
    %s65 = sadd.s32 %s64, 1
    %p68 = scmp.eq.s32.totalorder %s9, 1
    %p69 = scmp.ne.s32.totalorder %s64, %s66
    %p70 = scmp.eq.s32.totalorder %s9, 0
    %p71 = por %p69, %p70
    %p72 = scmp.ne.s32.totalorder %s64, %s66
    %p73 = scmp.eq.s32.totalorder %s14, 1
    %p74 = por %p72, %p73
    %p75 = scmp.ne.s32.totalorder %s66, %s67
    %p76 = scmp.eq.s32.totalorder %s14, 0
    %p77 = por %p75, %p76
    %p78 = scmp.ne.s32.totalorder %s66, %s67
    %p79 = scmp.eq.s32.totalorder %s15, 1
    %p80 = por %p78, %p79
    %p82 = scmp.ne.s32.totalorder %s67, %s81
    %p83 = scmp.eq.s32.totalorder %s15, 0
    %p84 = por %p82, %p83
    %s85 = ssub.s32 %s9, %s16
    %p86 = scmp.eq.s32.totalorder %s85, 0
    %s88 = sadd.s32 %s87, 1
    %s89 = scalar_select %p86, %s87, %s88
    %p92 = pneg %p86
    %p93 = scmp.eq.s32.totalorder %s9, 1
    %p94 = por %p92, %p93
    %p95 = scmp.ne.s32.totalorder %s87, %s90
    %p96 = scmp.eq.s32.totalorder %s9, 0
    %p97 = por %p95, %p96
    %p98 = scmp.ne.s32.totalorder %s87, %s90
    %p99 = scmp.eq.s32.totalorder %s14, 1
    %p100 = por %p98, %p99
    %p101 = scmp.ne.s32.totalorder %s90, %s91
    %p102 = scmp.eq.s32.totalorder %s14, 0
    %p103 = por %p101, %p102
    %p104 = scmp.ne.s32.totalorder %s90, %s91
    %p105 = scmp.eq.s32.totalorder %s15, 1
    %p106 = por %p104, %p105
    %p108 = scmp.ne.s32.totalorder %s91, %s107
    %p109 = scmp.eq.s32.totalorder %s15, 0
    %p110 = por %p108, %p109
    %p111 = scmp.le.s32.totalorder 1, %s9
    %p112 = scmp.lt.s32.totalorder %s9, 3
    %p113 = pnand %p111, %p112
    %p114 = pneg %p113
    // Predicated region
    $region9: #{layer_forward.2} parent=5 // pred_check
      _
    $region10: #{layer_forward.2} parent=5 // pred_check_branch
      %116 = sbr.rel (%p113) target = $region12
    $region11: #{layer_forward.2} parent=5 // pred_region
      %s117 = ssub.s32 %s9, 1
      // Predicated region
      $region13: #{layer_forward.2} parent=11 // pred_check
        %p118 = pneg %p56
      $region14: #{layer_forward.2} parent=11 // pred_check_branch
        %120 = sbr.rel (%p118) target = $region16
      $region15: #{layer_forward.2} parent=11 // pred_region
        _
      $region16: #{layer_forward.2} parent=11 // pred_fallthru
        _
      // Predicated region
      $region17: #{layer_forward.2} parent=11 // pred_check
        %p121 = pneg %p77
      $region18: #{layer_forward.2} parent=11 // pred_check_branch
        %123 = sbr.rel (%p121) target = $region20
      $region19: #{layer_forward.2} parent=11 // pred_region
        _
      $region20: #{layer_forward.2} parent=11 // pred_fallthru
        _
    $region12: #{layer_forward.2} parent=5 // pred_fallthru
      _
    %p124 = scmp.lt.s32.totalorder %s9, 2
    // Predicated region
    $region21: #{layer_forward.2} parent=5 // pred_check
      %p125 = pneg %p124
    $region22: #{layer_forward.2} parent=5 // pred_check_branch
      %127 = sbr.rel (%p125) target = $region24
    $region23: #{layer_forward.2} parent=5 // pred_region
      // Predicated region
      $region25: #{layer_forward.2} parent=23 // pred_check
        %p128 = pneg %p29
      $region26: #{layer_forward.2} parent=23 // pred_check_branch
        %130 = sbr.rel (%p128) target = $region28
      $region27: #{layer_forward.2} parent=23 // pred_region
        %p131 = scmp.lt.s32.totalorder %s9, 1
        %s132 = scalar_select %p131, %s9, 1
        %s133 = smul.addr %s132, 72
        %s134 = smul.addr %s133, 8
        %s135 = scalar_lea.vmem %s0, %s134
      $region28: #{layer_forward.2} parent=23 // pred_fallthru
        _
    $region24: #{layer_forward.2} parent=5 // pred_fallthru
      _
    %p136 = scmp.le.s32.totalorder 1, %s9
    %p137 = scmp.lt.s32.totalorder %s9, 3
    %p138 = pnand %p136, %p137
    %p139 = pneg %p138
    // Predicated region
    $region29: #{layer_forward.2} parent=5 // pred_check
      _
    $region30: #{layer_forward.2} parent=5 // pred_check_branch
      %141 = sbr.rel (%p138) target = $region32
    $region31: #{layer_forward.2} parent=5 // pred_region
      %s142 = ssub.s32 %s9, 1
      %p143 = scmp.lt.s32.totalorder %s14, 1
      %s144 = scalar_select %p143, %s14, 1
      %s145 = smul.addr %s144, 72
      %s146 = smul.addr %s145, 8
      %s147 = scalar_lea.vmem %s0, %s146
      %p148 = pneg %p35
      %p149 = pneg %p32
      %p150 = pneg %p56
      %p151 = pneg %p53
      %p152 = pneg %p77
      %p153 = pneg %p74
      %p154 = pneg %p103
      %p155 = pneg %p100
      %p156 = scmp.lt.s32.totalorder %s14, 1
      %s157 = scalar_select %p156, %s14, 1
      %s158 = smul.addr %s157, 8
      %s159 = smul.addr %s158, 8
      %s160 = scalar_lea.vmem %s3, %s159
      %p161 = scmp.lt.s32.totalorder %s14, 1
      %s162 = scalar_select %p161, %s14, 1
      %s163 = smul.addr %s162, 72
      %s164 = smul.addr %s163, 8
      %s165 = scalar_lea.vmem %s0, %s164
      %p166 = scmp.lt.s32.totalorder %s14, 1
      %s167 = scalar_select %p166, %s14, 1
      %s168 = smul.addr %s167, 8
      %s169 = smul.addr %s168, 8
      %s170 = scalar_lea.vmem %s3, %s169
      %v172 = vld [vmem:[%s165] sm:$0xff]
      %v173 = vld [vmem:[%s165 + $0x10] sm:$0xff]
      %v174 = vld [vmem:[%s165 + $0x20] sm:$0xff]
      %v175 = vld [vmem:[%s165 + $0x30] sm:$0xff]
      %v176 = vld [vmem:[%s165 + $0x40] sm:$0xff]
      %v177 = vld [vmem:[%s165 + $0x50] sm:$0xff]
      %v178 = vld [vmem:[%s165 + $0x60] sm:$0xff]
      %v179 = vld [vmem:[%s165 + $0x70] sm:$0xff]
      %v180 = vpack.c.bf16 %v173, %v172
      %v181 = vpack.c.bf16 %v175, %v174
      %v182 = vpack.c.bf16 %v177, %v176
      %v183 = vpack.c.bf16 %v179, %v178
      %v184 = vld [vmem:[%s1] sm:$0xf]
      %v185 = vld [vmem:[%s1 + $0x4] sm:$0xf]
      %v186 = vld [vmem:[%s1 + $0x8] sm:$0xf]
      %v187 = vld [vmem:[%s1 + $0xc] sm:$0xf]
      %v188 = vld [vmem:[%s1 + $0x10] sm:$0xf]
      %v189 = vld [vmem:[%s1 + $0x14] sm:$0xf]
      %v190 = vld [vmem:[%s1 + $0x18] sm:$0xf]
      %v191 = vld [vmem:[%s1 + $0x1c] sm:$0xf]
      %v192 = vld [vmem:[%s1 + $0x20] sm:$0xf]
      %v193 = vld [vmem:[%s1 + $0x24] sm:$0xf]
      %v194 = vld [vmem:[%s1 + $0x28] sm:$0xf]
      %v195 = vld [vmem:[%s1 + $0x2c] sm:$0xf]
      %v196 = vld [vmem:[%s1 + $0x30] sm:$0xf]
      %v197 = vld [vmem:[%s1 + $0x34] sm:$0xf]
      %v198 = vld [vmem:[%s1 + $0x38] sm:$0xf]
      %v199 = vld [vmem:[%s1 + $0x3c] sm:$0xf]
      %s200 = scalar_lea.vmem %s165, 144
      %v201 = vld [vmem:[%s200] sm:$0xff]
      %v202 = vld [vmem:[%s200 + $0x10] sm:$0xff]
      %v203 = vld [vmem:[%s200 + $0x20] sm:$0xff]
      %v204 = vld [vmem:[%s200 + $0x30] sm:$0xff]
      %v205 = vld [vmem:[%s200 + $0x40] sm:$0xff]
      %v206 = vld [vmem:[%s200 + $0x50] sm:$0xff]
      %v207 = vld [vmem:[%s200 + $0x60] sm:$0xff]
      %v208 = vld [vmem:[%s200 + $0x70] sm:$0xff]
      %v209 = vpack.c.bf16 %v202, %v201
      %v210 = vpack.c.bf16 %v204, %v203
      %v211 = vpack.c.bf16 %v206, %v205
      %v212 = vpack.c.bf16 %v208, %v207
      %s213 = scalar_lea.vmem %s1, 64
      %v214 = vld [vmem:[%s213] sm:$0xf]
      %v215 = vld [vmem:[%s213 + $0x4] sm:$0xf]
      %v216 = vld [vmem:[%s213 + $0x8] sm:$0xf]
      %v217 = vld [vmem:[%s213 + $0xc] sm:$0xf]
      %v218 = vld [vmem:[%s213 + $0x10] sm:$0xf]
      %v219 = vld [vmem:[%s213 + $0x14] sm:$0xf]
      %v220 = vld [vmem:[%s213 + $0x18] sm:$0xf]
      %v221 = vld [vmem:[%s213 + $0x1c] sm:$0xf]
      %v222 = vld [vmem:[%s213 + $0x20] sm:$0xf]
      %v223 = vld [vmem:[%s213 + $0x24] sm:$0xf]
      %v224 = vld [vmem:[%s213 + $0x28] sm:$0xf]
      %v225 = vld [vmem:[%s213 + $0x2c] sm:$0xf]
      %v226 = vld [vmem:[%s213 + $0x30] sm:$0xf]
      %v227 = vld [vmem:[%s213 + $0x34] sm:$0xf]
      %v228 = vld [vmem:[%s213 + $0x38] sm:$0xf]
      %v229 = vld [vmem:[%s213 + $0x3c] sm:$0xf]
      %v246 = vunpack.c.l.b16 %v214
      %v247 = vunpack.c.l.b16 %v215
      %v248 = vunpack.c.l.b16 %v216
      %v249 = vunpack.c.l.b16 %v217
      %v250 = vunpack.c.l.b16 %v218
      %v251 = vunpack.c.l.b16 %v219
      %v252 = vunpack.c.l.b16 %v220
      %v253 = vunpack.c.l.b16 %v221
      %v254 = vunpack.c.l.b16 %v222
      %v255 = vunpack.c.l.b16 %v223
      %v256 = vunpack.c.l.b16 %v224
      %v257 = vunpack.c.l.b16 %v225
      %v258 = vunpack.c.l.b16 %v226
      %v259 = vunpack.c.l.b16 %v227
      %v260 = vunpack.c.l.b16 %v228
      %v261 = vunpack.c.l.b16 %v229
      %v262 = vpack.c.b16 %v247, %v246
      %v263 = vpack.c.b16 %v249, %v248
      %v264 = vpack.c.b16 %v251, %v250
      %v265 = vpack.c.b16 %v253, %v252
      %v266 = vpack.c.b16 %v255, %v254
      %v267 = vpack.c.b16 %v257, %v256
      %v268 = vpack.c.b16 %v259, %v258
      %v269 = vpack.c.b16 %v261, %v260
      %278 = vmatprep.subr.bf16.mxu0 0
      %279 = vmatpush1.bf16.msra.mxu0 %v269
      %280 = vmatprep.subr.bf16.mxu0 0
      %281 = vmatpush1.bf16.msra.mxu0 %v268
      %282 = vmatprep.subr.bf16.mxu0 0
      %283 = vmatpush1.bf16.msra.mxu0 %v267
      %284 = vmatprep.subr.bf16.mxu0 0
      %285 = vmatpush1.bf16.msra.mxu0 %v266
      %286 = vmatprep.subr.bf16.mxu0 0
      %287 = vmatpush1.bf16.msra.mxu0 %v265
      %288 = vmatprep.subr.bf16.mxu0 0
      %289 = vmatpush1.bf16.msra.mxu0 %v264
      %290 = vmatprep.subr.bf16.mxu0 0
      %291 = vmatpush1.bf16.msra.mxu0 %v263
      %292 = vmatprep.subr.bf16.mxu0 0
      %293 = vmatpush1.bf16.msra.mxu0 %v262
      %294 = vmatprep.subr.bf16.mxu0 0
      %295 = vmatpush2.bf16.msra.mxu0 0
      %296 = vmatprep.subr.bf16.mxu0 0
      %297 = vmatpush2.bf16.msra.mxu0 0
      %298 = vmatprep.subr.bf16.mxu0 0
      %299 = vmatpush2.bf16.msra.mxu0 0
      %300 = vmatprep.subr.bf16.mxu0 0
      %301 = vmatpush2.bf16.msra.mxu0 0
      %302 = vmatprep.subr.bf16.mxu0 0
      %303 = vmatpush2.bf16.msra.mxu0 0
      %304 = vmatprep.subr.bf16.mxu0 0
      %305 = vmatpush2.bf16.msra.mxu0 0
      %306 = vmatprep.subr.bf16.mxu0 0
      %307 = vmatpush2.bf16.msra.mxu0 0
      %308 = vmatprep.subr.bf16.mxu0 0
      %309 = vmatpush2.bf16.msra.mxu0 0
      %310 = vmatprep.mubr.bf16.mxu0 0
      %311 = vmatmul.mubr.bf16.gmra.mxu0 %v209
      %v312 = vpop.f32.mrf.mxu0
      %v313 = vadd.f32 0.0, %v312
      %v314 = vpop.f32.mrf.mxu0
      %v315 = vpop.f32.mrf.mxu0
      %v316 = vadd.f32 0.0, %v315
      %v317 = vpop.f32.mrf.mxu0
      %318 = vmatprep.mubr.bf16.mxu0 0
      %319 = vmatmul.mubr.bf16.gmra.mxu0 %v210
      %v320 = vpop.f32.mrf.mxu0
      %v321 = vadd.f32 0.0, %v320
      %v322 = vpop.f32.mrf.mxu0
      %v323 = vpop.f32.mrf.mxu0
      %v324 = vadd.f32 0.0, %v323
      %v325 = vpop.f32.mrf.mxu0
      %326 = vmatprep.mubr.bf16.mxu0 0
      %327 = vmatmul.mubr.bf16.gmra.mxu0 %v211
      %v328 = vpop.f32.mrf.mxu0
      %v329 = vadd.f32 0.0, %v328
      %v330 = vpop.f32.mrf.mxu0
      %v331 = vpop.f32.mrf.mxu0
      %v332 = vadd.f32 0.0, %v331
      %v333 = vpop.f32.mrf.mxu0
      %334 = vmatprep.mubr.bf16.mxu0 0
      %335 = vmatmul.mubr.bf16.gmra.mxu0 %v212
      %v336 = vpop.f32.mrf.mxu0
      %v337 = vadd.f32 0.0, %v336
      %v338 = vpop.f32.mrf.mxu0
      %v339 = vpop.f32.mrf.mxu0
      %v340 = vadd.f32 0.0, %v339
      %v341 = vpop.f32.mrf.mxu0
      %342 = vdwg.mxu0
      %v359 = vunpack.c.l.b16 %v184
      %v360 = vunpack.c.l.b16 %v185
      %v361 = vunpack.c.l.b16 %v186
      %v362 = vunpack.c.l.b16 %v187
      %v363 = vunpack.c.l.b16 %v188
      %v364 = vunpack.c.l.b16 %v189
      %v365 = vunpack.c.l.b16 %v190
      %v366 = vunpack.c.l.b16 %v191
      %v367 = vunpack.c.l.b16 %v192
      %v368 = vunpack.c.l.b16 %v193
      %v369 = vunpack.c.l.b16 %v194
      %v370 = vunpack.c.l.b16 %v195
      %v371 = vunpack.c.l.b16 %v196
      %v372 = vunpack.c.l.b16 %v197
      %v373 = vunpack.c.l.b16 %v198
      %v374 = vunpack.c.l.b16 %v199
      %v375 = vpack.c.b16 %v360, %v359
      %v376 = vpack.c.b16 %v362, %v361
      %v377 = vpack.c.b16 %v364, %v363
      %v378 = vpack.c.b16 %v366, %v365
      %v379 = vpack.c.b16 %v368, %v367
      %v380 = vpack.c.b16 %v370, %v369
      %v381 = vpack.c.b16 %v372, %v371
      %v382 = vpack.c.b16 %v374, %v373
      %391 = vmatprep.subr.bf16.mxu0 0
      %392 = vmatpush1.bf16.msra.mxu0 %v382
      %393 = vmatprep.subr.bf16.mxu0 0
      %394 = vmatpush1.bf16.msra.mxu0 %v381
      %395 = vmatprep.subr.bf16.mxu0 0
      %396 = vmatpush1.bf16.msra.mxu0 %v380
      %397 = vmatprep.subr.bf16.mxu0 0
      %398 = vmatpush1.bf16.msra.mxu0 %v379
      %399 = vmatprep.subr.bf16.mxu0 0
      %400 = vmatpush1.bf16.msra.mxu0 %v378
      %401 = vmatprep.subr.bf16.mxu0 0
      %402 = vmatpush1.bf16.msra.mxu0 %v377
      %403 = vmatprep.subr.bf16.mxu0 0
      %404 = vmatpush1.bf16.msra.mxu0 %v376
      %405 = vmatprep.subr.bf16.mxu0 0
      %406 = vmatpush1.bf16.msra.mxu0 %v375
      %407 = vmatprep.subr.bf16.mxu0 0
      %408 = vmatpush2.bf16.msra.mxu0 0
      %409 = vmatprep.subr.bf16.mxu0 0
      %410 = vmatpush2.bf16.msra.mxu0 0
      %411 = vmatprep.subr.bf16.mxu0 0
      %412 = vmatpush2.bf16.msra.mxu0 0
      %413 = vmatprep.subr.bf16.mxu0 0
      %414 = vmatpush2.bf16.msra.mxu0 0
      %415 = vmatprep.subr.bf16.mxu0 0
      %416 = vmatpush2.bf16.msra.mxu0 0
      %417 = vmatprep.subr.bf16.mxu0 0
      %418 = vmatpush2.bf16.msra.mxu0 0
      %419 = vmatprep.subr.bf16.mxu0 0
      %420 = vmatpush2.bf16.msra.mxu0 0
      %421 = vmatprep.subr.bf16.mxu0 0
      %422 = vmatpush2.bf16.msra.mxu0 0
      %423 = vmatprep.mubr.bf16.mxu0 0
      %424 = vmatmul.mubr.bf16.gmra.mxu0 %v180
      %v425 = vpop.f32.mrf.mxu0
      %v426 = vadd.f32 %v313, %v425
      %v427 = vpop.f32.mrf.mxu0
      %v428 = vpop.f32.mrf.mxu0
      %v429 = vadd.f32 %v316, %v428
      %v430 = vpop.f32.mrf.mxu0
      %431 = vmatprep.mubr.bf16.mxu0 0
      %432 = vmatmul.mubr.bf16.gmra.mxu0 %v181
      %v433 = vpop.f32.mrf.mxu0
      %v434 = vadd.f32 %v321, %v433
      %v435 = vpop.f32.mrf.mxu0
      %v436 = vpop.f32.mrf.mxu0
      %v437 = vadd.f32 %v324, %v436
      %v438 = vpop.f32.mrf.mxu0
      %439 = vmatprep.mubr.bf16.mxu0 0
      %440 = vmatmul.mubr.bf16.gmra.mxu0 %v182
      %v441 = vpop.f32.mrf.mxu0
      %v442 = vadd.f32 %v329, %v441
      %v443 = vpop.f32.mrf.mxu0
      %v444 = vpop.f32.mrf.mxu0
      %v445 = vadd.f32 %v332, %v444
      %v446 = vpop.f32.mrf.mxu0
      %447 = vmatprep.mubr.bf16.mxu0 0
      %448 = vmatmul.mubr.bf16.gmra.mxu0 %v183
      %v449 = vpop.f32.mrf.mxu0
      %v450 = vadd.f32 %v337, %v449
      %v451 = vpop.f32.mrf.mxu0
      %v452 = vpop.f32.mrf.mxu0
      %v453 = vadd.f32 %v340, %v452
      %v454 = vpop.f32.mrf.mxu0
      %455 = vdwg.mxu0
      %v456 = vld [vmem:[%s165 + $0x1] sm:$0xff]
      %v457 = vld [vmem:[%s165 + $0x11] sm:$0xff]
      %v458 = vld [vmem:[%s165 + $0x21] sm:$0xff]
      %v459 = vld [vmem:[%s165 + $0x31] sm:$0xff]
      %v460 = vld [vmem:[%s165 + $0x41] sm:$0xff]
      %v461 = vld [vmem:[%s165 + $0x51] sm:$0xff]
      %v462 = vld [vmem:[%s165 + $0x61] sm:$0xff]
      %v463 = vld [vmem:[%s165 + $0x71] sm:$0xff]
      %v464 = vpack.c.bf16 %v457, %v456
      %v465 = vpack.c.bf16 %v459, %v458
      %v466 = vpack.c.bf16 %v461, %v460
      %v467 = vpack.c.bf16 %v463, %v462
      %s468 = scalar_lea.vmem %s1, 128
      %v469 = vld [vmem:[%s468] sm:$0xf]
      %v470 = vld [vmem:[%s468 + $0x4] sm:$0xf]
      %v471 = vld [vmem:[%s468 + $0x8] sm:$0xf]
      %v472 = vld [vmem:[%s468 + $0xc] sm:$0xf]
      %v473 = vld [vmem:[%s468 + $0x10] sm:$0xf]
      %v474 = vld [vmem:[%s468 + $0x14] sm:$0xf]
      %v475 = vld [vmem:[%s468 + $0x18] sm:$0xf]
      %v476 = vld [vmem:[%s468 + $0x1c] sm:$0xf]
      %v477 = vld [vmem:[%s468 + $0x20] sm:$0xf]
      %v478 = vld [vmem:[%s468 + $0x24] sm:$0xf]
      %v479 = vld [vmem:[%s468 + $0x28] sm:$0xf]
      %v480 = vld [vmem:[%s468 + $0x2c] sm:$0xf]
      %v481 = vld [vmem:[%s468 + $0x30] sm:$0xf]
      %v482 = vld [vmem:[%s468 + $0x34] sm:$0xf]
      %v483 = vld [vmem:[%s468 + $0x38] sm:$0xf]
      %v484 = vld [vmem:[%s468 + $0x3c] sm:$0xf]
      %v501 = vunpack.c.l.b16 %v469
      %v502 = vunpack.c.l.b16 %v470
      %v503 = vunpack.c.l.b16 %v471
      %v504 = vunpack.c.l.b16 %v472
      %v505 = vunpack.c.l.b16 %v473
      %v506 = vunpack.c.l.b16 %v474
      %v507 = vunpack.c.l.b16 %v475
      %v508 = vunpack.c.l.b16 %v476
      %v509 = vunpack.c.l.b16 %v477
      %v510 = vunpack.c.l.b16 %v478
      %v511 = vunpack.c.l.b16 %v479
      %v512 = vunpack.c.l.b16 %v480
      %v513 = vunpack.c.l.b16 %v481
      %v514 = vunpack.c.l.b16 %v482
      %v515 = vunpack.c.l.b16 %v483
      %v516 = vunpack.c.l.b16 %v484
      %v517 = vpack.c.b16 %v502, %v501
      %v518 = vpack.c.b16 %v504, %v503
      %v519 = vpack.c.b16 %v506, %v505
      %v520 = vpack.c.b16 %v508, %v507
      %v521 = vpack.c.b16 %v510, %v509
      %v522 = vpack.c.b16 %v512, %v511
      %v523 = vpack.c.b16 %v514, %v513
      %v524 = vpack.c.b16 %v516, %v515
      %533 = vmatprep.subr.bf16.mxu0 0
      %534 = vmatpush1.bf16.msra.mxu0 %v524
      %535 = vmatprep.subr.bf16.mxu0 0
      %536 = vmatpush1.bf16.msra.mxu0 %v523
      %537 = vmatprep.subr.bf16.mxu0 0
      %538 = vmatpush1.bf16.msra.mxu0 %v522
      %539 = vmatprep.subr.bf16.mxu0 0
      %540 = vmatpush1.bf16.msra.mxu0 %v521
      %541 = vmatprep.subr.bf16.mxu0 0
      %542 = vmatpush1.bf16.msra.mxu0 %v520
      %543 = vmatprep.subr.bf16.mxu0 0
      %544 = vmatpush1.bf16.msra.mxu0 %v519
      %545 = vmatprep.subr.bf16.mxu0 0
      %546 = vmatpush1.bf16.msra.mxu0 %v518
      %547 = vmatprep.subr.bf16.mxu0 0
      %548 = vmatpush1.bf16.msra.mxu0 %v517
      %549 = vmatprep.subr.bf16.mxu0 0
      %550 = vmatpush2.bf16.msra.mxu0 0
      %551 = vmatprep.subr.bf16.mxu0 0
      %552 = vmatpush2.bf16.msra.mxu0 0
      %553 = vmatprep.subr.bf16.mxu0 0
      %554 = vmatpush2.bf16.msra.mxu0 0
      %555 = vmatprep.subr.bf16.mxu0 0
      %556 = vmatpush2.bf16.msra.mxu0 0
      %557 = vmatprep.subr.bf16.mxu0 0
      %558 = vmatpush2.bf16.msra.mxu0 0
      %559 = vmatprep.subr.bf16.mxu0 0
      %560 = vmatpush2.bf16.msra.mxu0 0
      %561 = vmatprep.subr.bf16.mxu0 0
      %562 = vmatpush2.bf16.msra.mxu0 0
      %563 = vmatprep.subr.bf16.mxu0 0
      %564 = vmatpush2.bf16.msra.mxu0 0
      %565 = vmatprep.mubr.bf16.mxu0 0
      %566 = vmatmul.mubr.bf16.gmra.mxu0 %v464
      %v567 = vpop.f32.mrf.mxu0
      %v568 = vadd.f32 0.0, %v567
      %v569 = vpop.f32.mrf.mxu0
      %v570 = vpop.f32.mrf.mxu0
      %v571 = vadd.f32 0.0, %v570
      %v572 = vpop.f32.mrf.mxu0
      %573 = vmatprep.mubr.bf16.mxu0 0
      %574 = vmatmul.mubr.bf16.gmra.mxu0 %v465
      %v575 = vpop.f32.mrf.mxu0
      %v576 = vadd.f32 0.0, %v575
      %v577 = vpop.f32.mrf.mxu0
      %v578 = vpop.f32.mrf.mxu0
      %v579 = vadd.f32 0.0, %v578
      %v580 = vpop.f32.mrf.mxu0
      %581 = vmatprep.mubr.bf16.mxu0 0
      %582 = vmatmul.mubr.bf16.gmra.mxu0 %v466
      %v583 = vpop.f32.mrf.mxu0
      %v584 = vadd.f32 0.0, %v583
      %v585 = vpop.f32.mrf.mxu0
      %v586 = vpop.f32.mrf.mxu0
      %v587 = vadd.f32 0.0, %v586
      %v588 = vpop.f32.mrf.mxu0
      %589 = vmatprep.mubr.bf16.mxu0 0
      %590 = vmatmul.mubr.bf16.gmra.mxu0 %v467
      %v591 = vpop.f32.mrf.mxu0
      %v592 = vadd.f32 0.0, %v591
      %v593 = vpop.f32.mrf.mxu0
      %v594 = vpop.f32.mrf.mxu0
      %v595 = vadd.f32 0.0, %v594
      %v596 = vpop.f32.mrf.mxu0
      %597 = vdwg.mxu0
      %v598 = vadd.f32 %v426, %v568
      %v599 = vadd.f32 %v429, %v571
      %v600 = vadd.f32 %v434, %v576
      %v601 = vadd.f32 %v437, %v579
      %v602 = vadd.f32 %v442, %v584
      %v603 = vadd.f32 %v445, %v587
      %v604 = vadd.f32 %v450, %v592
      %v605 = vadd.f32 %v453, %v595
      %s606 = scalar_lea.vmem %s165, 288
      %v607 = vld [vmem:[%s606] sm:$0xff]
      %v608 = vld [vmem:[%s606 + $0x10] sm:$0xff]
      %v609 = vld [vmem:[%s606 + $0x20] sm:$0xff]
      %v610 = vld [vmem:[%s606 + $0x30] sm:$0xff]
      %v611 = vld [vmem:[%s606 + $0x40] sm:$0xff]
      %v612 = vld [vmem:[%s606 + $0x50] sm:$0xff]
      %v613 = vld [vmem:[%s606 + $0x60] sm:$0xff]
      %v614 = vld [vmem:[%s606 + $0x70] sm:$0xff]
      %v615 = vpack.c.bf16 %v608, %v607
      %v616 = vpack.c.bf16 %v610, %v609
      %v617 = vpack.c.bf16 %v612, %v611
      %v618 = vpack.c.bf16 %v614, %v613
      %s619 = scalar_lea.vmem %s1, 192
      %v620 = vld [vmem:[%s619] sm:$0xf]
      %v621 = vld [vmem:[%s619 + $0x4] sm:$0xf]
      %v622 = vld [vmem:[%s619 + $0x8] sm:$0xf]
      %v623 = vld [vmem:[%s619 + $0xc] sm:$0xf]
      %v624 = vld [vmem:[%s619 + $0x10] sm:$0xf]
      %v625 = vld [vmem:[%s619 + $0x14] sm:$0xf]
      %v626 = vld [vmem:[%s619 + $0x18] sm:$0xf]
      %v627 = vld [vmem:[%s619 + $0x1c] sm:$0xf]
      %v628 = vld [vmem:[%s619 + $0x20] sm:$0xf]
      %v629 = vld [vmem:[%s619 + $0x24] sm:$0xf]
      %v630 = vld [vmem:[%s619 + $0x28] sm:$0xf]
      %v631 = vld [vmem:[%s619 + $0x2c] sm:$0xf]
      %v632 = vld [vmem:[%s619 + $0x30] sm:$0xf]
      %v633 = vld [vmem:[%s619 + $0x34] sm:$0xf]
      %v634 = vld [vmem:[%s619 + $0x38] sm:$0xf]
      %v635 = vld [vmem:[%s619 + $0x3c] sm:$0xf]
      %v652 = vunpack.c.l.b16 %v620
      %v653 = vunpack.c.l.b16 %v621
      %v654 = vunpack.c.l.b16 %v622
      %v655 = vunpack.c.l.b16 %v623
      %v656 = vunpack.c.l.b16 %v624
      %v657 = vunpack.c.l.b16 %v625
      %v658 = vunpack.c.l.b16 %v626
      %v659 = vunpack.c.l.b16 %v627
      %v660 = vunpack.c.l.b16 %v628
      %v661 = vunpack.c.l.b16 %v629
      %v662 = vunpack.c.l.b16 %v630
      %v663 = vunpack.c.l.b16 %v631
      %v664 = vunpack.c.l.b16 %v632
      %v665 = vunpack.c.l.b16 %v633
      %v666 = vunpack.c.l.b16 %v634
      %v667 = vunpack.c.l.b16 %v635
      %v668 = vpack.c.b16 %v653, %v652
      %v669 = vpack.c.b16 %v655, %v654
      %v670 = vpack.c.b16 %v657, %v656
      %v671 = vpack.c.b16 %v659, %v658
      %v672 = vpack.c.b16 %v661, %v660
      %v673 = vpack.c.b16 %v663, %v662
      %v674 = vpack.c.b16 %v665, %v664
      %v675 = vpack.c.b16 %v667, %v666
      %684 = vmatprep.subr.bf16.mxu0 0
      %685 = vmatpush1.bf16.msra.mxu0 %v675
      %686 = vmatprep.subr.bf16.mxu0 0
      %687 = vmatpush1.bf16.msra.mxu0 %v674
      %688 = vmatprep.subr.bf16.mxu0 0
      %689 = vmatpush1.bf16.msra.mxu0 %v673
      %690 = vmatprep.subr.bf16.mxu0 0
      %691 = vmatpush1.bf16.msra.mxu0 %v672
      %692 = vmatprep.subr.bf16.mxu0 0
      %693 = vmatpush1.bf16.msra.mxu0 %v671
      %694 = vmatprep.subr.bf16.mxu0 0
      %695 = vmatpush1.bf16.msra.mxu0 %v670
      %696 = vmatprep.subr.bf16.mxu0 0
      %697 = vmatpush1.bf16.msra.mxu0 %v669
      %698 = vmatprep.subr.bf16.mxu0 0
      %699 = vmatpush1.bf16.msra.mxu0 %v668
      %700 = vmatprep.subr.bf16.mxu0 0
      %701 = vmatpush2.bf16.msra.mxu0 0
      %702 = vmatprep.subr.bf16.mxu0 0
      %703 = vmatpush2.bf16.msra.mxu0 0
      %704 = vmatprep.subr.bf16.mxu0 0
      %705 = vmatpush2.bf16.msra.mxu0 0
      %706 = vmatprep.subr.bf16.mxu0 0
      %707 = vmatpush2.bf16.msra.mxu0 0
      %708 = vmatprep.subr.bf16.mxu0 0
      %709 = vmatpush2.bf16.msra.mxu0 0
      %710 = vmatprep.subr.bf16.mxu0 0
      %711 = vmatpush2.bf16.msra.mxu0 0
      %712 = vmatprep.subr.bf16.mxu0 0
      %713 = vmatpush2.bf16.msra.mxu0 0
      %714 = vmatprep.subr.bf16.mxu0 0
      %715 = vmatpush2.bf16.msra.mxu0 0
      %716 = vmatprep.mubr.bf16.mxu0 0
      %717 = vmatmul.mubr.bf16.gmra.mxu0 %v615
      %v718 = vpop.f32.mrf.mxu0
      %v719 = vadd.f32 0.0, %v718
      %v720 = vpop.f32.mrf.mxu0
      %v721 = vpop.f32.mrf.mxu0
      %v722 = vadd.f32 0.0, %v721
      %v723 = vpop.f32.mrf.mxu0
      %724 = vmatprep.mubr.bf16.mxu0 0
      %725 = vmatmul.mubr.bf16.gmra.mxu0 %v616
      %v726 = vpop.f32.mrf.mxu0
      %v727 = vadd.f32 0.0, %v726
      %v728 = vpop.f32.mrf.mxu0
      %v729 = vpop.f32.mrf.mxu0
      %v730 = vadd.f32 0.0, %v729
      %v731 = vpop.f32.mrf.mxu0
      %732 = vmatprep.mubr.bf16.mxu0 0
      %733 = vmatmul.mubr.bf16.gmra.mxu0 %v617
      %v734 = vpop.f32.mrf.mxu0
      %v735 = vadd.f32 0.0, %v734
      %v736 = vpop.f32.mrf.mxu0
      %v737 = vpop.f32.mrf.mxu0
      %v738 = vadd.f32 0.0, %v737
      %v739 = vpop.f32.mrf.mxu0
      %740 = vmatprep.mubr.bf16.mxu0 0
      %741 = vmatmul.mubr.bf16.gmra.mxu0 %v618
      %v742 = vpop.f32.mrf.mxu0
      %v743 = vadd.f32 0.0, %v742
      %v744 = vpop.f32.mrf.mxu0
      %v745 = vpop.f32.mrf.mxu0
      %v746 = vadd.f32 0.0, %v745
      %v747 = vpop.f32.mrf.mxu0
      %748 = vdwg.mxu0
      %v749 = vadd.f32 %v598, %v719
      %v750 = vadd.f32 %v599, %v722
      %v751 = vadd.f32 %v600, %v727
      %v752 = vadd.f32 %v601, %v730
      %v753 = vadd.f32 %v602, %v735
      %v754 = vadd.f32 %v603, %v738
      %v755 = vadd.f32 %v604, %v743
      %v756 = vadd.f32 %v605, %v746
      %s757 = scalar_lea.vmem %s165, 432
      %v758 = vld [vmem:[%s757] sm:$0xff]
      %v759 = vld [vmem:[%s757 + $0x10] sm:$0xff]
      %v760 = vld [vmem:[%s757 + $0x20] sm:$0xff]
      %v761 = vld [vmem:[%s757 + $0x30] sm:$0xff]
      %v762 = vld [vmem:[%s757 + $0x40] sm:$0xff]
      %v763 = vld [vmem:[%s757 + $0x50] sm:$0xff]
      %v764 = vld [vmem:[%s757 + $0x60] sm:$0xff]
      %v765 = vld [vmem:[%s757 + $0x70] sm:$0xff]
      %v766 = vpack.c.bf16 %v759, %v758
      %v767 = vpack.c.bf16 %v761, %v760
      %v768 = vpack.c.bf16 %v763, %v762
      %v769 = vpack.c.bf16 %v765, %v764
      %s770 = scalar_lea.vmem %s1, 256
      %v771 = vld [vmem:[%s770] sm:$0xf]
      %v772 = vld [vmem:[%s770 + $0x4] sm:$0xf]
      %v773 = vld [vmem:[%s770 + $0x8] sm:$0xf]
      %v774 = vld [vmem:[%s770 + $0xc] sm:$0xf]
      %v775 = vld [vmem:[%s770 + $0x10] sm:$0xf]
      %v776 = vld [vmem:[%s770 + $0x14] sm:$0xf]
      %v777 = vld [vmem:[%s770 + $0x18] sm:$0xf]
      %v778 = vld [vmem:[%s770 + $0x1c] sm:$0xf]
      %v779 = vld [vmem:[%s770 + $0x20] sm:$0xf]
      %v780 = vld [vmem:[%s770 + $0x24] sm:$0xf]
      %v781 = vld [vmem:[%s770 + $0x28] sm:$0xf]
      %v782 = vld [vmem:[%s770 + $0x2c] sm:$0xf]
      %v783 = vld [vmem:[%s770 + $0x30] sm:$0xf]
      %v784 = vld [vmem:[%s770 + $0x34] sm:$0xf]
      %v785 = vld [vmem:[%s770 + $0x38] sm:$0xf]
      %v786 = vld [vmem:[%s770 + $0x3c] sm:$0xf]
      %v803 = vunpack.c.l.b16 %v771
      %v804 = vunpack.c.l.b16 %v772
      %v805 = vunpack.c.l.b16 %v773
      %v806 = vunpack.c.l.b16 %v774
      %v807 = vunpack.c.l.b16 %v775
      %v808 = vunpack.c.l.b16 %v776
      %v809 = vunpack.c.l.b16 %v777
      %v810 = vunpack.c.l.b16 %v778
      %v811 = vunpack.c.l.b16 %v779
      %v812 = vunpack.c.l.b16 %v780
      %v813 = vunpack.c.l.b16 %v781
      %v814 = vunpack.c.l.b16 %v782
      %v815 = vunpack.c.l.b16 %v783
      %v816 = vunpack.c.l.b16 %v784
      %v817 = vunpack.c.l.b16 %v785
      %v818 = vunpack.c.l.b16 %v786
      %v819 = vpack.c.b16 %v804, %v803
      %v820 = vpack.c.b16 %v806, %v805
      %v821 = vpack.c.b16 %v808, %v807
      %v822 = vpack.c.b16 %v810, %v809
      %v823 = vpack.c.b16 %v812, %v811
      %v824 = vpack.c.b16 %v814, %v813
      %v825 = vpack.c.b16 %v816, %v815
      %v826 = vpack.c.b16 %v818, %v817
      %835 = vmatprep.subr.bf16.mxu0 0
      %836 = vmatpush1.bf16.msra.mxu0 %v826
      %837 = vmatprep.subr.bf16.mxu0 0
      %838 = vmatpush1.bf16.msra.mxu0 %v825
      %839 = vmatprep.subr.bf16.mxu0 0
      %840 = vmatpush1.bf16.msra.mxu0 %v824
      %841 = vmatprep.subr.bf16.mxu0 0
      %842 = vmatpush1.bf16.msra.mxu0 %v823
      %843 = vmatprep.subr.bf16.mxu0 0
      %844 = vmatpush1.bf16.msra.mxu0 %v822
      %845 = vmatprep.subr.bf16.mxu0 0
      %846 = vmatpush1.bf16.msra.mxu0 %v821
      %847 = vmatprep.subr.bf16.mxu0 0
      %848 = vmatpush1.bf16.msra.mxu0 %v820
      %849 = vmatprep.subr.bf16.mxu0 0
      %850 = vmatpush1.bf16.msra.mxu0 %v819
      %851 = vmatprep.subr.bf16.mxu0 0
      %852 = vmatpush2.bf16.msra.mxu0 0
      %853 = vmatprep.subr.bf16.mxu0 0
      %854 = vmatpush2.bf16.msra.mxu0 0
      %855 = vmatprep.subr.bf16.mxu0 0
      %856 = vmatpush2.bf16.msra.mxu0 0
      %857 = vmatprep.subr.bf16.mxu0 0
      %858 = vmatpush2.bf16.msra.mxu0 0
      %859 = vmatprep.subr.bf16.mxu0 0
      %860 = vmatpush2.bf16.msra.mxu0 0
      %861 = vmatprep.subr.bf16.mxu0 0
      %862 = vmatpush2.bf16.msra.mxu0 0
      %863 = vmatprep.subr.bf16.mxu0 0
      %864 = vmatpush2.bf16.msra.mxu0 0
      %865 = vmatprep.subr.bf16.mxu0 0
      %866 = vmatpush2.bf16.msra.mxu0 0
      %867 = vmatprep.mubr.bf16.mxu0 0
      %868 = vmatmul.mubr.bf16.gmra.mxu0 %v766
      %v869 = vpop.f32.mrf.mxu0
      %v870 = vadd.f32 0.0, %v869
      %v871 = vpop.f32.mrf.mxu0
      %v872 = vpop.f32.mrf.mxu0
      %v873 = vadd.f32 0.0, %v872
      %v874 = vpop.f32.mrf.mxu0
      %875 = vmatprep.mubr.bf16.mxu0 0
      %876 = vmatmul.mubr.bf16.gmra.mxu0 %v767
      %v877 = vpop.f32.mrf.mxu0
      %v878 = vadd.f32 0.0, %v877
      %v879 = vpop.f32.mrf.mxu0
      %v880 = vpop.f32.mrf.mxu0
      %v881 = vadd.f32 0.0, %v880
      %v882 = vpop.f32.mrf.mxu0
      %883 = vmatprep.mubr.bf16.mxu0 0
      %884 = vmatmul.mubr.bf16.gmra.mxu0 %v768
      %v885 = vpop.f32.mrf.mxu0
      %v886 = vadd.f32 0.0, %v885
      %v887 = vpop.f32.mrf.mxu0
      %v888 = vpop.f32.mrf.mxu0
      %v889 = vadd.f32 0.0, %v888
      %v890 = vpop.f32.mrf.mxu0
      %891 = vmatprep.mubr.bf16.mxu0 0
      %892 = vmatmul.mubr.bf16.gmra.mxu0 %v769
      %v893 = vpop.f32.mrf.mxu0
      %v894 = vadd.f32 0.0, %v893
      %v895 = vpop.f32.mrf.mxu0
      %v896 = vpop.f32.mrf.mxu0
      %v897 = vadd.f32 0.0, %v896
      %v898 = vpop.f32.mrf.mxu0
      %899 = vdwg.mxu0
      %v900 = vadd.f32 %v749, %v870
      %v901 = vadd.f32 %v750, %v873
      %v902 = vadd.f32 %v751, %v878
      %v903 = vadd.f32 %v752, %v881
      %v904 = vadd.f32 %v753, %v886
      %v905 = vadd.f32 %v754, %v889
      %v906 = vadd.f32 %v755, %v894
      %v907 = vadd.f32 %v756, %v897
      %v908 = vld [vmem:[%s606 + $0x1] sm:$0xff]
      %v909 = vld [vmem:[%s606 + $0x11] sm:$0xff]
      %v910 = vld [vmem:[%s606 + $0x21] sm:$0xff]
      %v911 = vld [vmem:[%s606 + $0x31] sm:$0xff]
      %v912 = vld [vmem:[%s606 + $0x41] sm:$0xff]
      %v913 = vld [vmem:[%s606 + $0x51] sm:$0xff]
      %v914 = vld [vmem:[%s606 + $0x61] sm:$0xff]
      %v915 = vld [vmem:[%s606 + $0x71] sm:$0xff]
      %v916 = vpack.c.bf16 %v909, %v908
      %v917 = vpack.c.bf16 %v911, %v910
      %v918 = vpack.c.bf16 %v913, %v912
      %v919 = vpack.c.bf16 %v915, %v914
      %s920 = scalar_lea.vmem %s1, 320
      %v921 = vld [vmem:[%s920] sm:$0xf]
      %v922 = vld [vmem:[%s920 + $0x4] sm:$0xf]
      %v923 = vld [vmem:[%s920 + $0x8] sm:$0xf]
      %v924 = vld [vmem:[%s920 + $0xc] sm:$0xf]
      %v925 = vld [vmem:[%s920 + $0x10] sm:$0xf]
      %v926 = vld [vmem:[%s920 + $0x14] sm:$0xf]
      %v927 = vld [vmem:[%s920 + $0x18] sm:$0xf]
      %v928 = vld [vmem:[%s920 + $0x1c] sm:$0xf]
      %v929 = vld [vmem:[%s920 + $0x20] sm:$0xf]
      %v930 = vld [vmem:[%s920 + $0x24] sm:$0xf]
      %v931 = vld [vmem:[%s920 + $0x28] sm:$0xf]
      %v932 = vld [vmem:[%s920 + $0x2c] sm:$0xf]
      %v933 = vld [vmem:[%s920 + $0x30] sm:$0xf]
      %v934 = vld [vmem:[%s920 + $0x34] sm:$0xf]
      %v935 = vld [vmem:[%s920 + $0x38] sm:$0xf]
      %v936 = vld [vmem:[%s920 + $0x3c] sm:$0xf]
      %v953 = vunpack.c.l.b16 %v921
      %v954 = vunpack.c.l.b16 %v922
      %v955 = vunpack.c.l.b16 %v923
      %v956 = vunpack.c.l.b16 %v924
      %v957 = vunpack.c.l.b16 %v925
      %v958 = vunpack.c.l.b16 %v926
      %v959 = vunpack.c.l.b16 %v927
      %v960 = vunpack.c.l.b16 %v928
      %v961 = vunpack.c.l.b16 %v929
      %v962 = vunpack.c.l.b16 %v930
      %v963 = vunpack.c.l.b16 %v931
      %v964 = vunpack.c.l.b16 %v932
      %v965 = vunpack.c.l.b16 %v933
      %v966 = vunpack.c.l.b16 %v934
      %v967 = vunpack.c.l.b16 %v935
      %v968 = vunpack.c.l.b16 %v936
      %v969 = vpack.c.b16 %v954, %v953
      %v970 = vpack.c.b16 %v956, %v955
      %v971 = vpack.c.b16 %v958, %v957
      %v972 = vpack.c.b16 %v960, %v959
      %v973 = vpack.c.b16 %v962, %v961
      %v974 = vpack.c.b16 %v964, %v963
      %v975 = vpack.c.b16 %v966, %v965
      %v976 = vpack.c.b16 %v968, %v967
      %985 = vmatprep.subr.bf16.mxu0 0
      %986 = vmatpush1.bf16.msra.mxu0 %v976
      %987 = vmatprep.subr.bf16.mxu0 0
      %988 = vmatpush1.bf16.msra.mxu0 %v975
      %989 = vmatprep.subr.bf16.mxu0 0
      %990 = vmatpush1.bf16.msra.mxu0 %v974
      %991 = vmatprep.subr.bf16.mxu0 0
      %992 = vmatpush1.bf16.msra.mxu0 %v973
      %993 = vmatprep.subr.bf16.mxu0 0
      %994 = vmatpush1.bf16.msra.mxu0 %v972
      %995 = vmatprep.subr.bf16.mxu0 0
      %996 = vmatpush1.bf16.msra.mxu0 %v971
      %997 = vmatprep.subr.bf16.mxu0 0
      %998 = vmatpush1.bf16.msra.mxu0 %v970
      %999 = vmatprep.subr.bf16.mxu0 0
      %1000 = vmatpush1.bf16.msra.mxu0 %v969
      %1001 = vmatprep.subr.bf16.mxu0 0
      %1002 = vmatpush2.bf16.msra.mxu0 0
      %1003 = vmatprep.subr.bf16.mxu0 0
      %1004 = vmatpush2.bf16.msra.mxu0 0
      %1005 = vmatprep.subr.bf16.mxu0 0
      %1006 = vmatpush2.bf16.msra.mxu0 0
      %1007 = vmatprep.subr.bf16.mxu0 0
      %1008 = vmatpush2.bf16.msra.mxu0 0
      %1009 = vmatprep.subr.bf16.mxu0 0
      %1010 = vmatpush2.bf16.msra.mxu0 0
      %1011 = vmatprep.subr.bf16.mxu0 0
      %1012 = vmatpush2.bf16.msra.mxu0 0
      %1013 = vmatprep.subr.bf16.mxu0 0
      %1014 = vmatpush2.bf16.msra.mxu0 0
      %1015 = vmatprep.subr.bf16.mxu0 0
      %1016 = vmatpush2.bf16.msra.mxu0 0
      %1017 = vmatprep.mubr.bf16.mxu0 0
      %1018 = vmatmul.mubr.bf16.gmra.mxu0 %v916
      %v1019 = vpop.f32.mrf.mxu0
      %v1020 = vadd.f32 0.0, %v1019
      %v1021 = vpop.f32.mrf.mxu0
      %v1022 = vpop.f32.mrf.mxu0
      %v1023 = vadd.f32 0.0, %v1022
      %v1024 = vpop.f32.mrf.mxu0
      %1025 = vmatprep.mubr.bf16.mxu0 0
      %1026 = vmatmul.mubr.bf16.gmra.mxu0 %v917
      %v1027 = vpop.f32.mrf.mxu0
      %v1028 = vadd.f32 0.0, %v1027
      %v1029 = vpop.f32.mrf.mxu0
      %v1030 = vpop.f32.mrf.mxu0
      %v1031 = vadd.f32 0.0, %v1030
      %v1032 = vpop.f32.mrf.mxu0
      %1033 = vmatprep.mubr.bf16.mxu0 0
      %1034 = vmatmul.mubr.bf16.gmra.mxu0 %v918
      %v1035 = vpop.f32.mrf.mxu0
      %v1036 = vadd.f32 0.0, %v1035
      %v1037 = vpop.f32.mrf.mxu0
      %v1038 = vpop.f32.mrf.mxu0
      %v1039 = vadd.f32 0.0, %v1038
      %v1040 = vpop.f32.mrf.mxu0
      %1041 = vmatprep.mubr.bf16.mxu0 0
      %1042 = vmatmul.mubr.bf16.gmra.mxu0 %v919
      %v1043 = vpop.f32.mrf.mxu0
      %v1044 = vadd.f32 0.0, %v1043
      %v1045 = vpop.f32.mrf.mxu0
      %v1046 = vpop.f32.mrf.mxu0
      %v1047 = vadd.f32 0.0, %v1046
      %v1048 = vpop.f32.mrf.mxu0
      %1049 = vdwg.mxu0
      %v1050 = vadd.f32 %v900, %v1020
      %v1051 = vadd.f32 %v901, %v1023
      %v1052 = vadd.f32 %v902, %v1028
      %v1053 = vadd.f32 %v903, %v1031
      %v1054 = vadd.f32 %v904, %v1036
      %v1055 = vadd.f32 %v905, %v1039
      %v1056 = vadd.f32 %v906, %v1044
      %v1057 = vadd.f32 %v907, %v1047
      %s1058 = scalar_lea.vmem %s165, 16
      %v1059 = vld [vmem:[%s1058] sm:$0xff]
      %v1060 = vld [vmem:[%s1058 + $0x10] sm:$0xff]
      %v1061 = vld [vmem:[%s1058 + $0x20] sm:$0xff]
      %v1062 = vld [vmem:[%s1058 + $0x30] sm:$0xff]
      %v1063 = vld [vmem:[%s1058 + $0x40] sm:$0xff]
      %v1064 = vld [vmem:[%s1058 + $0x50] sm:$0xff]
      %v1065 = vld [vmem:[%s1058 + $0x60] sm:$0xff]
      %v1066 = vld [vmem:[%s1058 + $0x70] sm:$0xff]
      %v1067 = vpack.c.bf16 %v1060, %v1059
      %v1068 = vpack.c.bf16 %v1062, %v1061
      %v1069 = vpack.c.bf16 %v1064, %v1063
      %v1070 = vpack.c.bf16 %v1066, %v1065
      %s1071 = scalar_lea.vmem %s1, 384
      %v1072 = vld [vmem:[%s1071] sm:$0xf]
      %v1073 = vld [vmem:[%s1071 + $0x4] sm:$0xf]
      %v1074 = vld [vmem:[%s1071 + $0x8] sm:$0xf]
      %v1075 = vld [vmem:[%s1071 + $0xc] sm:$0xf]
      %v1076 = vld [vmem:[%s1071 + $0x10] sm:$0xf]
      %v1077 = vld [vmem:[%s1071 + $0x14] sm:$0xf]
      %v1078 = vld [vmem:[%s1071 + $0x18] sm:$0xf]
      %v1079 = vld [vmem:[%s1071 + $0x1c] sm:$0xf]
      %v1080 = vld [vmem:[%s1071 + $0x20] sm:$0xf]
      %v1081 = vld [vmem:[%s1071 + $0x24] sm:$0xf]
      %v1082 = vld [vmem:[%s1071 + $0x28] sm:$0xf]
      %v1083 = vld [vmem:[%s1071 + $0x2c] sm:$0xf]
      %v1084 = vld [vmem:[%s1071 + $0x30] sm:$0xf]
      %v1085 = vld [vmem:[%s1071 + $0x34] sm:$0xf]
      %v1086 = vld [vmem:[%s1071 + $0x38] sm:$0xf]
      %v1087 = vld [vmem:[%s1071 + $0x3c] sm:$0xf]
      %v1104 = vunpack.c.l.b16 %v1072
      %v1105 = vunpack.c.l.b16 %v1073
      %v1106 = vunpack.c.l.b16 %v1074
      %v1107 = vunpack.c.l.b16 %v1075
      %v1108 = vunpack.c.l.b16 %v1076
      %v1109 = vunpack.c.l.b16 %v1077
      %v1110 = vunpack.c.l.b16 %v1078
      %v1111 = vunpack.c.l.b16 %v1079
      %v1112 = vunpack.c.l.b16 %v1080
      %v1113 = vunpack.c.l.b16 %v1081
      %v1114 = vunpack.c.l.b16 %v1082
      %v1115 = vunpack.c.l.b16 %v1083
      %v1116 = vunpack.c.l.b16 %v1084
      %v1117 = vunpack.c.l.b16 %v1085
      %v1118 = vunpack.c.l.b16 %v1086
      %v1119 = vunpack.c.l.b16 %v1087
      %v1120 = vpack.c.b16 %v1105, %v1104
      %v1121 = vpack.c.b16 %v1107, %v1106
      %v1122 = vpack.c.b16 %v1109, %v1108
      %v1123 = vpack.c.b16 %v1111, %v1110
      %v1124 = vpack.c.b16 %v1113, %v1112
      %v1125 = vpack.c.b16 %v1115, %v1114
      %v1126 = vpack.c.b16 %v1117, %v1116
      %v1127 = vpack.c.b16 %v1119, %v1118
      %1136 = vmatprep.subr.bf16.mxu0 0
      %1137 = vmatpush1.bf16.msra.mxu0 %v1127
      %1138 = vmatprep.subr.bf16.mxu0 0
      %1139 = vmatpush1.bf16.msra.mxu0 %v1126
      %1140 = vmatprep.subr.bf16.mxu0 0
      %1141 = vmatpush1.bf16.msra.mxu0 %v1125
      %1142 = vmatprep.subr.bf16.mxu0 0
      %1143 = vmatpush1.bf16.msra.mxu0 %v1124
      %1144 = vmatprep.subr.bf16.mxu0 0
      %1145 = vmatpush1.bf16.msra.mxu0 %v1123
      %1146 = vmatprep.subr.bf16.mxu0 0
      %1147 = vmatpush1.bf16.msra.mxu0 %v1122
      %1148 = vmatprep.subr.bf16.mxu0 0
      %1149 = vmatpush1.bf16.msra.mxu0 %v1121
      %1150 = vmatprep.subr.bf16.mxu0 0
      %1151 = vmatpush1.bf16.msra.mxu0 %v1120
      %1152 = vmatprep.subr.bf16.mxu0 0
      %1153 = vmatpush2.bf16.msra.mxu0 0
      %1154 = vmatprep.subr.bf16.mxu0 0
      %1155 = vmatpush2.bf16.msra.mxu0 0
      %1156 = vmatprep.subr.bf16.mxu0 0
      %1157 = vmatpush2.bf16.msra.mxu0 0
      %1158 = vmatprep.subr.bf16.mxu0 0
      %1159 = vmatpush2.bf16.msra.mxu0 0
      %1160 = vmatprep.subr.bf16.mxu0 0
      %1161 = vmatpush2.bf16.msra.mxu0 0
      %1162 = vmatprep.subr.bf16.mxu0 0
      %1163 = vmatpush2.bf16.msra.mxu0 0
      %1164 = vmatprep.subr.bf16.mxu0 0
      %1165 = vmatpush2.bf16.msra.mxu0 0
      %1166 = vmatprep.subr.bf16.mxu0 0
      %1167 = vmatpush2.bf16.msra.mxu0 0
      %1168 = vmatprep.mubr.bf16.mxu0 0
      %1169 = vmatmul.mubr.bf16.gmra.mxu0 %v1067
      %v1170 = vpop.f32.mrf.mxu0
      %v1171 = vadd.f32 0.0, %v1170
      %v1172 = vpop.f32.mrf.mxu0
      %v1173 = vpop.f32.mrf.mxu0
      %v1174 = vadd.f32 0.0, %v1173
      %v1175 = vpop.f32.mrf.mxu0
      %1176 = vmatprep.mubr.bf16.mxu0 0
      %1177 = vmatmul.mubr.bf16.gmra.mxu0 %v1068
      %v1178 = vpop.f32.mrf.mxu0
      %v1179 = vadd.f32 0.0, %v1178
      %v1180 = vpop.f32.mrf.mxu0
      %v1181 = vpop.f32.mrf.mxu0
      %v1182 = vadd.f32 0.0, %v1181
      %v1183 = vpop.f32.mrf.mxu0
      %1184 = vmatprep.mubr.bf16.mxu0 0
      %1185 = vmatmul.mubr.bf16.gmra.mxu0 %v1069
      %v1186 = vpop.f32.mrf.mxu0
      %v1187 = vadd.f32 0.0, %v1186
      %v1188 = vpop.f32.mrf.mxu0
      %v1189 = vpop.f32.mrf.mxu0
      %v1190 = vadd.f32 0.0, %v1189
      %v1191 = vpop.f32.mrf.mxu0
      %1192 = vmatprep.mubr.bf16.mxu0 0
      %1193 = vmatmul.mubr.bf16.gmra.mxu0 %v1070
      %v1194 = vpop.f32.mrf.mxu0
      %v1195 = vadd.f32 0.0, %v1194
      %v1196 = vpop.f32.mrf.mxu0
      %v1197 = vpop.f32.mrf.mxu0
      %v1198 = vadd.f32 0.0, %v1197
      %v1199 = vpop.f32.mrf.mxu0
      %1200 = vdwg.mxu0
      %v1201 = vadd.f32 %v1050, %v1171
      %v1202 = vadd.f32 %v1051, %v1174
      %v1203 = vadd.f32 %v1052, %v1179
      %v1204 = vadd.f32 %v1053, %v1182
      %v1205 = vadd.f32 %v1054, %v1187
      %v1206 = vadd.f32 %v1055, %v1190
      %v1207 = vadd.f32 %v1056, %v1195
      %v1208 = vadd.f32 %v1057, %v1198
      %s1209 = scalar_lea.vmem %s165, 160
      %v1210 = vld [vmem:[%s1209] sm:$0xff]
      %v1211 = vld [vmem:[%s1209 + $0x10] sm:$0xff]
      %v1212 = vld [vmem:[%s1209 + $0x20] sm:$0xff]
      %v1213 = vld [vmem:[%s1209 + $0x30] sm:$0xff]
      %v1214 = vld [vmem:[%s1209 + $0x40] sm:$0xff]
      %v1215 = vld [vmem:[%s1209 + $0x50] sm:$0xff]
      %v1216 = vld [vmem:[%s1209 + $0x60] sm:$0xff]
      %v1217 = vld [vmem:[%s1209 + $0x70] sm:$0xff]
      %v1218 = vpack.c.bf16 %v1211, %v1210
      %v1219 = vpack.c.bf16 %v1213, %v1212
      %v1220 = vpack.c.bf16 %v1215, %v1214
      %v1221 = vpack.c.bf16 %v1217, %v1216
      %s1222 = scalar_lea.vmem %s1, 448
      %v1223 = vld [vmem:[%s1222] sm:$0xf]
      %v1224 = vld [vmem:[%s1222 + $0x4] sm:$0xf]
      %v1225 = vld [vmem:[%s1222 + $0x8] sm:$0xf]
      %v1226 = vld [vmem:[%s1222 + $0xc] sm:$0xf]
      %v1227 = vld [vmem:[%s1222 + $0x10] sm:$0xf]
      %v1228 = vld [vmem:[%s1222 + $0x14] sm:$0xf]
      %v1229 = vld [vmem:[%s1222 + $0x18] sm:$0xf]
      %v1230 = vld [vmem:[%s1222 + $0x1c] sm:$0xf]
      %v1231 = vld [vmem:[%s1222 + $0x20] sm:$0xf]
      %v1232 = vld [vmem:[%s1222 + $0x24] sm:$0xf]
      %v1233 = vld [vmem:[%s1222 + $0x28] sm:$0xf]
      %v1234 = vld [vmem:[%s1222 + $0x2c] sm:$0xf]
      %v1235 = vld [vmem:[%s1222 + $0x30] sm:$0xf]
      %v1236 = vld [vmem:[%s1222 + $0x34] sm:$0xf]
      %v1237 = vld [vmem:[%s1222 + $0x38] sm:$0xf]
      %v1238 = vld [vmem:[%s1222 + $0x3c] sm:$0xf]
      %v1255 = vunpack.c.l.b16 %v1223
      %v1256 = vunpack.c.l.b16 %v1224
      %v1257 = vunpack.c.l.b16 %v1225
      %v1258 = vunpack.c.l.b16 %v1226
      %v1259 = vunpack.c.l.b16 %v1227
      %v1260 = vunpack.c.l.b16 %v1228
      %v1261 = vunpack.c.l.b16 %v1229
      %v1262 = vunpack.c.l.b16 %v1230
      %v1263 = vunpack.c.l.b16 %v1231
      %v1264 = vunpack.c.l.b16 %v1232
      %v1265 = vunpack.c.l.b16 %v1233
      %v1266 = vunpack.c.l.b16 %v1234
      %v1267 = vunpack.c.l.b16 %v1235
      %v1268 = vunpack.c.l.b16 %v1236
      %v1269 = vunpack.c.l.b16 %v1237
      %v1270 = vunpack.c.l.b16 %v1238
      %v1271 = vpack.c.b16 %v1256, %v1255
      %v1272 = vpack.c.b16 %v1258, %v1257
      %v1273 = vpack.c.b16 %v1260, %v1259
      %v1274 = vpack.c.b16 %v1262, %v1261
      %v1275 = vpack.c.b16 %v1264, %v1263
      %v1276 = vpack.c.b16 %v1266, %v1265
      %v1277 = vpack.c.b16 %v1268, %v1267
      %v1278 = vpack.c.b16 %v1270, %v1269
      %1287 = vmatprep.subr.bf16.mxu0 0
      %1288 = vmatpush1.bf16.msra.mxu0 %v1278
      %1289 = vmatprep.subr.bf16.mxu0 0
      %1290 = vmatpush1.bf16.msra.mxu0 %v1277
      %1291 = vmatprep.subr.bf16.mxu0 0
      %1292 = vmatpush1.bf16.msra.mxu0 %v1276
      %1293 = vmatprep.subr.bf16.mxu0 0
      %1294 = vmatpush1.bf16.msra.mxu0 %v1275
      %1295 = vmatprep.subr.bf16.mxu0 0
      %1296 = vmatpush1.bf16.msra.mxu0 %v1274
      %1297 = vmatprep.subr.bf16.mxu0 0
      %1298 = vmatpush1.bf16.msra.mxu0 %v1273
      %1299 = vmatprep.subr.bf16.mxu0 0
      %1300 = vmatpush1.bf16.msra.mxu0 %v1272
      %1301 = vmatprep.subr.bf16.mxu0 0
      %1302 = vmatpush1.bf16.msra.mxu0 %v1271
      %1303 = vmatprep.subr.bf16.mxu0 0
      %1304 = vmatpush2.bf16.msra.mxu0 0
      %1305 = vmatprep.subr.bf16.mxu0 0
      %1306 = vmatpush2.bf16.msra.mxu0 0
      %1307 = vmatprep.subr.bf16.mxu0 0
      %1308 = vmatpush2.bf16.msra.mxu0 0
      %1309 = vmatprep.subr.bf16.mxu0 0
      %1310 = vmatpush2.bf16.msra.mxu0 0
      %1311 = vmatprep.subr.bf16.mxu0 0
      %1312 = vmatpush2.bf16.msra.mxu0 0
      %1313 = vmatprep.subr.bf16.mxu0 0
      %1314 = vmatpush2.bf16.msra.mxu0 0
      %1315 = vmatprep.subr.bf16.mxu0 0
      %1316 = vmatpush2.bf16.msra.mxu0 0
      %1317 = vmatprep.subr.bf16.mxu0 0
      %1318 = vmatpush2.bf16.msra.mxu0 0
      %1319 = vmatprep.mubr.bf16.mxu0 0
      %1320 = vmatmul.mubr.bf16.gmra.mxu0 %v1218
      %v1321 = vpop.f32.mrf.mxu0
      %v1322 = vadd.f32 0.0, %v1321
      %v1323 = vpop.f32.mrf.mxu0
      %v1324 = vpop.f32.mrf.mxu0
      %v1325 = vadd.f32 0.0, %v1324
      %v1326 = vpop.f32.mrf.mxu0
      %1327 = vmatprep.mubr.bf16.mxu0 0
      %1328 = vmatmul.mubr.bf16.gmra.mxu0 %v1219
      %v1329 = vpop.f32.mrf.mxu0
      %v1330 = vadd.f32 0.0, %v1329
      %v1331 = vpop.f32.mrf.mxu0
      %v1332 = vpop.f32.mrf.mxu0
      %v1333 = vadd.f32 0.0, %v1332
      %v1334 = vpop.f32.mrf.mxu0
      %1335 = vmatprep.mubr.bf16.mxu0 0
      %1336 = vmatmul.mubr.bf16.gmra.mxu0 %v1220
      %v1337 = vpop.f32.mrf.mxu0
      %v1338 = vadd.f32 0.0, %v1337
      %v1339 = vpop.f32.mrf.mxu0
      %v1340 = vpop.f32.mrf.mxu0
      %v1341 = vadd.f32 0.0, %v1340
      %v1342 = vpop.f32.mrf.mxu0
      %1343 = vmatprep.mubr.bf16.mxu0 0
      %1344 = vmatmul.mubr.bf16.gmra.mxu0 %v1221
      %v1345 = vpop.f32.mrf.mxu0
      %v1346 = vadd.f32 0.0, %v1345
      %v1347 = vpop.f32.mrf.mxu0
      %v1348 = vpop.f32.mrf.mxu0
      %v1349 = vadd.f32 0.0, %v1348
      %v1350 = vpop.f32.mrf.mxu0
      %1351 = vdwg.mxu0
      %v1352 = vadd.f32 %v1201, %v1322
      %v1353 = vadd.f32 %v1202, %v1325
      %v1354 = vadd.f32 %v1203, %v1330
      %v1355 = vadd.f32 %v1204, %v1333
      %v1356 = vadd.f32 %v1205, %v1338
      %v1357 = vadd.f32 %v1206, %v1341
      %v1358 = vadd.f32 %v1207, %v1346
      %v1359 = vadd.f32 %v1208, %v1349
      %v1360 = vld [vmem:[%s1058 + $0x1] sm:$0xff]
      %v1361 = vld [vmem:[%s1058 + $0x11] sm:$0xff]
      %v1362 = vld [vmem:[%s1058 + $0x21] sm:$0xff]
      %v1363 = vld [vmem:[%s1058 + $0x31] sm:$0xff]
      %v1364 = vld [vmem:[%s1058 + $0x41] sm:$0xff]
      %v1365 = vld [vmem:[%s1058 + $0x51] sm:$0xff]
      %v1366 = vld [vmem:[%s1058 + $0x61] sm:$0xff]
      %v1367 = vld [vmem:[%s1058 + $0x71] sm:$0xff]
      %v1368 = vpack.c.bf16 %v1361, %v1360
      %v1369 = vpack.c.bf16 %v1363, %v1362
      %v1370 = vpack.c.bf16 %v1365, %v1364
      %v1371 = vpack.c.bf16 %v1367, %v1366
      %s1372 = scalar_lea.vmem %s1, 512
      %v1373 = vld [vmem:[%s1372] sm:$0xf]
      %v1374 = vld [vmem:[%s1372 + $0x4] sm:$0xf]
      %v1375 = vld [vmem:[%s1372 + $0x8] sm:$0xf]
      %v1376 = vld [vmem:[%s1372 + $0xc] sm:$0xf]
      %v1377 = vld [vmem:[%s1372 + $0x10] sm:$0xf]
      %v1378 = vld [vmem:[%s1372 + $0x14] sm:$0xf]
      %v1379 = vld [vmem:[%s1372 + $0x18] sm:$0xf]
      %v1380 = vld [vmem:[%s1372 + $0x1c] sm:$0xf]
      %v1381 = vld [vmem:[%s1372 + $0x20] sm:$0xf]
      %v1382 = vld [vmem:[%s1372 + $0x24] sm:$0xf]
      %v1383 = vld [vmem:[%s1372 + $0x28] sm:$0xf]
      %v1384 = vld [vmem:[%s1372 + $0x2c] sm:$0xf]
      %v1385 = vld [vmem:[%s1372 + $0x30] sm:$0xf]
      %v1386 = vld [vmem:[%s1372 + $0x34] sm:$0xf]
      %v1387 = vld [vmem:[%s1372 + $0x38] sm:$0xf]
      %v1388 = vld [vmem:[%s1372 + $0x3c] sm:$0xf]
      %v1405 = vunpack.c.l.b16 %v1373
      %v1406 = vunpack.c.l.b16 %v1374
      %v1407 = vunpack.c.l.b16 %v1375
      %v1408 = vunpack.c.l.b16 %v1376
      %v1409 = vunpack.c.l.b16 %v1377
      %v1410 = vunpack.c.l.b16 %v1378
      %v1411 = vunpack.c.l.b16 %v1379
      %v1412 = vunpack.c.l.b16 %v1380
      %v1413 = vunpack.c.l.b16 %v1381
      %v1414 = vunpack.c.l.b16 %v1382
      %v1415 = vunpack.c.l.b16 %v1383
      %v1416 = vunpack.c.l.b16 %v1384
      %v1417 = vunpack.c.l.b16 %v1385
      %v1418 = vunpack.c.l.b16 %v1386
      %v1419 = vunpack.c.l.b16 %v1387
      %v1420 = vunpack.c.l.b16 %v1388
      %v1421 = vpack.c.b16 %v1406, %v1405
      %v1422 = vpack.c.b16 %v1408, %v1407
      %v1423 = vpack.c.b16 %v1410, %v1409
      %v1424 = vpack.c.b16 %v1412, %v1411
      %v1425 = vpack.c.b16 %v1414, %v1413
      %v1426 = vpack.c.b16 %v1416, %v1415
      %v1427 = vpack.c.b16 %v1418, %v1417
      %v1428 = vpack.c.b16 %v1420, %v1419
      %1437 = vmatprep.subr.bf16.mxu0 0
      %1438 = vmatpush1.bf16.msra.mxu0 %v1428
      %1439 = vmatprep.subr.bf16.mxu0 0
      %1440 = vmatpush1.bf16.msra.mxu0 %v1427
      %1441 = vmatprep.subr.bf16.mxu0 0
      %1442 = vmatpush1.bf16.msra.mxu0 %v1426
      %1443 = vmatprep.subr.bf16.mxu0 0
      %1444 = vmatpush1.bf16.msra.mxu0 %v1425
      %1445 = vmatprep.subr.bf16.mxu0 0
      %1446 = vmatpush1.bf16.msra.mxu0 %v1424
      %1447 = vmatprep.subr.bf16.mxu0 0
      %1448 = vmatpush1.bf16.msra.mxu0 %v1423
      %1449 = vmatprep.subr.bf16.mxu0 0
      %1450 = vmatpush1.bf16.msra.mxu0 %v1422
      %1451 = vmatprep.subr.bf16.mxu0 0
      %1452 = vmatpush1.bf16.msra.mxu0 %v1421
      %1453 = vmatprep.subr.bf16.mxu0 0
      %1454 = vmatpush2.bf16.msra.mxu0 0
      %1455 = vmatprep.subr.bf16.mxu0 0
      %1456 = vmatpush2.bf16.msra.mxu0 0
      %1457 = vmatprep.subr.bf16.mxu0 0
      %1458 = vmatpush2.bf16.msra.mxu0 0
      %1459 = vmatprep.subr.bf16.mxu0 0
      %1460 = vmatpush2.bf16.msra.mxu0 0
      %1461 = vmatprep.subr.bf16.mxu0 0
      %1462 = vmatpush2.bf16.msra.mxu0 0
      %1463 = vmatprep.subr.bf16.mxu0 0
      %1464 = vmatpush2.bf16.msra.mxu0 0
      %1465 = vmatprep.subr.bf16.mxu0 0
      %1466 = vmatpush2.bf16.msra.mxu0 0
      %1467 = vmatprep.subr.bf16.mxu0 0
      %1468 = vmatpush2.bf16.msra.mxu0 0
      %1469 = vmatprep.mubr.bf16.mxu0 0
      %1470 = vmatmul.mubr.bf16.gmra.mxu0 %v1368
      %v1471 = vpop.f32.mrf.mxu0
      %v1472 = vadd.f32 0.0, %v1471
      %v1473 = vpop.f32.mrf.mxu0
      %v1474 = vpop.f32.mrf.mxu0
      %v1475 = vadd.f32 0.0, %v1474
      %v1476 = vpop.f32.mrf.mxu0
      %1477 = vmatprep.mubr.bf16.mxu0 0
      %1478 = vmatmul.mubr.bf16.gmra.mxu0 %v1369
      %v1479 = vpop.f32.mrf.mxu0
      %v1480 = vadd.f32 0.0, %v1479
      %v1481 = vpop.f32.mrf.mxu0
      %v1482 = vpop.f32.mrf.mxu0
      %v1483 = vadd.f32 0.0, %v1482
      %v1484 = vpop.f32.mrf.mxu0
      %1485 = vmatprep.mubr.bf16.mxu0 0
      %1486 = vmatmul.mubr.bf16.gmra.mxu0 %v1370
      %v1487 = vpop.f32.mrf.mxu0
      %v1488 = vadd.f32 0.0, %v1487
      %v1489 = vpop.f32.mrf.mxu0
      %v1490 = vpop.f32.mrf.mxu0
      %v1491 = vadd.f32 0.0, %v1490
      %v1492 = vpop.f32.mrf.mxu0
      %1493 = vmatprep.mubr.bf16.mxu0 0
      %1494 = vmatmul.mubr.bf16.gmra.mxu0 %v1371
      %v1495 = vpop.f32.mrf.mxu0
      %v1496 = vadd.f32 0.0, %v1495
      %v1497 = vpop.f32.mrf.mxu0
      %v1498 = vpop.f32.mrf.mxu0
      %v1499 = vadd.f32 0.0, %v1498
      %v1500 = vpop.f32.mrf.mxu0
      %1501 = vdwg.mxu0
      %v1502 = vadd.f32 %v1352, %v1472
      %v1503 = vadd.f32 %v1353, %v1475
      %v1504 = vadd.f32 %v1354, %v1480
      %v1505 = vadd.f32 %v1355, %v1483
      %v1506 = vadd.f32 %v1356, %v1488
      %v1507 = vadd.f32 %v1357, %v1491
      %v1508 = vadd.f32 %v1358, %v1496
      %v1509 = vadd.f32 %v1359, %v1499
      %v1510 = vadd.f32 %v1502, %v1503
      %v1511 = vadd.f32 %v1510, %v1504
      %v1512 = vadd.f32 %v1511, %v1505
      %v1513 = vadd.f32 %v1512, %v1506
      %v1514 = vadd.f32 %v1513, %v1507
      %v1515 = vadd.f32 %v1514, %v1508
      %v1516 = vadd.f32 %v1515, %v1509
      %v1517 = vrot.slane %v1516, 4
      %v1518 = vadd.f32 %v1516, %v1517
      %v1519 = vrot.slane %v1518, 2
      %v1520 = vadd.f32 %v1518, %v1519
      %v1521 = vrot.slane %v1520, 1
      %v1522 = vadd.f32 %v1520, %v1521
      %v1523 = vmul.f32 %v1522, 0.015625
      %v1524 = vmul.f32 %v1502, %v1502
      %v1525 = vmul.f32 %v1503, %v1503
      %v1526 = vmul.f32 %v1504, %v1504
      %v1527 = vmul.f32 %v1505, %v1505
      %v1528 = vmul.f32 %v1506, %v1506
      %v1529 = vmul.f32 %v1507, %v1507
      %v1530 = vmul.f32 %v1508, %v1508
      %v1531 = vmul.f32 %v1509, %v1509
      %v1532 = vadd.f32 %v1524, %v1525
      %v1533 = vadd.f32 %v1532, %v1526
      %v1534 = vadd.f32 %v1533, %v1527
      %v1535 = vadd.f32 %v1534, %v1528
      %v1536 = vadd.f32 %v1535, %v1529
      %v1537 = vadd.f32 %v1536, %v1530
      %v1538 = vadd.f32 %v1537, %v1531
      %v1539 = vrot.slane %v1538, 4
      %v1540 = vadd.f32 %v1538, %v1539
      %v1541 = vrot.slane %v1540, 2
      %v1542 = vadd.f32 %v1540, %v1541
      %v1543 = vrot.slane %v1542, 1
      %v1544 = vadd.f32 %v1542, %v1543
      %v1545 = vmul.f32 %v1544, 0.015625
      %v1546 = vmul.f32 %v1523, %v1523
      %v1547 = vsub.f32 %v1545, %v1546
      %v1548 = vmax.f32 %v1547, 0.0
      %v1549 = vsub.f32 %v1502, %v1523
      %v1550 = vsub.f32 %v1503, %v1523
      %v1551 = vsub.f32 %v1504, %v1523
      %v1552 = vsub.f32 %v1505, %v1523
      %v1553 = vsub.f32 %v1506, %v1523
      %v1554 = vsub.f32 %v1507, %v1523
      %v1555 = vsub.f32 %v1508, %v1523
      %v1556 = vsub.f32 %v1509, %v1523
      %v1557 = vadd.f32 %v1548, 1e-05
      %v1558 = vrsqrt.pop %v1557
      %v1559 = vmul.f32 %v1549, %v1558
      %v1560 = vmul.f32 %v1550, %v1558
      %v1561 = vmul.f32 %v1551, %v1558
      %v1562 = vmul.f32 %v1552, %v1558
      %v1563 = vmul.f32 %v1553, %v1558
      %v1564 = vmul.f32 %v1554, %v1558
      %v1565 = vmul.f32 %v1555, %v1558
      %v1566 = vmul.f32 %v1556, %v1558
      %v1567 = vmax.f32 %v1559, 0.0
      %v1568 = vmax.f32 %v1560, 0.0
      %v1569 = vmax.f32 %v1561, 0.0
      %v1570 = vmax.f32 %v1562, 0.0
      %v1571 = vmax.f32 %v1563, 0.0
      %v1572 = vmax.f32 %v1564, 0.0
      %v1573 = vmax.f32 %v1565, 0.0
      %v1574 = vmax.f32 %v1566, 0.0
      %1575 = vst [vmem:[#allocation2] sm:$0xff] 0.0
      %1576 = vst [vmem:[#allocation2 + $0x8] sm:$0x3] 0.0
      %1577 = vst [vmem:[#allocation2 + $0x10] sm:$0xff] 0.0
      %1578 = vst [vmem:[#allocation2 + $0x18] sm:$0x3] 0.0
      %1579 = vst [vmem:[#allocation2 + $0x20] sm:$0xff] 0.0
      %1580 = vst [vmem:[#allocation2 + $0x28] sm:$0x3] 0.0
      %1581 = vst [vmem:[#allocation2 + $0x30] sm:$0xff] 0.0
      %1582 = vst [vmem:[#allocation2 + $0x38] sm:$0x3] 0.0
      %1583 = vst [vmem:[#allocation2 + $0x40] sm:$0xff] 0.0
      %1584 = vst [vmem:[#allocation2 + $0x48] sm:$0x3] 0.0
      %1585 = vst [vmem:[#allocation2 + $0x50] sm:$0xff] 0.0
      %1586 = vst [vmem:[#allocation2 + $0x58] sm:$0x3] 0.0
      %1587 = vst [vmem:[#allocation2 + $0x60] sm:$0xff] 0.0
      %1588 = vst [vmem:[#allocation2 + $0x68] sm:$0x3] 0.0
      %1589 = vst [vmem:[#allocation2 + $0x70] sm:$0xff] 0.0
      %1590 = vst [vmem:[#allocation2 + $0x78] sm:$0x3] 0.0
      %1591 = vst [vmem:[#allocation2 + $0x80] sm:$0xff] 0.0
      %1592 = vst [vmem:[#allocation2 + $0x88] sm:$0x3] 0.0
      %1593 = vst [vmem:[#allocation2 + $0x90] sm:$0xff] 0.0
      %1594 = vst [vmem:[#allocation2 + $0x98] sm:$0x3] 0.0
      %s1595 = scalar_lea.vmem [#allocation2], 16
      %1596 = vst [vmem:[%s1595 + $0x1] sm:$0xff] %v1567
      %1597 = vst [vmem:[%s1595 + $0x11] sm:$0xff] %v1568
      %1598 = vst [vmem:[%s1595 + $0x21] sm:$0xff] %v1569
      %1599 = vst [vmem:[%s1595 + $0x31] sm:$0xff] %v1570
      %1600 = vst [vmem:[%s1595 + $0x41] sm:$0xff] %v1571
      %1601 = vst [vmem:[%s1595 + $0x51] sm:$0xff] %v1572
      %1602 = vst [vmem:[%s1595 + $0x61] sm:$0xff] %v1573
      %1603 = vst [vmem:[%s1595 + $0x71] sm:$0xff] %v1574
      %v1604 = vld [vmem:[#allocation2] sm:$0xff]
      %v1605 = vld [vmem:[#allocation2 + $0x10] sm:$0xff]
      %v1606 = vld [vmem:[#allocation2 + $0x20] sm:$0xff]
      %v1607 = vld [vmem:[#allocation2 + $0x30] sm:$0xff]
      %v1608 = vld [vmem:[#allocation2 + $0x40] sm:$0xff]
      %v1609 = vld [vmem:[#allocation2 + $0x50] sm:$0xff]
      %v1610 = vld [vmem:[#allocation2 + $0x60] sm:$0xff]
      %v1611 = vld [vmem:[#allocation2 + $0x70] sm:$0xff]
      %v1612 = vpack.c.bf16 %v1605, %v1604
      %v1613 = vpack.c.bf16 %v1607, %v1606
      %v1614 = vpack.c.bf16 %v1609, %v1608
      %v1615 = vpack.c.bf16 %v1611, %v1610
      %v1616 = vld [vmem:[%s2] sm:$0xf]
      %v1617 = vld [vmem:[%s2 + $0x4] sm:$0xf]
      %v1618 = vld [vmem:[%s2 + $0x8] sm:$0xf]
      %v1619 = vld [vmem:[%s2 + $0xc] sm:$0xf]
      %v1620 = vld [vmem:[%s2 + $0x10] sm:$0xf]
      %v1621 = vld [vmem:[%s2 + $0x14] sm:$0xf]
      %v1622 = vld [vmem:[%s2 + $0x18] sm:$0xf]
      %v1623 = vld [vmem:[%s2 + $0x1c] sm:$0xf]
      %v1624 = vld [vmem:[%s2 + $0x20] sm:$0xf]
      %v1625 = vld [vmem:[%s2 + $0x24] sm:$0xf]
      %v1626 = vld [vmem:[%s2 + $0x28] sm:$0xf]
      %v1627 = vld [vmem:[%s2 + $0x2c] sm:$0xf]
      %v1628 = vld [vmem:[%s2 + $0x30] sm:$0xf]
      %v1629 = vld [vmem:[%s2 + $0x34] sm:$0xf]
      %v1630 = vld [vmem:[%s2 + $0x38] sm:$0xf]
      %v1631 = vld [vmem:[%s2 + $0x3c] sm:$0xf]
      %v1632 = vld [vmem:[#allocation2 + $0x1] sm:$0xff]
      %v1633 = vld [vmem:[#allocation2 + $0x11] sm:$0xff]
      %v1634 = vld [vmem:[#allocation2 + $0x21] sm:$0xff]
      %v1635 = vld [vmem:[#allocation2 + $0x31] sm:$0xff]
      %v1636 = vld [vmem:[#allocation2 + $0x41] sm:$0xff]
      %v1637 = vld [vmem:[#allocation2 + $0x51] sm:$0xff]
      %v1638 = vld [vmem:[#allocation2 + $0x61] sm:$0xff]
      %v1639 = vld [vmem:[#allocation2 + $0x71] sm:$0xff]
      %v1640 = vpack.c.bf16 %v1633, %v1632
      %v1641 = vpack.c.bf16 %v1635, %v1634
      %v1642 = vpack.c.bf16 %v1637, %v1636
      %v1643 = vpack.c.bf16 %v1639, %v1638
      %s1644 = scalar_lea.vmem %s2, 64
      %v1645 = vld [vmem:[%s1644] sm:$0xf]
      %v1646 = vld [vmem:[%s1644 + $0x4] sm:$0xf]
      %v1647 = vld [vmem:[%s1644 + $0x8] sm:$0xf]
      %v1648 = vld [vmem:[%s1644 + $0xc] sm:$0xf]
      %v1649 = vld [vmem:[%s1644 + $0x10] sm:$0xf]
      %v1650 = vld [vmem:[%s1644 + $0x14] sm:$0xf]
      %v1651 = vld [vmem:[%s1644 + $0x18] sm:$0xf]
      %v1652 = vld [vmem:[%s1644 + $0x1c] sm:$0xf]
      %v1653 = vld [vmem:[%s1644 + $0x20] sm:$0xf]
      %v1654 = vld [vmem:[%s1644 + $0x24] sm:$0xf]
      %v1655 = vld [vmem:[%s1644 + $0x28] sm:$0xf]
      %v1656 = vld [vmem:[%s1644 + $0x2c] sm:$0xf]
      %v1657 = vld [vmem:[%s1644 + $0x30] sm:$0xf]
      %v1658 = vld [vmem:[%s1644 + $0x34] sm:$0xf]
      %v1659 = vld [vmem:[%s1644 + $0x38] sm:$0xf]
      %v1660 = vld [vmem:[%s1644 + $0x3c] sm:$0xf]
      %v1677 = vunpack.c.l.b16 %v1645
      %v1678 = vunpack.c.l.b16 %v1646
      %v1679 = vunpack.c.l.b16 %v1647
      %v1680 = vunpack.c.l.b16 %v1648
      %v1681 = vunpack.c.l.b16 %v1649
      %v1682 = vunpack.c.l.b16 %v1650
      %v1683 = vunpack.c.l.b16 %v1651
      %v1684 = vunpack.c.l.b16 %v1652
      %v1685 = vunpack.c.l.b16 %v1653
      %v1686 = vunpack.c.l.b16 %v1654
      %v1687 = vunpack.c.l.b16 %v1655
      %v1688 = vunpack.c.l.b16 %v1656
      %v1689 = vunpack.c.l.b16 %v1657
      %v1690 = vunpack.c.l.b16 %v1658
      %v1691 = vunpack.c.l.b16 %v1659
      %v1692 = vunpack.c.l.b16 %v1660
      %v1693 = vpack.c.b16 %v1678, %v1677
      %v1694 = vpack.c.b16 %v1680, %v1679
      %v1695 = vpack.c.b16 %v1682, %v1681
      %v1696 = vpack.c.b16 %v1684, %v1683
      %v1697 = vpack.c.b16 %v1686, %v1685
      %v1698 = vpack.c.b16 %v1688, %v1687
      %v1699 = vpack.c.b16 %v1690, %v1689
      %v1700 = vpack.c.b16 %v1692, %v1691
      %1709 = vmatprep.subr.bf16.mxu0 0
      %1710 = vmatpush1.bf16.msra.mxu0 %v1700
      %1711 = vmatprep.subr.bf16.mxu0 0
      %1712 = vmatpush1.bf16.msra.mxu0 %v1699
      %1713 = vmatprep.subr.bf16.mxu0 0
      %1714 = vmatpush1.bf16.msra.mxu0 %v1698
      %1715 = vmatprep.subr.bf16.mxu0 0
      %1716 = vmatpush1.bf16.msra.mxu0 %v1697
      %1717 = vmatprep.subr.bf16.mxu0 0
      %1718 = vmatpush1.bf16.msra.mxu0 %v1696
      %1719 = vmatprep.subr.bf16.mxu0 0
      %1720 = vmatpush1.bf16.msra.mxu0 %v1695
      %1721 = vmatprep.subr.bf16.mxu0 0
      %1722 = vmatpush1.bf16.msra.mxu0 %v1694
      %1723 = vmatprep.subr.bf16.mxu0 0
      %1724 = vmatpush1.bf16.msra.mxu0 %v1693
      %1725 = vmatprep.subr.bf16.mxu0 0
      %1726 = vmatpush2.bf16.msra.mxu0 0
      %1727 = vmatprep.subr.bf16.mxu0 0
      %1728 = vmatpush2.bf16.msra.mxu0 0
      %1729 = vmatprep.subr.bf16.mxu0 0
      %1730 = vmatpush2.bf16.msra.mxu0 0
      %1731 = vmatprep.subr.bf16.mxu0 0
      %1732 = vmatpush2.bf16.msra.mxu0 0
      %1733 = vmatprep.subr.bf16.mxu0 0
      %1734 = vmatpush2.bf16.msra.mxu0 0
      %1735 = vmatprep.subr.bf16.mxu0 0
      %1736 = vmatpush2.bf16.msra.mxu0 0
      %1737 = vmatprep.subr.bf16.mxu0 0
      %1738 = vmatpush2.bf16.msra.mxu0 0
      %1739 = vmatprep.subr.bf16.mxu0 0
      %1740 = vmatpush2.bf16.msra.mxu0 0
      %1741 = vmatprep.mubr.bf16.mxu0 0
      %1742 = vmatmul.mubr.bf16.gmra.mxu0 %v1640
      %v1743 = vpop.f32.mrf.mxu0
      %v1744 = vadd.f32 0.0, %v1743
      %v1745 = vpop.f32.mrf.mxu0
      %v1746 = vpop.f32.mrf.mxu0
      %v1747 = vadd.f32 0.0, %v1746
      %v1748 = vpop.f32.mrf.mxu0
      %1749 = vmatprep.mubr.bf16.mxu0 0
      %1750 = vmatmul.mubr.bf16.gmra.mxu0 %v1641
      %v1751 = vpop.f32.mrf.mxu0
      %v1752 = vadd.f32 0.0, %v1751
      %v1753 = vpop.f32.mrf.mxu0
      %v1754 = vpop.f32.mrf.mxu0
      %v1755 = vadd.f32 0.0, %v1754
      %v1756 = vpop.f32.mrf.mxu0
      %1757 = vmatprep.mubr.bf16.mxu0 0
      %1758 = vmatmul.mubr.bf16.gmra.mxu0 %v1642
      %v1759 = vpop.f32.mrf.mxu0
      %v1760 = vadd.f32 0.0, %v1759
      %v1761 = vpop.f32.mrf.mxu0
      %v1762 = vpop.f32.mrf.mxu0
      %v1763 = vadd.f32 0.0, %v1762
      %v1764 = vpop.f32.mrf.mxu0
      %1765 = vmatprep.mubr.bf16.mxu0 0
      %1766 = vmatmul.mubr.bf16.gmra.mxu0 %v1643
      %v1767 = vpop.f32.mrf.mxu0
      %v1768 = vadd.f32 0.0, %v1767
      %v1769 = vpop.f32.mrf.mxu0
      %v1770 = vpop.f32.mrf.mxu0
      %v1771 = vadd.f32 0.0, %v1770
      %v1772 = vpop.f32.mrf.mxu0
      %1773 = vdwg.mxu0
      %v1790 = vunpack.c.l.b16 %v1616
      %v1791 = vunpack.c.l.b16 %v1617
      %v1792 = vunpack.c.l.b16 %v1618
      %v1793 = vunpack.c.l.b16 %v1619
      %v1794 = vunpack.c.l.b16 %v1620
      %v1795 = vunpack.c.l.b16 %v1621
      %v1796 = vunpack.c.l.b16 %v1622
      %v1797 = vunpack.c.l.b16 %v1623
      %v1798 = vunpack.c.l.b16 %v1624
      %v1799 = vunpack.c.l.b16 %v1625
      %v1800 = vunpack.c.l.b16 %v1626
      %v1801 = vunpack.c.l.b16 %v1627
      %v1802 = vunpack.c.l.b16 %v1628
      %v1803 = vunpack.c.l.b16 %v1629
      %v1804 = vunpack.c.l.b16 %v1630
      %v1805 = vunpack.c.l.b16 %v1631
      %v1806 = vpack.c.b16 %v1791, %v1790
      %v1807 = vpack.c.b16 %v1793, %v1792
      %v1808 = vpack.c.b16 %v1795, %v1794
      %v1809 = vpack.c.b16 %v1797, %v1796
      %v1810 = vpack.c.b16 %v1799, %v1798
      %v1811 = vpack.c.b16 %v1801, %v1800
      %v1812 = vpack.c.b16 %v1803, %v1802
      %v1813 = vpack.c.b16 %v1805, %v1804
      %1822 = vmatprep.subr.bf16.mxu0 0
      %1823 = vmatpush1.bf16.msra.mxu0 %v1813
      %1824 = vmatprep.subr.bf16.mxu0 0
      %1825 = vmatpush1.bf16.msra.mxu0 %v1812
      %1826 = vmatprep.subr.bf16.mxu0 0
      %1827 = vmatpush1.bf16.msra.mxu0 %v1811
      %1828 = vmatprep.subr.bf16.mxu0 0
      %1829 = vmatpush1.bf16.msra.mxu0 %v1810
      %1830 = vmatprep.subr.bf16.mxu0 0
      %1831 = vmatpush1.bf16.msra.mxu0 %v1809
      %1832 = vmatprep.subr.bf16.mxu0 0
      %1833 = vmatpush1.bf16.msra.mxu0 %v1808
      %1834 = vmatprep.subr.bf16.mxu0 0
      %1835 = vmatpush1.bf16.msra.mxu0 %v1807
      %1836 = vmatprep.subr.bf16.mxu0 0
      %1837 = vmatpush1.bf16.msra.mxu0 %v1806
      %1838 = vmatprep.subr.bf16.mxu0 0
      %1839 = vmatpush2.bf16.msra.mxu0 0
      %1840 = vmatprep.subr.bf16.mxu0 0
      %1841 = vmatpush2.bf16.msra.mxu0 0
      %1842 = vmatprep.subr.bf16.mxu0 0
      %1843 = vmatpush2.bf16.msra.mxu0 0
      %1844 = vmatprep.subr.bf16.mxu0 0
      %1845 = vmatpush2.bf16.msra.mxu0 0
      %1846 = vmatprep.subr.bf16.mxu0 0
      %1847 = vmatpush2.bf16.msra.mxu0 0
      %1848 = vmatprep.subr.bf16.mxu0 0
      %1849 = vmatpush2.bf16.msra.mxu0 0
      %1850 = vmatprep.subr.bf16.mxu0 0
      %1851 = vmatpush2.bf16.msra.mxu0 0
      %1852 = vmatprep.subr.bf16.mxu0 0
      %1853 = vmatpush2.bf16.msra.mxu0 0
      %1854 = vmatprep.mubr.bf16.mxu0 0
      %1855 = vmatmul.mubr.bf16.gmra.mxu0 %v1612
      %v1856 = vpop.f32.mrf.mxu0
      %v1857 = vadd.f32 %v1744, %v1856
      %v1858 = vpop.f32.mrf.mxu0
      %v1859 = vpop.f32.mrf.mxu0
      %v1860 = vadd.f32 %v1747, %v1859
      %v1861 = vpop.f32.mrf.mxu0
      %1862 = vmatprep.mubr.bf16.mxu0 0
      %1863 = vmatmul.mubr.bf16.gmra.mxu0 %v1613
      %v1864 = vpop.f32.mrf.mxu0
      %v1865 = vadd.f32 %v1752, %v1864
      %v1866 = vpop.f32.mrf.mxu0
      %v1867 = vpop.f32.mrf.mxu0
      %v1868 = vadd.f32 %v1755, %v1867
      %v1869 = vpop.f32.mrf.mxu0
      %1870 = vmatprep.mubr.bf16.mxu0 0
      %1871 = vmatmul.mubr.bf16.gmra.mxu0 %v1614
      %v1872 = vpop.f32.mrf.mxu0
      %v1873 = vadd.f32 %v1760, %v1872
      %v1874 = vpop.f32.mrf.mxu0
      %v1875 = vpop.f32.mrf.mxu0
      %v1876 = vadd.f32 %v1763, %v1875
      %v1877 = vpop.f32.mrf.mxu0
      %1878 = vmatprep.mubr.bf16.mxu0 0
      %1879 = vmatmul.mubr.bf16.gmra.mxu0 %v1615
      %v1880 = vpop.f32.mrf.mxu0
      %v1881 = vadd.f32 %v1768, %v1880
      %v1882 = vpop.f32.mrf.mxu0
      %v1883 = vpop.f32.mrf.mxu0
      %v1884 = vadd.f32 %v1771, %v1883
      %v1885 = vpop.f32.mrf.mxu0
      %1886 = vdwg.mxu0
      %v1887 = vld [vmem:[#allocation2 + $0x2] sm:$0xff]
      %v1888 = vld [vmem:[#allocation2 + $0x12] sm:$0xff]
      %v1889 = vld [vmem:[#allocation2 + $0x22] sm:$0xff]
      %v1890 = vld [vmem:[#allocation2 + $0x32] sm:$0xff]
      %v1891 = vld [vmem:[#allocation2 + $0x42] sm:$0xff]
      %v1892 = vld [vmem:[#allocation2 + $0x52] sm:$0xff]
      %v1893 = vld [vmem:[#allocation2 + $0x62] sm:$0xff]
      %v1894 = vld [vmem:[#allocation2 + $0x72] sm:$0xff]
      %v1895 = vpack.c.bf16 %v1888, %v1887
      %v1896 = vpack.c.bf16 %v1890, %v1889
      %v1897 = vpack.c.bf16 %v1892, %v1891
      %v1898 = vpack.c.bf16 %v1894, %v1893
      %s1899 = scalar_lea.vmem %s2, 128
      %v1900 = vld [vmem:[%s1899] sm:$0xf]
      %v1901 = vld [vmem:[%s1899 + $0x4] sm:$0xf]
      %v1902 = vld [vmem:[%s1899 + $0x8] sm:$0xf]
      %v1903 = vld [vmem:[%s1899 + $0xc] sm:$0xf]
      %v1904 = vld [vmem:[%s1899 + $0x10] sm:$0xf]
      %v1905 = vld [vmem:[%s1899 + $0x14] sm:$0xf]
      %v1906 = vld [vmem:[%s1899 + $0x18] sm:$0xf]
      %v1907 = vld [vmem:[%s1899 + $0x1c] sm:$0xf]
      %v1908 = vld [vmem:[%s1899 + $0x20] sm:$0xf]
      %v1909 = vld [vmem:[%s1899 + $0x24] sm:$0xf]
      %v1910 = vld [vmem:[%s1899 + $0x28] sm:$0xf]
      %v1911 = vld [vmem:[%s1899 + $0x2c] sm:$0xf]
      %v1912 = vld [vmem:[%s1899 + $0x30] sm:$0xf]
      %v1913 = vld [vmem:[%s1899 + $0x34] sm:$0xf]
      %v1914 = vld [vmem:[%s1899 + $0x38] sm:$0xf]
      %v1915 = vld [vmem:[%s1899 + $0x3c] sm:$0xf]
      %v1932 = vunpack.c.l.b16 %v1900
      %v1933 = vunpack.c.l.b16 %v1901
      %v1934 = vunpack.c.l.b16 %v1902
      %v1935 = vunpack.c.l.b16 %v1903
      %v1936 = vunpack.c.l.b16 %v1904
      %v1937 = vunpack.c.l.b16 %v1905
      %v1938 = vunpack.c.l.b16 %v1906
      %v1939 = vunpack.c.l.b16 %v1907
      %v1940 = vunpack.c.l.b16 %v1908
      %v1941 = vunpack.c.l.b16 %v1909
      %v1942 = vunpack.c.l.b16 %v1910
      %v1943 = vunpack.c.l.b16 %v1911
      %v1944 = vunpack.c.l.b16 %v1912
      %v1945 = vunpack.c.l.b16 %v1913
      %v1946 = vunpack.c.l.b16 %v1914
      %v1947 = vunpack.c.l.b16 %v1915
      %v1948 = vpack.c.b16 %v1933, %v1932
      %v1949 = vpack.c.b16 %v1935, %v1934
      %v1950 = vpack.c.b16 %v1937, %v1936
      %v1951 = vpack.c.b16 %v1939, %v1938
      %v1952 = vpack.c.b16 %v1941, %v1940
      %v1953 = vpack.c.b16 %v1943, %v1942
      %v1954 = vpack.c.b16 %v1945, %v1944
      %v1955 = vpack.c.b16 %v1947, %v1946
      %1964 = vmatprep.subr.bf16.mxu0 0
      %1965 = vmatpush1.bf16.msra.mxu0 %v1955
      %1966 = vmatprep.subr.bf16.mxu0 0
      %1967 = vmatpush1.bf16.msra.mxu0 %v1954
      %1968 = vmatprep.subr.bf16.mxu0 0
      %1969 = vmatpush1.bf16.msra.mxu0 %v1953
      %1970 = vmatprep.subr.bf16.mxu0 0
      %1971 = vmatpush1.bf16.msra.mxu0 %v1952
      %1972 = vmatprep.subr.bf16.mxu0 0
      %1973 = vmatpush1.bf16.msra.mxu0 %v1951
      %1974 = vmatprep.subr.bf16.mxu0 0
      %1975 = vmatpush1.bf16.msra.mxu0 %v1950
      %1976 = vmatprep.subr.bf16.mxu0 0
      %1977 = vmatpush1.bf16.msra.mxu0 %v1949
      %1978 = vmatprep.subr.bf16.mxu0 0
      %1979 = vmatpush1.bf16.msra.mxu0 %v1948
      %1980 = vmatprep.subr.bf16.mxu0 0
      %1981 = vmatpush2.bf16.msra.mxu0 0
      %1982 = vmatprep.subr.bf16.mxu0 0
      %1983 = vmatpush2.bf16.msra.mxu0 0
      %1984 = vmatprep.subr.bf16.mxu0 0
      %1985 = vmatpush2.bf16.msra.mxu0 0
      %1986 = vmatprep.subr.bf16.mxu0 0
      %1987 = vmatpush2.bf16.msra.mxu0 0
      %1988 = vmatprep.subr.bf16.mxu0 0
      %1989 = vmatpush2.bf16.msra.mxu0 0
      %1990 = vmatprep.subr.bf16.mxu0 0
      %1991 = vmatpush2.bf16.msra.mxu0 0
      %1992 = vmatprep.subr.bf16.mxu0 0
      %1993 = vmatpush2.bf16.msra.mxu0 0
      %1994 = vmatprep.subr.bf16.mxu0 0
      %1995 = vmatpush2.bf16.msra.mxu0 0
      %1996 = vmatprep.mubr.bf16.mxu0 0
      %1997 = vmatmul.mubr.bf16.gmra.mxu0 %v1895
      %v1998 = vpop.f32.mrf.mxu0
      %v1999 = vadd.f32 0.0, %v1998
      %v2000 = vpop.f32.mrf.mxu0
      %v2001 = vpop.f32.mrf.mxu0
      %v2002 = vadd.f32 0.0, %v2001
      %v2003 = vpop.f32.mrf.mxu0
      %2004 = vmatprep.mubr.bf16.mxu0 0
      %2005 = vmatmul.mubr.bf16.gmra.mxu0 %v1896
      %v2006 = vpop.f32.mrf.mxu0
      %v2007 = vadd.f32 0.0, %v2006
      %v2008 = vpop.f32.mrf.mxu0
      %v2009 = vpop.f32.mrf.mxu0
      %v2010 = vadd.f32 0.0, %v2009
      %v2011 = vpop.f32.mrf.mxu0
      %2012 = vmatprep.mubr.bf16.mxu0 0
      %2013 = vmatmul.mubr.bf16.gmra.mxu0 %v1897
      %v2014 = vpop.f32.mrf.mxu0
      %v2015 = vadd.f32 0.0, %v2014
      %v2016 = vpop.f32.mrf.mxu0
      %v2017 = vpop.f32.mrf.mxu0
      %v2018 = vadd.f32 0.0, %v2017
      %v2019 = vpop.f32.mrf.mxu0
      %2020 = vmatprep.mubr.bf16.mxu0 0
      %2021 = vmatmul.mubr.bf16.gmra.mxu0 %v1898
      %v2022 = vpop.f32.mrf.mxu0
      %v2023 = vadd.f32 0.0, %v2022
      %v2024 = vpop.f32.mrf.mxu0
      %v2025 = vpop.f32.mrf.mxu0
      %v2026 = vadd.f32 0.0, %v2025
      %v2027 = vpop.f32.mrf.mxu0
      %2028 = vdwg.mxu0
      %v2029 = vadd.f32 %v1857, %v1999
      %v2030 = vadd.f32 %v1860, %v2002
      %v2031 = vadd.f32 %v1865, %v2007
      %v2032 = vadd.f32 %v1868, %v2010
      %v2033 = vadd.f32 %v1873, %v2015
      %v2034 = vadd.f32 %v1876, %v2018
      %v2035 = vadd.f32 %v1881, %v2023
      %v2036 = vadd.f32 %v1884, %v2026
      %v2037 = vld [vmem:[%s1595] sm:$0xff]
      %v2038 = vld [vmem:[%s1595 + $0x10] sm:$0xff]
      %v2039 = vld [vmem:[%s1595 + $0x20] sm:$0xff]
      %v2040 = vld [vmem:[%s1595 + $0x30] sm:$0xff]
      %v2041 = vld [vmem:[%s1595 + $0x40] sm:$0xff]
      %v2042 = vld [vmem:[%s1595 + $0x50] sm:$0xff]
      %v2043 = vld [vmem:[%s1595 + $0x60] sm:$0xff]
      %v2044 = vld [vmem:[%s1595 + $0x70] sm:$0xff]
      %v2045 = vpack.c.bf16 %v2038, %v2037
      %v2046 = vpack.c.bf16 %v2040, %v2039
      %v2047 = vpack.c.bf16 %v2042, %v2041
      %v2048 = vpack.c.bf16 %v2044, %v2043
      %s2049 = scalar_lea.vmem %s2, 192
      %v2050 = vld [vmem:[%s2049] sm:$0xf]
      %v2051 = vld [vmem:[%s2049 + $0x4] sm:$0xf]
      %v2052 = vld [vmem:[%s2049 + $0x8] sm:$0xf]
      %v2053 = vld [vmem:[%s2049 + $0xc] sm:$0xf]
      %v2054 = vld [vmem:[%s2049 + $0x10] sm:$0xf]
      %v2055 = vld [vmem:[%s2049 + $0x14] sm:$0xf]
      %v2056 = vld [vmem:[%s2049 + $0x18] sm:$0xf]
      %v2057 = vld [vmem:[%s2049 + $0x1c] sm:$0xf]
      %v2058 = vld [vmem:[%s2049 + $0x20] sm:$0xf]
      %v2059 = vld [vmem:[%s2049 + $0x24] sm:$0xf]
      %v2060 = vld [vmem:[%s2049 + $0x28] sm:$0xf]
      %v2061 = vld [vmem:[%s2049 + $0x2c] sm:$0xf]
      %v2062 = vld [vmem:[%s2049 + $0x30] sm:$0xf]
      %v2063 = vld [vmem:[%s2049 + $0x34] sm:$0xf]
      %v2064 = vld [vmem:[%s2049 + $0x38] sm:$0xf]
      %v2065 = vld [vmem:[%s2049 + $0x3c] sm:$0xf]
      %v2082 = vunpack.c.l.b16 %v2050
      %v2083 = vunpack.c.l.b16 %v2051
      %v2084 = vunpack.c.l.b16 %v2052
      %v2085 = vunpack.c.l.b16 %v2053
      %v2086 = vunpack.c.l.b16 %v2054
      %v2087 = vunpack.c.l.b16 %v2055
      %v2088 = vunpack.c.l.b16 %v2056
      %v2089 = vunpack.c.l.b16 %v2057
      %v2090 = vunpack.c.l.b16 %v2058
      %v2091 = vunpack.c.l.b16 %v2059
      %v2092 = vunpack.c.l.b16 %v2060
      %v2093 = vunpack.c.l.b16 %v2061
      %v2094 = vunpack.c.l.b16 %v2062
      %v2095 = vunpack.c.l.b16 %v2063
      %v2096 = vunpack.c.l.b16 %v2064
      %v2097 = vunpack.c.l.b16 %v2065
      %v2098 = vpack.c.b16 %v2083, %v2082
      %v2099 = vpack.c.b16 %v2085, %v2084
      %v2100 = vpack.c.b16 %v2087, %v2086
      %v2101 = vpack.c.b16 %v2089, %v2088
      %v2102 = vpack.c.b16 %v2091, %v2090
      %v2103 = vpack.c.b16 %v2093, %v2092
      %v2104 = vpack.c.b16 %v2095, %v2094
      %v2105 = vpack.c.b16 %v2097, %v2096
      %2114 = vmatprep.subr.bf16.mxu0 0
      %2115 = vmatpush1.bf16.msra.mxu0 %v2105
      %2116 = vmatprep.subr.bf16.mxu0 0
      %2117 = vmatpush1.bf16.msra.mxu0 %v2104
      %2118 = vmatprep.subr.bf16.mxu0 0
      %2119 = vmatpush1.bf16.msra.mxu0 %v2103
      %2120 = vmatprep.subr.bf16.mxu0 0
      %2121 = vmatpush1.bf16.msra.mxu0 %v2102
      %2122 = vmatprep.subr.bf16.mxu0 0
      %2123 = vmatpush1.bf16.msra.mxu0 %v2101
      %2124 = vmatprep.subr.bf16.mxu0 0
      %2125 = vmatpush1.bf16.msra.mxu0 %v2100
      %2126 = vmatprep.subr.bf16.mxu0 0
      %2127 = vmatpush1.bf16.msra.mxu0 %v2099
      %2128 = vmatprep.subr.bf16.mxu0 0
      %2129 = vmatpush1.bf16.msra.mxu0 %v2098
      %2130 = vmatprep.subr.bf16.mxu0 0
      %2131 = vmatpush2.bf16.msra.mxu0 0
      %2132 = vmatprep.subr.bf16.mxu0 0
      %2133 = vmatpush2.bf16.msra.mxu0 0
      %2134 = vmatprep.subr.bf16.mxu0 0
      %2135 = vmatpush2.bf16.msra.mxu0 0
      %2136 = vmatprep.subr.bf16.mxu0 0
      %2137 = vmatpush2.bf16.msra.mxu0 0
      %2138 = vmatprep.subr.bf16.mxu0 0
      %2139 = vmatpush2.bf16.msra.mxu0 0
      %2140 = vmatprep.subr.bf16.mxu0 0
      %2141 = vmatpush2.bf16.msra.mxu0 0
      %2142 = vmatprep.subr.bf16.mxu0 0
      %2143 = vmatpush2.bf16.msra.mxu0 0
      %2144 = vmatprep.subr.bf16.mxu0 0
      %2145 = vmatpush2.bf16.msra.mxu0 0
      %2146 = vmatprep.mubr.bf16.mxu0 0
      %2147 = vmatmul.mubr.bf16.gmra.mxu0 %v2045
      %v2148 = vpop.f32.mrf.mxu0
      %v2149 = vadd.f32 0.0, %v2148
      %v2150 = vpop.f32.mrf.mxu0
      %v2151 = vpop.f32.mrf.mxu0
      %v2152 = vadd.f32 0.0, %v2151
      %v2153 = vpop.f32.mrf.mxu0
      %2154 = vmatprep.mubr.bf16.mxu0 0
      %2155 = vmatmul.mubr.bf16.gmra.mxu0 %v2046
      %v2156 = vpop.f32.mrf.mxu0
      %v2157 = vadd.f32 0.0, %v2156
      %v2158 = vpop.f32.mrf.mxu0
      %v2159 = vpop.f32.mrf.mxu0
      %v2160 = vadd.f32 0.0, %v2159
      %v2161 = vpop.f32.mrf.mxu0
      %2162 = vmatprep.mubr.bf16.mxu0 0
      %2163 = vmatmul.mubr.bf16.gmra.mxu0 %v2047
      %v2164 = vpop.f32.mrf.mxu0
      %v2165 = vadd.f32 0.0, %v2164
      %v2166 = vpop.f32.mrf.mxu0
      %v2167 = vpop.f32.mrf.mxu0
      %v2168 = vadd.f32 0.0, %v2167
      %v2169 = vpop.f32.mrf.mxu0
      %2170 = vmatprep.mubr.bf16.mxu0 0
      %2171 = vmatmul.mubr.bf16.gmra.mxu0 %v2048
      %v2172 = vpop.f32.mrf.mxu0
      %v2173 = vadd.f32 0.0, %v2172
      %v2174 = vpop.f32.mrf.mxu0
      %v2175 = vpop.f32.mrf.mxu0
      %v2176 = vadd.f32 0.0, %v2175
      %v2177 = vpop.f32.mrf.mxu0
      %2178 = vdwg.mxu0
      %v2179 = vadd.f32 %v2029, %v2149
      %v2180 = vadd.f32 %v2030, %v2152
      %v2181 = vadd.f32 %v2031, %v2157
      %v2182 = vadd.f32 %v2032, %v2160
      %v2183 = vadd.f32 %v2033, %v2165
      %v2184 = vadd.f32 %v2034, %v2168
      %v2185 = vadd.f32 %v2035, %v2173
      %v2186 = vadd.f32 %v2036, %v2176
      %v2187 = vld [vmem:[%s1595 + $0x1] sm:$0xff]
      %v2188 = vld [vmem:[%s1595 + $0x11] sm:$0xff]
      %v2189 = vld [vmem:[%s1595 + $0x21] sm:$0xff]
      %v2190 = vld [vmem:[%s1595 + $0x31] sm:$0xff]
      %v2191 = vld [vmem:[%s1595 + $0x41] sm:$0xff]
      %v2192 = vld [vmem:[%s1595 + $0x51] sm:$0xff]
      %v2193 = vld [vmem:[%s1595 + $0x61] sm:$0xff]
      %v2194 = vld [vmem:[%s1595 + $0x71] sm:$0xff]
      %v2195 = vpack.c.bf16 %v2188, %v2187
      %v2196 = vpack.c.bf16 %v2190, %v2189
      %v2197 = vpack.c.bf16 %v2192, %v2191
      %v2198 = vpack.c.bf16 %v2194, %v2193
      %s2199 = scalar_lea.vmem %s2, 256
      %v2200 = vld [vmem:[%s2199] sm:$0xf]
      %v2201 = vld [vmem:[%s2199 + $0x4] sm:$0xf]
      %v2202 = vld [vmem:[%s2199 + $0x8] sm:$0xf]
      %v2203 = vld [vmem:[%s2199 + $0xc] sm:$0xf]
      %v2204 = vld [vmem:[%s2199 + $0x10] sm:$0xf]
      %v2205 = vld [vmem:[%s2199 + $0x14] sm:$0xf]
      %v2206 = vld [vmem:[%s2199 + $0x18] sm:$0xf]
      %v2207 = vld [vmem:[%s2199 + $0x1c] sm:$0xf]
      %v2208 = vld [vmem:[%s2199 + $0x20] sm:$0xf]
      %v2209 = vld [vmem:[%s2199 + $0x24] sm:$0xf]
      %v2210 = vld [vmem:[%s2199 + $0x28] sm:$0xf]
      %v2211 = vld [vmem:[%s2199 + $0x2c] sm:$0xf]
      %v2212 = vld [vmem:[%s2199 + $0x30] sm:$0xf]
      %v2213 = vld [vmem:[%s2199 + $0x34] sm:$0xf]
      %v2214 = vld [vmem:[%s2199 + $0x38] sm:$0xf]
      %v2215 = vld [vmem:[%s2199 + $0x3c] sm:$0xf]
      %v2232 = vunpack.c.l.b16 %v2200
      %v2233 = vunpack.c.l.b16 %v2201
      %v2234 = vunpack.c.l.b16 %v2202
      %v2235 = vunpack.c.l.b16 %v2203
      %v2236 = vunpack.c.l.b16 %v2204
      %v2237 = vunpack.c.l.b16 %v2205
      %v2238 = vunpack.c.l.b16 %v2206
      %v2239 = vunpack.c.l.b16 %v2207
      %v2240 = vunpack.c.l.b16 %v2208
      %v2241 = vunpack.c.l.b16 %v2209
      %v2242 = vunpack.c.l.b16 %v2210
      %v2243 = vunpack.c.l.b16 %v2211
      %v2244 = vunpack.c.l.b16 %v2212
      %v2245 = vunpack.c.l.b16 %v2213
      %v2246 = vunpack.c.l.b16 %v2214
      %v2247 = vunpack.c.l.b16 %v2215
      %v2248 = vpack.c.b16 %v2233, %v2232
      %v2249 = vpack.c.b16 %v2235, %v2234
      %v2250 = vpack.c.b16 %v2237, %v2236
      %v2251 = vpack.c.b16 %v2239, %v2238
      %v2252 = vpack.c.b16 %v2241, %v2240
      %v2253 = vpack.c.b16 %v2243, %v2242
      %v2254 = vpack.c.b16 %v2245, %v2244
      %v2255 = vpack.c.b16 %v2247, %v2246
      %2264 = vmatprep.subr.bf16.mxu0 0
      %2265 = vmatpush1.bf16.msra.mxu0 %v2255
      %2266 = vmatprep.subr.bf16.mxu0 0
      %2267 = vmatpush1.bf16.msra.mxu0 %v2254
      %2268 = vmatprep.subr.bf16.mxu0 0
      %2269 = vmatpush1.bf16.msra.mxu0 %v2253
      %2270 = vmatprep.subr.bf16.mxu0 0
      %2271 = vmatpush1.bf16.msra.mxu0 %v2252
      %2272 = vmatprep.subr.bf16.mxu0 0
      %2273 = vmatpush1.bf16.msra.mxu0 %v2251
      %2274 = vmatprep.subr.bf16.mxu0 0
      %2275 = vmatpush1.bf16.msra.mxu0 %v2250
      %2276 = vmatprep.subr.bf16.mxu0 0
      %2277 = vmatpush1.bf16.msra.mxu0 %v2249
      %2278 = vmatprep.subr.bf16.mxu0 0
      %2279 = vmatpush1.bf16.msra.mxu0 %v2248
      %2280 = vmatprep.subr.bf16.mxu0 0
      %2281 = vmatpush2.bf16.msra.mxu0 0
      %2282 = vmatprep.subr.bf16.mxu0 0
      %2283 = vmatpush2.bf16.msra.mxu0 0
      %2284 = vmatprep.subr.bf16.mxu0 0
      %2285 = vmatpush2.bf16.msra.mxu0 0
      %2286 = vmatprep.subr.bf16.mxu0 0
      %2287 = vmatpush2.bf16.msra.mxu0 0
      %2288 = vmatprep.subr.bf16.mxu0 0
      %2289 = vmatpush2.bf16.msra.mxu0 0
      %2290 = vmatprep.subr.bf16.mxu0 0
      %2291 = vmatpush2.bf16.msra.mxu0 0
      %2292 = vmatprep.subr.bf16.mxu0 0
      %2293 = vmatpush2.bf16.msra.mxu0 0
      %2294 = vmatprep.subr.bf16.mxu0 0
      %2295 = vmatpush2.bf16.msra.mxu0 0
      %2296 = vmatprep.mubr.bf16.mxu0 0
      %2297 = vmatmul.mubr.bf16.gmra.mxu0 %v2195
      %v2298 = vpop.f32.mrf.mxu0
      %v2299 = vadd.f32 0.0, %v2298
      %v2300 = vpop.f32.mrf.mxu0
      %v2301 = vpop.f32.mrf.mxu0
      %v2302 = vadd.f32 0.0, %v2301
      %v2303 = vpop.f32.mrf.mxu0
      %2304 = vmatprep.mubr.bf16.mxu0 0
      %2305 = vmatmul.mubr.bf16.gmra.mxu0 %v2196
      %v2306 = vpop.f32.mrf.mxu0
      %v2307 = vadd.f32 0.0, %v2306
      %v2308 = vpop.f32.mrf.mxu0
      %v2309 = vpop.f32.mrf.mxu0
      %v2310 = vadd.f32 0.0, %v2309
      %v2311 = vpop.f32.mrf.mxu0
      %2312 = vmatprep.mubr.bf16.mxu0 0
      %2313 = vmatmul.mubr.bf16.gmra.mxu0 %v2197
      %v2314 = vpop.f32.mrf.mxu0
      %v2315 = vadd.f32 0.0, %v2314
      %v2316 = vpop.f32.mrf.mxu0
      %v2317 = vpop.f32.mrf.mxu0
      %v2318 = vadd.f32 0.0, %v2317
      %v2319 = vpop.f32.mrf.mxu0
      %2320 = vmatprep.mubr.bf16.mxu0 0
      %2321 = vmatmul.mubr.bf16.gmra.mxu0 %v2198
      %v2322 = vpop.f32.mrf.mxu0
      %v2323 = vadd.f32 0.0, %v2322
      %v2324 = vpop.f32.mrf.mxu0
      %v2325 = vpop.f32.mrf.mxu0
      %v2326 = vadd.f32 0.0, %v2325
      %v2327 = vpop.f32.mrf.mxu0
      %2328 = vdwg.mxu0
      %v2329 = vadd.f32 %v2179, %v2299
      %v2330 = vadd.f32 %v2180, %v2302
      %v2331 = vadd.f32 %v2181, %v2307
      %v2332 = vadd.f32 %v2182, %v2310
      %v2333 = vadd.f32 %v2183, %v2315
      %v2334 = vadd.f32 %v2184, %v2318
      %v2335 = vadd.f32 %v2185, %v2323
      %v2336 = vadd.f32 %v2186, %v2326
      %v2337 = vld [vmem:[%s1595 + $0x2] sm:$0xff]
      %v2338 = vld [vmem:[%s1595 + $0x12] sm:$0xff]
      %v2339 = vld [vmem:[%s1595 + $0x22] sm:$0xff]
      %v2340 = vld [vmem:[%s1595 + $0x32] sm:$0xff]
      %v2341 = vld [vmem:[%s1595 + $0x42] sm:$0xff]
      %v2342 = vld [vmem:[%s1595 + $0x52] sm:$0xff]
      %v2343 = vld [vmem:[%s1595 + $0x62] sm:$0xff]
      %v2344 = vld [vmem:[%s1595 + $0x72] sm:$0xff]
      %v2345 = vpack.c.bf16 %v2338, %v2337
      %v2346 = vpack.c.bf16 %v2340, %v2339
      %v2347 = vpack.c.bf16 %v2342, %v2341
      %v2348 = vpack.c.bf16 %v2344, %v2343
      %s2349 = scalar_lea.vmem %s2, 320
      %v2350 = vld [vmem:[%s2349] sm:$0xf]
      %v2351 = vld [vmem:[%s2349 + $0x4] sm:$0xf]
      %v2352 = vld [vmem:[%s2349 + $0x8] sm:$0xf]
      %v2353 = vld [vmem:[%s2349 + $0xc] sm:$0xf]
      %v2354 = vld [vmem:[%s2349 + $0x10] sm:$0xf]
      %v2355 = vld [vmem:[%s2349 + $0x14] sm:$0xf]
      %v2356 = vld [vmem:[%s2349 + $0x18] sm:$0xf]
      %v2357 = vld [vmem:[%s2349 + $0x1c] sm:$0xf]
      %v2358 = vld [vmem:[%s2349 + $0x20] sm:$0xf]
      %v2359 = vld [vmem:[%s2349 + $0x24] sm:$0xf]
      %v2360 = vld [vmem:[%s2349 + $0x28] sm:$0xf]
      %v2361 = vld [vmem:[%s2349 + $0x2c] sm:$0xf]
      %v2362 = vld [vmem:[%s2349 + $0x30] sm:$0xf]
      %v2363 = vld [vmem:[%s2349 + $0x34] sm:$0xf]
      %v2364 = vld [vmem:[%s2349 + $0x38] sm:$0xf]
      %v2365 = vld [vmem:[%s2349 + $0x3c] sm:$0xf]
      %v2382 = vunpack.c.l.b16 %v2350
      %v2383 = vunpack.c.l.b16 %v2351
      %v2384 = vunpack.c.l.b16 %v2352
      %v2385 = vunpack.c.l.b16 %v2353
      %v2386 = vunpack.c.l.b16 %v2354
      %v2387 = vunpack.c.l.b16 %v2355
      %v2388 = vunpack.c.l.b16 %v2356
      %v2389 = vunpack.c.l.b16 %v2357
      %v2390 = vunpack.c.l.b16 %v2358
      %v2391 = vunpack.c.l.b16 %v2359
      %v2392 = vunpack.c.l.b16 %v2360
      %v2393 = vunpack.c.l.b16 %v2361
      %v2394 = vunpack.c.l.b16 %v2362
      %v2395 = vunpack.c.l.b16 %v2363
      %v2396 = vunpack.c.l.b16 %v2364
      %v2397 = vunpack.c.l.b16 %v2365
      %v2398 = vpack.c.b16 %v2383, %v2382
      %v2399 = vpack.c.b16 %v2385, %v2384
      %v2400 = vpack.c.b16 %v2387, %v2386
      %v2401 = vpack.c.b16 %v2389, %v2388
      %v2402 = vpack.c.b16 %v2391, %v2390
      %v2403 = vpack.c.b16 %v2393, %v2392
      %v2404 = vpack.c.b16 %v2395, %v2394
      %v2405 = vpack.c.b16 %v2397, %v2396
      %2414 = vmatprep.subr.bf16.mxu0 0
      %2415 = vmatpush1.bf16.msra.mxu0 %v2405
      %2416 = vmatprep.subr.bf16.mxu0 0
      %2417 = vmatpush1.bf16.msra.mxu0 %v2404
      %2418 = vmatprep.subr.bf16.mxu0 0
      %2419 = vmatpush1.bf16.msra.mxu0 %v2403
      %2420 = vmatprep.subr.bf16.mxu0 0
      %2421 = vmatpush1.bf16.msra.mxu0 %v2402
      %2422 = vmatprep.subr.bf16.mxu0 0
      %2423 = vmatpush1.bf16.msra.mxu0 %v2401
      %2424 = vmatprep.subr.bf16.mxu0 0
      %2425 = vmatpush1.bf16.msra.mxu0 %v2400
      %2426 = vmatprep.subr.bf16.mxu0 0
      %2427 = vmatpush1.bf16.msra.mxu0 %v2399
      %2428 = vmatprep.subr.bf16.mxu0 0
      %2429 = vmatpush1.bf16.msra.mxu0 %v2398
      %2430 = vmatprep.subr.bf16.mxu0 0
      %2431 = vmatpush2.bf16.msra.mxu0 0
      %2432 = vmatprep.subr.bf16.mxu0 0
      %2433 = vmatpush2.bf16.msra.mxu0 0
      %2434 = vmatprep.subr.bf16.mxu0 0
      %2435 = vmatpush2.bf16.msra.mxu0 0
      %2436 = vmatprep.subr.bf16.mxu0 0
      %2437 = vmatpush2.bf16.msra.mxu0 0
      %2438 = vmatprep.subr.bf16.mxu0 0
      %2439 = vmatpush2.bf16.msra.mxu0 0
      %2440 = vmatprep.subr.bf16.mxu0 0
      %2441 = vmatpush2.bf16.msra.mxu0 0
      %2442 = vmatprep.subr.bf16.mxu0 0
      %2443 = vmatpush2.bf16.msra.mxu0 0
      %2444 = vmatprep.subr.bf16.mxu0 0
      %2445 = vmatpush2.bf16.msra.mxu0 0
      %2446 = vmatprep.mubr.bf16.mxu0 0
      %2447 = vmatmul.mubr.bf16.gmra.mxu0 %v2345
      %v2448 = vpop.f32.mrf.mxu0
      %v2449 = vadd.f32 0.0, %v2448
      %v2450 = vpop.f32.mrf.mxu0
      %v2451 = vpop.f32.mrf.mxu0
      %v2452 = vadd.f32 0.0, %v2451
      %v2453 = vpop.f32.mrf.mxu0
      %2454 = vmatprep.mubr.bf16.mxu0 0
      %2455 = vmatmul.mubr.bf16.gmra.mxu0 %v2346
      %v2456 = vpop.f32.mrf.mxu0
      %v2457 = vadd.f32 0.0, %v2456
      %v2458 = vpop.f32.mrf.mxu0
      %v2459 = vpop.f32.mrf.mxu0
      %v2460 = vadd.f32 0.0, %v2459
      %v2461 = vpop.f32.mrf.mxu0
      %2462 = vmatprep.mubr.bf16.mxu0 0
      %2463 = vmatmul.mubr.bf16.gmra.mxu0 %v2347
      %v2464 = vpop.f32.mrf.mxu0
      %v2465 = vadd.f32 0.0, %v2464
      %v2466 = vpop.f32.mrf.mxu0
      %v2467 = vpop.f32.mrf.mxu0
      %v2468 = vadd.f32 0.0, %v2467
      %v2469 = vpop.f32.mrf.mxu0
      %2470 = vmatprep.mubr.bf16.mxu0 0
      %2471 = vmatmul.mubr.bf16.gmra.mxu0 %v2348
      %v2472 = vpop.f32.mrf.mxu0
      %v2473 = vadd.f32 0.0, %v2472
      %v2474 = vpop.f32.mrf.mxu0
      %v2475 = vpop.f32.mrf.mxu0
      %v2476 = vadd.f32 0.0, %v2475
      %v2477 = vpop.f32.mrf.mxu0
      %2478 = vdwg.mxu0
      %v2479 = vadd.f32 %v2329, %v2449
      %v2480 = vadd.f32 %v2330, %v2452
      %v2481 = vadd.f32 %v2331, %v2457
      %v2482 = vadd.f32 %v2332, %v2460
      %v2483 = vadd.f32 %v2333, %v2465
      %v2484 = vadd.f32 %v2334, %v2468
      %v2485 = vadd.f32 %v2335, %v2473
      %v2486 = vadd.f32 %v2336, %v2476
      %s2487 = scalar_lea.vmem [#allocation2], 32
      %v2488 = vld [vmem:[%s2487] sm:$0xff]
      %v2489 = vld [vmem:[%s2487 + $0x10] sm:$0xff]
      %v2490 = vld [vmem:[%s2487 + $0x20] sm:$0xff]
      %v2491 = vld [vmem:[%s2487 + $0x30] sm:$0xff]
      %v2492 = vld [vmem:[%s2487 + $0x40] sm:$0xff]
      %v2493 = vld [vmem:[%s2487 + $0x50] sm:$0xff]
      %v2494 = vld [vmem:[%s2487 + $0x60] sm:$0xff]
      %v2495 = vld [vmem:[%s2487 + $0x70] sm:$0xff]
      %v2496 = vpack.c.bf16 %v2489, %v2488
      %v2497 = vpack.c.bf16 %v2491, %v2490
      %v2498 = vpack.c.bf16 %v2493, %v2492
      %v2499 = vpack.c.bf16 %v2495, %v2494
      %s2500 = scalar_lea.vmem %s2, 384
      %v2501 = vld [vmem:[%s2500] sm:$0xf]
      %v2502 = vld [vmem:[%s2500 + $0x4] sm:$0xf]
      %v2503 = vld [vmem:[%s2500 + $0x8] sm:$0xf]
      %v2504 = vld [vmem:[%s2500 + $0xc] sm:$0xf]
      %v2505 = vld [vmem:[%s2500 + $0x10] sm:$0xf]
      %v2506 = vld [vmem:[%s2500 + $0x14] sm:$0xf]
      %v2507 = vld [vmem:[%s2500 + $0x18] sm:$0xf]
      %v2508 = vld [vmem:[%s2500 + $0x1c] sm:$0xf]
      %v2509 = vld [vmem:[%s2500 + $0x20] sm:$0xf]
      %v2510 = vld [vmem:[%s2500 + $0x24] sm:$0xf]
      %v2511 = vld [vmem:[%s2500 + $0x28] sm:$0xf]
      %v2512 = vld [vmem:[%s2500 + $0x2c] sm:$0xf]
      %v2513 = vld [vmem:[%s2500 + $0x30] sm:$0xf]
      %v2514 = vld [vmem:[%s2500 + $0x34] sm:$0xf]
      %v2515 = vld [vmem:[%s2500 + $0x38] sm:$0xf]
      %v2516 = vld [vmem:[%s2500 + $0x3c] sm:$0xf]
      %v2533 = vunpack.c.l.b16 %v2501
      %v2534 = vunpack.c.l.b16 %v2502
      %v2535 = vunpack.c.l.b16 %v2503
      %v2536 = vunpack.c.l.b16 %v2504
      %v2537 = vunpack.c.l.b16 %v2505
      %v2538 = vunpack.c.l.b16 %v2506
      %v2539 = vunpack.c.l.b16 %v2507
      %v2540 = vunpack.c.l.b16 %v2508
      %v2541 = vunpack.c.l.b16 %v2509
      %v2542 = vunpack.c.l.b16 %v2510
      %v2543 = vunpack.c.l.b16 %v2511
      %v2544 = vunpack.c.l.b16 %v2512
      %v2545 = vunpack.c.l.b16 %v2513
      %v2546 = vunpack.c.l.b16 %v2514
      %v2547 = vunpack.c.l.b16 %v2515
      %v2548 = vunpack.c.l.b16 %v2516
      %v2549 = vpack.c.b16 %v2534, %v2533
      %v2550 = vpack.c.b16 %v2536, %v2535
      %v2551 = vpack.c.b16 %v2538, %v2537
      %v2552 = vpack.c.b16 %v2540, %v2539
      %v2553 = vpack.c.b16 %v2542, %v2541
      %v2554 = vpack.c.b16 %v2544, %v2543
      %v2555 = vpack.c.b16 %v2546, %v2545
      %v2556 = vpack.c.b16 %v2548, %v2547
      %2565 = vmatprep.subr.bf16.mxu0 0
      %2566 = vmatpush1.bf16.msra.mxu0 %v2556
      %2567 = vmatprep.subr.bf16.mxu0 0
      %2568 = vmatpush1.bf16.msra.mxu0 %v2555
      %2569 = vmatprep.subr.bf16.mxu0 0
      %2570 = vmatpush1.bf16.msra.mxu0 %v2554
      %2571 = vmatprep.subr.bf16.mxu0 0
      %2572 = vmatpush1.bf16.msra.mxu0 %v2553
      %2573 = vmatprep.subr.bf16.mxu0 0
      %2574 = vmatpush1.bf16.msra.mxu0 %v2552
      %2575 = vmatprep.subr.bf16.mxu0 0
      %2576 = vmatpush1.bf16.msra.mxu0 %v2551
      %2577 = vmatprep.subr.bf16.mxu0 0
      %2578 = vmatpush1.bf16.msra.mxu0 %v2550
      %2579 = vmatprep.subr.bf16.mxu0 0
      %2580 = vmatpush1.bf16.msra.mxu0 %v2549
      %2581 = vmatprep.subr.bf16.mxu0 0
      %2582 = vmatpush2.bf16.msra.mxu0 0
      %2583 = vmatprep.subr.bf16.mxu0 0
      %2584 = vmatpush2.bf16.msra.mxu0 0
      %2585 = vmatprep.subr.bf16.mxu0 0
      %2586 = vmatpush2.bf16.msra.mxu0 0
      %2587 = vmatprep.subr.bf16.mxu0 0
      %2588 = vmatpush2.bf16.msra.mxu0 0
      %2589 = vmatprep.subr.bf16.mxu0 0
      %2590 = vmatpush2.bf16.msra.mxu0 0
      %2591 = vmatprep.subr.bf16.mxu0 0
      %2592 = vmatpush2.bf16.msra.mxu0 0
      %2593 = vmatprep.subr.bf16.mxu0 0
      %2594 = vmatpush2.bf16.msra.mxu0 0
      %2595 = vmatprep.subr.bf16.mxu0 0
      %2596 = vmatpush2.bf16.msra.mxu0 0
      %2597 = vmatprep.mubr.bf16.mxu0 0
      %2598 = vmatmul.mubr.bf16.gmra.mxu0 %v2496
      %v2599 = vpop.f32.mrf.mxu0
      %v2600 = vadd.f32 0.0, %v2599
      %v2601 = vpop.f32.mrf.mxu0
      %v2602 = vpop.f32.mrf.mxu0
      %v2603 = vadd.f32 0.0, %v2602
      %v2604 = vpop.f32.mrf.mxu0
      %2605 = vmatprep.mubr.bf16.mxu0 0
      %2606 = vmatmul.mubr.bf16.gmra.mxu0 %v2497
      %v2607 = vpop.f32.mrf.mxu0
      %v2608 = vadd.f32 0.0, %v2607
      %v2609 = vpop.f32.mrf.mxu0
      %v2610 = vpop.f32.mrf.mxu0
      %v2611 = vadd.f32 0.0, %v2610
      %v2612 = vpop.f32.mrf.mxu0
      %2613 = vmatprep.mubr.bf16.mxu0 0
      %2614 = vmatmul.mubr.bf16.gmra.mxu0 %v2498
      %v2615 = vpop.f32.mrf.mxu0
      %v2616 = vadd.f32 0.0, %v2615
      %v2617 = vpop.f32.mrf.mxu0
      %v2618 = vpop.f32.mrf.mxu0
      %v2619 = vadd.f32 0.0, %v2618
      %v2620 = vpop.f32.mrf.mxu0
      %2621 = vmatprep.mubr.bf16.mxu0 0
      %2622 = vmatmul.mubr.bf16.gmra.mxu0 %v2499
      %v2623 = vpop.f32.mrf.mxu0
      %v2624 = vadd.f32 0.0, %v2623
      %v2625 = vpop.f32.mrf.mxu0
      %v2626 = vpop.f32.mrf.mxu0
      %v2627 = vadd.f32 0.0, %v2626
      %v2628 = vpop.f32.mrf.mxu0
      %2629 = vdwg.mxu0
      %v2630 = vadd.f32 %v2479, %v2600
      %v2631 = vadd.f32 %v2480, %v2603
      %v2632 = vadd.f32 %v2481, %v2608
      %v2633 = vadd.f32 %v2482, %v2611
      %v2634 = vadd.f32 %v2483, %v2616
      %v2635 = vadd.f32 %v2484, %v2619
      %v2636 = vadd.f32 %v2485, %v2624
      %v2637 = vadd.f32 %v2486, %v2627
      %v2638 = vld [vmem:[%s2487 + $0x1] sm:$0xff]
      %v2639 = vld [vmem:[%s2487 + $0x11] sm:$0xff]
      %v2640 = vld [vmem:[%s2487 + $0x21] sm:$0xff]
      %v2641 = vld [vmem:[%s2487 + $0x31] sm:$0xff]
      %v2642 = vld [vmem:[%s2487 + $0x41] sm:$0xff]
      %v2643 = vld [vmem:[%s2487 + $0x51] sm:$0xff]
      %v2644 = vld [vmem:[%s2487 + $0x61] sm:$0xff]
      %v2645 = vld [vmem:[%s2487 + $0x71] sm:$0xff]
      %v2646 = vpack.c.bf16 %v2639, %v2638
      %v2647 = vpack.c.bf16 %v2641, %v2640
      %v2648 = vpack.c.bf16 %v2643, %v2642
      %v2649 = vpack.c.bf16 %v2645, %v2644
      %s2650 = scalar_lea.vmem %s2, 448
      %v2651 = vld [vmem:[%s2650] sm:$0xf]
      %v2652 = vld [vmem:[%s2650 + $0x4] sm:$0xf]
      %v2653 = vld [vmem:[%s2650 + $0x8] sm:$0xf]
      %v2654 = vld [vmem:[%s2650 + $0xc] sm:$0xf]
      %v2655 = vld [vmem:[%s2650 + $0x10] sm:$0xf]
      %v2656 = vld [vmem:[%s2650 + $0x14] sm:$0xf]
      %v2657 = vld [vmem:[%s2650 + $0x18] sm:$0xf]
      %v2658 = vld [vmem:[%s2650 + $0x1c] sm:$0xf]
      %v2659 = vld [vmem:[%s2650 + $0x20] sm:$0xf]
      %v2660 = vld [vmem:[%s2650 + $0x24] sm:$0xf]
      %v2661 = vld [vmem:[%s2650 + $0x28] sm:$0xf]
      %v2662 = vld [vmem:[%s2650 + $0x2c] sm:$0xf]
      %v2663 = vld [vmem:[%s2650 + $0x30] sm:$0xf]
      %v2664 = vld [vmem:[%s2650 + $0x34] sm:$0xf]
      %v2665 = vld [vmem:[%s2650 + $0x38] sm:$0xf]
      %v2666 = vld [vmem:[%s2650 + $0x3c] sm:$0xf]
      %v2683 = vunpack.c.l.b16 %v2651
      %v2684 = vunpack.c.l.b16 %v2652
      %v2685 = vunpack.c.l.b16 %v2653
      %v2686 = vunpack.c.l.b16 %v2654
      %v2687 = vunpack.c.l.b16 %v2655
      %v2688 = vunpack.c.l.b16 %v2656
      %v2689 = vunpack.c.l.b16 %v2657
      %v2690 = vunpack.c.l.b16 %v2658
      %v2691 = vunpack.c.l.b16 %v2659
      %v2692 = vunpack.c.l.b16 %v2660
      %v2693 = vunpack.c.l.b16 %v2661
      %v2694 = vunpack.c.l.b16 %v2662
      %v2695 = vunpack.c.l.b16 %v2663
      %v2696 = vunpack.c.l.b16 %v2664
      %v2697 = vunpack.c.l.b16 %v2665
      %v2698 = vunpack.c.l.b16 %v2666
      %v2699 = vpack.c.b16 %v2684, %v2683
      %v2700 = vpack.c.b16 %v2686, %v2685
      %v2701 = vpack.c.b16 %v2688, %v2687
      %v2702 = vpack.c.b16 %v2690, %v2689
      %v2703 = vpack.c.b16 %v2692, %v2691
      %v2704 = vpack.c.b16 %v2694, %v2693
      %v2705 = vpack.c.b16 %v2696, %v2695
      %v2706 = vpack.c.b16 %v2698, %v2697
      %2715 = vmatprep.subr.bf16.mxu0 0
      %2716 = vmatpush1.bf16.msra.mxu0 %v2706
      %2717 = vmatprep.subr.bf16.mxu0 0
      %2718 = vmatpush1.bf16.msra.mxu0 %v2705
      %2719 = vmatprep.subr.bf16.mxu0 0
      %2720 = vmatpush1.bf16.msra.mxu0 %v2704
      %2721 = vmatprep.subr.bf16.mxu0 0
      %2722 = vmatpush1.bf16.msra.mxu0 %v2703
      %2723 = vmatprep.subr.bf16.mxu0 0
      %2724 = vmatpush1.bf16.msra.mxu0 %v2702
      %2725 = vmatprep.subr.bf16.mxu0 0
      %2726 = vmatpush1.bf16.msra.mxu0 %v2701
      %2727 = vmatprep.subr.bf16.mxu0 0
      %2728 = vmatpush1.bf16.msra.mxu0 %v2700
      %2729 = vmatprep.subr.bf16.mxu0 0
      %2730 = vmatpush1.bf16.msra.mxu0 %v2699
      %2731 = vmatprep.subr.bf16.mxu0 0
      %2732 = vmatpush2.bf16.msra.mxu0 0
      %2733 = vmatprep.subr.bf16.mxu0 0
      %2734 = vmatpush2.bf16.msra.mxu0 0
      %2735 = vmatprep.subr.bf16.mxu0 0
      %2736 = vmatpush2.bf16.msra.mxu0 0
      %2737 = vmatprep.subr.bf16.mxu0 0
      %2738 = vmatpush2.bf16.msra.mxu0 0
      %2739 = vmatprep.subr.bf16.mxu0 0
      %2740 = vmatpush2.bf16.msra.mxu0 0
      %2741 = vmatprep.subr.bf16.mxu0 0
      %2742 = vmatpush2.bf16.msra.mxu0 0
      %2743 = vmatprep.subr.bf16.mxu0 0
      %2744 = vmatpush2.bf16.msra.mxu0 0
      %2745 = vmatprep.subr.bf16.mxu0 0
      %2746 = vmatpush2.bf16.msra.mxu0 0
      %2747 = vmatprep.mubr.bf16.mxu0 0
      %2748 = vmatmul.mubr.bf16.gmra.mxu0 %v2646
      %v2749 = vpop.f32.mrf.mxu0
      %v2750 = vadd.f32 0.0, %v2749
      %v2751 = vpop.f32.mrf.mxu0
      %v2752 = vpop.f32.mrf.mxu0
      %v2753 = vadd.f32 0.0, %v2752
      %v2754 = vpop.f32.mrf.mxu0
      %2755 = vmatprep.mubr.bf16.mxu0 0
      %2756 = vmatmul.mubr.bf16.gmra.mxu0 %v2647
      %v2757 = vpop.f32.mrf.mxu0
      %v2758 = vadd.f32 0.0, %v2757
      %v2759 = vpop.f32.mrf.mxu0
      %v2760 = vpop.f32.mrf.mxu0
      %v2761 = vadd.f32 0.0, %v2760
      %v2762 = vpop.f32.mrf.mxu0
      %2763 = vmatprep.mubr.bf16.mxu0 0
      %2764 = vmatmul.mubr.bf16.gmra.mxu0 %v2648
      %v2765 = vpop.f32.mrf.mxu0
      %v2766 = vadd.f32 0.0, %v2765
      %v2767 = vpop.f32.mrf.mxu0
      %v2768 = vpop.f32.mrf.mxu0
      %v2769 = vadd.f32 0.0, %v2768
      %v2770 = vpop.f32.mrf.mxu0
      %2771 = vmatprep.mubr.bf16.mxu0 0
      %2772 = vmatmul.mubr.bf16.gmra.mxu0 %v2649
      %v2773 = vpop.f32.mrf.mxu0
      %v2774 = vadd.f32 0.0, %v2773
      %v2775 = vpop.f32.mrf.mxu0
      %v2776 = vpop.f32.mrf.mxu0
      %v2777 = vadd.f32 0.0, %v2776
      %v2778 = vpop.f32.mrf.mxu0
      %2779 = vdwg.mxu0
      %v2780 = vadd.f32 %v2630, %v2750
      %v2781 = vadd.f32 %v2631, %v2753
      %v2782 = vadd.f32 %v2632, %v2758
      %v2783 = vadd.f32 %v2633, %v2761
      %v2784 = vadd.f32 %v2634, %v2766
      %v2785 = vadd.f32 %v2635, %v2769
      %v2786 = vadd.f32 %v2636, %v2774
      %v2787 = vadd.f32 %v2637, %v2777
      %v2788 = vld [vmem:[%s2487 + $0x2] sm:$0xff]
      %v2789 = vld [vmem:[%s2487 + $0x12] sm:$0xff]
      %v2790 = vld [vmem:[%s2487 + $0x22] sm:$0xff]
      %v2791 = vld [vmem:[%s2487 + $0x32] sm:$0xff]
      %v2792 = vld [vmem:[%s2487 + $0x42] sm:$0xff]
      %v2793 = vld [vmem:[%s2487 + $0x52] sm:$0xff]
      %v2794 = vld [vmem:[%s2487 + $0x62] sm:$0xff]
      %v2795 = vld [vmem:[%s2487 + $0x72] sm:$0xff]
      %v2796 = vpack.c.bf16 %v2789, %v2788
      %v2797 = vpack.c.bf16 %v2791, %v2790
      %v2798 = vpack.c.bf16 %v2793, %v2792
      %v2799 = vpack.c.bf16 %v2795, %v2794
      %s2800 = scalar_lea.vmem %s2, 512
      %v2801 = vld [vmem:[%s2800] sm:$0xf]
      %v2802 = vld [vmem:[%s2800 + $0x4] sm:$0xf]
      %v2803 = vld [vmem:[%s2800 + $0x8] sm:$0xf]
      %v2804 = vld [vmem:[%s2800 + $0xc] sm:$0xf]
      %v2805 = vld [vmem:[%s2800 + $0x10] sm:$0xf]
      %v2806 = vld [vmem:[%s2800 + $0x14] sm:$0xf]
      %v2807 = vld [vmem:[%s2800 + $0x18] sm:$0xf]
      %v2808 = vld [vmem:[%s2800 + $0x1c] sm:$0xf]
      %v2809 = vld [vmem:[%s2800 + $0x20] sm:$0xf]
      %v2810 = vld [vmem:[%s2800 + $0x24] sm:$0xf]
      %v2811 = vld [vmem:[%s2800 + $0x28] sm:$0xf]
      %v2812 = vld [vmem:[%s2800 + $0x2c] sm:$0xf]
      %v2813 = vld [vmem:[%s2800 + $0x30] sm:$0xf]
      %v2814 = vld [vmem:[%s2800 + $0x34] sm:$0xf]
      %v2815 = vld [vmem:[%s2800 + $0x38] sm:$0xf]
      %v2816 = vld [vmem:[%s2800 + $0x3c] sm:$0xf]
      %v2833 = vunpack.c.l.b16 %v2801
      %v2834 = vunpack.c.l.b16 %v2802
      %v2835 = vunpack.c.l.b16 %v2803
      %v2836 = vunpack.c.l.b16 %v2804
      %v2837 = vunpack.c.l.b16 %v2805
      %v2838 = vunpack.c.l.b16 %v2806
      %v2839 = vunpack.c.l.b16 %v2807
      %v2840 = vunpack.c.l.b16 %v2808
      %v2841 = vunpack.c.l.b16 %v2809
      %v2842 = vunpack.c.l.b16 %v2810
      %v2843 = vunpack.c.l.b16 %v2811
      %v2844 = vunpack.c.l.b16 %v2812
      %v2845 = vunpack.c.l.b16 %v2813
      %v2846 = vunpack.c.l.b16 %v2814
      %v2847 = vunpack.c.l.b16 %v2815
      %v2848 = vunpack.c.l.b16 %v2816
      %v2849 = vpack.c.b16 %v2834, %v2833
      %v2850 = vpack.c.b16 %v2836, %v2835
      %v2851 = vpack.c.b16 %v2838, %v2837
      %v2852 = vpack.c.b16 %v2840, %v2839
      %v2853 = vpack.c.b16 %v2842, %v2841
      %v2854 = vpack.c.b16 %v2844, %v2843
      %v2855 = vpack.c.b16 %v2846, %v2845
      %v2856 = vpack.c.b16 %v2848, %v2847
      %2865 = vmatprep.subr.bf16.mxu0 0
      %2866 = vmatpush1.bf16.msra.mxu0 %v2856
      %2867 = vmatprep.subr.bf16.mxu0 0
      %2868 = vmatpush1.bf16.msra.mxu0 %v2855
      %2869 = vmatprep.subr.bf16.mxu0 0
      %2870 = vmatpush1.bf16.msra.mxu0 %v2854
      %2871 = vmatprep.subr.bf16.mxu0 0
      %2872 = vmatpush1.bf16.msra.mxu0 %v2853
      %2873 = vmatprep.subr.bf16.mxu0 0
      %2874 = vmatpush1.bf16.msra.mxu0 %v2852
      %2875 = vmatprep.subr.bf16.mxu0 0
      %2876 = vmatpush1.bf16.msra.mxu0 %v2851
      %2877 = vmatprep.subr.bf16.mxu0 0
      %2878 = vmatpush1.bf16.msra.mxu0 %v2850
      %2879 = vmatprep.subr.bf16.mxu0 0
      %2880 = vmatpush1.bf16.msra.mxu0 %v2849
      %2881 = vmatprep.subr.bf16.mxu0 0
      %2882 = vmatpush2.bf16.msra.mxu0 0
      %2883 = vmatprep.subr.bf16.mxu0 0
      %2884 = vmatpush2.bf16.msra.mxu0 0
      %2885 = vmatprep.subr.bf16.mxu0 0
      %2886 = vmatpush2.bf16.msra.mxu0 0
      %2887 = vmatprep.subr.bf16.mxu0 0
      %2888 = vmatpush2.bf16.msra.mxu0 0
      %2889 = vmatprep.subr.bf16.mxu0 0
      %2890 = vmatpush2.bf16.msra.mxu0 0
      %2891 = vmatprep.subr.bf16.mxu0 0
      %2892 = vmatpush2.bf16.msra.mxu0 0
      %2893 = vmatprep.subr.bf16.mxu0 0
      %2894 = vmatpush2.bf16.msra.mxu0 0
      %2895 = vmatprep.subr.bf16.mxu0 0
      %2896 = vmatpush2.bf16.msra.mxu0 0
      %2897 = vmatprep.mubr.bf16.mxu0 0
      %2898 = vmatmul.mubr.bf16.gmra.mxu0 %v2796
      %v2899 = vpop.f32.mrf.mxu0
      %v2900 = vadd.f32 0.0, %v2899
      %v2901 = vpop.f32.mrf.mxu0
      %v2902 = vpop.f32.mrf.mxu0
      %v2903 = vadd.f32 0.0, %v2902
      %v2904 = vpop.f32.mrf.mxu0
      %2905 = vmatprep.mubr.bf16.mxu0 0
      %2906 = vmatmul.mubr.bf16.gmra.mxu0 %v2797
      %v2907 = vpop.f32.mrf.mxu0
      %v2908 = vadd.f32 0.0, %v2907
      %v2909 = vpop.f32.mrf.mxu0
      %v2910 = vpop.f32.mrf.mxu0
      %v2911 = vadd.f32 0.0, %v2910
      %v2912 = vpop.f32.mrf.mxu0
      %2913 = vmatprep.mubr.bf16.mxu0 0
      %2914 = vmatmul.mubr.bf16.gmra.mxu0 %v2798
      %v2915 = vpop.f32.mrf.mxu0
      %v2916 = vadd.f32 0.0, %v2915
      %v2917 = vpop.f32.mrf.mxu0
      %v2918 = vpop.f32.mrf.mxu0
      %v2919 = vadd.f32 0.0, %v2918
      %v2920 = vpop.f32.mrf.mxu0
      %2921 = vmatprep.mubr.bf16.mxu0 0
      %2922 = vmatmul.mubr.bf16.gmra.mxu0 %v2799
      %v2923 = vpop.f32.mrf.mxu0
      %v2924 = vadd.f32 0.0, %v2923
      %v2925 = vpop.f32.mrf.mxu0
      %v2926 = vpop.f32.mrf.mxu0
      %v2927 = vadd.f32 0.0, %v2926
      %v2928 = vpop.f32.mrf.mxu0
      %2929 = vdwg.mxu0
      %v2930 = vadd.f32 %v2780, %v2900
      %v2931 = vadd.f32 %v2781, %v2903
      %v2932 = vadd.f32 %v2782, %v2908
      %v2933 = vadd.f32 %v2783, %v2911
      %v2934 = vadd.f32 %v2784, %v2916
      %v2935 = vadd.f32 %v2785, %v2919
      %v2936 = vadd.f32 %v2786, %v2924
      %v2937 = vadd.f32 %v2787, %v2927
      %v2938 = vadd.f32 %v2930, %v2931
      %v2939 = vadd.f32 %v2938, %v2932
      %v2940 = vadd.f32 %v2939, %v2933
      %v2941 = vadd.f32 %v2940, %v2934
      %v2942 = vadd.f32 %v2941, %v2935
      %v2943 = vadd.f32 %v2942, %v2936
      %v2944 = vadd.f32 %v2943, %v2937
      %v2945 = vrot.slane %v2944, 4
      %v2946 = vadd.f32 %v2944, %v2945
      %v2947 = vrot.slane %v2946, 2
      %v2948 = vadd.f32 %v2946, %v2947
      %v2949 = vrot.slane %v2948, 1
      %v2950 = vadd.f32 %v2948, %v2949
      %v2951 = vmul.f32 %v2950, 0.015625
      %v2952 = vmul.f32 %v2930, %v2930
      %v2953 = vmul.f32 %v2931, %v2931
      %v2954 = vmul.f32 %v2932, %v2932
      %v2955 = vmul.f32 %v2933, %v2933
      %v2956 = vmul.f32 %v2934, %v2934
      %v2957 = vmul.f32 %v2935, %v2935
      %v2958 = vmul.f32 %v2936, %v2936
      %v2959 = vmul.f32 %v2937, %v2937
      %v2960 = vadd.f32 %v2952, %v2953
      %v2961 = vadd.f32 %v2960, %v2954
      %v2962 = vadd.f32 %v2961, %v2955
      %v2963 = vadd.f32 %v2962, %v2956
      %v2964 = vadd.f32 %v2963, %v2957
      %v2965 = vadd.f32 %v2964, %v2958
      %v2966 = vadd.f32 %v2965, %v2959
      %v2967 = vrot.slane %v2966, 4
      %v2968 = vadd.f32 %v2966, %v2967
      %v2969 = vrot.slane %v2968, 2
      %v2970 = vadd.f32 %v2968, %v2969
      %v2971 = vrot.slane %v2970, 1
      %v2972 = vadd.f32 %v2970, %v2971
      %v2973 = vmul.f32 %v2972, 0.015625
      %v2974 = vmul.f32 %v2951, %v2951
      %v2975 = vsub.f32 %v2973, %v2974
      %v2976 = vmax.f32 %v2975, 0.0
      %v2977 = vsub.f32 %v2930, %v2951
      %v2978 = vsub.f32 %v2931, %v2951
      %v2979 = vsub.f32 %v2932, %v2951
      %v2980 = vsub.f32 %v2933, %v2951
      %v2981 = vsub.f32 %v2934, %v2951
      %v2982 = vsub.f32 %v2935, %v2951
      %v2983 = vsub.f32 %v2936, %v2951
      %v2984 = vsub.f32 %v2937, %v2951
      %v2985 = vadd.f32 %v2976, 1e-05
      %v2986 = vrsqrt.pop %v2985
      %v2987 = vmul.f32 %v2977, %v2986
      %v2988 = vmul.f32 %v2978, %v2986
      %v2989 = vmul.f32 %v2979, %v2986
      %v2990 = vmul.f32 %v2980, %v2986
      %v2991 = vmul.f32 %v2981, %v2986
      %v2992 = vmul.f32 %v2982, %v2986
      %v2993 = vmul.f32 %v2983, %v2986
      %v2994 = vmul.f32 %v2984, %v2986
      %v2995 = vmax.f32 %v2987, 0.0
      %v2996 = vmax.f32 %v2988, 0.0
      %v2997 = vmax.f32 %v2989, 0.0
      %v2998 = vmax.f32 %v2990, 0.0
      %v2999 = vmax.f32 %v2991, 0.0
      %v3000 = vmax.f32 %v2992, 0.0
      %v3001 = vmax.f32 %v2993, 0.0
      %v3002 = vmax.f32 %v2994, 0.0
      %3003 = vst [vmem:[%s170] sm:$0xff] %v2995
      %3004 = vst [vmem:[%s170 + $0x8] sm:$0xff] %v2996
      %3005 = vst [vmem:[%s170 + $0x10] sm:$0xff] %v2997
      %3006 = vst [vmem:[%s170 + $0x18] sm:$0xff] %v2998
      %3007 = vst [vmem:[%s170 + $0x20] sm:$0xff] %v2999
      %3008 = vst [vmem:[%s170 + $0x28] sm:$0xff] %v3000
      %3009 = vst [vmem:[%s170 + $0x30] sm:$0xff] %v3001
      %3010 = vst [vmem:[%s170 + $0x38] sm:$0xff] %v3002
      %p3011 = scmp.lt.s32.totalorder %s14, 1
      %s3012 = scalar_select %p3011, %s14, 1
      %s3013 = smul.addr %s3012, 8
      %s3014 = smul.addr %s3013, 8
      %s3015 = scalar_lea.vmem %s3, %s3014
      // Predicated region
      $region33: #{layer_forward.2} parent=31 // pred_check
        %p3016 = pneg %p100
      $region34: #{layer_forward.2} parent=31 // pred_check_branch
        %3018 = sbr.rel (%p3016) target = $region36
      $region35: #{layer_forward.2} parent=31 // pred_region
        _
      $region36: #{layer_forward.2} parent=31 // pred_fallthru
        _
    $region32: #{layer_forward.2} parent=5 // pred_fallthru
      _
    %p3019 = scmp.le.s32.totalorder 2, %s9
    // Predicated region
    $region37: #{layer_forward.2} parent=5 // pred_check
      %p3020 = pneg %p3019
    $region38: #{layer_forward.2} parent=5 // pred_check_branch
      %3022 = sbr.rel (%p3020) target = $region40
    $region39: #{layer_forward.2} parent=5 // pred_region
      %s3023 = ssub.s32 %s9, 2
      // Predicated region
      $region41: #{layer_forward.2} parent=39 // pred_check
        %p3024 = pneg %p106
      $region42: #{layer_forward.2} parent=39 // pred_check_branch
        %3026 = sbr.rel (%p3024) target = $region44
      $region43: #{layer_forward.2} parent=39 // pred_region
        %p3027 = scmp.lt.s32.totalorder %s15, 1
        %s3028 = scalar_select %p3027, %s15, 1
        %s3029 = smul.addr %s3028, 8
        %s3030 = smul.addr %s3029, 8
        %s3031 = scalar_lea.vmem %s3, %s3030
      $region44: #{layer_forward.2} parent=39 // pred_fallthru
        _
    $region40: #{layer_forward.2} parent=5 // pred_fallthru
      _
  $region6: #{layer_forward.2} parent=0 // loop_footer
    %s13 = sadd.s32 1, %s9
  $region7: #{layer_forward.2} parent=0 // loop_footer_branch
    %8 = sbr.rel target = $region3
  $region8: #{layer_forward.2} parent=0 // loop_exit
    _

</llo_original>
